<compile_context>
chip_gen: v7x
topology: tpu7x:2x2x1
jax: 0.10.0
libtpu: 0.0.40
codegen_flags: <defaults>
</compile_context>

<pallas_src>
import functools

import jax
import jax.numpy as jnp
from jax.experimental import pallas as pl
from jax.experimental.pallas import tpu as pltpu

# ---------------- config (small, consistent with the forward) ----------------
B   = 2              # batch
S   = 64             # seq len, fixed by rearrange: h*w = 8*8
TCN = 4
CIN = TCN * 2        # input channel dim into ReciverModel2d (tcn * 2)
H   = 32             # config.hidden_size
NH  = 4              # attention heads
HD  = H // NH        # head dim
FF  = 4 * H          # FFN intermediate
L   = 2              # number of encoder layers
OUT = 48             # final_dense out features (= 4*4*3)
PADOUT = 128         # lane-padded output width (unmasked stores, full MXU N)
EPS = 1e-12          # BERT LayerNorm eps
SCALE = 1.0 / float(HD) ** 0.5

# ---------------- packed-parameter slab layout (static row offsets) -----------
# Weight slab W: (W_ROWS, 128) f32.  All blocks start at multiples of 8 rows.
W_EMB       = 0                       # emb_w  (CIN, H)   rows [0, CIN)
W_FINAL     = W_EMB + CIN             # fw     (H, OUT)   rows [CIN, CIN+H)
W_LAYER     = W_FINAL + H             # per-layer blocks start here
W_PER_LAYER = H + H + FF              # qkv+o block (H rows) + w1 (H) + w2 (FF)
W_ROWS      = W_LAYER + L * W_PER_LAYER        # 424 (multiple of 8)

# Vector slab V: (V_ROWS, 128) f32.  One row per vector (cols beyond width = 0).
V_POS       = 0                       # pos   (S, H)
V_EMB_B     = S                       # emb_b
V_LNE_G     = S + 1
V_LNE_B     = S + 2
V_FB        = S + 3                   # fb (width OUT, rest zero)
V_LAYER     = S + 4
V_PER_LAYER = 7                       # [bq|bk|bv|bo], ln1_g, ln1_b, b1, b2, ln2_g, ln2_b
V_ROWS_RAW  = V_LAYER + L * V_PER_LAYER
V_ROWS      = ((V_ROWS_RAW + 7) // 8) * 8       # pad rows to multiple of 8


def _layer_norm(x, g, b):
    mu = jnp.mean(x, axis=-1, keepdims=True)
    var = jnp.mean((x - mu) ** 2, axis=-1, keepdims=True)
    return (x - mu) * jax.lax.rsqrt(var + EPS) * g + b


# ------------------------------- Pallas kernel --------------------------------
def decoder_kernel(x_ref, w_ref, v_ref, out_ref, *, bb):
    """x_ref: (bb*S, CIN); w_ref: (W_ROWS,128); v_ref: (V_ROWS,128);
    out_ref: (bb*S, PADOUT)  (cols >= OUT are zero)."""
    f32 = jnp.float32
    x = x_ref[...].astype(f32)                                   # (T, CIN)

    # --- embeddings: linear projection + positional + LayerNorm ---
    emb_w = w_ref[W_EMB:W_EMB + CIN, 0:H]                        # (CIN, H)
    h = jnp.dot(x, emb_w, preferred_element_type=f32)
    h = h + v_ref[V_EMB_B:V_EMB_B + 1, 0:H]                      # (1, H) bias
    pos = v_ref[V_POS:V_POS + S, 0:H]                            # (S, H)
    if bb > 1:
        pos = jnp.concatenate([pos] * bb, axis=0)                # (T, H)
    h = h + pos
    h = _layer_norm(h, v_ref[V_LNE_G:V_LNE_G + 1, 0:H],
                    v_ref[V_LNE_B:V_LNE_B + 1, 0:H])

    # --- L transformer encoder layers (post-LN BERT style), fully unrolled ---
    for l in range(L):
        bw = W_LAYER + l * W_PER_LAYER
        rv = V_LAYER + l * V_PER_LAYER

        wqkv = w_ref[bw:bw + H, 0:3 * H]                         # (H, 3H)
        wo   = w_ref[bw:bw + H, 3 * H:4 * H]                     # (H, H)
        w1   = w_ref[bw + H:bw + 2 * H, 0:FF]                    # (H, FF)
        w2   = w_ref[bw + 2 * H:bw + 2 * H + FF, 0:H]            # (FF, H)

        bqkv  = v_ref[rv:rv + 1, 0:3 * H]                        # (1, 3H)
        bo    = v_ref[rv:rv + 1, 3 * H:4 * H]                    # (1, H)
        ln1_g = v_ref[rv + 1:rv + 2, 0:H]
        ln1_b = v_ref[rv + 2:rv + 3, 0:H]
        b1    = v_ref[rv + 3:rv + 4, 0:FF]
        b2    = v_ref[rv + 4:rv + 5, 0:H]
        ln2_g = v_ref[rv + 5:rv + 6, 0:H]
        ln2_b = v_ref[rv + 6:rv + 7, 0:H]

        # fused q/k/v projection; attention scale folded into q
        qkv = jnp.dot(h, wqkv, preferred_element_type=f32) + bqkv    # (T, 3H)
        q = qkv[:, 0:H] * SCALE
        k = qkv[:, H:2 * H]
        v = qkv[:, 2 * H:3 * H]

        # per-batch-element, per-head attention (all 2-D matmuls, no 3-D reshape)
        ctx_parts = []
        for b in range(bb):
            r0 = b * S
            q_b  = q[r0:r0 + S, :]                               # (S, H)
            kT_b = k[r0:r0 + S, :].T                             # (H, S) one transpose
            v_b  = v[r0:r0 + S, :]                               # (S, H)
            heads = []
            for nh in range(NH):
                c0 = nh * HD
                s_bh = jnp.dot(q_b[:, c0:c0 + HD], kT_b[c0:c0 + HD, :],
                               preferred_element_type=f32)        # (S, S)
                m = jnp.max(s_bh, axis=-1, keepdims=True)
                e = jnp.exp(s_bh - m)
                p = e * pl.reciprocal(jnp.sum(e, axis=-1, keepdims=True),
                                      approx=True)
                heads.append(jnp.dot(p, v_b[:, c0:c0 + HD],
                                     preferred_element_type=f32))  # (S, HD)
            ctx_parts.append(jnp.concatenate(heads, axis=-1))      # (S, H)
        ctx = ctx_parts[0] if bb == 1 else jnp.concatenate(ctx_parts, axis=0)

        attn = jnp.dot(ctx, wo, preferred_element_type=f32) + bo
        h = _layer_norm(h + attn, ln1_g, ln1_b)

        ff = jnp.dot(h, w1, preferred_element_type=f32) + b1
        ff = jax.nn.gelu(ff, approximate=True)   # TODO(synk): tanh GELU assumed; swap to erf if reference uses nn.GELU default
        ff = jnp.dot(ff, w2, preferred_element_type=f32) + b2
        h = _layer_norm(h + ff, ln2_g, ln2_b)

    # --- final_dense: Linear(hidden_size -> 48), padded to 128 lanes ---
    # Weight/bias columns >= OUT are zero in the slabs, so out[:, OUT:] == 0.
    # Full 128-lane N is free on the MXU and gives an unmasked output store.
    fw = w_ref[W_FINAL:W_FINAL + H, :]                           # (H, 128)
    fb = v_ref[V_FB:V_FB + 1, :]                                 # (1, 128)
    out = jnp.dot(h, fw, preferred_element_type=f32) + fb        # (T, 128)
    out_ref[...] = out.astype(out_ref.dtype)


# ------------------------------ parameter packing ------------------------------
def pack_params(params):
    """23 individual parameter arrays -> (weight_slab, vector_slab), each (rows, 128) f32."""
    (emb_w, emb_b, pos, lne_g, lne_b,
     wq, bq, wk, bk, wv, bv,
     wo, bo, ln1_g, ln1_b,
     w1, b1, w2, b2, ln2_g, ln2_b,
     fw, fb) = params

    ws = jnp.zeros((W_ROWS, 128), jnp.float32)
    ws = ws.at[W_EMB:W_EMB + CIN, 0:H].set(emb_w)
    ws = ws.at[W_FINAL:W_FINAL + H, 0:OUT].set(fw)
    for l in range(L):
        bw = W_LAYER + l * W_PER_LAYER
        ws = ws.at[bw:bw + H, 0:H].set(wq[l])
        ws = ws.at[bw:bw + H, H:2 * H].set(wk[l])
        ws = ws.at[bw:bw + H, 2 * H:3 * H].set(wv[l])
        ws = ws.at[bw:bw + H, 3 * H:4 * H].set(wo[l])
        ws = ws.at[bw + H:bw + 2 * H, 0:FF].set(w1[l])
        ws = ws.at[bw + 2 * H:bw + 2 * H + FF, 0:H].set(w2[l])

    vs = jnp.zeros((V_ROWS, 128), jnp.float32)
    vs = vs.at[V_POS:V_POS + S, 0:H].set(pos)
    vs = vs.at[V_EMB_B, 0:H].set(emb_b.reshape(H))
    vs = vs.at[V_LNE_G, 0:H].set(lne_g.reshape(H))
    vs = vs.at[V_LNE_B, 0:H].set(lne_b.reshape(H))
    vs = vs.at[V_FB, 0:OUT].set(fb.reshape(OUT))
    for l in range(L):
        rv = V_LAYER + l * V_PER_LAYER
        vs = vs.at[rv, 0:H].set(bq[l].reshape(H))
        vs = vs.at[rv, H:2 * H].set(bk[l].reshape(H))
        vs = vs.at[rv, 2 * H:3 * H].set(bv[l].reshape(H))
        vs = vs.at[rv, 3 * H:4 * H].set(bo[l].reshape(H))
        vs = vs.at[rv + 1, 0:H].set(ln1_g[l].reshape(H))
        vs = vs.at[rv + 2, 0:H].set(ln1_b[l].reshape(H))
        vs = vs.at[rv + 3, 0:FF].set(b1[l].reshape(FF))
        vs = vs.at[rv + 4, 0:H].set(b2[l].reshape(H))
        vs = vs.at[rv + 5, 0:H].set(ln2_g[l].reshape(H))
        vs = vs.at[rv + 6, 0:H].set(ln2_b[l].reshape(H))
    return ws, vs


# --------------------------------- wrapper ------------------------------------
def _batch_block():
    """Tokens-per-invocation choice: collapse batch on 1-TC chips (v5e/v6e);
    keep a 2-wide parallel grid on v7x (2 TensorCores/chip)."""
    try:
        kind = jax.devices()[0].device_kind.lower()
    except Exception:
        kind = ""
    if "v7" in kind or "tpu7" in kind:
        return 1          # one batch element per TensorCore
    return B              # single invocation, all B*S tokens


def decoder2d_trans(x, w_slab, v_slab, *, batch_block=None):
    """x: (B, S, CIN) float32 -> (B, 3, 32, 32) float32."""
    assert x.shape == (B, S, CIN)
    bb = _batch_block() if batch_block is None else batch_block
    assert B % bb == 0
    grid = (B // bb,)
    x2d = x.reshape(B * S, CIN)

    tok = B * S
    cost = pl.CostEstimate(
        flops=2 * tok * (CIN * H + PADOUT * H)
              + L * 2 * tok * (3 * H * H + H * H + 2 * H * FF + 2 * S * H),
        transcendentals=tok * L * (NH * S + FF),
        bytes_accessed=4 * (tok * (CIN + PADOUT) + W_ROWS * 128 + V_ROWS * 128),
    )

    dense_out = pl.pallas_call(
        functools.partial(decoder_kernel, bb=bb),
        out_shape=jax.ShapeDtypeStruct((B * S, PADOUT), jnp.float32),
        grid=grid,
        in_specs=[
            pl.BlockSpec((bb * S, CIN), lambda i: (i, 0)),
            pl.BlockSpec((W_ROWS, 128), lambda i: (0, 0)),
            pl.BlockSpec((V_ROWS, 128), lambda i: (0, 0)),
        ],
        out_specs=pl.BlockSpec((bb * S, PADOUT), lambda i: (i, 0)),
        compiler_params=pltpu.CompilerParams(dimension_semantics=("parallel",)),
        cost_estimate=cost,
    )(x2d, w_slab, v_slab)

    dense_out = dense_out[:, :OUT]                   # drop lane padding (layout glue)

    # rearrange 'b (h w) (p1 p2 c) -> b c (h p1) (w p2)', p1=4, p2=4, h=8, w=8, c=3
    y = dense_out.reshape(B, 8, 8, 4, 4, 3)          # (b, h, w, p1, p2, c)
    y = jnp.transpose(y, (0, 5, 1, 3, 2, 4))         # (b, c, h, p1, w, p2)
    return y.reshape(B, 3, 8 * 4, 8 * 4)             # (b, 3, 32, 32)


# --------------------------- deterministic parameters --------------------------
def init_params(key):
    ks = iter(jax.random.split(key, 32))

    def rnd(shape, std=0.02):
        return (std * jax.random.normal(next(ks), shape)).astype(jnp.float32)

    emb_w = rnd((CIN, H))
    emb_b = jnp.zeros((1, H), jnp.float32)
    pos   = rnd((S, H))
    lne_g = jnp.ones((1, H), jnp.float32)
    lne_b = jnp.zeros((1, H), jnp.float32)

    wq = rnd((L, H, H)); bq = jnp.zeros((L, 1, H), jnp.float32)
    wk = rnd((L, H, H)); bk = jnp.zeros((L, 1, H), jnp.float32)
    wv = rnd((L, H, H)); bv = jnp.zeros((L, 1, H), jnp.float32)
    wo = rnd((L, H, H)); bo = jnp.zeros((L, 1, H), jnp.float32)
    ln1_g = jnp.ones((L, 1, H), jnp.float32); ln1_b = jnp.zeros((L, 1, H), jnp.float32)

    w1 = rnd((L, H, FF)); b1 = jnp.zeros((L, 1, FF), jnp.float32)
    w2 = rnd((L, FF, H)); b2 = jnp.zeros((L, 1, H), jnp.float32)
    ln2_g = jnp.ones((L, 1, H), jnp.float32); ln2_b = jnp.zeros((L, 1, H), jnp.float32)

    fw = rnd((H, OUT))
    fb = jnp.zeros((1, OUT), jnp.float32)

    return (emb_w, emb_b, pos, lne_g, lne_b,
            wq, bq, wk, bk, wv, bv,
            wo, bo, ln1_g, ln1_b,
            w1, b1, w2, b2, ln2_g, ln2_b,
            fw, fb)


if __name__ == "__main__":
    key = jax.random.PRNGKey(0)
    kx, kp = jax.random.split(key)

    x = jax.random.normal(kx, (B, S, CIN), dtype=jnp.float32)
    params = init_params(kp)
    w_slab, v_slab = pack_params(params)

    out = decoder2d_trans(x, w_slab, v_slab)
    out = jax.block_until_ready(out)

    assert out.shape == (B, 3, 32, 32), out.shape
    assert out.dtype == jnp.float32
    assert bool(jnp.all(jnp.isfinite(out)))
    print("KERNEL_OK")
</pallas_src>

<mosaic_0001>
module attributes {stable_mosaic.version = 11 : i64} {
  func.func @decoder_kernel(%arg0: i32, %arg1: memref<128x8xf32, #tpu.memory_space<vmem>>, %arg2: memref<424x128xf32, #tpu.memory_space<vmem>>, %arg3: memref<88x128xf32, #tpu.memory_space<vmem>>, %arg4: memref<128x128xf32, #tpu.memory_space<vmem>>) attributes {dimension_semantics = [#tpu.dimension_semantics<parallel>], iteration_bounds = array<i64: 1>, scalar_prefetch = 0 : i64, scratch_operands = 0 : i64, tpu.core_type = #tpu.core_type<tc>, window_params = [{transform_indices = @transform_0, window_bounds = array<i64: 128, 8>}, {pipeline_mode = #tpu.pipeline_mode<synchronous>, transform_indices = @transform_1, window_bounds = array<i64: 424, 128>}, {pipeline_mode = #tpu.pipeline_mode<synchronous>, transform_indices = @transform_2, window_bounds = array<i64: 88, 128>}, {transform_indices = @transform_3, window_bounds = array<i64: 128, 128>}]} {
    %c0 = arith.constant 0 : index
    %c0_0 = arith.constant 0 : index
    %0 = vector.load %arg1[%c0, %c0_0] : memref<128x8xf32, #tpu.memory_space<vmem>>, vector<128x8xf32>
    %c0_1 = arith.constant 0 : index
    %c0_2 = arith.constant 0 : index
    %1 = vector.load %arg2[%c0_1, %c0_2] : memref<424x128xf32, #tpu.memory_space<vmem>>, vector<8x32xf32>
    %cst = arith.constant dense<0.000000e+00> : vector<128x32xf32>
    %2 = tpu.matmul %0, %1, %cst {dimension_numbers = #tpu.dot_dimension_numbers<[1], [0], [0], [1], [0, 0, 1, 1], [], []>} : vector<128x8xf32>, vector<8x32xf32>, vector<128x32xf32> -> vector<128x32xf32>
    %c64 = arith.constant 64 : index
    %c0_3 = arith.constant 0 : index
    %3 = vector.load %arg3[%c64, %c0_3] : memref<88x128xf32, #tpu.memory_space<vmem>>, vector<1x32xf32>
    %4 = vector.broadcast %3 : vector<1x32xf32> to vector<128x32xf32>
    %5 = arith.addf %2, %4 : vector<128x32xf32>
    %c0_4 = arith.constant 0 : index
    %c0_5 = arith.constant 0 : index
    %6 = vector.load %arg3[%c0_4, %c0_5] : memref<88x128xf32, #tpu.memory_space<vmem>>, vector<64x32xf32>
    %7 = tpu.concatenate %6, %6 in 0 : vector<64x32xf32>, vector<64x32xf32> -> vector<128x32xf32>
    %8 = arith.addf %5, %7 : vector<128x32xf32>
    %c65 = arith.constant 65 : index
    %c0_6 = arith.constant 0 : index
    %9 = vector.load %arg3[%c65, %c0_6] : memref<88x128xf32, #tpu.memory_space<vmem>>, vector<1x32xf32>
    %c66 = arith.constant 66 : index
    %c0_7 = arith.constant 0 : index
    %10 = vector.load %arg3[%c66, %c0_7] : memref<88x128xf32, #tpu.memory_space<vmem>>, vector<1x32xf32>
    %cst_8 = arith.constant dense<0.000000e+00> : vector<128xf32>
    %11 = vector.multi_reduction <add>, %8, %cst_8 [1] : vector<128x32xf32> to vector<128xf32>
    %12 = vector.shape_cast %11 : vector<128xf32> to vector<128x1xf32>
    %cst_9 = arith.constant 3.200000e+01 : f32
    %13 = vector.broadcast %cst_9 : f32 to vector<128x1xf32>
    %14 = arith.divf %12, %13 : vector<128x1xf32>
    %15 = vector.broadcast %14 : vector<128x1xf32> to vector<128x32xf32>
    %16 = arith.subf %8, %15 : vector<128x32xf32>
    %17 = arith.mulf %16, %16 : vector<128x32xf32>
    %cst_10 = arith.constant dense<0.000000e+00> : vector<128xf32>
    %18 = vector.multi_reduction <add>, %17, %cst_10 [1] : vector<128x32xf32> to vector<128xf32>
    %19 = vector.shape_cast %18 : vector<128xf32> to vector<128x1xf32>
    %cst_11 = arith.constant 3.200000e+01 : f32
    %20 = vector.broadcast %cst_11 : f32 to vector<128x1xf32>
    %21 = arith.divf %19, %20 : vector<128x1xf32>
    %22 = vector.broadcast %14 : vector<128x1xf32> to vector<128x32xf32>
    %23 = arith.subf %8, %22 : vector<128x32xf32>
    %cst_12 = arith.constant 9.99999996E-13 : f32
    %24 = vector.broadcast %cst_12 : f32 to vector<128x1xf32>
    %25 = arith.addf %21, %24 : vector<128x1xf32>
    %26 = math.rsqrt %25 : vector<128x1xf32>
    %27 = vector.broadcast %26 : vector<128x1xf32> to vector<128x32xf32>
    %28 = arith.mulf %23, %27 : vector<128x32xf32>
    %29 = vector.broadcast %9 : vector<1x32xf32> to vector<128x32xf32>
    %30 = arith.mulf %28, %29 : vector<128x32xf32>
    %31 = vector.broadcast %10 : vector<1x32xf32> to vector<128x32xf32>
    %32 = arith.addf %30, %31 : vector<128x32xf32>
    %c40 = arith.constant 40 : index
    %c0_13 = arith.constant 0 : index
    %33 = vector.load %arg2[%c40, %c0_13] : memref<424x128xf32, #tpu.memory_space<vmem>>, vector<32x96xf32>
    %c40_14 = arith.constant 40 : index
    %c96 = arith.constant 96 : index
    %34 = vector.load %arg2[%c40_14, %c96] : memref<424x128xf32, #tpu.memory_space<vmem>>, vector<32x32xf32>
    %c72 = arith.constant 72 : index
    %c0_15 = arith.constant 0 : index
    %35 = vector.load %arg2[%c72, %c0_15] : memref<424x128xf32, #tpu.memory_space<vmem>>, vector<32x128xf32>
    %c104 = arith.constant 104 : index
    %c0_16 = arith.constant 0 : index
    %36 = vector.load %arg2[%c104, %c0_16] : memref<424x128xf32, #tpu.memory_space<vmem>>, vector<128x32xf32>
    %c68 = arith.constant 68 : index
    %c0_17 = arith.constant 0 : index
    %37 = vector.load %arg3[%c68, %c0_17] : memref<88x128xf32, #tpu.memory_space<vmem>>, vector<1x96xf32>
    %c68_18 = arith.constant 68 : index
    %c96_19 = arith.constant 96 : index
    %38 = vector.load %arg3[%c68_18, %c96_19] : memref<88x128xf32, #tpu.memory_space<vmem>>, vector<1x32xf32>
    %c69 = arith.constant 69 : index
    %c0_20 = arith.constant 0 : index
    %39 = vector.load %arg3[%c69, %c0_20] : memref<88x128xf32, #tpu.memory_space<vmem>>, vector<1x32xf32>
    %c70 = arith.constant 70 : index
    %c0_21 = arith.constant 0 : index
    %40 = vector.load %arg3[%c70, %c0_21] : memref<88x128xf32, #tpu.memory_space<vmem>>, vector<1x32xf32>
    %c71 = arith.constant 71 : index
    %c0_22 = arith.constant 0 : index
    %41 = vector.load %arg3[%c71, %c0_22] : memref<88x128xf32, #tpu.memory_space<vmem>>, vector<1x128xf32>
    %c72_23 = arith.constant 72 : index
    %c0_24 = arith.constant 0 : index
    %42 = vector.load %arg3[%c72_23, %c0_24] : memref<88x128xf32, #tpu.memory_space<vmem>>, vector<1x32xf32>
    %c73 = arith.constant 73 : index
    %c0_25 = arith.constant 0 : index
    %43 = vector.load %arg3[%c73, %c0_25] : memref<88x128xf32, #tpu.memory_space<vmem>>, vector<1x32xf32>
    %c74 = arith.constant 74 : index
    %c0_26 = arith.constant 0 : index
    %44 = vector.load %arg3[%c74, %c0_26] : memref<88x128xf32, #tpu.memory_space<vmem>>, vector<1x32xf32>
    %cst_27 = arith.constant dense<0.000000e+00> : vector<128x96xf32>
    %45 = tpu.matmul %32, %33, %cst_27 {dimension_numbers = #tpu.dot_dimension_numbers<[1], [0], [0], [1], [0, 0, 1, 1], [], []>} : vector<128x32xf32>, vector<32x96xf32>, vector<128x96xf32> -> vector<128x96xf32>
    %46 = vector.broadcast %37 : vector<1x96xf32> to vector<128x96xf32>
    %47 = arith.addf %45, %46 : vector<128x96xf32>
    %48 = vector.extract_strided_slice %47 {offsets = [0, 0], sizes = [128, 32], strides = [1, 1]} : vector<128x96xf32> to vector<128x32xf32>
    %cst_28 = arith.constant 0.353553385 : f32
    %49 = vector.broadcast %cst_28 : f32 to vector<128x32xf32>
    %50 = arith.mulf %48, %49 : vector<128x32xf32>
    %51 = vector.extract_strided_slice %47 {offsets = [0, 32], sizes = [128, 32], strides = [1, 1]} : vector<128x96xf32> to vector<128x32xf32>
    %52 = vector.extract_strided_slice %47 {offsets = [0, 64], sizes = [128, 32], strides = [1, 1]} : vector<128x96xf32> to vector<128x32xf32>
    %53 = vector.extract_strided_slice %50 {offsets = [0, 0], sizes = [64, 32], strides = [1, 1]} : vector<128x32xf32> to vector<64x32xf32>
    %54 = vector.extract_strided_slice %51 {offsets = [0, 0], sizes = [64, 32], strides = [1, 1]} : vector<128x32xf32> to vector<64x32xf32>
    %55 = tpu.transpose %54, [1, 0] : vector<64x32xf32> -> vector<32x64xf32>
    %56 = vector.extract_strided_slice %52 {offsets = [0, 0], sizes = [64, 32], strides = [1, 1]} : vector<128x32xf32> to vector<64x32xf32>
    %57 = vector.extract_strided_slice %53 {offsets = [0, 0], sizes = [64, 8], strides = [1, 1]} : vector<64x32xf32> to vector<64x8xf32>
    %58 = vector.extract_strided_slice %55 {offsets = [0, 0], sizes = [8, 64], strides = [1, 1]} : vector<32x64xf32> to vector<8x64xf32>
    %cst_29 = arith.constant dense<0.000000e+00> : vector<64x64xf32>
    %59 = tpu.matmul %57, %58, %cst_29 {dimension_numbers = #tpu.dot_dimension_numbers<[1], [0], [0], [1], [0, 0, 1, 1], [], []>} : vector<64x8xf32>, vector<8x64xf32>, vector<64x64xf32> -> vector<64x64xf32>
    %cst_30 = arith.constant dense<0xFF800000> : vector<64xf32>
    %60 = vector.multi_reduction <maximumf>, %59, %cst_30 [1] : vector<64x64xf32> to vector<64xf32>
    %61 = vector.shape_cast %60 : vector<64xf32> to vector<64x1xf32>
    %62 = vector.broadcast %61 : vector<64x1xf32> to vector<64x64xf32>
    %63 = arith.subf %59, %62 : vector<64x64xf32>
    %64 = math.exp %63 : vector<64x64xf32>
    %cst_31 = arith.constant dense<0.000000e+00> : vector<64xf32>
    %65 = vector.multi_reduction <add>, %64, %cst_31 [1] : vector<64x64xf32> to vector<64xf32>
    %66 = vector.shape_cast %65 : vector<64xf32> to vector<64x1xf32>
    %67 = tpu.reciprocal %66 {approx = true} : vector<64x1xf32> -> vector<64x1xf32>
    %68 = vector.broadcast %67 : vector<64x1xf32> to vector<64x64xf32>
    %69 = arith.mulf %64, %68 : vector<64x64xf32>
    %70 = vector.extract_strided_slice %56 {offsets = [0, 0], sizes = [64, 8], strides = [1, 1]} : vector<64x32xf32> to vector<64x8xf32>
    %cst_32 = arith.constant dense<0.000000e+00> : vector<64x8xf32>
    %71 = tpu.matmul %69, %70, %cst_32 {dimension_numbers = #tpu.dot_dimension_numbers<[1], [0], [0], [1], [0, 0, 1, 1], [], []>} : vector<64x64xf32>, vector<64x8xf32>, vector<64x8xf32> -> vector<64x8xf32>
    %72 = vector.extract_strided_slice %53 {offsets = [0, 8], sizes = [64, 8], strides = [1, 1]} : vector<64x32xf32> to vector<64x8xf32>
    %73 = vector.extract_strided_slice %55 {offsets = [8, 0], sizes = [8, 64], strides = [1, 1]} : vector<32x64xf32> to vector<8x64xf32>
    %cst_33 = arith.constant dense<0.000000e+00> : vector<64x64xf32>
    %74 = tpu.matmul %72, %73, %cst_33 {dimension_numbers = #tpu.dot_dimension_numbers<[1], [0], [0], [1], [0, 0, 1, 1], [], []>} : vector<64x8xf32>, vector<8x64xf32>, vector<64x64xf32> -> vector<64x64xf32>
    %cst_34 = arith.constant dense<0xFF800000> : vector<64xf32>
    %75 = vector.multi_reduction <maximumf>, %74, %cst_34 [1] : vector<64x64xf32> to vector<64xf32>
    %76 = vector.shape_cast %75 : vector<64xf32> to vector<64x1xf32>
    %77 = vector.broadcast %76 : vector<64x1xf32> to vector<64x64xf32>
    %78 = arith.subf %74, %77 : vector<64x64xf32>
    %79 = math.exp %78 : vector<64x64xf32>
    %cst_35 = arith.constant dense<0.000000e+00> : vector<64xf32>
    %80 = vector.multi_reduction <add>, %79, %cst_35 [1] : vector<64x64xf32> to vector<64xf32>
    %81 = vector.shape_cast %80 : vector<64xf32> to vector<64x1xf32>
    %82 = tpu.reciprocal %81 {approx = true} : vector<64x1xf32> -> vector<64x1xf32>
    %83 = vector.broadcast %82 : vector<64x1xf32> to vector<64x64xf32>
    %84 = arith.mulf %79, %83 : vector<64x64xf32>
    %85 = vector.extract_strided_slice %56 {offsets = [0, 8], sizes = [64, 8], strides = [1, 1]} : vector<64x32xf32> to vector<64x8xf32>
    %cst_36 = arith.constant dense<0.000000e+00> : vector<64x8xf32>
    %86 = tpu.matmul %84, %85, %cst_36 {dimension_numbers = #tpu.dot_dimension_numbers<[1], [0], [0], [1], [0, 0, 1, 1], [], []>} : vector<64x64xf32>, vector<64x8xf32>, vector<64x8xf32> -> vector<64x8xf32>
    %87 = vector.extract_strided_slice %53 {offsets = [0, 16], sizes = [64, 8], strides = [1, 1]} : vector<64x32xf32> to vector<64x8xf32>
    %88 = vector.extract_strided_slice %55 {offsets = [16, 0], sizes = [8, 64], strides = [1, 1]} : vector<32x64xf32> to vector<8x64xf32>
    %cst_37 = arith.constant dense<0.000000e+00> : vector<64x64xf32>
    %89 = tpu.matmul %87, %88, %cst_37 {dimension_numbers = #tpu.dot_dimension_numbers<[1], [0], [0], [1], [0, 0, 1, 1], [], []>} : vector<64x8xf32>, vector<8x64xf32>, vector<64x64xf32> -> vector<64x64xf32>
    %cst_38 = arith.constant dense<0xFF800000> : vector<64xf32>
    %90 = vector.multi_reduction <maximumf>, %89, %cst_38 [1] : vector<64x64xf32> to vector<64xf32>
    %91 = vector.shape_cast %90 : vector<64xf32> to vector<64x1xf32>
    %92 = vector.broadcast %91 : vector<64x1xf32> to vector<64x64xf32>
    %93 = arith.subf %89, %92 : vector<64x64xf32>
    %94 = math.exp %93 : vector<64x64xf32>
    %cst_39 = arith.constant dense<0.000000e+00> : vector<64xf32>
    %95 = vector.multi_reduction <add>, %94, %cst_39 [1] : vector<64x64xf32> to vector<64xf32>
    %96 = vector.shape_cast %95 : vector<64xf32> to vector<64x1xf32>
    %97 = tpu.reciprocal %96 {approx = true} : vector<64x1xf32> -> vector<64x1xf32>
    %98 = vector.broadcast %97 : vector<64x1xf32> to vector<64x64xf32>
    %99 = arith.mulf %94, %98 : vector<64x64xf32>
    %100 = vector.extract_strided_slice %56 {offsets = [0, 16], sizes = [64, 8], strides = [1, 1]} : vector<64x32xf32> to vector<64x8xf32>
    %cst_40 = arith.constant dense<0.000000e+00> : vector<64x8xf32>
    %101 = tpu.matmul %99, %100, %cst_40 {dimension_numbers = #tpu.dot_dimension_numbers<[1], [0], [0], [1], [0, 0, 1, 1], [], []>} : vector<64x64xf32>, vector<64x8xf32>, vector<64x8xf32> -> vector<64x8xf32>
    %102 = vector.extract_strided_slice %53 {offsets = [0, 24], sizes = [64, 8], strides = [1, 1]} : vector<64x32xf32> to vector<64x8xf32>
    %103 = vector.extract_strided_slice %55 {offsets = [24, 0], sizes = [8, 64], strides = [1, 1]} : vector<32x64xf32> to vector<8x64xf32>
    %cst_41 = arith.constant dense<0.000000e+00> : vector<64x64xf32>
    %104 = tpu.matmul %102, %103, %cst_41 {dimension_numbers = #tpu.dot_dimension_numbers<[1], [0], [0], [1], [0, 0, 1, 1], [], []>} : vector<64x8xf32>, vector<8x64xf32>, vector<64x64xf32> -> vector<64x64xf32>
    %cst_42 = arith.constant dense<0xFF800000> : vector<64xf32>
    %105 = vector.multi_reduction <maximumf>, %104, %cst_42 [1] : vector<64x64xf32> to vector<64xf32>
    %106 = vector.shape_cast %105 : vector<64xf32> to vector<64x1xf32>
    %107 = vector.broadcast %106 : vector<64x1xf32> to vector<64x64xf32>
    %108 = arith.subf %104, %107 : vector<64x64xf32>
    %109 = math.exp %108 : vector<64x64xf32>
    %cst_43 = arith.constant dense<0.000000e+00> : vector<64xf32>
    %110 = vector.multi_reduction <add>, %109, %cst_43 [1] : vector<64x64xf32> to vector<64xf32>
    %111 = vector.shape_cast %110 : vector<64xf32> to vector<64x1xf32>
    %112 = tpu.reciprocal %111 {approx = true} : vector<64x1xf32> -> vector<64x1xf32>
    %113 = vector.broadcast %112 : vector<64x1xf32> to vector<64x64xf32>
    %114 = arith.mulf %109, %113 : vector<64x64xf32>
    %115 = vector.extract_strided_slice %56 {offsets = [0, 24], sizes = [64, 8], strides = [1, 1]} : vector<64x32xf32> to vector<64x8xf32>
    %cst_44 = arith.constant dense<0.000000e+00> : vector<64x8xf32>
    %116 = tpu.matmul %114, %115, %cst_44 {dimension_numbers = #tpu.dot_dimension_numbers<[1], [0], [0], [1], [0, 0, 1, 1], [], []>} : vector<64x64xf32>, vector<64x8xf32>, vector<64x8xf32> -> vector<64x8xf32>
    %117 = tpu.concatenate %71, %86, %101, %116 in 1 : vector<64x8xf32>, vector<64x8xf32>, vector<64x8xf32>, vector<64x8xf32> -> vector<64x32xf32>
    %118 = vector.extract_strided_slice %50 {offsets = [64, 0], sizes = [64, 32], strides = [1, 1]} : vector<128x32xf32> to vector<64x32xf32>
    %119 = vector.extract_strided_slice %51 {offsets = [64, 0], sizes = [64, 32], strides = [1, 1]} : vector<128x32xf32> to vector<64x32xf32>
    %120 = tpu.transpose %119, [1, 0] : vector<64x32xf32> -> vector<32x64xf32>
    %121 = vector.extract_strided_slice %52 {offsets = [64, 0], sizes = [64, 32], strides = [1, 1]} : vector<128x32xf32> to vector<64x32xf32>
    %122 = vector.extract_strided_slice %118 {offsets = [0, 0], sizes = [64, 8], strides = [1, 1]} : vector<64x32xf32> to vector<64x8xf32>
    %123 = vector.extract_strided_slice %120 {offsets = [0, 0], sizes = [8, 64], strides = [1, 1]} : vector<32x64xf32> to vector<8x64xf32>
    %cst_45 = arith.constant dense<0.000000e+00> : vector<64x64xf32>
    %124 = tpu.matmul %122, %123, %cst_45 {dimension_numbers = #tpu.dot_dimension_numbers<[1], [0], [0], [1], [0, 0, 1, 1], [], []>} : vector<64x8xf32>, vector<8x64xf32>, vector<64x64xf32> -> vector<64x64xf32>
    %cst_46 = arith.constant dense<0xFF800000> : vector<64xf32>
    %125 = vector.multi_reduction <maximumf>, %124, %cst_46 [1] : vector<64x64xf32> to vector<64xf32>
    %126 = vector.shape_cast %125 : vector<64xf32> to vector<64x1xf32>
    %127 = vector.broadcast %126 : vector<64x1xf32> to vector<64x64xf32>
    %128 = arith.subf %124, %127 : vector<64x64xf32>
    %129 = math.exp %128 : vector<64x64xf32>
    %cst_47 = arith.constant dense<0.000000e+00> : vector<64xf32>
    %130 = vector.multi_reduction <add>, %129, %cst_47 [1] : vector<64x64xf32> to vector<64xf32>
    %131 = vector.shape_cast %130 : vector<64xf32> to vector<64x1xf32>
    %132 = tpu.reciprocal %131 {approx = true} : vector<64x1xf32> -> vector<64x1xf32>
    %133 = vector.broadcast %132 : vector<64x1xf32> to vector<64x64xf32>
    %134 = arith.mulf %129, %133 : vector<64x64xf32>
    %135 = vector.extract_strided_slice %121 {offsets = [0, 0], sizes = [64, 8], strides = [1, 1]} : vector<64x32xf32> to vector<64x8xf32>
    %cst_48 = arith.constant dense<0.000000e+00> : vector<64x8xf32>
    %136 = tpu.matmul %134, %135, %cst_48 {dimension_numbers = #tpu.dot_dimension_numbers<[1], [0], [0], [1], [0, 0, 1, 1], [], []>} : vector<64x64xf32>, vector<64x8xf32>, vector<64x8xf32> -> vector<64x8xf32>
    %137 = vector.extract_strided_slice %118 {offsets = [0, 8], sizes = [64, 8], strides = [1, 1]} : vector<64x32xf32> to vector<64x8xf32>
    %138 = vector.extract_strided_slice %120 {offsets = [8, 0], sizes = [8, 64], strides = [1, 1]} : vector<32x64xf32> to vector<8x64xf32>
    %cst_49 = arith.constant dense<0.000000e+00> : vector<64x64xf32>
    %139 = tpu.matmul %137, %138, %cst_49 {dimension_numbers = #tpu.dot_dimension_numbers<[1], [0], [0], [1], [0, 0, 1, 1], [], []>} : vector<64x8xf32>, vector<8x64xf32>, vector<64x64xf32> -> vector<64x64xf32>
    %cst_50 = arith.constant dense<0xFF800000> : vector<64xf32>
    %140 = vector.multi_reduction <maximumf>, %139, %cst_50 [1] : vector<64x64xf32> to vector<64xf32>
    %141 = vector.shape_cast %140 : vector<64xf32> to vector<64x1xf32>
    %142 = vector.broadcast %141 : vector<64x1xf32> to vector<64x64xf32>
    %143 = arith.subf %139, %142 : vector<64x64xf32>
    %144 = math.exp %143 : vector<64x64xf32>
    %cst_51 = arith.constant dense<0.000000e+00> : vector<64xf32>
    %145 = vector.multi_reduction <add>, %144, %cst_51 [1] : vector<64x64xf32> to vector<64xf32>
    %146 = vector.shape_cast %145 : vector<64xf32> to vector<64x1xf32>
    %147 = tpu.reciprocal %146 {approx = true} : vector<64x1xf32> -> vector<64x1xf32>
    %148 = vector.broadcast %147 : vector<64x1xf32> to vector<64x64xf32>
    %149 = arith.mulf %144, %148 : vector<64x64xf32>
    %150 = vector.extract_strided_slice %121 {offsets = [0, 8], sizes = [64, 8], strides = [1, 1]} : vector<64x32xf32> to vector<64x8xf32>
    %cst_52 = arith.constant dense<0.000000e+00> : vector<64x8xf32>
    %151 = tpu.matmul %149, %150, %cst_52 {dimension_numbers = #tpu.dot_dimension_numbers<[1], [0], [0], [1], [0, 0, 1, 1], [], []>} : vector<64x64xf32>, vector<64x8xf32>, vector<64x8xf32> -> vector<64x8xf32>
    %152 = vector.extract_strided_slice %118 {offsets = [0, 16], sizes = [64, 8], strides = [1, 1]} : vector<64x32xf32> to vector<64x8xf32>
    %153 = vector.extract_strided_slice %120 {offsets = [16, 0], sizes = [8, 64], strides = [1, 1]} : vector<32x64xf32> to vector<8x64xf32>
    %cst_53 = arith.constant dense<0.000000e+00> : vector<64x64xf32>
    %154 = tpu.matmul %152, %153, %cst_53 {dimension_numbers = #tpu.dot_dimension_numbers<[1], [0], [0], [1], [0, 0, 1, 1], [], []>} : vector<64x8xf32>, vector<8x64xf32>, vector<64x64xf32> -> vector<64x64xf32>
    %cst_54 = arith.constant dense<0xFF800000> : vector<64xf32>
    %155 = vector.multi_reduction <maximumf>, %154, %cst_54 [1] : vector<64x64xf32> to vector<64xf32>
    %156 = vector.shape_cast %155 : vector<64xf32> to vector<64x1xf32>
    %157 = vector.broadcast %156 : vector<64x1xf32> to vector<64x64xf32>
    %158 = arith.subf %154, %157 : vector<64x64xf32>
    %159 = math.exp %158 : vector<64x64xf32>
    %cst_55 = arith.constant dense<0.000000e+00> : vector<64xf32>
    %160 = vector.multi_reduction <add>, %159, %cst_55 [1] : vector<64x64xf32> to vector<64xf32>
    %161 = vector.shape_cast %160 : vector<64xf32> to vector<64x1xf32>
    %162 = tpu.reciprocal %161 {approx = true} : vector<64x1xf32> -> vector<64x1xf32>
    %163 = vector.broadcast %162 : vector<64x1xf32> to vector<64x64xf32>
    %164 = arith.mulf %159, %163 : vector<64x64xf32>
    %165 = vector.extract_strided_slice %121 {offsets = [0, 16], sizes = [64, 8], strides = [1, 1]} : vector<64x32xf32> to vector<64x8xf32>
    %cst_56 = arith.constant dense<0.000000e+00> : vector<64x8xf32>
    %166 = tpu.matmul %164, %165, %cst_56 {dimension_numbers = #tpu.dot_dimension_numbers<[1], [0], [0], [1], [0, 0, 1, 1], [], []>} : vector<64x64xf32>, vector<64x8xf32>, vector<64x8xf32> -> vector<64x8xf32>
    %167 = vector.extract_strided_slice %118 {offsets = [0, 24], sizes = [64, 8], strides = [1, 1]} : vector<64x32xf32> to vector<64x8xf32>
    %168 = vector.extract_strided_slice %120 {offsets = [24, 0], sizes = [8, 64], strides = [1, 1]} : vector<32x64xf32> to vector<8x64xf32>
    %cst_57 = arith.constant dense<0.000000e+00> : vector<64x64xf32>
    %169 = tpu.matmul %167, %168, %cst_57 {dimension_numbers = #tpu.dot_dimension_numbers<[1], [0], [0], [1], [0, 0, 1, 1], [], []>} : vector<64x8xf32>, vector<8x64xf32>, vector<64x64xf32> -> vector<64x64xf32>
    %cst_58 = arith.constant dense<0xFF800000> : vector<64xf32>
    %170 = vector.multi_reduction <maximumf>, %169, %cst_58 [1] : vector<64x64xf32> to vector<64xf32>
    %171 = vector.shape_cast %170 : vector<64xf32> to vector<64x1xf32>
    %172 = vector.broadcast %171 : vector<64x1xf32> to vector<64x64xf32>
    %173 = arith.subf %169, %172 : vector<64x64xf32>
    %174 = math.exp %173 : vector<64x64xf32>
    %cst_59 = arith.constant dense<0.000000e+00> : vector<64xf32>
    %175 = vector.multi_reduction <add>, %174, %cst_59 [1] : vector<64x64xf32> to vector<64xf32>
    %176 = vector.shape_cast %175 : vector<64xf32> to vector<64x1xf32>
    %177 = tpu.reciprocal %176 {approx = true} : vector<64x1xf32> -> vector<64x1xf32>
    %178 = vector.broadcast %177 : vector<64x1xf32> to vector<64x64xf32>
    %179 = arith.mulf %174, %178 : vector<64x64xf32>
    %180 = vector.extract_strided_slice %121 {offsets = [0, 24], sizes = [64, 8], strides = [1, 1]} : vector<64x32xf32> to vector<64x8xf32>
    %cst_60 = arith.constant dense<0.000000e+00> : vector<64x8xf32>
    %181 = tpu.matmul %179, %180, %cst_60 {dimension_numbers = #tpu.dot_dimension_numbers<[1], [0], [0], [1], [0, 0, 1, 1], [], []>} : vector<64x64xf32>, vector<64x8xf32>, vector<64x8xf32> -> vector<64x8xf32>
    %182 = tpu.concatenate %136, %151, %166, %181 in 1 : vector<64x8xf32>, vector<64x8xf32>, vector<64x8xf32>, vector<64x8xf32> -> vector<64x32xf32>
    %183 = tpu.concatenate %117, %182 in 0 : vector<64x32xf32>, vector<64x32xf32> -> vector<128x32xf32>
    %cst_61 = arith.constant dense<0.000000e+00> : vector<128x32xf32>
    %184 = tpu.matmul %183, %34, %cst_61 {dimension_numbers = #tpu.dot_dimension_numbers<[1], [0], [0], [1], [0, 0, 1, 1], [], []>} : vector<128x32xf32>, vector<32x32xf32>, vector<128x32xf32> -> vector<128x32xf32>
    %185 = vector.broadcast %38 : vector<1x32xf32> to vector<128x32xf32>
    %186 = arith.addf %184, %185 : vector<128x32xf32>
    %187 = arith.addf %32, %186 : vector<128x32xf32>
    %cst_62 = arith.constant dense<0.000000e+00> : vector<128xf32>
    %188 = vector.multi_reduction <add>, %187, %cst_62 [1] : vector<128x32xf32> to vector<128xf32>
    %189 = vector.shape_cast %188 : vector<128xf32> to vector<128x1xf32>
    %cst_63 = arith.constant 3.200000e+01 : f32
    %190 = vector.broadcast %cst_63 : f32 to vector<128x1xf32>
    %191 = arith.divf %189, %190 : vector<128x1xf32>
    %192 = vector.broadcast %191 : vector<128x1xf32> to vector<128x32xf32>
    %193 = arith.subf %187, %192 : vector<128x32xf32>
    %194 = arith.mulf %193, %193 : vector<128x32xf32>
    %cst_64 = arith.constant dense<0.000000e+00> : vector<128xf32>
    %195 = vector.multi_reduction <add>, %194, %cst_64 [1] : vector<128x32xf32> to vector<128xf32>
    %196 = vector.shape_cast %195 : vector<128xf32> to vector<128x1xf32>
    %cst_65 = arith.constant 3.200000e+01 : f32
    %197 = vector.broadcast %cst_65 : f32 to vector<128x1xf32>
    %198 = arith.divf %196, %197 : vector<128x1xf32>
    %199 = vector.broadcast %191 : vector<128x1xf32> to vector<128x32xf32>
    %200 = arith.subf %187, %199 : vector<128x32xf32>
    %cst_66 = arith.constant 9.99999996E-13 : f32
    %201 = vector.broadcast %cst_66 : f32 to vector<128x1xf32>
    %202 = arith.addf %198, %201 : vector<128x1xf32>
    %203 = math.rsqrt %202 : vector<128x1xf32>
    %204 = vector.broadcast %203 : vector<128x1xf32> to vector<128x32xf32>
    %205 = arith.mulf %200, %204 : vector<128x32xf32>
    %206 = vector.broadcast %39 : vector<1x32xf32> to vector<128x32xf32>
    %207 = arith.mulf %205, %206 : vector<128x32xf32>
    %208 = vector.broadcast %40 : vector<1x32xf32> to vector<128x32xf32>
    %209 = arith.addf %207, %208 : vector<128x32xf32>
    %cst_67 = arith.constant dense<0.000000e+00> : vector<128x128xf32>
    %210 = tpu.matmul %209, %35, %cst_67 {dimension_numbers = #tpu.dot_dimension_numbers<[1], [0], [0], [1], [0, 0, 1, 1], [], []>} : vector<128x32xf32>, vector<32x128xf32>, vector<128x128xf32> -> vector<128x128xf32>
    %211 = vector.broadcast %41 : vector<1x128xf32> to vector<128x128xf32>
    %212 = arith.addf %210, %211 : vector<128x128xf32>
    %213 = arith.mulf %212, %212 : vector<128x128xf32>
    %214 = arith.mulf %212, %213 : vector<128x128xf32>
    %cst_68 = arith.constant 4.471500e-02 : f32
    %215 = vector.broadcast %cst_68 : f32 to vector<128x128xf32>
    %216 = arith.mulf %215, %214 : vector<128x128xf32>
    %217 = arith.addf %212, %216 : vector<128x128xf32>
    %cst_69 = arith.constant 0.797884583 : f32
    %218 = vector.broadcast %cst_69 : f32 to vector<128x128xf32>
    %219 = arith.mulf %218, %217 : vector<128x128xf32>
    %220 = math.tanh %219 : vector<128x128xf32>
    %cst_70 = arith.constant 1.000000e+00 : f32
    %221 = vector.broadcast %cst_70 : f32 to vector<128x128xf32>
    %222 = arith.addf %221, %220 : vector<128x128xf32>
    %cst_71 = arith.constant 5.000000e-01 : f32
    %223 = vector.broadcast %cst_71 : f32 to vector<128x128xf32>
    %224 = arith.mulf %223, %222 : vector<128x128xf32>
    %225 = arith.mulf %212, %224 : vector<128x128xf32>
    %cst_72 = arith.constant dense<0.000000e+00> : vector<128x32xf32>
    %226 = tpu.matmul %225, %36, %cst_72 {dimension_numbers = #tpu.dot_dimension_numbers<[1], [0], [0], [1], [0, 0, 1, 1], [], []>} : vector<128x128xf32>, vector<128x32xf32>, vector<128x32xf32> -> vector<128x32xf32>
    %227 = vector.broadcast %42 : vector<1x32xf32> to vector<128x32xf32>
    %228 = arith.addf %226, %227 : vector<128x32xf32>
    %229 = arith.addf %209, %228 : vector<128x32xf32>
    %cst_73 = arith.constant dense<0.000000e+00> : vector<128xf32>
    %230 = vector.multi_reduction <add>, %229, %cst_73 [1] : vector<128x32xf32> to vector<128xf32>
    %231 = vector.shape_cast %230 : vector<128xf32> to vector<128x1xf32>
    %cst_74 = arith.constant 3.200000e+01 : f32
    %232 = vector.broadcast %cst_74 : f32 to vector<128x1xf32>
    %233 = arith.divf %231, %232 : vector<128x1xf32>
    %234 = vector.broadcast %233 : vector<128x1xf32> to vector<128x32xf32>
    %235 = arith.subf %229, %234 : vector<128x32xf32>
    %236 = arith.mulf %235, %235 : vector<128x32xf32>
    %cst_75 = arith.constant dense<0.000000e+00> : vector<128xf32>
    %237 = vector.multi_reduction <add>, %236, %cst_75 [1] : vector<128x32xf32> to vector<128xf32>
    %238 = vector.shape_cast %237 : vector<128xf32> to vector<128x1xf32>
    %cst_76 = arith.constant 3.200000e+01 : f32
    %239 = vector.broadcast %cst_76 : f32 to vector<128x1xf32>
    %240 = arith.divf %238, %239 : vector<128x1xf32>
    %241 = vector.broadcast %233 : vector<128x1xf32> to vector<128x32xf32>
    %242 = arith.subf %229, %241 : vector<128x32xf32>
    %cst_77 = arith.constant 9.99999996E-13 : f32
    %243 = vector.broadcast %cst_77 : f32 to vector<128x1xf32>
    %244 = arith.addf %240, %243 : vector<128x1xf32>
    %245 = math.rsqrt %244 : vector<128x1xf32>
    %246 = vector.broadcast %245 : vector<128x1xf32> to vector<128x32xf32>
    %247 = arith.mulf %242, %246 : vector<128x32xf32>
    %248 = vector.broadcast %43 : vector<1x32xf32> to vector<128x32xf32>
    %249 = arith.mulf %247, %248 : vector<128x32xf32>
    %250 = vector.broadcast %44 : vector<1x32xf32> to vector<128x32xf32>
    %251 = arith.addf %249, %250 : vector<128x32xf32>
    %c232 = arith.constant 232 : index
    %c0_78 = arith.constant 0 : index
    %252 = vector.load %arg2[%c232, %c0_78] : memref<424x128xf32, #tpu.memory_space<vmem>>, vector<32x96xf32>
    %c232_79 = arith.constant 232 : index
    %c96_80 = arith.constant 96 : index
    %253 = vector.load %arg2[%c232_79, %c96_80] : memref<424x128xf32, #tpu.memory_space<vmem>>, vector<32x32xf32>
    %c264 = arith.constant 264 : index
    %c0_81 = arith.constant 0 : index
    %254 = vector.load %arg2[%c264, %c0_81] : memref<424x128xf32, #tpu.memory_space<vmem>>, vector<32x128xf32>
    %c296 = arith.constant 296 : index
    %c0_82 = arith.constant 0 : index
    %255 = vector.load %arg2[%c296, %c0_82] : memref<424x128xf32, #tpu.memory_space<vmem>>, vector<128x32xf32>
    %c75 = arith.constant 75 : index
    %c0_83 = arith.constant 0 : index
    %256 = vector.load %arg3[%c75, %c0_83] : memref<88x128xf32, #tpu.memory_space<vmem>>, vector<1x96xf32>
    %c75_84 = arith.constant 75 : index
    %c96_85 = arith.constant 96 : index
    %257 = vector.load %arg3[%c75_84, %c96_85] : memref<88x128xf32, #tpu.memory_space<vmem>>, vector<1x32xf32>
    %c76 = arith.constant 76 : index
    %c0_86 = arith.constant 0 : index
    %258 = vector.load %arg3[%c76, %c0_86] : memref<88x128xf32, #tpu.memory_space<vmem>>, vector<1x32xf32>
    %c77 = arith.constant 77 : index
    %c0_87 = arith.constant 0 : index
    %259 = vector.load %arg3[%c77, %c0_87] : memref<88x128xf32, #tpu.memory_space<vmem>>, vector<1x32xf32>
    %c78 = arith.constant 78 : index
    %c0_88 = arith.constant 0 : index
    %260 = vector.load %arg3[%c78, %c0_88] : memref<88x128xf32, #tpu.memory_space<vmem>>, vector<1x128xf32>
    %c79 = arith.constant 79 : index
    %c0_89 = arith.constant 0 : index
    %261 = vector.load %arg3[%c79, %c0_89] : memref<88x128xf32, #tpu.memory_space<vmem>>, vector<1x32xf32>
    %c80 = arith.constant 80 : index
    %c0_90 = arith.constant 0 : index
    %262 = vector.load %arg3[%c80, %c0_90] : memref<88x128xf32, #tpu.memory_space<vmem>>, vector<1x32xf32>
    %c81 = arith.constant 81 : index
    %c0_91 = arith.constant 0 : index
    %263 = vector.load %arg3[%c81, %c0_91] : memref<88x128xf32, #tpu.memory_space<vmem>>, vector<1x32xf32>
    %cst_92 = arith.constant dense<0.000000e+00> : vector<128x96xf32>
    %264 = tpu.matmul %251, %252, %cst_92 {dimension_numbers = #tpu.dot_dimension_numbers<[1], [0], [0], [1], [0, 0, 1, 1], [], []>} : vector<128x32xf32>, vector<32x96xf32>, vector<128x96xf32> -> vector<128x96xf32>
    %265 = vector.broadcast %256 : vector<1x96xf32> to vector<128x96xf32>
    %266 = arith.addf %264, %265 : vector<128x96xf32>
    %267 = vector.extract_strided_slice %266 {offsets = [0, 0], sizes = [128, 32], strides = [1, 1]} : vector<128x96xf32> to vector<128x32xf32>
    %cst_93 = arith.constant 0.353553385 : f32
    %268 = vector.broadcast %cst_93 : f32 to vector<128x32xf32>
    %269 = arith.mulf %267, %268 : vector<128x32xf32>
    %270 = vector.extract_strided_slice %266 {offsets = [0, 32], sizes = [128, 32], strides = [1, 1]} : vector<128x96xf32> to vector<128x32xf32>
    %271 = vector.extract_strided_slice %266 {offsets = [0, 64], sizes = [128, 32], strides = [1, 1]} : vector<128x96xf32> to vector<128x32xf32>
    %272 = vector.extract_strided_slice %269 {offsets = [0, 0], sizes = [64, 32], strides = [1, 1]} : vector<128x32xf32> to vector<64x32xf32>
    %273 = vector.extract_strided_slice %270 {offsets = [0, 0], sizes = [64, 32], strides = [1, 1]} : vector<128x32xf32> to vector<64x32xf32>
    %274 = tpu.transpose %273, [1, 0] : vector<64x32xf32> -> vector<32x64xf32>
    %275 = vector.extract_strided_slice %271 {offsets = [0, 0], sizes = [64, 32], strides = [1, 1]} : vector<128x32xf32> to vector<64x32xf32>
    %276 = vector.extract_strided_slice %272 {offsets = [0, 0], sizes = [64, 8], strides = [1, 1]} : vector<64x32xf32> to vector<64x8xf32>
    %277 = vector.extract_strided_slice %274 {offsets = [0, 0], sizes = [8, 64], strides = [1, 1]} : vector<32x64xf32> to vector<8x64xf32>
    %cst_94 = arith.constant dense<0.000000e+00> : vector<64x64xf32>
    %278 = tpu.matmul %276, %277, %cst_94 {dimension_numbers = #tpu.dot_dimension_numbers<[1], [0], [0], [1], [0, 0, 1, 1], [], []>} : vector<64x8xf32>, vector<8x64xf32>, vector<64x64xf32> -> vector<64x64xf32>
    %cst_95 = arith.constant dense<0xFF800000> : vector<64xf32>
    %279 = vector.multi_reduction <maximumf>, %278, %cst_95 [1] : vector<64x64xf32> to vector<64xf32>
    %280 = vector.shape_cast %279 : vector<64xf32> to vector<64x1xf32>
    %281 = vector.broadcast %280 : vector<64x1xf32> to vector<64x64xf32>
    %282 = arith.subf %278, %281 : vector<64x64xf32>
    %283 = math.exp %282 : vector<64x64xf32>
    %cst_96 = arith.constant dense<0.000000e+00> : vector<64xf32>
    %284 = vector.multi_reduction <add>, %283, %cst_96 [1] : vector<64x64xf32> to vector<64xf32>
    %285 = vector.shape_cast %284 : vector<64xf32> to vector<64x1xf32>
    %286 = tpu.reciprocal %285 {approx = true} : vector<64x1xf32> -> vector<64x1xf32>
    %287 = vector.broadcast %286 : vector<64x1xf32> to vector<64x64xf32>
    %288 = arith.mulf %283, %287 : vector<64x64xf32>
    %289 = vector.extract_strided_slice %275 {offsets = [0, 0], sizes = [64, 8], strides = [1, 1]} : vector<64x32xf32> to vector<64x8xf32>
    %cst_97 = arith.constant dense<0.000000e+00> : vector<64x8xf32>
    %290 = tpu.matmul %288, %289, %cst_97 {dimension_numbers = #tpu.dot_dimension_numbers<[1], [0], [0], [1], [0, 0, 1, 1], [], []>} : vector<64x64xf32>, vector<64x8xf32>, vector<64x8xf32> -> vector<64x8xf32>
    %291 = vector.extract_strided_slice %272 {offsets = [0, 8], sizes = [64, 8], strides = [1, 1]} : vector<64x32xf32> to vector<64x8xf32>
    %292 = vector.extract_strided_slice %274 {offsets = [8, 0], sizes = [8, 64], strides = [1, 1]} : vector<32x64xf32> to vector<8x64xf32>
    %cst_98 = arith.constant dense<0.000000e+00> : vector<64x64xf32>
    %293 = tpu.matmul %291, %292, %cst_98 {dimension_numbers = #tpu.dot_dimension_numbers<[1], [0], [0], [1], [0, 0, 1, 1], [], []>} : vector<64x8xf32>, vector<8x64xf32>, vector<64x64xf32> -> vector<64x64xf32>
    %cst_99 = arith.constant dense<0xFF800000> : vector<64xf32>
    %294 = vector.multi_reduction <maximumf>, %293, %cst_99 [1] : vector<64x64xf32> to vector<64xf32>
    %295 = vector.shape_cast %294 : vector<64xf32> to vector<64x1xf32>
    %296 = vector.broadcast %295 : vector<64x1xf32> to vector<64x64xf32>
    %297 = arith.subf %293, %296 : vector<64x64xf32>
    %298 = math.exp %297 : vector<64x64xf32>
    %cst_100 = arith.constant dense<0.000000e+00> : vector<64xf32>
    %299 = vector.multi_reduction <add>, %298, %cst_100 [1] : vector<64x64xf32> to vector<64xf32>
    %300 = vector.shape_cast %299 : vector<64xf32> to vector<64x1xf32>
    %301 = tpu.reciprocal %300 {approx = true} : vector<64x1xf32> -> vector<64x1xf32>
    %302 = vector.broadcast %301 : vector<64x1xf32> to vector<64x64xf32>
    %303 = arith.mulf %298, %302 : vector<64x64xf32>
    %304 = vector.extract_strided_slice %275 {offsets = [0, 8], sizes = [64, 8], strides = [1, 1]} : vector<64x32xf32> to vector<64x8xf32>
    %cst_101 = arith.constant dense<0.000000e+00> : vector<64x8xf32>
    %305 = tpu.matmul %303, %304, %cst_101 {dimension_numbers = #tpu.dot_dimension_numbers<[1], [0], [0], [1], [0, 0, 1, 1], [], []>} : vector<64x64xf32>, vector<64x8xf32>, vector<64x8xf32> -> vector<64x8xf32>
    %306 = vector.extract_strided_slice %272 {offsets = [0, 16], sizes = [64, 8], strides = [1, 1]} : vector<64x32xf32> to vector<64x8xf32>
    %307 = vector.extract_strided_slice %274 {offsets = [16, 0], sizes = [8, 64], strides = [1, 1]} : vector<32x64xf32> to vector<8x64xf32>
    %cst_102 = arith.constant dense<0.000000e+00> : vector<64x64xf32>
    %308 = tpu.matmul %306, %307, %cst_102 {dimension_numbers = #tpu.dot_dimension_numbers<[1], [0], [0], [1], [0, 0, 1, 1], [], []>} : vector<64x8xf32>, vector<8x64xf32>, vector<64x64xf32> -> vector<64x64xf32>
    %cst_103 = arith.constant dense<0xFF800000> : vector<64xf32>
    %309 = vector.multi_reduction <maximumf>, %308, %cst_103 [1] : vector<64x64xf32> to vector<64xf32>
    %310 = vector.shape_cast %309 : vector<64xf32> to vector<64x1xf32>
    %311 = vector.broadcast %310 : vector<64x1xf32> to vector<64x64xf32>
    %312 = arith.subf %308, %311 : vector<64x64xf32>
    %313 = math.exp %312 : vector<64x64xf32>
    %cst_104 = arith.constant dense<0.000000e+00> : vector<64xf32>
    %314 = vector.multi_reduction <add>, %313, %cst_104 [1] : vector<64x64xf32> to vector<64xf32>
    %315 = vector.shape_cast %314 : vector<64xf32> to vector<64x1xf32>
    %316 = tpu.reciprocal %315 {approx = true} : vector<64x1xf32> -> vector<64x1xf32>
    %317 = vector.broadcast %316 : vector<64x1xf32> to vector<64x64xf32>
    %318 = arith.mulf %313, %317 : vector<64x64xf32>
    %319 = vector.extract_strided_slice %275 {offsets = [0, 16], sizes = [64, 8], strides = [1, 1]} : vector<64x32xf32> to vector<64x8xf32>
    %cst_105 = arith.constant dense<0.000000e+00> : vector<64x8xf32>
    %320 = tpu.matmul %318, %319, %cst_105 {dimension_numbers = #tpu.dot_dimension_numbers<[1], [0], [0], [1], [0, 0, 1, 1], [], []>} : vector<64x64xf32>, vector<64x8xf32>, vector<64x8xf32> -> vector<64x8xf32>
    %321 = vector.extract_strided_slice %272 {offsets = [0, 24], sizes = [64, 8], strides = [1, 1]} : vector<64x32xf32> to vector<64x8xf32>
    %322 = vector.extract_strided_slice %274 {offsets = [24, 0], sizes = [8, 64], strides = [1, 1]} : vector<32x64xf32> to vector<8x64xf32>
    %cst_106 = arith.constant dense<0.000000e+00> : vector<64x64xf32>
    %323 = tpu.matmul %321, %322, %cst_106 {dimension_numbers = #tpu.dot_dimension_numbers<[1], [0], [0], [1], [0, 0, 1, 1], [], []>} : vector<64x8xf32>, vector<8x64xf32>, vector<64x64xf32> -> vector<64x64xf32>
    %cst_107 = arith.constant dense<0xFF800000> : vector<64xf32>
    %324 = vector.multi_reduction <maximumf>, %323, %cst_107 [1] : vector<64x64xf32> to vector<64xf32>
    %325 = vector.shape_cast %324 : vector<64xf32> to vector<64x1xf32>
    %326 = vector.broadcast %325 : vector<64x1xf32> to vector<64x64xf32>
    %327 = arith.subf %323, %326 : vector<64x64xf32>
    %328 = math.exp %327 : vector<64x64xf32>
    %cst_108 = arith.constant dense<0.000000e+00> : vector<64xf32>
    %329 = vector.multi_reduction <add>, %328, %cst_108 [1] : vector<64x64xf32> to vector<64xf32>
    %330 = vector.shape_cast %329 : vector<64xf32> to vector<64x1xf32>
    %331 = tpu.reciprocal %330 {approx = true} : vector<64x1xf32> -> vector<64x1xf32>
    %332 = vector.broadcast %331 : vector<64x1xf32> to vector<64x64xf32>
    %333 = arith.mulf %328, %332 : vector<64x64xf32>
    %334 = vector.extract_strided_slice %275 {offsets = [0, 24], sizes = [64, 8], strides = [1, 1]} : vector<64x32xf32> to vector<64x8xf32>
    %cst_109 = arith.constant dense<0.000000e+00> : vector<64x8xf32>
    %335 = tpu.matmul %333, %334, %cst_109 {dimension_numbers = #tpu.dot_dimension_numbers<[1], [0], [0], [1], [0, 0, 1, 1], [], []>} : vector<64x64xf32>, vector<64x8xf32>, vector<64x8xf32> -> vector<64x8xf32>
    %336 = tpu.concatenate %290, %305, %320, %335 in 1 : vector<64x8xf32>, vector<64x8xf32>, vector<64x8xf32>, vector<64x8xf32> -> vector<64x32xf32>
    %337 = vector.extract_strided_slice %269 {offsets = [64, 0], sizes = [64, 32], strides = [1, 1]} : vector<128x32xf32> to vector<64x32xf32>
    %338 = vector.extract_strided_slice %270 {offsets = [64, 0], sizes = [64, 32], strides = [1, 1]} : vector<128x32xf32> to vector<64x32xf32>
    %339 = tpu.transpose %338, [1, 0] : vector<64x32xf32> -> vector<32x64xf32>
    %340 = vector.extract_strided_slice %271 {offsets = [64, 0], sizes = [64, 32], strides = [1, 1]} : vector<128x32xf32> to vector<64x32xf32>
    %341 = vector.extract_strided_slice %337 {offsets = [0, 0], sizes = [64, 8], strides = [1, 1]} : vector<64x32xf32> to vector<64x8xf32>
    %342 = vector.extract_strided_slice %339 {offsets = [0, 0], sizes = [8, 64], strides = [1, 1]} : vector<32x64xf32> to vector<8x64xf32>
    %cst_110 = arith.constant dense<0.000000e+00> : vector<64x64xf32>
    %343 = tpu.matmul %341, %342, %cst_110 {dimension_numbers = #tpu.dot_dimension_numbers<[1], [0], [0], [1], [0, 0, 1, 1], [], []>} : vector<64x8xf32>, vector<8x64xf32>, vector<64x64xf32> -> vector<64x64xf32>
    %cst_111 = arith.constant dense<0xFF800000> : vector<64xf32>
    %344 = vector.multi_reduction <maximumf>, %343, %cst_111 [1] : vector<64x64xf32> to vector<64xf32>
    %345 = vector.shape_cast %344 : vector<64xf32> to vector<64x1xf32>
    %346 = vector.broadcast %345 : vector<64x1xf32> to vector<64x64xf32>
    %347 = arith.subf %343, %346 : vector<64x64xf32>
    %348 = math.exp %347 : vector<64x64xf32>
    %cst_112 = arith.constant dense<0.000000e+00> : vector<64xf32>
    %349 = vector.multi_reduction <add>, %348, %cst_112 [1] : vector<64x64xf32> to vector<64xf32>
    %350 = vector.shape_cast %349 : vector<64xf32> to vector<64x1xf32>
    %351 = tpu.reciprocal %350 {approx = true} : vector<64x1xf32> -> vector<64x1xf32>
    %352 = vector.broadcast %351 : vector<64x1xf32> to vector<64x64xf32>
    %353 = arith.mulf %348, %352 : vector<64x64xf32>
    %354 = vector.extract_strided_slice %340 {offsets = [0, 0], sizes = [64, 8], strides = [1, 1]} : vector<64x32xf32> to vector<64x8xf32>
    %cst_113 = arith.constant dense<0.000000e+00> : vector<64x8xf32>
    %355 = tpu.matmul %353, %354, %cst_113 {dimension_numbers = #tpu.dot_dimension_numbers<[1], [0], [0], [1], [0, 0, 1, 1], [], []>} : vector<64x64xf32>, vector<64x8xf32>, vector<64x8xf32> -> vector<64x8xf32>
    %356 = vector.extract_strided_slice %337 {offsets = [0, 8], sizes = [64, 8], strides = [1, 1]} : vector<64x32xf32> to vector<64x8xf32>
    %357 = vector.extract_strided_slice %339 {offsets = [8, 0], sizes = [8, 64], strides = [1, 1]} : vector<32x64xf32> to vector<8x64xf32>
    %cst_114 = arith.constant dense<0.000000e+00> : vector<64x64xf32>
    %358 = tpu.matmul %356, %357, %cst_114 {dimension_numbers = #tpu.dot_dimension_numbers<[1], [0], [0], [1], [0, 0, 1, 1], [], []>} : vector<64x8xf32>, vector<8x64xf32>, vector<64x64xf32> -> vector<64x64xf32>
    %cst_115 = arith.constant dense<0xFF800000> : vector<64xf32>
    %359 = vector.multi_reduction <maximumf>, %358, %cst_115 [1] : vector<64x64xf32> to vector<64xf32>
    %360 = vector.shape_cast %359 : vector<64xf32> to vector<64x1xf32>
    %361 = vector.broadcast %360 : vector<64x1xf32> to vector<64x64xf32>
    %362 = arith.subf %358, %361 : vector<64x64xf32>
    %363 = math.exp %362 : vector<64x64xf32>
    %cst_116 = arith.constant dense<0.000000e+00> : vector<64xf32>
    %364 = vector.multi_reduction <add>, %363, %cst_116 [1] : vector<64x64xf32> to vector<64xf32>
    %365 = vector.shape_cast %364 : vector<64xf32> to vector<64x1xf32>
    %366 = tpu.reciprocal %365 {approx = true} : vector<64x1xf32> -> vector<64x1xf32>
    %367 = vector.broadcast %366 : vector<64x1xf32> to vector<64x64xf32>
    %368 = arith.mulf %363, %367 : vector<64x64xf32>
    %369 = vector.extract_strided_slice %340 {offsets = [0, 8], sizes = [64, 8], strides = [1, 1]} : vector<64x32xf32> to vector<64x8xf32>
    %cst_117 = arith.constant dense<0.000000e+00> : vector<64x8xf32>
    %370 = tpu.matmul %368, %369, %cst_117 {dimension_numbers = #tpu.dot_dimension_numbers<[1], [0], [0], [1], [0, 0, 1, 1], [], []>} : vector<64x64xf32>, vector<64x8xf32>, vector<64x8xf32> -> vector<64x8xf32>
    %371 = vector.extract_strided_slice %337 {offsets = [0, 16], sizes = [64, 8], strides = [1, 1]} : vector<64x32xf32> to vector<64x8xf32>
    %372 = vector.extract_strided_slice %339 {offsets = [16, 0], sizes = [8, 64], strides = [1, 1]} : vector<32x64xf32> to vector<8x64xf32>
    %cst_118 = arith.constant dense<0.000000e+00> : vector<64x64xf32>
    %373 = tpu.matmul %371, %372, %cst_118 {dimension_numbers = #tpu.dot_dimension_numbers<[1], [0], [0], [1], [0, 0, 1, 1], [], []>} : vector<64x8xf32>, vector<8x64xf32>, vector<64x64xf32> -> vector<64x64xf32>
    %cst_119 = arith.constant dense<0xFF800000> : vector<64xf32>
    %374 = vector.multi_reduction <maximumf>, %373, %cst_119 [1] : vector<64x64xf32> to vector<64xf32>
    %375 = vector.shape_cast %374 : vector<64xf32> to vector<64x1xf32>
    %376 = vector.broadcast %375 : vector<64x1xf32> to vector<64x64xf32>
    %377 = arith.subf %373, %376 : vector<64x64xf32>
    %378 = math.exp %377 : vector<64x64xf32>
    %cst_120 = arith.constant dense<0.000000e+00> : vector<64xf32>
    %379 = vector.multi_reduction <add>, %378, %cst_120 [1] : vector<64x64xf32> to vector<64xf32>
    %380 = vector.shape_cast %379 : vector<64xf32> to vector<64x1xf32>
    %381 = tpu.reciprocal %380 {approx = true} : vector<64x1xf32> -> vector<64x1xf32>
    %382 = vector.broadcast %381 : vector<64x1xf32> to vector<64x64xf32>
    %383 = arith.mulf %378, %382 : vector<64x64xf32>
    %384 = vector.extract_strided_slice %340 {offsets = [0, 16], sizes = [64, 8], strides = [1, 1]} : vector<64x32xf32> to vector<64x8xf32>
    %cst_121 = arith.constant dense<0.000000e+00> : vector<64x8xf32>
    %385 = tpu.matmul %383, %384, %cst_121 {dimension_numbers = #tpu.dot_dimension_numbers<[1], [0], [0], [1], [0, 0, 1, 1], [], []>} : vector<64x64xf32>, vector<64x8xf32>, vector<64x8xf32> -> vector<64x8xf32>
    %386 = vector.extract_strided_slice %337 {offsets = [0, 24], sizes = [64, 8], strides = [1, 1]} : vector<64x32xf32> to vector<64x8xf32>
    %387 = vector.extract_strided_slice %339 {offsets = [24, 0], sizes = [8, 64], strides = [1, 1]} : vector<32x64xf32> to vector<8x64xf32>
    %cst_122 = arith.constant dense<0.000000e+00> : vector<64x64xf32>
    %388 = tpu.matmul %386, %387, %cst_122 {dimension_numbers = #tpu.dot_dimension_numbers<[1], [0], [0], [1], [0, 0, 1, 1], [], []>} : vector<64x8xf32>, vector<8x64xf32>, vector<64x64xf32> -> vector<64x64xf32>
    %cst_123 = arith.constant dense<0xFF800000> : vector<64xf32>
    %389 = vector.multi_reduction <maximumf>, %388, %cst_123 [1] : vector<64x64xf32> to vector<64xf32>
    %390 = vector.shape_cast %389 : vector<64xf32> to vector<64x1xf32>
    %391 = vector.broadcast %390 : vector<64x1xf32> to vector<64x64xf32>
    %392 = arith.subf %388, %391 : vector<64x64xf32>
    %393 = math.exp %392 : vector<64x64xf32>
    %cst_124 = arith.constant dense<0.000000e+00> : vector<64xf32>
    %394 = vector.multi_reduction <add>, %393, %cst_124 [1] : vector<64x64xf32> to vector<64xf32>
    %395 = vector.shape_cast %394 : vector<64xf32> to vector<64x1xf32>
    %396 = tpu.reciprocal %395 {approx = true} : vector<64x1xf32> -> vector<64x1xf32>
    %397 = vector.broadcast %396 : vector<64x1xf32> to vector<64x64xf32>
    %398 = arith.mulf %393, %397 : vector<64x64xf32>
    %399 = vector.extract_strided_slice %340 {offsets = [0, 24], sizes = [64, 8], strides = [1, 1]} : vector<64x32xf32> to vector<64x8xf32>
    %cst_125 = arith.constant dense<0.000000e+00> : vector<64x8xf32>
    %400 = tpu.matmul %398, %399, %cst_125 {dimension_numbers = #tpu.dot_dimension_numbers<[1], [0], [0], [1], [0, 0, 1, 1], [], []>} : vector<64x64xf32>, vector<64x8xf32>, vector<64x8xf32> -> vector<64x8xf32>
    %401 = tpu.concatenate %355, %370, %385, %400 in 1 : vector<64x8xf32>, vector<64x8xf32>, vector<64x8xf32>, vector<64x8xf32> -> vector<64x32xf32>
    %402 = tpu.concatenate %336, %401 in 0 : vector<64x32xf32>, vector<64x32xf32> -> vector<128x32xf32>
    %cst_126 = arith.constant dense<0.000000e+00> : vector<128x32xf32>
    %403 = tpu.matmul %402, %253, %cst_126 {dimension_numbers = #tpu.dot_dimension_numbers<[1], [0], [0], [1], [0, 0, 1, 1], [], []>} : vector<128x32xf32>, vector<32x32xf32>, vector<128x32xf32> -> vector<128x32xf32>
    %404 = vector.broadcast %257 : vector<1x32xf32> to vector<128x32xf32>
    %405 = arith.addf %403, %404 : vector<128x32xf32>
    %406 = arith.addf %251, %405 : vector<128x32xf32>
    %cst_127 = arith.constant dense<0.000000e+00> : vector<128xf32>
    %407 = vector.multi_reduction <add>, %406, %cst_127 [1] : vector<128x32xf32> to vector<128xf32>
    %408 = vector.shape_cast %407 : vector<128xf32> to vector<128x1xf32>
    %cst_128 = arith.constant 3.200000e+01 : f32
    %409 = vector.broadcast %cst_128 : f32 to vector<128x1xf32>
    %410 = arith.divf %408, %409 : vector<128x1xf32>
    %411 = vector.broadcast %410 : vector<128x1xf32> to vector<128x32xf32>
    %412 = arith.subf %406, %411 : vector<128x32xf32>
    %413 = arith.mulf %412, %412 : vector<128x32xf32>
    %cst_129 = arith.constant dense<0.000000e+00> : vector<128xf32>
    %414 = vector.multi_reduction <add>, %413, %cst_129 [1] : vector<128x32xf32> to vector<128xf32>
    %415 = vector.shape_cast %414 : vector<128xf32> to vector<128x1xf32>
    %cst_130 = arith.constant 3.200000e+01 : f32
    %416 = vector.broadcast %cst_130 : f32 to vector<128x1xf32>
    %417 = arith.divf %415, %416 : vector<128x1xf32>
    %418 = vector.broadcast %410 : vector<128x1xf32> to vector<128x32xf32>
    %419 = arith.subf %406, %418 : vector<128x32xf32>
    %cst_131 = arith.constant 9.99999996E-13 : f32
    %420 = vector.broadcast %cst_131 : f32 to vector<128x1xf32>
    %421 = arith.addf %417, %420 : vector<128x1xf32>
    %422 = math.rsqrt %421 : vector<128x1xf32>
    %423 = vector.broadcast %422 : vector<128x1xf32> to vector<128x32xf32>
    %424 = arith.mulf %419, %423 : vector<128x32xf32>
    %425 = vector.broadcast %258 : vector<1x32xf32> to vector<128x32xf32>
    %426 = arith.mulf %424, %425 : vector<128x32xf32>
    %427 = vector.broadcast %259 : vector<1x32xf32> to vector<128x32xf32>
    %428 = arith.addf %426, %427 : vector<128x32xf32>
    %cst_132 = arith.constant dense<0.000000e+00> : vector<128x128xf32>
    %429 = tpu.matmul %428, %254, %cst_132 {dimension_numbers = #tpu.dot_dimension_numbers<[1], [0], [0], [1], [0, 0, 1, 1], [], []>} : vector<128x32xf32>, vector<32x128xf32>, vector<128x128xf32> -> vector<128x128xf32>
    %430 = vector.broadcast %260 : vector<1x128xf32> to vector<128x128xf32>
    %431 = arith.addf %429, %430 : vector<128x128xf32>
    %432 = arith.mulf %431, %431 : vector<128x128xf32>
    %433 = arith.mulf %431, %432 : vector<128x128xf32>
    %cst_133 = arith.constant 4.471500e-02 : f32
    %434 = vector.broadcast %cst_133 : f32 to vector<128x128xf32>
    %435 = arith.mulf %434, %433 : vector<128x128xf32>
    %436 = arith.addf %431, %435 : vector<128x128xf32>
    %cst_134 = arith.constant 0.797884583 : f32
    %437 = vector.broadcast %cst_134 : f32 to vector<128x128xf32>
    %438 = arith.mulf %437, %436 : vector<128x128xf32>
    %439 = math.tanh %438 : vector<128x128xf32>
    %cst_135 = arith.constant 1.000000e+00 : f32
    %440 = vector.broadcast %cst_135 : f32 to vector<128x128xf32>
    %441 = arith.addf %440, %439 : vector<128x128xf32>
    %cst_136 = arith.constant 5.000000e-01 : f32
    %442 = vector.broadcast %cst_136 : f32 to vector<128x128xf32>
    %443 = arith.mulf %442, %441 : vector<128x128xf32>
    %444 = arith.mulf %431, %443 : vector<128x128xf32>
    %cst_137 = arith.constant dense<0.000000e+00> : vector<128x32xf32>
    %445 = tpu.matmul %444, %255, %cst_137 {dimension_numbers = #tpu.dot_dimension_numbers<[1], [0], [0], [1], [0, 0, 1, 1], [], []>} : vector<128x128xf32>, vector<128x32xf32>, vector<128x32xf32> -> vector<128x32xf32>
    %446 = vector.broadcast %261 : vector<1x32xf32> to vector<128x32xf32>
    %447 = arith.addf %445, %446 : vector<128x32xf32>
    %448 = arith.addf %428, %447 : vector<128x32xf32>
    %cst_138 = arith.constant dense<0.000000e+00> : vector<128xf32>
    %449 = vector.multi_reduction <add>, %448, %cst_138 [1] : vector<128x32xf32> to vector<128xf32>
    %450 = vector.shape_cast %449 : vector<128xf32> to vector<128x1xf32>
    %cst_139 = arith.constant 3.200000e+01 : f32
    %451 = vector.broadcast %cst_139 : f32 to vector<128x1xf32>
    %452 = arith.divf %450, %451 : vector<128x1xf32>
    %453 = vector.broadcast %452 : vector<128x1xf32> to vector<128x32xf32>
    %454 = arith.subf %448, %453 : vector<128x32xf32>
    %455 = arith.mulf %454, %454 : vector<128x32xf32>
    %cst_140 = arith.constant dense<0.000000e+00> : vector<128xf32>
    %456 = vector.multi_reduction <add>, %455, %cst_140 [1] : vector<128x32xf32> to vector<128xf32>
    %457 = vector.shape_cast %456 : vector<128xf32> to vector<128x1xf32>
    %cst_141 = arith.constant 3.200000e+01 : f32
    %458 = vector.broadcast %cst_141 : f32 to vector<128x1xf32>
    %459 = arith.divf %457, %458 : vector<128x1xf32>
    %460 = vector.broadcast %452 : vector<128x1xf32> to vector<128x32xf32>
    %461 = arith.subf %448, %460 : vector<128x32xf32>
    %cst_142 = arith.constant 9.99999996E-13 : f32
    %462 = vector.broadcast %cst_142 : f32 to vector<128x1xf32>
    %463 = arith.addf %459, %462 : vector<128x1xf32>
    %464 = math.rsqrt %463 : vector<128x1xf32>
    %465 = vector.broadcast %464 : vector<128x1xf32> to vector<128x32xf32>
    %466 = arith.mulf %461, %465 : vector<128x32xf32>
    %467 = vector.broadcast %262 : vector<1x32xf32> to vector<128x32xf32>
    %468 = arith.mulf %466, %467 : vector<128x32xf32>
    %469 = vector.broadcast %263 : vector<1x32xf32> to vector<128x32xf32>
    %470 = arith.addf %468, %469 : vector<128x32xf32>
    %c8 = arith.constant 8 : index
    %c0_143 = arith.constant 0 : index
    %471 = vector.load %arg2[%c8, %c0_143] : memref<424x128xf32, #tpu.memory_space<vmem>>, vector<32x128xf32>
    %c67 = arith.constant 67 : index
    %c0_144 = arith.constant 0 : index
    %472 = vector.load %arg3[%c67, %c0_144] : memref<88x128xf32, #tpu.memory_space<vmem>>, vector<1x128xf32>
    %cst_145 = arith.constant dense<0.000000e+00> : vector<128x128xf32>
    %473 = tpu.matmul %470, %471, %cst_145 {dimension_numbers = #tpu.dot_dimension_numbers<[1], [0], [0], [1], [0, 0, 1, 1], [], []>} : vector<128x32xf32>, vector<32x128xf32>, vector<128x128xf32> -> vector<128x128xf32>
    %474 = vector.broadcast %472 : vector<1x128xf32> to vector<128x128xf32>
    %475 = arith.addf %473, %474 : vector<128x128xf32>
    %c0_146 = arith.constant 0 : index
    %c0_147 = arith.constant 0 : index
    %476 = vector.load %arg4[%c0_146, %c0_147] : memref<128x128xf32, #tpu.memory_space<vmem>>, vector<128x128xf32>
    tpu.vector_store %arg4[%c0_146, %c0_147], %475 {strides = array<i32>} : memref<128x128xf32, #tpu.memory_space<vmem>>, vector<128x128xf32>,
    return
  }
  func.func @transform_0(%arg0: i32) -> (i32, i32) {
    %c0_i32 = arith.constant 0 : i32
    %c0_i32_0 = arith.constant 0 : i32
    return %arg0, %c0_i32 : i32, i32
  }
  func.func @transform_1(%arg0: i32) -> (i32, i32) {
    %c0_i32 = arith.constant 0 : i32
    %c0_i32_0 = arith.constant 0 : i32
    %c0_i32_1 = arith.constant 0 : i32
    return %c0_i32, %c0_i32_0 : i32, i32
  }
  func.func @transform_2(%arg0: i32) -> (i32, i32) {
    %c0_i32 = arith.constant 0 : i32
    %c0_i32_0 = arith.constant 0 : i32
    %c0_i32_1 = arith.constant 0 : i32
    return %c0_i32, %c0_i32_0 : i32, i32
  }
  func.func @transform_3(%arg0: i32) -> (i32, i32) {
    %c0_i32 = arith.constant 0 : i32
    %c0_i32_0 = arith.constant 0 : i32
    return %arg0, %c0_i32 : i32, i32
  }
}

</mosaic_0001>

<llo_original>
// kernel: tpu_custom_call.1
$region0: #{tpu_custom_call.1}
  #allocation0 [shape = 'u32[]', space=smem, size = 0x4, offset = 0x4, fixed_abs, tag = 'smem constant byte address 0x4 - core index']
  #allocation1 [shape = 'u32[144,128]{1,0:T(1,128)}', space=vmem, size = 0x12000, scoped, tag = 'internal scratch']
  %s0 = inlined_call_operand.vmem [shape: f32[128,8], index: 0, kind: input, shape index: {}]
  %s1 = inlined_call_operand.hbm [shape: f32[424,128], index: 1, kind: input, shape index: {}]
  %s2 = inlined_call_operand.vmem [shape: f32[88,128], index: 2, kind: input, shape index: {}]
  %s3 = inlined_call_operand.hbm [shape: f32[128,128], index: 3, kind: output, shape index: {}]
  %s4 = sld [smem:[#allocation0]]
  $region26: #{tpu_custom_call.1} parent=0
    _
  %s6 = ssub.s32 1, %s4
  %s7 = scalar_select 0, %s6, %s4
  $region1: #{tpu_custom_call.1} parent=0
    #allocation2 [shape = 'u8[217088]{0}', space=vmem, size = 0x35000, scoped, tag = 'input window, operand 1, single buffered']
    #allocation3 [shape = 's32[1]{0}', space=sflag, size = 0x4, scoped, tag = 'scoped memory for tpu_custom_call.1']
    #allocation4 [shape = 's32[1]{0}', space=sflag, size = 0x4, scoped, tag = 'scoped memory for tpu_custom_call.1']
    #allocation5 [shape = 'u8[65536]{0}', space=vmem, size = 0x10000, scoped, tag = 'output window, operand 0, single buffered']
    %8 = vsyncpa [#allocation3], 0
    %9 = vsyncpa [#allocation4], 0
    // Predicated region
    $region2: #{tpu_custom_call.1} parent=1 // pred_check
      _
    $region3: #{tpu_custom_call.1} parent=1 // pred_check_branch
      %11 = sbr.rel (0) target = $region5
    $region4: #{tpu_custom_call.1} parent=1 // pred_region
      _
    $region5: #{tpu_custom_call.1} parent=1 // pred_fallthru
      _
    // Predicated region
    $region6: #{tpu_custom_call.1} parent=1 // pred_check
      _
    $region7: #{tpu_custom_call.1} parent=1 // pred_check_branch
      %13 = sbr.rel (0) target = $region9
    $region8: #{tpu_custom_call.1} parent=1 // pred_region
      %s15 = ssub.s32 6784, 6784
      %16 = vsyncadd [#allocation3], %s15
      %s17 = sshll.u32 [#allocation2], 4
      %s18 = int_to_ptr.vmem [resolvable:$true] %s17
      %23 = dma.hbm_to_vmem [thread:$0]  %s1, 6784, %s18, [#allocation3], 128, 128, 8
    $region9: #{tpu_custom_call.1} parent=1 // pred_fallthru
      _
    // Predicated region
    $region10: #{tpu_custom_call.1} parent=1 // pred_check
      _
    $region11: #{tpu_custom_call.1} parent=1 // pred_check_branch
      %25 = sbr.rel (0) target = $region13
    $region12: #{tpu_custom_call.1} parent=1 // pred_region
      _
    $region13: #{tpu_custom_call.1} parent=1 // pred_fallthru
      _
    // Predicated region
    $region14: #{tpu_custom_call.1} parent=1 // pred_check
      _
    $region15: #{tpu_custom_call.1} parent=1 // pred_check_branch
      %27 = sbr.rel (0) target = $region17
    $region16: #{tpu_custom_call.1} parent=1 // pred_region
      %28 = dma.done [#allocation3], 6784
    $region17: #{tpu_custom_call.1} parent=1 // pred_fallthru
      _
    %v29 = vld [vmem:[%s0] sm:$0xff]
    %v30 = vld [vmem:[%s0 + $0x8] sm:$0xff]
    %v31 = vld [vmem:[%s0 + $0x10] sm:$0xff]
    %v32 = vld [vmem:[%s0 + $0x18] sm:$0xff]
    %v33 = vld [vmem:[%s0 + $0x20] sm:$0xff]
    %v34 = vld [vmem:[%s0 + $0x28] sm:$0xff]
    %v35 = vld [vmem:[%s0 + $0x30] sm:$0xff]
    %v36 = vld [vmem:[%s0 + $0x38] sm:$0xff]
    %v37 = vld [vmem:[%s0 + $0x40] sm:$0xff]
    %v38 = vld [vmem:[%s0 + $0x48] sm:$0xff]
    %v39 = vld [vmem:[%s0 + $0x50] sm:$0xff]
    %v40 = vld [vmem:[%s0 + $0x58] sm:$0xff]
    %v41 = vld [vmem:[%s0 + $0x60] sm:$0xff]
    %v42 = vld [vmem:[%s0 + $0x68] sm:$0xff]
    %v43 = vld [vmem:[%s0 + $0x70] sm:$0xff]
    %v44 = vld [vmem:[%s0 + $0x78] sm:$0xff]
    %v45 = vld [vmem:[#allocation2] sm:$0xff]
    %v46 = vld [vmem:[%s2 + $0x40] sm:$0x1]
    %v47 = vlaneseq
    %v48 = vshrl.u32 %v47, 7
    %v49 = vsub.s32 0, %v48
    %v50 = vrot.slane %v46, %v49
    %vm51 = vcmask 64512
    %v53 = vsel %vm51, %v29, 0
    %v56 = vsel %vm51, %v30, 0
    %v59 = vsel %vm51, %v31, 0
    %v62 = vsel %vm51, %v32, 0
    %v65 = vsel %vm51, %v33, 0
    %v68 = vsel %vm51, %v34, 0
    %v71 = vsel %vm51, %v35, 0
    %v74 = vsel %vm51, %v36, 0
    %v77 = vsel %vm51, %v37, 0
    %v80 = vsel %vm51, %v38, 0
    %v83 = vsel %vm51, %v39, 0
    %v86 = vsel %vm51, %v40, 0
    %v89 = vsel %vm51, %v41, 0
    %v92 = vsel %vm51, %v42, 0
    %v95 = vsel %vm51, %v43, 0
    %v98 = vsel %vm51, %v44, 0
    %100 = vmatprep.subr.mxu0 0.0
    %101 = vmatpush1.msra.mxu0 %v45
    %102 = vmatprep.subr.mxu0 0.0
    %103 = vmatpush1.msra.mxu0 0.0
    %104 = vmatprep.subr.mxu0 0.0
    %105 = vmatpush1.msra.mxu0 0.0
    %106 = vmatprep.subr.mxu0 0.0
    %107 = vmatpush1.msra.mxu0 0.0
    %108 = vmatprep.subr.mxu0 0.0
    %109 = vmatpush1.msra.mxu0 0.0
    %110 = vmatprep.subr.mxu0 0.0
    %111 = vmatpush1.msra.mxu0 0.0
    %112 = vmatprep.subr.mxu0 0.0
    %113 = vmatpush1.msra.mxu0 0.0
    %114 = vmatprep.subr.mxu0 0.0
    %115 = vmatpush1.msra.mxu0 0.0
    %116 = vmatprep.subr.mxu0 0.0
    %117 = vmatpush1.msra.mxu0 0.0
    %118 = vmatprep.subr.mxu0 0.0
    %119 = vmatpush1.msra.mxu0 0.0
    %120 = vmatprep.subr.mxu0 0.0
    %121 = vmatpush1.msra.mxu0 0.0
    %122 = vmatprep.subr.mxu0 0.0
    %123 = vmatpush1.msra.mxu0 0.0
    %124 = vmatprep.subr.mxu0 0.0
    %125 = vmatpush1.msra.mxu0 0.0
    %126 = vmatprep.subr.mxu0 0.0
    %127 = vmatpush1.msra.mxu0 0.0
    %128 = vmatprep.subr.mxu0 0.0
    %129 = vmatpush1.msra.mxu0 0.0
    %130 = vmatprep.subr.mxu0 0.0
    %131 = vmatpush1.msra.mxu0 0.0
    %132 = vmatprep.subr.mxu0 0.0
    %133 = vmatpush1.msra.mxu0 0.0
    %134 = vmatprep.subr.mxu0 0.0
    %135 = vmatpush1.msra.mxu0 0.0
    %136 = vmatprep.subr.mxu0 0.0
    %137 = vmatpush1.msra.mxu0 0.0
    %138 = vmatprep.subr.mxu0 0.0
    %139 = vmatpush1.msra.mxu0 0.0
    %140 = vmatprep.subr.mxu0 0.0
    %141 = vmatpush1.msra.mxu0 0.0
    %142 = vmatprep.subr.mxu0 0.0
    %143 = vmatpush1.msra.mxu0 0.0
    %144 = vmatprep.subr.mxu0 0.0
    %145 = vmatpush1.msra.mxu0 0.0
    %146 = vmatprep.subr.mxu0 0.0
    %147 = vmatpush1.msra.mxu0 0.0
    %148 = vmatprep.subr.mxu0 0.0
    %149 = vmatpush1.msra.mxu0 0.0
    %150 = vmatprep.subr.mxu0 0.0
    %151 = vmatpush1.msra.mxu0 0.0
    %152 = vmatprep.subr.mxu0 0.0
    %153 = vmatpush1.msra.mxu0 0.0
    %154 = vmatprep.subr.mxu0 0.0
    %155 = vmatpush1.msra.mxu0 0.0
    %156 = vmatprep.subr.mxu0 0.0
    %157 = vmatpush1.msra.mxu0 0.0
    %158 = vmatprep.subr.mxu0 0.0
    %159 = vmatpush1.msra.mxu0 0.0
    %160 = vmatprep.subr.mxu0 0.0
    %161 = vmatpush1.msra.mxu0 0.0
    %162 = vmatprep.subr.mxu0 0.0
    %163 = vmatpush1.msra.mxu0 0.0
    %164 = vmatprep.mubr.f32.mxu0 0.0
    %165 = vmatmul.mubr.f32.gmra.mrb[0].mxu0 %v53
    %v166 = vpop.f32.mrb[0].mxu0
    %v167 = vadd.f32 %v50, %v166
    %v168 = vpop.f32.mrb[0].mxu0
    %169 = vmatprep.mubr.f32.mxu0 0.0
    %170 = vmatmul.mubr.f32.gmra.mrb[0].mxu0 %v56
    %v171 = vpop.f32.mrb[0].mxu0
    %v172 = vadd.f32 %v50, %v171
    %v173 = vpop.f32.mrb[0].mxu0
    %174 = vmatprep.mubr.f32.mxu0 0.0
    %175 = vmatmul.mubr.f32.gmra.mrb[0].mxu0 %v59
    %v176 = vpop.f32.mrb[0].mxu0
    %v177 = vadd.f32 %v50, %v176
    %v178 = vpop.f32.mrb[0].mxu0
    %179 = vmatprep.mubr.f32.mxu0 0.0
    %180 = vmatmul.mubr.f32.gmra.mrb[0].mxu0 %v62
    %v181 = vpop.f32.mrb[0].mxu0
    %v182 = vadd.f32 %v50, %v181
    %v183 = vpop.f32.mrb[0].mxu0
    %184 = vmatprep.mubr.f32.mxu0 0.0
    %185 = vmatmul.mubr.f32.gmra.mrb[0].mxu0 %v65
    %v186 = vpop.f32.mrb[0].mxu0
    %v187 = vadd.f32 %v50, %v186
    %v188 = vpop.f32.mrb[0].mxu0
    %189 = vmatprep.mubr.f32.mxu0 0.0
    %190 = vmatmul.mubr.f32.gmra.mrb[0].mxu0 %v68
    %v191 = vpop.f32.mrb[0].mxu0
    %v192 = vadd.f32 %v50, %v191
    %v193 = vpop.f32.mrb[0].mxu0
    %194 = vmatprep.mubr.f32.mxu0 0.0
    %195 = vmatmul.mubr.f32.gmra.mrb[0].mxu0 %v71
    %v196 = vpop.f32.mrb[0].mxu0
    %v197 = vadd.f32 %v50, %v196
    %v198 = vpop.f32.mrb[0].mxu0
    %199 = vmatprep.mubr.f32.mxu0 0.0
    %200 = vmatmul.mubr.f32.gmra.mrb[0].mxu0 %v74
    %v201 = vpop.f32.mrb[0].mxu0
    %v202 = vadd.f32 %v50, %v201
    %v203 = vpop.f32.mrb[0].mxu0
    %204 = vmatprep.mubr.f32.mxu0 0.0
    %205 = vmatmul.mubr.f32.gmra.mrb[0].mxu0 %v77
    %v206 = vpop.f32.mrb[0].mxu0
    %v207 = vadd.f32 %v50, %v206
    %v208 = vpop.f32.mrb[0].mxu0
    %209 = vmatprep.mubr.f32.mxu0 0.0
    %210 = vmatmul.mubr.f32.gmra.mrb[0].mxu0 %v80
    %v211 = vpop.f32.mrb[0].mxu0
    %v212 = vadd.f32 %v50, %v211
    %v213 = vpop.f32.mrb[0].mxu0
    %214 = vmatprep.mubr.f32.mxu0 0.0
    %215 = vmatmul.mubr.f32.gmra.mrb[0].mxu0 %v83
    %v216 = vpop.f32.mrb[0].mxu0
    %v217 = vadd.f32 %v50, %v216
    %v218 = vpop.f32.mrb[0].mxu0
    %219 = vmatprep.mubr.f32.mxu0 0.0
    %220 = vmatmul.mubr.f32.gmra.mrb[0].mxu0 %v86
    %v221 = vpop.f32.mrb[0].mxu0
    %v222 = vadd.f32 %v50, %v221
    %v223 = vpop.f32.mrb[0].mxu0
    %224 = vmatprep.mubr.f32.mxu0 0.0
    %225 = vmatmul.mubr.f32.gmra.mrb[0].mxu0 %v89
    %v226 = vpop.f32.mrb[0].mxu0
    %v227 = vadd.f32 %v50, %v226
    %v228 = vpop.f32.mrb[0].mxu0
    %229 = vmatprep.mubr.f32.mxu0 0.0
    %230 = vmatmul.mubr.f32.gmra.mrb[0].mxu0 %v92
    %v231 = vpop.f32.mrb[0].mxu0
    %v232 = vadd.f32 %v50, %v231
    %v233 = vpop.f32.mrb[0].mxu0
    %234 = vmatprep.mubr.f32.mxu0 0.0
    %235 = vmatmul.mubr.f32.gmra.mrb[0].mxu0 %v95
    %v236 = vpop.f32.mrb[0].mxu0
    %v237 = vadd.f32 %v50, %v236
    %v238 = vpop.f32.mrb[0].mxu0
    %239 = vmatprep.mubr.f32.mxu0 0.0
    %240 = vmatmul.mubr.f32.gmra.mrb[0].mxu0 %v98
    %v241 = vpop.f32.mrb[0].mxu0
    %v242 = vadd.f32 %v50, %v241
    %v243 = vpop.f32.mrb[0].mxu0
    %244 = vdwg.mxu0
    %v245 = vld [vmem:[%s2] sm:$0xff]
    %v246 = vld [vmem:[%s2 + $0x8] sm:$0xff]
    %v247 = vld [vmem:[%s2 + $0x10] sm:$0xff]
    %v248 = vld [vmem:[%s2 + $0x18] sm:$0xff]
    %v249 = vld [vmem:[%s2 + $0x20] sm:$0xff]
    %v250 = vld [vmem:[%s2 + $0x28] sm:$0xff]
    %v251 = vld [vmem:[%s2 + $0x30] sm:$0xff]
    %v252 = vld [vmem:[%s2 + $0x38] sm:$0xff]
    %v253 = vadd.f32 %v167, %v245
    %v254 = vadd.f32 %v172, %v246
    %v255 = vadd.f32 %v177, %v247
    %v256 = vadd.f32 %v182, %v248
    %v257 = vadd.f32 %v187, %v249
    %v258 = vadd.f32 %v192, %v250
    %v259 = vadd.f32 %v197, %v251
    %v260 = vadd.f32 %v202, %v252
    %v261 = vadd.f32 %v207, %v245
    %v262 = vadd.f32 %v212, %v246
    %v263 = vadd.f32 %v217, %v247
    %v264 = vadd.f32 %v222, %v248
    %v265 = vadd.f32 %v227, %v249
    %v266 = vadd.f32 %v232, %v250
    %v267 = vadd.f32 %v237, %v251
    %v268 = vadd.f32 %v242, %v252
    %v269 = vld [vmem:[%s2 + $0x41] sm:$0x1]
    %v270 = vld [vmem:[%s2 + $0x42] sm:$0x1]
    %vm271 = vcmask 261120
    %v272 = vsel %vm271, %v253, 0.0
    %273 = vadd.xlane.f32.xlu0 %v272
    %v274 = vpop.xlane.xlu0 %273
    %v275 = vsel %vm271, %v254, 0.0
    %276 = vadd.xlane.f32.xlu0 %v275
    %v277 = vpop.xlane.xlu0 %276
    %v278 = vsel %vm271, %v255, 0.0
    %279 = vadd.xlane.f32.xlu0 %v278
    %v280 = vpop.xlane.xlu0 %279
    %v281 = vsel %vm271, %v256, 0.0
    %282 = vadd.xlane.f32.xlu0 %v281
    %v283 = vpop.xlane.xlu0 %282
    %v284 = vsel %vm271, %v257, 0.0
    %285 = vadd.xlane.f32.xlu0 %v284
    %v286 = vpop.xlane.xlu0 %285
    %v287 = vsel %vm271, %v258, 0.0
    %288 = vadd.xlane.f32.xlu0 %v287
    %v289 = vpop.xlane.xlu0 %288
    %v290 = vsel %vm271, %v259, 0.0
    %291 = vadd.xlane.f32.xlu0 %v290
    %v292 = vpop.xlane.xlu0 %291
    %v293 = vsel %vm271, %v260, 0.0
    %294 = vadd.xlane.f32.xlu0 %v293
    %v295 = vpop.xlane.xlu0 %294
    %v296 = vsel %vm271, %v261, 0.0
    %297 = vadd.xlane.f32.xlu0 %v296
    %v298 = vpop.xlane.xlu0 %297
    %v299 = vsel %vm271, %v262, 0.0
    %300 = vadd.xlane.f32.xlu0 %v299
    %v301 = vpop.xlane.xlu0 %300
    %v302 = vsel %vm271, %v263, 0.0
    %303 = vadd.xlane.f32.xlu0 %v302
    %v304 = vpop.xlane.xlu0 %303
    %v305 = vsel %vm271, %v264, 0.0
    %306 = vadd.xlane.f32.xlu0 %v305
    %v307 = vpop.xlane.xlu0 %306
    %v308 = vsel %vm271, %v265, 0.0
    %309 = vadd.xlane.f32.xlu0 %v308
    %v310 = vpop.xlane.xlu0 %309
    %v311 = vsel %vm271, %v266, 0.0
    %312 = vadd.xlane.f32.xlu0 %v311
    %v313 = vpop.xlane.xlu0 %312
    %v314 = vsel %vm271, %v267, 0.0
    %315 = vadd.xlane.f32.xlu0 %v314
    %v316 = vpop.xlane.xlu0 %315
    %v317 = vsel %vm271, %v268, 0.0
    %318 = vadd.xlane.f32.xlu0 %v317
    %v319 = vpop.xlane.xlu0 %318
    %v320 = vrcp.pop 32.0
    %v321 = vmul.f32 %v274, %v320
    %v322 = vmul.f32 %v277, %v320
    %v323 = vmul.f32 %v280, %v320
    %v324 = vmul.f32 %v283, %v320
    %v325 = vmul.f32 %v286, %v320
    %v326 = vmul.f32 %v289, %v320
    %v327 = vmul.f32 %v292, %v320
    %v328 = vmul.f32 %v295, %v320
    %v329 = vmul.f32 %v298, %v320
    %v330 = vmul.f32 %v301, %v320
    %v331 = vmul.f32 %v304, %v320
    %v332 = vmul.f32 %v307, %v320
    %v333 = vmul.f32 %v310, %v320
    %v334 = vmul.f32 %v313, %v320
    %v335 = vmul.f32 %v316, %v320
    %v336 = vmul.f32 %v319, %v320
    %v337 = vsub.f32 %v253, %v321
    %v338 = vsub.f32 %v254, %v322
    %v339 = vsub.f32 %v255, %v323
    %v340 = vsub.f32 %v256, %v324
    %v341 = vsub.f32 %v257, %v325
    %v342 = vsub.f32 %v258, %v326
    %v343 = vsub.f32 %v259, %v327
    %v344 = vsub.f32 %v260, %v328
    %v345 = vsub.f32 %v261, %v329
    %v346 = vsub.f32 %v262, %v330
    %v347 = vsub.f32 %v263, %v331
    %v348 = vsub.f32 %v264, %v332
    %v349 = vsub.f32 %v265, %v333
    %v350 = vsub.f32 %v266, %v334
    %v351 = vsub.f32 %v267, %v335
    %v352 = vsub.f32 %v268, %v336
    %v353 = vmul.f32 %v337, %v337
    %v354 = vmul.f32 %v338, %v338
    %v355 = vmul.f32 %v339, %v339
    %v356 = vmul.f32 %v340, %v340
    %v357 = vmul.f32 %v341, %v341
    %v358 = vmul.f32 %v342, %v342
    %v359 = vmul.f32 %v343, %v343
    %v360 = vmul.f32 %v344, %v344
    %v361 = vmul.f32 %v345, %v345
    %v362 = vmul.f32 %v346, %v346
    %v363 = vmul.f32 %v347, %v347
    %v364 = vmul.f32 %v348, %v348
    %v365 = vmul.f32 %v349, %v349
    %v366 = vmul.f32 %v350, %v350
    %v367 = vmul.f32 %v351, %v351
    %v368 = vmul.f32 %v352, %v352
    %v369 = vsel %vm271, %v353, 0.0
    %370 = vadd.xlane.f32.xlu0 %v369
    %v371 = vpop.xlane.xlu0 %370
    %v372 = vsel %vm271, %v354, 0.0
    %373 = vadd.xlane.f32.xlu0 %v372
    %v374 = vpop.xlane.xlu0 %373
    %v375 = vsel %vm271, %v355, 0.0
    %376 = vadd.xlane.f32.xlu0 %v375
    %v377 = vpop.xlane.xlu0 %376
    %v378 = vsel %vm271, %v356, 0.0
    %379 = vadd.xlane.f32.xlu0 %v378
    %v380 = vpop.xlane.xlu0 %379
    %v381 = vsel %vm271, %v357, 0.0
    %382 = vadd.xlane.f32.xlu0 %v381
    %v383 = vpop.xlane.xlu0 %382
    %v384 = vsel %vm271, %v358, 0.0
    %385 = vadd.xlane.f32.xlu0 %v384
    %v386 = vpop.xlane.xlu0 %385
    %v387 = vsel %vm271, %v359, 0.0
    %388 = vadd.xlane.f32.xlu0 %v387
    %v389 = vpop.xlane.xlu0 %388
    %v390 = vsel %vm271, %v360, 0.0
    %391 = vadd.xlane.f32.xlu0 %v390
    %v392 = vpop.xlane.xlu0 %391
    %v393 = vsel %vm271, %v361, 0.0
    %394 = vadd.xlane.f32.xlu0 %v393
    %v395 = vpop.xlane.xlu0 %394
    %v396 = vsel %vm271, %v362, 0.0
    %397 = vadd.xlane.f32.xlu0 %v396
    %v398 = vpop.xlane.xlu0 %397
    %v399 = vsel %vm271, %v363, 0.0
    %400 = vadd.xlane.f32.xlu0 %v399
    %v401 = vpop.xlane.xlu0 %400
    %v402 = vsel %vm271, %v364, 0.0
    %403 = vadd.xlane.f32.xlu0 %v402
    %v404 = vpop.xlane.xlu0 %403
    %v405 = vsel %vm271, %v365, 0.0
    %406 = vadd.xlane.f32.xlu0 %v405
    %v407 = vpop.xlane.xlu0 %406
    %v408 = vsel %vm271, %v366, 0.0
    %409 = vadd.xlane.f32.xlu0 %v408
    %v410 = vpop.xlane.xlu0 %409
    %v411 = vsel %vm271, %v367, 0.0
    %412 = vadd.xlane.f32.xlu0 %v411
    %v413 = vpop.xlane.xlu0 %412
    %v414 = vsel %vm271, %v368, 0.0
    %415 = vadd.xlane.f32.xlu0 %v414
    %v416 = vpop.xlane.xlu0 %415
    %v417 = vmul.f32 %v371, %v320
    %v418 = vmul.f32 %v374, %v320
    %v419 = vmul.f32 %v377, %v320
    %v420 = vmul.f32 %v380, %v320
    %v421 = vmul.f32 %v383, %v320
    %v422 = vmul.f32 %v386, %v320
    %v423 = vmul.f32 %v389, %v320
    %v424 = vmul.f32 %v392, %v320
    %v425 = vmul.f32 %v395, %v320
    %v426 = vmul.f32 %v398, %v320
    %v427 = vmul.f32 %v401, %v320
    %v428 = vmul.f32 %v404, %v320
    %v429 = vmul.f32 %v407, %v320
    %v430 = vmul.f32 %v410, %v320
    %v431 = vmul.f32 %v413, %v320
    %v432 = vmul.f32 %v416, %v320
    %v433 = vadd.f32 %v417, 1e-12
    %v434 = vadd.f32 %v418, 1e-12
    %v435 = vadd.f32 %v419, 1e-12
    %v436 = vadd.f32 %v420, 1e-12
    %v437 = vadd.f32 %v421, 1e-12
    %v438 = vadd.f32 %v422, 1e-12
    %v439 = vadd.f32 %v423, 1e-12
    %v440 = vadd.f32 %v424, 1e-12
    %v441 = vadd.f32 %v425, 1e-12
    %v442 = vadd.f32 %v426, 1e-12
    %v443 = vadd.f32 %v427, 1e-12
    %v444 = vadd.f32 %v428, 1e-12
    %v445 = vadd.f32 %v429, 1e-12
    %v446 = vadd.f32 %v430, 1e-12
    %v447 = vadd.f32 %v431, 1e-12
    %v448 = vadd.f32 %v432, 1e-12
    %v449 = vrsqrt.pop %v433
    %v450 = vrsqrt.pop %v434
    %v451 = vrsqrt.pop %v435
    %v452 = vrsqrt.pop %v436
    %v453 = vrsqrt.pop %v437
    %v454 = vrsqrt.pop %v438
    %v455 = vrsqrt.pop %v439
    %v456 = vrsqrt.pop %v440
    %v457 = vrsqrt.pop %v441
    %v458 = vrsqrt.pop %v442
    %v459 = vrsqrt.pop %v443
    %v460 = vrsqrt.pop %v444
    %v461 = vrsqrt.pop %v445
    %v462 = vrsqrt.pop %v446
    %v463 = vrsqrt.pop %v447
    %v464 = vrsqrt.pop %v448
    %v465 = vmul.f32 %v337, %v449
    %v466 = vmul.f32 %v338, %v450
    %v467 = vmul.f32 %v339, %v451
    %v468 = vmul.f32 %v340, %v452
    %v469 = vmul.f32 %v341, %v453
    %v470 = vmul.f32 %v342, %v454
    %v471 = vmul.f32 %v343, %v455
    %v472 = vmul.f32 %v344, %v456
    %v473 = vmul.f32 %v345, %v457
    %v474 = vmul.f32 %v346, %v458
    %v475 = vmul.f32 %v347, %v459
    %v476 = vmul.f32 %v348, %v460
    %v477 = vmul.f32 %v349, %v461
    %v478 = vmul.f32 %v350, %v462
    %v479 = vmul.f32 %v351, %v463
    %v480 = vmul.f32 %v352, %v464
    %v481 = vlaneseq
    %v482 = vshrl.u32 %v481, 7
    %v483 = vsub.s32 0, %v482
    %v484 = vrot.slane %v269, %v483
    %v485 = vmul.f32 %v465, %v484
    %v486 = vmul.f32 %v466, %v484
    %v487 = vmul.f32 %v467, %v484
    %v488 = vmul.f32 %v468, %v484
    %v489 = vmul.f32 %v469, %v484
    %v490 = vmul.f32 %v470, %v484
    %v491 = vmul.f32 %v471, %v484
    %v492 = vmul.f32 %v472, %v484
    %v493 = vmul.f32 %v473, %v484
    %v494 = vmul.f32 %v474, %v484
    %v495 = vmul.f32 %v475, %v484
    %v496 = vmul.f32 %v476, %v484
    %v497 = vmul.f32 %v477, %v484
    %v498 = vmul.f32 %v478, %v484
    %v499 = vmul.f32 %v479, %v484
    %v500 = vmul.f32 %v480, %v484
    %v501 = vlaneseq
    %v502 = vshrl.u32 %v501, 7
    %v503 = vsub.s32 0, %v502
    %v504 = vrot.slane %v270, %v503
    %v505 = vadd.f32 %v485, %v504
    %v506 = vadd.f32 %v486, %v504
    %v507 = vadd.f32 %v487, %v504
    %v508 = vadd.f32 %v488, %v504
    %v509 = vadd.f32 %v489, %v504
    %v510 = vadd.f32 %v490, %v504
    %v511 = vadd.f32 %v491, %v504
    %v512 = vadd.f32 %v492, %v504
    %v513 = vadd.f32 %v493, %v504
    %v514 = vadd.f32 %v494, %v504
    %v515 = vadd.f32 %v495, %v504
    %v516 = vadd.f32 %v496, %v504
    %v517 = vadd.f32 %v497, %v504
    %v518 = vadd.f32 %v498, %v504
    %v519 = vadd.f32 %v499, %v504
    %v520 = vadd.f32 %v500, %v504
    %v521 = vld [vmem:[#allocation2 + $0x28] sm:$0xff]
    %v522 = vld [vmem:[#allocation2 + $0x30] sm:$0xff]
    %v523 = vld [vmem:[#allocation2 + $0x38] sm:$0xff]
    %v524 = vld [vmem:[#allocation2 + $0x40] sm:$0xff]
    %v525 = vld [vmem:[#allocation2 + $0x48] sm:$0xff]
    %v526 = vld [vmem:[#allocation2 + $0x50] sm:$0xff]
    %v527 = vld [vmem:[#allocation2 + $0x58] sm:$0xff]
    %v528 = vld [vmem:[#allocation2 + $0x60] sm:$0xff]
    %v529 = vld [vmem:[#allocation2 + $0x68] sm:$0xff]
    %v530 = vld [vmem:[#allocation2 + $0x70] sm:$0xff]
    %v531 = vld [vmem:[#allocation2 + $0x78] sm:$0xff]
    %v532 = vld [vmem:[#allocation2 + $0x80] sm:$0xff]
    %v533 = vld [vmem:[#allocation2 + $0x88] sm:$0xff]
    %v534 = vld [vmem:[#allocation2 + $0x90] sm:$0xff]
    %v535 = vld [vmem:[#allocation2 + $0x98] sm:$0xff]
    %v536 = vld [vmem:[#allocation2 + $0xa0] sm:$0xff]
    %v537 = vld [vmem:[#allocation2 + $0xa8] sm:$0xff]
    %v538 = vld [vmem:[#allocation2 + $0xb0] sm:$0xff]
    %v539 = vld [vmem:[#allocation2 + $0xb8] sm:$0xff]
    %v540 = vld [vmem:[#allocation2 + $0xc0] sm:$0xff]
    %v541 = vld [vmem:[#allocation2 + $0xc8] sm:$0xff]
    %v542 = vld [vmem:[#allocation2 + $0xd0] sm:$0xff]
    %v543 = vld [vmem:[#allocation2 + $0xd8] sm:$0xff]
    %v544 = vld [vmem:[#allocation2 + $0xe0] sm:$0xff]
    %v545 = vld [vmem:[%s2 + $0x44] sm:$0x1]
    %v546 = vld [vmem:[%s2 + $0x45] sm:$0x1]
    %v547 = vld [vmem:[%s2 + $0x46] sm:$0x1]
    %v548 = vld [vmem:[%s2 + $0x47] sm:$0x1]
    %v549 = vld [vmem:[%s2 + $0x48] sm:$0x1]
    %v550 = vld [vmem:[%s2 + $0x49] sm:$0x1]
    %v551 = vld [vmem:[%s2 + $0x4a] sm:$0x1]
    %v552 = vlaneseq
    %v553 = vshrl.u32 %v552, 7
    %v554 = vsub.s32 0, %v553
    %v555 = vrot.slane %v545, %v554
    %v557 = vsel %vm271, %v505, 0
    %v560 = vsel %vm271, %v506, 0
    %v563 = vsel %vm271, %v507, 0
    %v566 = vsel %vm271, %v508, 0
    %v569 = vsel %vm271, %v509, 0
    %v572 = vsel %vm271, %v510, 0
    %v575 = vsel %vm271, %v511, 0
    %v578 = vsel %vm271, %v512, 0
    %v581 = vsel %vm271, %v513, 0
    %v584 = vsel %vm271, %v514, 0
    %v587 = vsel %vm271, %v515, 0
    %v590 = vsel %vm271, %v516, 0
    %v593 = vsel %vm271, %v517, 0
    %v596 = vsel %vm271, %v518, 0
    %v599 = vsel %vm271, %v519, 0
    %v602 = vsel %vm271, %v520, 0
    %604 = vmatprep.subr.mxu0 0.0
    %605 = vmatpush1.msra.mxu0 %v521
    %606 = vmatprep.subr.mxu0 0.0
    %607 = vmatpush1.msra.mxu0 %v522
    %608 = vmatprep.subr.mxu0 0.0
    %609 = vmatpush1.msra.mxu0 %v523
    %610 = vmatprep.subr.mxu0 0.0
    %611 = vmatpush1.msra.mxu0 %v524
    %612 = vmatprep.subr.mxu0 0.0
    %613 = vmatpush1.msra.mxu0 0.0
    %614 = vmatprep.subr.mxu0 0.0
    %615 = vmatpush1.msra.mxu0 0.0
    %616 = vmatprep.subr.mxu0 0.0
    %617 = vmatpush1.msra.mxu0 0.0
    %618 = vmatprep.subr.mxu0 0.0
    %619 = vmatpush1.msra.mxu0 0.0
    %620 = vmatprep.subr.mxu0 0.0
    %621 = vmatpush1.msra.mxu0 0.0
    %622 = vmatprep.subr.mxu0 0.0
    %623 = vmatpush1.msra.mxu0 0.0
    %624 = vmatprep.subr.mxu0 0.0
    %625 = vmatpush1.msra.mxu0 0.0
    %626 = vmatprep.subr.mxu0 0.0
    %627 = vmatpush1.msra.mxu0 0.0
    %628 = vmatprep.subr.mxu0 0.0
    %629 = vmatpush1.msra.mxu0 0.0
    %630 = vmatprep.subr.mxu0 0.0
    %631 = vmatpush1.msra.mxu0 0.0
    %632 = vmatprep.subr.mxu0 0.0
    %633 = vmatpush1.msra.mxu0 0.0
    %634 = vmatprep.subr.mxu0 0.0
    %635 = vmatpush1.msra.mxu0 0.0
    %636 = vmatprep.subr.mxu0 0.0
    %637 = vmatpush1.msra.mxu0 0.0
    %638 = vmatprep.subr.mxu0 0.0
    %639 = vmatpush1.msra.mxu0 0.0
    %640 = vmatprep.subr.mxu0 0.0
    %641 = vmatpush1.msra.mxu0 0.0
    %642 = vmatprep.subr.mxu0 0.0
    %643 = vmatpush1.msra.mxu0 0.0
    %644 = vmatprep.subr.mxu0 0.0
    %645 = vmatpush1.msra.mxu0 0.0
    %646 = vmatprep.subr.mxu0 0.0
    %647 = vmatpush1.msra.mxu0 0.0
    %648 = vmatprep.subr.mxu0 0.0
    %649 = vmatpush1.msra.mxu0 0.0
    %650 = vmatprep.subr.mxu0 0.0
    %651 = vmatpush1.msra.mxu0 0.0
    %652 = vmatprep.subr.mxu0 0.0
    %653 = vmatpush1.msra.mxu0 0.0
    %654 = vmatprep.subr.mxu0 0.0
    %655 = vmatpush1.msra.mxu0 0.0
    %656 = vmatprep.subr.mxu0 0.0
    %657 = vmatpush1.msra.mxu0 0.0
    %658 = vmatprep.subr.mxu0 0.0
    %659 = vmatpush1.msra.mxu0 0.0
    %660 = vmatprep.subr.mxu0 0.0
    %661 = vmatpush1.msra.mxu0 0.0
    %662 = vmatprep.subr.mxu0 0.0
    %663 = vmatpush1.msra.mxu0 0.0
    %664 = vmatprep.subr.mxu0 0.0
    %665 = vmatpush1.msra.mxu0 0.0
    %666 = vmatprep.subr.mxu0 0.0
    %667 = vmatpush1.msra.mxu0 0.0
    %668 = vmatprep.mubr.f32.mxu0 0.0
    %669 = vmatmul.mubr.f32.gmra.mrb[0].mxu0 %v557
    %v670 = vpop.f32.mrb[0].mxu0
    %v671 = vadd.f32 %v555, %v670
    %v672 = vpop.f32.mrb[0].mxu0
    %673 = vmatprep.mubr.f32.mxu0 0.0
    %674 = vmatmul.mubr.f32.gmra.mrb[0].mxu0 %v560
    %v675 = vpop.f32.mrb[0].mxu0
    %v676 = vadd.f32 %v555, %v675
    %v677 = vpop.f32.mrb[0].mxu0
    %678 = vmatprep.mubr.f32.mxu0 0.0
    %679 = vmatmul.mubr.f32.gmra.mrb[0].mxu0 %v563
    %v680 = vpop.f32.mrb[0].mxu0
    %v681 = vadd.f32 %v555, %v680
    %v682 = vpop.f32.mrb[0].mxu0
    %683 = vmatprep.mubr.f32.mxu0 0.0
    %684 = vmatmul.mubr.f32.gmra.mrb[0].mxu0 %v566
    %v685 = vpop.f32.mrb[0].mxu0
    %v686 = vadd.f32 %v555, %v685
    %v687 = vpop.f32.mrb[0].mxu0
    %688 = vmatprep.mubr.f32.mxu0 0.0
    %689 = vmatmul.mubr.f32.gmra.mrb[0].mxu0 %v569
    %v690 = vpop.f32.mrb[0].mxu0
    %v691 = vadd.f32 %v555, %v690
    %v692 = vpop.f32.mrb[0].mxu0
    %693 = vmatprep.mubr.f32.mxu0 0.0
    %694 = vmatmul.mubr.f32.gmra.mrb[0].mxu0 %v572
    %v695 = vpop.f32.mrb[0].mxu0
    %v696 = vadd.f32 %v555, %v695
    %v697 = vpop.f32.mrb[0].mxu0
    %698 = vmatprep.mubr.f32.mxu0 0.0
    %699 = vmatmul.mubr.f32.gmra.mrb[0].mxu0 %v575
    %v700 = vpop.f32.mrb[0].mxu0
    %v701 = vadd.f32 %v555, %v700
    %v702 = vpop.f32.mrb[0].mxu0
    %703 = vmatprep.mubr.f32.mxu0 0.0
    %704 = vmatmul.mubr.f32.gmra.mrb[0].mxu0 %v578
    %v705 = vpop.f32.mrb[0].mxu0
    %v706 = vadd.f32 %v555, %v705
    %v707 = vpop.f32.mrb[0].mxu0
    %708 = vmatprep.mubr.f32.mxu0 0.0
    %709 = vmatmul.mubr.f32.gmra.mrb[0].mxu0 %v581
    %v710 = vpop.f32.mrb[0].mxu0
    %v711 = vadd.f32 %v555, %v710
    %v712 = vpop.f32.mrb[0].mxu0
    %713 = vmatprep.mubr.f32.mxu0 0.0
    %714 = vmatmul.mubr.f32.gmra.mrb[0].mxu0 %v584
    %v715 = vpop.f32.mrb[0].mxu0
    %v716 = vadd.f32 %v555, %v715
    %v717 = vpop.f32.mrb[0].mxu0
    %718 = vmatprep.mubr.f32.mxu0 0.0
    %719 = vmatmul.mubr.f32.gmra.mrb[0].mxu0 %v587
    %v720 = vpop.f32.mrb[0].mxu0
    %v721 = vadd.f32 %v555, %v720
    %v722 = vpop.f32.mrb[0].mxu0
    %723 = vmatprep.mubr.f32.mxu0 0.0
    %724 = vmatmul.mubr.f32.gmra.mrb[0].mxu0 %v590
    %v725 = vpop.f32.mrb[0].mxu0
    %v726 = vadd.f32 %v555, %v725
    %v727 = vpop.f32.mrb[0].mxu0
    %728 = vmatprep.mubr.f32.mxu0 0.0
    %729 = vmatmul.mubr.f32.gmra.mrb[0].mxu0 %v593
    %v730 = vpop.f32.mrb[0].mxu0
    %v731 = vadd.f32 %v555, %v730
    %v732 = vpop.f32.mrb[0].mxu0
    %733 = vmatprep.mubr.f32.mxu0 0.0
    %734 = vmatmul.mubr.f32.gmra.mrb[0].mxu0 %v596
    %v735 = vpop.f32.mrb[0].mxu0
    %v736 = vadd.f32 %v555, %v735
    %v737 = vpop.f32.mrb[0].mxu0
    %738 = vmatprep.mubr.f32.mxu0 0.0
    %739 = vmatmul.mubr.f32.gmra.mrb[0].mxu0 %v599
    %v740 = vpop.f32.mrb[0].mxu0
    %v741 = vadd.f32 %v555, %v740
    %v742 = vpop.f32.mrb[0].mxu0
    %743 = vmatprep.mubr.f32.mxu0 0.0
    %744 = vmatmul.mubr.f32.gmra.mrb[0].mxu0 %v602
    %v745 = vpop.f32.mrb[0].mxu0
    %v746 = vadd.f32 %v555, %v745
    %v747 = vpop.f32.mrb[0].mxu0
    %748 = vdwg.mxu0
    %v749 = vmul.f32 %v671, 0.35355338
    %v750 = vmul.f32 %v676, 0.35355338
    %v751 = vmul.f32 %v681, 0.35355338
    %v752 = vmul.f32 %v686, 0.35355338
    %v753 = vmul.f32 %v691, 0.35355338
    %v754 = vmul.f32 %v696, 0.35355338
    %v755 = vmul.f32 %v701, 0.35355338
    %v756 = vmul.f32 %v706, 0.35355338
    %v757 = vmul.f32 %v711, 0.35355338
    %v758 = vmul.f32 %v716, 0.35355338
    %v759 = vmul.f32 %v721, 0.35355338
    %v760 = vmul.f32 %v726, 0.35355338
    %v761 = vmul.f32 %v731, 0.35355338
    %v762 = vmul.f32 %v736, 0.35355338
    %v763 = vmul.f32 %v741, 0.35355338
    %v764 = vmul.f32 %v746, 0.35355338
    %773 = vrot.lane.b32.xlu0 %v671, 96
    %v774 = vpop.permute.xlu0 %773
    %775 = vrot.lane.b32.xlu0 %v676, 96
    %v776 = vpop.permute.xlu0 %775
    %777 = vrot.lane.b32.xlu0 %v681, 96
    %v778 = vpop.permute.xlu0 %777
    %779 = vrot.lane.b32.xlu0 %v686, 96
    %v780 = vpop.permute.xlu0 %779
    %781 = vrot.lane.b32.xlu0 %v691, 96
    %v782 = vpop.permute.xlu0 %781
    %783 = vrot.lane.b32.xlu0 %v696, 96
    %v784 = vpop.permute.xlu0 %783
    %785 = vrot.lane.b32.xlu0 %v701, 96
    %v786 = vpop.permute.xlu0 %785
    %787 = vrot.lane.b32.xlu0 %v706, 96
    %v788 = vpop.permute.xlu0 %787
    %v790 = vsel %vm51, %v749, 0
    %v793 = vsel %vm51, %v750, 0
    %v796 = vsel %vm51, %v751, 0
    %v799 = vsel %vm51, %v752, 0
    %v802 = vsel %vm51, %v753, 0
    %v805 = vsel %vm51, %v754, 0
    %v808 = vsel %vm51, %v755, 0
    %v811 = vsel %vm51, %v756, 0
    %v813 = vsel %vm51, %v774, 0
    %v815 = vsel %vm51, %v776, 0
    %v817 = vsel %vm51, %v778, 0
    %v819 = vsel %vm51, %v780, 0
    %v821 = vsel %vm51, %v782, 0
    %v823 = vsel %vm51, %v784, 0
    %v825 = vsel %vm51, %v786, 0
    %v827 = vsel %vm51, %v788, 0
    %829 = vmatprep.subr.mxu0 0.0
    %830 = vmatpush1.xpose.msra.mxu0 %v813
    %831 = vmatprep.subr.mxu0 0.0
    %832 = vmatpush1.xpose.msra.mxu0 %v815
    %833 = vmatprep.subr.mxu0 0.0
    %834 = vmatpush1.xpose.msra.mxu0 %v817
    %835 = vmatprep.subr.mxu0 0.0
    %836 = vmatpush1.xpose.msra.mxu0 %v819
    %837 = vmatprep.subr.mxu0 0.0
    %838 = vmatpush1.xpose.msra.mxu0 %v821
    %839 = vmatprep.subr.mxu0 0.0
    %840 = vmatpush1.xpose.msra.mxu0 %v823
    %841 = vmatprep.subr.mxu0 0.0
    %842 = vmatpush1.xpose.msra.mxu0 %v825
    %843 = vmatprep.subr.mxu0 0.0
    %844 = vmatpush1.xpose.msra.mxu0 %v827
    %845 = vmatprep.subr.mxu0 0.0
    %846 = vmatpush1.xpose.msra.mxu0 0.0
    %847 = vmatprep.subr.mxu0 0.0
    %848 = vmatpush1.xpose.msra.mxu0 0.0
    %849 = vmatprep.subr.mxu0 0.0
    %850 = vmatpush1.xpose.msra.mxu0 0.0
    %851 = vmatprep.subr.mxu0 0.0
    %852 = vmatpush1.xpose.msra.mxu0 0.0
    %853 = vmatprep.subr.mxu0 0.0
    %854 = vmatpush1.xpose.msra.mxu0 0.0
    %855 = vmatprep.subr.mxu0 0.0
    %856 = vmatpush1.xpose.msra.mxu0 0.0
    %857 = vmatprep.subr.mxu0 0.0
    %858 = vmatpush1.xpose.msra.mxu0 0.0
    %859 = vmatprep.subr.mxu0 0.0
    %860 = vmatpush1.xpose.msra.mxu0 0.0
    %861 = vmatprep.subr.mxu0 0.0
    %862 = vmatpush1.xpose.msra.mxu0 0.0
    %863 = vmatprep.subr.mxu0 0.0
    %864 = vmatpush1.xpose.msra.mxu0 0.0
    %865 = vmatprep.subr.mxu0 0.0
    %866 = vmatpush1.xpose.msra.mxu0 0.0
    %867 = vmatprep.subr.mxu0 0.0
    %868 = vmatpush1.xpose.msra.mxu0 0.0
    %869 = vmatprep.subr.mxu0 0.0
    %870 = vmatpush1.xpose.msra.mxu0 0.0
    %871 = vmatprep.subr.mxu0 0.0
    %872 = vmatpush1.xpose.msra.mxu0 0.0
    %873 = vmatprep.subr.mxu0 0.0
    %874 = vmatpush1.xpose.msra.mxu0 0.0
    %875 = vmatprep.subr.mxu0 0.0
    %876 = vmatpush1.xpose.msra.mxu0 0.0
    %877 = vmatprep.subr.mxu0 0.0
    %878 = vmatpush1.xpose.msra.mxu0 0.0
    %879 = vmatprep.subr.mxu0 0.0
    %880 = vmatpush1.xpose.msra.mxu0 0.0
    %881 = vmatprep.subr.mxu0 0.0
    %882 = vmatpush1.xpose.msra.mxu0 0.0
    %883 = vmatprep.subr.mxu0 0.0
    %884 = vmatpush1.xpose.msra.mxu0 0.0
    %885 = vmatprep.subr.mxu0 0.0
    %886 = vmatpush1.xpose.msra.mxu0 0.0
    %887 = vmatprep.subr.mxu0 0.0
    %888 = vmatpush1.xpose.msra.mxu0 0.0
    %889 = vmatprep.subr.mxu0 0.0
    %890 = vmatpush1.xpose.msra.mxu0 0.0
    %891 = vmatprep.subr.mxu0 0.0
    %892 = vmatpush1.xpose.msra.mxu0 0.0
    %893 = vmatprep.mubr.f32.mxu0 0.0
    %894 = vmatmul.mubr.f32.gmra.mrb[0].mxu0 %v790
    %v895 = vpop.f32.mrb[0].mxu0
    %v896 = vadd.f32 0.0, %v895
    %v897 = vpop.f32.mrb[0].mxu0
    %898 = vmatprep.mubr.f32.mxu0 0.0
    %899 = vmatmul.mubr.f32.gmra.mrb[0].mxu0 %v793
    %v900 = vpop.f32.mrb[0].mxu0
    %v901 = vadd.f32 0.0, %v900
    %v902 = vpop.f32.mrb[0].mxu0
    %903 = vmatprep.mubr.f32.mxu0 0.0
    %904 = vmatmul.mubr.f32.gmra.mrb[0].mxu0 %v796
    %v905 = vpop.f32.mrb[0].mxu0
    %v906 = vadd.f32 0.0, %v905
    %v907 = vpop.f32.mrb[0].mxu0
    %908 = vmatprep.mubr.f32.mxu0 0.0
    %909 = vmatmul.mubr.f32.gmra.mrb[0].mxu0 %v799
    %v910 = vpop.f32.mrb[0].mxu0
    %v911 = vadd.f32 0.0, %v910
    %v912 = vpop.f32.mrb[0].mxu0
    %913 = vmatprep.mubr.f32.mxu0 0.0
    %914 = vmatmul.mubr.f32.gmra.mrb[0].mxu0 %v802
    %v915 = vpop.f32.mrb[0].mxu0
    %v916 = vadd.f32 0.0, %v915
    %v917 = vpop.f32.mrb[0].mxu0
    %918 = vmatprep.mubr.f32.mxu0 0.0
    %919 = vmatmul.mubr.f32.gmra.mrb[0].mxu0 %v805
    %v920 = vpop.f32.mrb[0].mxu0
    %v921 = vadd.f32 0.0, %v920
    %v922 = vpop.f32.mrb[0].mxu0
    %923 = vmatprep.mubr.f32.mxu0 0.0
    %924 = vmatmul.mubr.f32.gmra.mrb[0].mxu0 %v808
    %v925 = vpop.f32.mrb[0].mxu0
    %v926 = vadd.f32 0.0, %v925
    %v927 = vpop.f32.mrb[0].mxu0
    %928 = vmatprep.mubr.f32.mxu0 0.0
    %929 = vmatmul.mubr.f32.gmra.mrb[0].mxu0 %v811
    %v930 = vpop.f32.mrb[0].mxu0
    %v931 = vadd.f32 0.0, %v930
    %v932 = vpop.f32.mrb[0].mxu0
    %933 = vdwg.mxu0
    %vm934 = vcmask 523264
    %v935 = vsel %vm934, %v896, -inf
    %936 = vmax.xlane.f32.xlu0 %v935
    %v937 = vpop.xlane.xlu0 %936
    %v938 = vsel %vm934, %v901, -inf
    %939 = vmax.xlane.f32.xlu0 %v938
    %v940 = vpop.xlane.xlu0 %939
    %v941 = vsel %vm934, %v906, -inf
    %942 = vmax.xlane.f32.xlu0 %v941
    %v943 = vpop.xlane.xlu0 %942
    %v944 = vsel %vm934, %v911, -inf
    %945 = vmax.xlane.f32.xlu0 %v944
    %v946 = vpop.xlane.xlu0 %945
    %v947 = vsel %vm934, %v916, -inf
    %948 = vmax.xlane.f32.xlu0 %v947
    %v949 = vpop.xlane.xlu0 %948
    %v950 = vsel %vm934, %v921, -inf
    %951 = vmax.xlane.f32.xlu0 %v950
    %v952 = vpop.xlane.xlu0 %951
    %v953 = vsel %vm934, %v926, -inf
    %954 = vmax.xlane.f32.xlu0 %v953
    %v955 = vpop.xlane.xlu0 %954
    %v956 = vsel %vm934, %v931, -inf
    %957 = vmax.xlane.f32.xlu0 %v956
    %v958 = vpop.xlane.xlu0 %957
    %v959 = vsub.f32 %v896, %v937
    %v960 = vsub.f32 %v901, %v940
    %v961 = vsub.f32 %v906, %v943
    %v962 = vsub.f32 %v911, %v946
    %v963 = vsub.f32 %v916, %v949
    %v964 = vsub.f32 %v921, %v952
    %v965 = vsub.f32 %v926, %v955
    %v966 = vsub.f32 %v931, %v958
    %v967 = vmul.f32 %v959, 1.442695
    %v968 = vpow.pop %v967
    %v969 = vmul.f32 %v960, 1.442695
    %v970 = vpow.pop %v969
    %v971 = vmul.f32 %v961, 1.442695
    %v972 = vpow.pop %v971
    %v973 = vmul.f32 %v962, 1.442695
    %v974 = vpow.pop %v973
    %v975 = vmul.f32 %v963, 1.442695
    %v976 = vpow.pop %v975
    %v977 = vmul.f32 %v964, 1.442695
    %v978 = vpow.pop %v977
    %v979 = vmul.f32 %v965, 1.442695
    %v980 = vpow.pop %v979
    %v981 = vmul.f32 %v966, 1.442695
    %v982 = vpow.pop %v981
    %v983 = vsel %vm934, %v968, 0.0
    %984 = vadd.xlane.f32.xlu0 %v983
    %v985 = vpop.xlane.xlu0 %984
    %v986 = vsel %vm934, %v970, 0.0
    %987 = vadd.xlane.f32.xlu0 %v986
    %v988 = vpop.xlane.xlu0 %987
    %v989 = vsel %vm934, %v972, 0.0
    %990 = vadd.xlane.f32.xlu0 %v989
    %v991 = vpop.xlane.xlu0 %990
    %v992 = vsel %vm934, %v974, 0.0
    %993 = vadd.xlane.f32.xlu0 %v992
    %v994 = vpop.xlane.xlu0 %993
    %v995 = vsel %vm934, %v976, 0.0
    %996 = vadd.xlane.f32.xlu0 %v995
    %v997 = vpop.xlane.xlu0 %996
    %v998 = vsel %vm934, %v978, 0.0
    %999 = vadd.xlane.f32.xlu0 %v998
    %v1000 = vpop.xlane.xlu0 %999
    %v1001 = vsel %vm934, %v980, 0.0
    %1002 = vadd.xlane.f32.xlu0 %v1001
    %v1003 = vpop.xlane.xlu0 %1002
    %v1004 = vsel %vm934, %v982, 0.0
    %1005 = vadd.xlane.f32.xlu0 %v1004
    %v1006 = vpop.xlane.xlu0 %1005
    %v1007 = vrcp.pop %v985
    %v1008 = vrcp.pop %v988
    %v1009 = vrcp.pop %v991
    %v1010 = vrcp.pop %v994
    %v1011 = vrcp.pop %v997
    %v1012 = vrcp.pop %v1000
    %v1013 = vrcp.pop %v1003
    %v1014 = vrcp.pop %v1006
    %v1015 = vmul.f32 %v968, %v1007
    %v1016 = vmul.f32 %v970, %v1008
    %v1017 = vmul.f32 %v972, %v1009
    %v1018 = vmul.f32 %v974, %v1010
    %v1019 = vmul.f32 %v976, %v1011
    %v1020 = vmul.f32 %v978, %v1012
    %v1021 = vmul.f32 %v980, %v1013
    %v1022 = vmul.f32 %v982, %v1014
    %1023 = vrot.lane.b32.xlu0 %v671, 64
    %v1024 = vpop.permute.xlu0 %1023
    %1025 = vrot.lane.b32.xlu0 %v676, 64
    %v1026 = vpop.permute.xlu0 %1025
    %1027 = vrot.lane.b32.xlu0 %v681, 64
    %v1028 = vpop.permute.xlu0 %1027
    %1029 = vrot.lane.b32.xlu0 %v686, 64
    %v1030 = vpop.permute.xlu0 %1029
    %1031 = vrot.lane.b32.xlu0 %v691, 64
    %v1032 = vpop.permute.xlu0 %1031
    %1033 = vrot.lane.b32.xlu0 %v696, 64
    %v1034 = vpop.permute.xlu0 %1033
    %1035 = vrot.lane.b32.xlu0 %v701, 64
    %v1036 = vpop.permute.xlu0 %1035
    %1037 = vrot.lane.b32.xlu0 %v706, 64
    %v1038 = vpop.permute.xlu0 %1037
    %v1048 = vsel %vm934, %v1015, 0
    %v1051 = vsel %vm934, %v1016, 0
    %v1054 = vsel %vm934, %v1017, 0
    %v1057 = vsel %vm934, %v1018, 0
    %v1060 = vsel %vm934, %v1019, 0
    %v1063 = vsel %vm934, %v1020, 0
    %v1066 = vsel %vm934, %v1021, 0
    %v1069 = vsel %vm934, %v1022, 0
    %1071 = vmatprep.subr.mxu0 0.0
    %1072 = vmatpush1.msra.mxu0 %v1024
    %1073 = vmatprep.subr.mxu0 0.0
    %1074 = vmatpush1.msra.mxu0 %v1026
    %1075 = vmatprep.subr.mxu0 0.0
    %1076 = vmatpush1.msra.mxu0 %v1028
    %1077 = vmatprep.subr.mxu0 0.0
    %1078 = vmatpush1.msra.mxu0 %v1030
    %1079 = vmatprep.subr.mxu0 0.0
    %1080 = vmatpush1.msra.mxu0 %v1032
    %1081 = vmatprep.subr.mxu0 0.0
    %1082 = vmatpush1.msra.mxu0 %v1034
    %1083 = vmatprep.subr.mxu0 0.0
    %1084 = vmatpush1.msra.mxu0 %v1036
    %1085 = vmatprep.subr.mxu0 0.0
    %1086 = vmatpush1.msra.mxu0 %v1038
    %1087 = vmatprep.subr.mxu0 0.0
    %1088 = vmatpush1.msra.mxu0 0.0
    %1089 = vmatprep.subr.mxu0 0.0
    %1090 = vmatpush1.msra.mxu0 0.0
    %1091 = vmatprep.subr.mxu0 0.0
    %1092 = vmatpush1.msra.mxu0 0.0
    %1093 = vmatprep.subr.mxu0 0.0
    %1094 = vmatpush1.msra.mxu0 0.0
    %1095 = vmatprep.subr.mxu0 0.0
    %1096 = vmatpush1.msra.mxu0 0.0
    %1097 = vmatprep.subr.mxu0 0.0
    %1098 = vmatpush1.msra.mxu0 0.0
    %1099 = vmatprep.subr.mxu0 0.0
    %1100 = vmatpush1.msra.mxu0 0.0
    %1101 = vmatprep.subr.mxu0 0.0
    %1102 = vmatpush1.msra.mxu0 0.0
    %1103 = vmatprep.subr.mxu0 0.0
    %1104 = vmatpush1.msra.mxu0 0.0
    %1105 = vmatprep.subr.mxu0 0.0
    %1106 = vmatpush1.msra.mxu0 0.0
    %1107 = vmatprep.subr.mxu0 0.0
    %1108 = vmatpush1.msra.mxu0 0.0
    %1109 = vmatprep.subr.mxu0 0.0
    %1110 = vmatpush1.msra.mxu0 0.0
    %1111 = vmatprep.subr.mxu0 0.0
    %1112 = vmatpush1.msra.mxu0 0.0
    %1113 = vmatprep.subr.mxu0 0.0
    %1114 = vmatpush1.msra.mxu0 0.0
    %1115 = vmatprep.subr.mxu0 0.0
    %1116 = vmatpush1.msra.mxu0 0.0
    %1117 = vmatprep.subr.mxu0 0.0
    %1118 = vmatpush1.msra.mxu0 0.0
    %1119 = vmatprep.subr.mxu0 0.0
    %1120 = vmatpush1.msra.mxu0 0.0
    %1121 = vmatprep.subr.mxu0 0.0
    %1122 = vmatpush1.msra.mxu0 0.0
    %1123 = vmatprep.subr.mxu0 0.0
    %1124 = vmatpush1.msra.mxu0 0.0
    %1125 = vmatprep.subr.mxu0 0.0
    %1126 = vmatpush1.msra.mxu0 0.0
    %1127 = vmatprep.subr.mxu0 0.0
    %1128 = vmatpush1.msra.mxu0 0.0
    %1129 = vmatprep.subr.mxu0 0.0
    %1130 = vmatpush1.msra.mxu0 0.0
    %1131 = vmatprep.subr.mxu0 0.0
    %1132 = vmatpush1.msra.mxu0 0.0
    %1133 = vmatprep.subr.mxu0 0.0
    %1134 = vmatpush1.msra.mxu0 0.0
    %1135 = vmatprep.mubr.f32.mxu0 0.0
    %1136 = vmatmul.mubr.f32.gmra.mrb[0].mxu0 %v1048
    %v1137 = vpop.f32.mrb[0].mxu0
    %v1138 = vadd.f32 0.0, %v1137
    %v1139 = vpop.f32.mrb[0].mxu0
    %1140 = vmatprep.mubr.f32.mxu0 0.0
    %1141 = vmatmul.mubr.f32.gmra.mrb[0].mxu0 %v1051
    %v1142 = vpop.f32.mrb[0].mxu0
    %v1143 = vadd.f32 0.0, %v1142
    %v1144 = vpop.f32.mrb[0].mxu0
    %1145 = vmatprep.mubr.f32.mxu0 0.0
    %1146 = vmatmul.mubr.f32.gmra.mrb[0].mxu0 %v1054
    %v1147 = vpop.f32.mrb[0].mxu0
    %v1148 = vadd.f32 0.0, %v1147
    %v1149 = vpop.f32.mrb[0].mxu0
    %1150 = vmatprep.mubr.f32.mxu0 0.0
    %1151 = vmatmul.mubr.f32.gmra.mrb[0].mxu0 %v1057
    %v1152 = vpop.f32.mrb[0].mxu0
    %v1153 = vadd.f32 0.0, %v1152
    %v1154 = vpop.f32.mrb[0].mxu0
    %1155 = vmatprep.mubr.f32.mxu0 0.0
    %1156 = vmatmul.mubr.f32.gmra.mrb[0].mxu0 %v1060
    %v1157 = vpop.f32.mrb[0].mxu0
    %v1158 = vadd.f32 0.0, %v1157
    %v1159 = vpop.f32.mrb[0].mxu0
    %1160 = vmatprep.mubr.f32.mxu0 0.0
    %1161 = vmatmul.mubr.f32.gmra.mrb[0].mxu0 %v1063
    %v1162 = vpop.f32.mrb[0].mxu0
    %v1163 = vadd.f32 0.0, %v1162
    %v1164 = vpop.f32.mrb[0].mxu0
    %1165 = vmatprep.mubr.f32.mxu0 0.0
    %1166 = vmatmul.mubr.f32.gmra.mrb[0].mxu0 %v1066
    %v1167 = vpop.f32.mrb[0].mxu0
    %v1168 = vadd.f32 0.0, %v1167
    %v1169 = vpop.f32.mrb[0].mxu0
    %1170 = vmatprep.mubr.f32.mxu0 0.0
    %1171 = vmatmul.mubr.f32.gmra.mrb[0].mxu0 %v1069
    %v1172 = vpop.f32.mrb[0].mxu0
    %v1173 = vadd.f32 0.0, %v1172
    %v1174 = vpop.f32.mrb[0].mxu0
    %1175 = vdwg.mxu0
    %1176 = vrot.lane.b32.xlu0 %v749, 120
    %v1177 = vpop.permute.xlu0 %1176
    %1178 = vrot.lane.b32.xlu0 %v750, 120
    %v1179 = vpop.permute.xlu0 %1178
    %1180 = vrot.lane.b32.xlu0 %v751, 120
    %v1181 = vpop.permute.xlu0 %1180
    %1182 = vrot.lane.b32.xlu0 %v752, 120
    %v1183 = vpop.permute.xlu0 %1182
    %1184 = vrot.lane.b32.xlu0 %v753, 120
    %v1185 = vpop.permute.xlu0 %1184
    %1186 = vrot.lane.b32.xlu0 %v754, 120
    %v1187 = vpop.permute.xlu0 %1186
    %1188 = vrot.lane.b32.xlu0 %v755, 120
    %v1189 = vpop.permute.xlu0 %1188
    %1190 = vrot.lane.b32.xlu0 %v756, 120
    %v1191 = vpop.permute.xlu0 %1190
    %1192 = vrot.lane.b32.xlu0 %v671, 88
    %v1193 = vpop.permute.xlu0 %1192
    %1194 = vrot.lane.b32.xlu0 %v676, 88
    %v1195 = vpop.permute.xlu0 %1194
    %1196 = vrot.lane.b32.xlu0 %v681, 88
    %v1197 = vpop.permute.xlu0 %1196
    %1198 = vrot.lane.b32.xlu0 %v686, 88
    %v1199 = vpop.permute.xlu0 %1198
    %1200 = vrot.lane.b32.xlu0 %v691, 88
    %v1201 = vpop.permute.xlu0 %1200
    %1202 = vrot.lane.b32.xlu0 %v696, 88
    %v1203 = vpop.permute.xlu0 %1202
    %1204 = vrot.lane.b32.xlu0 %v701, 88
    %v1205 = vpop.permute.xlu0 %1204
    %1206 = vrot.lane.b32.xlu0 %v706, 88
    %v1207 = vpop.permute.xlu0 %1206
    %v1208 = vsel %vm51, %v1177, 0
    %v1210 = vsel %vm51, %v1179, 0
    %v1212 = vsel %vm51, %v1181, 0
    %v1214 = vsel %vm51, %v1183, 0
    %v1216 = vsel %vm51, %v1185, 0
    %v1218 = vsel %vm51, %v1187, 0
    %v1220 = vsel %vm51, %v1189, 0
    %v1222 = vsel %vm51, %v1191, 0
    %v1224 = vsel %vm51, %v1193, 0
    %v1226 = vsel %vm51, %v1195, 0
    %v1228 = vsel %vm51, %v1197, 0
    %v1230 = vsel %vm51, %v1199, 0
    %v1232 = vsel %vm51, %v1201, 0
    %v1234 = vsel %vm51, %v1203, 0
    %v1236 = vsel %vm51, %v1205, 0
    %v1238 = vsel %vm51, %v1207, 0
    %1240 = vmatprep.subr.mxu0 0.0
    %1241 = vmatpush1.xpose.msra.mxu0 %v1224
    %1242 = vmatprep.subr.mxu0 0.0
    %1243 = vmatpush1.xpose.msra.mxu0 %v1226
    %1244 = vmatprep.subr.mxu0 0.0
    %1245 = vmatpush1.xpose.msra.mxu0 %v1228
    %1246 = vmatprep.subr.mxu0 0.0
    %1247 = vmatpush1.xpose.msra.mxu0 %v1230
    %1248 = vmatprep.subr.mxu0 0.0
    %1249 = vmatpush1.xpose.msra.mxu0 %v1232
    %1250 = vmatprep.subr.mxu0 0.0
    %1251 = vmatpush1.xpose.msra.mxu0 %v1234
    %1252 = vmatprep.subr.mxu0 0.0
    %1253 = vmatpush1.xpose.msra.mxu0 %v1236
    %1254 = vmatprep.subr.mxu0 0.0
    %1255 = vmatpush1.xpose.msra.mxu0 %v1238
    %1256 = vmatprep.subr.mxu0 0.0
    %1257 = vmatpush1.xpose.msra.mxu0 0.0
    %1258 = vmatprep.subr.mxu0 0.0
    %1259 = vmatpush1.xpose.msra.mxu0 0.0
    %1260 = vmatprep.subr.mxu0 0.0
    %1261 = vmatpush1.xpose.msra.mxu0 0.0
    %1262 = vmatprep.subr.mxu0 0.0
    %1263 = vmatpush1.xpose.msra.mxu0 0.0
    %1264 = vmatprep.subr.mxu0 0.0
    %1265 = vmatpush1.xpose.msra.mxu0 0.0
    %1266 = vmatprep.subr.mxu0 0.0
    %1267 = vmatpush1.xpose.msra.mxu0 0.0
    %1268 = vmatprep.subr.mxu0 0.0
    %1269 = vmatpush1.xpose.msra.mxu0 0.0
    %1270 = vmatprep.subr.mxu0 0.0
    %1271 = vmatpush1.xpose.msra.mxu0 0.0
    %1272 = vmatprep.subr.mxu0 0.0
    %1273 = vmatpush1.xpose.msra.mxu0 0.0
    %1274 = vmatprep.subr.mxu0 0.0
    %1275 = vmatpush1.xpose.msra.mxu0 0.0
    %1276 = vmatprep.subr.mxu0 0.0
    %1277 = vmatpush1.xpose.msra.mxu0 0.0
    %1278 = vmatprep.subr.mxu0 0.0
    %1279 = vmatpush1.xpose.msra.mxu0 0.0
    %1280 = vmatprep.subr.mxu0 0.0
    %1281 = vmatpush1.xpose.msra.mxu0 0.0
    %1282 = vmatprep.subr.mxu0 0.0
    %1283 = vmatpush1.xpose.msra.mxu0 0.0
    %1284 = vmatprep.subr.mxu0 0.0
    %1285 = vmatpush1.xpose.msra.mxu0 0.0
    %1286 = vmatprep.subr.mxu0 0.0
    %1287 = vmatpush1.xpose.msra.mxu0 0.0
    %1288 = vmatprep.subr.mxu0 0.0
    %1289 = vmatpush1.xpose.msra.mxu0 0.0
    %1290 = vmatprep.subr.mxu0 0.0
    %1291 = vmatpush1.xpose.msra.mxu0 0.0
    %1292 = vmatprep.subr.mxu0 0.0
    %1293 = vmatpush1.xpose.msra.mxu0 0.0
    %1294 = vmatprep.subr.mxu0 0.0
    %1295 = vmatpush1.xpose.msra.mxu0 0.0
    %1296 = vmatprep.subr.mxu0 0.0
    %1297 = vmatpush1.xpose.msra.mxu0 0.0
    %1298 = vmatprep.subr.mxu0 0.0
    %1299 = vmatpush1.xpose.msra.mxu0 0.0
    %1300 = vmatprep.subr.mxu0 0.0
    %1301 = vmatpush1.xpose.msra.mxu0 0.0
    %1302 = vmatprep.subr.mxu0 0.0
    %1303 = vmatpush1.xpose.msra.mxu0 0.0
    %1304 = vmatprep.mubr.f32.mxu0 0.0
    %1305 = vmatmul.mubr.f32.gmra.mrb[0].mxu0 %v1208
    %v1306 = vpop.f32.mrb[0].mxu0
    %v1307 = vadd.f32 0.0, %v1306
    %v1308 = vpop.f32.mrb[0].mxu0
    %1309 = vmatprep.mubr.f32.mxu0 0.0
    %1310 = vmatmul.mubr.f32.gmra.mrb[0].mxu0 %v1210
    %v1311 = vpop.f32.mrb[0].mxu0
    %v1312 = vadd.f32 0.0, %v1311
    %v1313 = vpop.f32.mrb[0].mxu0
    %1314 = vmatprep.mubr.f32.mxu0 0.0
    %1315 = vmatmul.mubr.f32.gmra.mrb[0].mxu0 %v1212
    %v1316 = vpop.f32.mrb[0].mxu0
    %v1317 = vadd.f32 0.0, %v1316
    %v1318 = vpop.f32.mrb[0].mxu0
    %1319 = vmatprep.mubr.f32.mxu0 0.0
    %1320 = vmatmul.mubr.f32.gmra.mrb[0].mxu0 %v1214
    %v1321 = vpop.f32.mrb[0].mxu0
    %v1322 = vadd.f32 0.0, %v1321
    %v1323 = vpop.f32.mrb[0].mxu0
    %1324 = vmatprep.mubr.f32.mxu0 0.0
    %1325 = vmatmul.mubr.f32.gmra.mrb[0].mxu0 %v1216
    %v1326 = vpop.f32.mrb[0].mxu0
    %v1327 = vadd.f32 0.0, %v1326
    %v1328 = vpop.f32.mrb[0].mxu0
    %1329 = vmatprep.mubr.f32.mxu0 0.0
    %1330 = vmatmul.mubr.f32.gmra.mrb[0].mxu0 %v1218
    %v1331 = vpop.f32.mrb[0].mxu0
    %v1332 = vadd.f32 0.0, %v1331
    %v1333 = vpop.f32.mrb[0].mxu0
    %1334 = vmatprep.mubr.f32.mxu0 0.0
    %1335 = vmatmul.mubr.f32.gmra.mrb[0].mxu0 %v1220
    %v1336 = vpop.f32.mrb[0].mxu0
    %v1337 = vadd.f32 0.0, %v1336
    %v1338 = vpop.f32.mrb[0].mxu0
    %1339 = vmatprep.mubr.f32.mxu0 0.0
    %1340 = vmatmul.mubr.f32.gmra.mrb[0].mxu0 %v1222
    %v1341 = vpop.f32.mrb[0].mxu0
    %v1342 = vadd.f32 0.0, %v1341
    %v1343 = vpop.f32.mrb[0].mxu0
    %1344 = vdwg.mxu0
    %v1345 = vsel %vm934, %v1307, -inf
    %1346 = vmax.xlane.f32.xlu0 %v1345
    %v1347 = vpop.xlane.xlu0 %1346
    %v1348 = vsel %vm934, %v1312, -inf
    %1349 = vmax.xlane.f32.xlu0 %v1348
    %v1350 = vpop.xlane.xlu0 %1349
    %v1351 = vsel %vm934, %v1317, -inf
    %1352 = vmax.xlane.f32.xlu0 %v1351
    %v1353 = vpop.xlane.xlu0 %1352
    %v1354 = vsel %vm934, %v1322, -inf
    %1355 = vmax.xlane.f32.xlu0 %v1354
    %v1356 = vpop.xlane.xlu0 %1355
    %v1357 = vsel %vm934, %v1327, -inf
    %1358 = vmax.xlane.f32.xlu0 %v1357
    %v1359 = vpop.xlane.xlu0 %1358
    %v1360 = vsel %vm934, %v1332, -inf
    %1361 = vmax.xlane.f32.xlu0 %v1360
    %v1362 = vpop.xlane.xlu0 %1361
    %v1363 = vsel %vm934, %v1337, -inf
    %1364 = vmax.xlane.f32.xlu0 %v1363
    %v1365 = vpop.xlane.xlu0 %1364
    %v1366 = vsel %vm934, %v1342, -inf
    %1367 = vmax.xlane.f32.xlu0 %v1366
    %v1368 = vpop.xlane.xlu0 %1367
    %v1369 = vsub.f32 %v1307, %v1347
    %v1370 = vsub.f32 %v1312, %v1350
    %v1371 = vsub.f32 %v1317, %v1353
    %v1372 = vsub.f32 %v1322, %v1356
    %v1373 = vsub.f32 %v1327, %v1359
    %v1374 = vsub.f32 %v1332, %v1362
    %v1375 = vsub.f32 %v1337, %v1365
    %v1376 = vsub.f32 %v1342, %v1368
    %v1377 = vmul.f32 %v1369, 1.442695
    %v1378 = vpow.pop %v1377
    %v1379 = vmul.f32 %v1370, 1.442695
    %v1380 = vpow.pop %v1379
    %v1381 = vmul.f32 %v1371, 1.442695
    %v1382 = vpow.pop %v1381
    %v1383 = vmul.f32 %v1372, 1.442695
    %v1384 = vpow.pop %v1383
    %v1385 = vmul.f32 %v1373, 1.442695
    %v1386 = vpow.pop %v1385
    %v1387 = vmul.f32 %v1374, 1.442695
    %v1388 = vpow.pop %v1387
    %v1389 = vmul.f32 %v1375, 1.442695
    %v1390 = vpow.pop %v1389
    %v1391 = vmul.f32 %v1376, 1.442695
    %v1392 = vpow.pop %v1391
    %v1393 = vsel %vm934, %v1378, 0.0
    %1394 = vadd.xlane.f32.xlu0 %v1393
    %v1395 = vpop.xlane.xlu0 %1394
    %v1396 = vsel %vm934, %v1380, 0.0
    %1397 = vadd.xlane.f32.xlu0 %v1396
    %v1398 = vpop.xlane.xlu0 %1397
    %v1399 = vsel %vm934, %v1382, 0.0
    %1400 = vadd.xlane.f32.xlu0 %v1399
    %v1401 = vpop.xlane.xlu0 %1400
    %v1402 = vsel %vm934, %v1384, 0.0
    %1403 = vadd.xlane.f32.xlu0 %v1402
    %v1404 = vpop.xlane.xlu0 %1403
    %v1405 = vsel %vm934, %v1386, 0.0
    %1406 = vadd.xlane.f32.xlu0 %v1405
    %v1407 = vpop.xlane.xlu0 %1406
    %v1408 = vsel %vm934, %v1388, 0.0
    %1409 = vadd.xlane.f32.xlu0 %v1408
    %v1410 = vpop.xlane.xlu0 %1409
    %v1411 = vsel %vm934, %v1390, 0.0
    %1412 = vadd.xlane.f32.xlu0 %v1411
    %v1413 = vpop.xlane.xlu0 %1412
    %v1414 = vsel %vm934, %v1392, 0.0
    %1415 = vadd.xlane.f32.xlu0 %v1414
    %v1416 = vpop.xlane.xlu0 %1415
    %v1417 = vrcp.pop %v1395
    %v1418 = vrcp.pop %v1398
    %v1419 = vrcp.pop %v1401
    %v1420 = vrcp.pop %v1404
    %v1421 = vrcp.pop %v1407
    %v1422 = vrcp.pop %v1410
    %v1423 = vrcp.pop %v1413
    %v1424 = vrcp.pop %v1416
    %v1425 = vmul.f32 %v1378, %v1417
    %v1426 = vmul.f32 %v1380, %v1418
    %v1427 = vmul.f32 %v1382, %v1419
    %v1428 = vmul.f32 %v1384, %v1420
    %v1429 = vmul.f32 %v1386, %v1421
    %v1430 = vmul.f32 %v1388, %v1422
    %v1431 = vmul.f32 %v1390, %v1423
    %v1432 = vmul.f32 %v1392, %v1424
    %1433 = vrot.lane.b32.xlu0 %v671, 56
    %v1434 = vpop.permute.xlu0 %1433
    %1435 = vrot.lane.b32.xlu0 %v676, 56
    %v1436 = vpop.permute.xlu0 %1435
    %1437 = vrot.lane.b32.xlu0 %v681, 56
    %v1438 = vpop.permute.xlu0 %1437
    %1439 = vrot.lane.b32.xlu0 %v686, 56
    %v1440 = vpop.permute.xlu0 %1439
    %1441 = vrot.lane.b32.xlu0 %v691, 56
    %v1442 = vpop.permute.xlu0 %1441
    %1443 = vrot.lane.b32.xlu0 %v696, 56
    %v1444 = vpop.permute.xlu0 %1443
    %1445 = vrot.lane.b32.xlu0 %v701, 56
    %v1446 = vpop.permute.xlu0 %1445
    %1447 = vrot.lane.b32.xlu0 %v706, 56
    %v1448 = vpop.permute.xlu0 %1447
    %v1458 = vsel %vm934, %v1425, 0
    %v1461 = vsel %vm934, %v1426, 0
    %v1464 = vsel %vm934, %v1427, 0
    %v1467 = vsel %vm934, %v1428, 0
    %v1470 = vsel %vm934, %v1429, 0
    %v1473 = vsel %vm934, %v1430, 0
    %v1476 = vsel %vm934, %v1431, 0
    %v1479 = vsel %vm934, %v1432, 0
    %1481 = vmatprep.subr.mxu0 0.0
    %1482 = vmatpush1.msra.mxu0 %v1434
    %1483 = vmatprep.subr.mxu0 0.0
    %1484 = vmatpush1.msra.mxu0 %v1436
    %1485 = vmatprep.subr.mxu0 0.0
    %1486 = vmatpush1.msra.mxu0 %v1438
    %1487 = vmatprep.subr.mxu0 0.0
    %1488 = vmatpush1.msra.mxu0 %v1440
    %1489 = vmatprep.subr.mxu0 0.0
    %1490 = vmatpush1.msra.mxu0 %v1442
    %1491 = vmatprep.subr.mxu0 0.0
    %1492 = vmatpush1.msra.mxu0 %v1444
    %1493 = vmatprep.subr.mxu0 0.0
    %1494 = vmatpush1.msra.mxu0 %v1446
    %1495 = vmatprep.subr.mxu0 0.0
    %1496 = vmatpush1.msra.mxu0 %v1448
    %1497 = vmatprep.subr.mxu0 0.0
    %1498 = vmatpush1.msra.mxu0 0.0
    %1499 = vmatprep.subr.mxu0 0.0
    %1500 = vmatpush1.msra.mxu0 0.0
    %1501 = vmatprep.subr.mxu0 0.0
    %1502 = vmatpush1.msra.mxu0 0.0
    %1503 = vmatprep.subr.mxu0 0.0
    %1504 = vmatpush1.msra.mxu0 0.0
    %1505 = vmatprep.subr.mxu0 0.0
    %1506 = vmatpush1.msra.mxu0 0.0
    %1507 = vmatprep.subr.mxu0 0.0
    %1508 = vmatpush1.msra.mxu0 0.0
    %1509 = vmatprep.subr.mxu0 0.0
    %1510 = vmatpush1.msra.mxu0 0.0
    %1511 = vmatprep.subr.mxu0 0.0
    %1512 = vmatpush1.msra.mxu0 0.0
    %1513 = vmatprep.subr.mxu0 0.0
    %1514 = vmatpush1.msra.mxu0 0.0
    %1515 = vmatprep.subr.mxu0 0.0
    %1516 = vmatpush1.msra.mxu0 0.0
    %1517 = vmatprep.subr.mxu0 0.0
    %1518 = vmatpush1.msra.mxu0 0.0
    %1519 = vmatprep.subr.mxu0 0.0
    %1520 = vmatpush1.msra.mxu0 0.0
    %1521 = vmatprep.subr.mxu0 0.0
    %1522 = vmatpush1.msra.mxu0 0.0
    %1523 = vmatprep.subr.mxu0 0.0
    %1524 = vmatpush1.msra.mxu0 0.0
    %1525 = vmatprep.subr.mxu0 0.0
    %1526 = vmatpush1.msra.mxu0 0.0
    %1527 = vmatprep.subr.mxu0 0.0
    %1528 = vmatpush1.msra.mxu0 0.0
    %1529 = vmatprep.subr.mxu0 0.0
    %1530 = vmatpush1.msra.mxu0 0.0
    %1531 = vmatprep.subr.mxu0 0.0
    %1532 = vmatpush1.msra.mxu0 0.0
    %1533 = vmatprep.subr.mxu0 0.0
    %1534 = vmatpush1.msra.mxu0 0.0
    %1535 = vmatprep.subr.mxu0 0.0
    %1536 = vmatpush1.msra.mxu0 0.0
    %1537 = vmatprep.subr.mxu0 0.0
    %1538 = vmatpush1.msra.mxu0 0.0
    %1539 = vmatprep.subr.mxu0 0.0
    %1540 = vmatpush1.msra.mxu0 0.0
    %1541 = vmatprep.subr.mxu0 0.0
    %1542 = vmatpush1.msra.mxu0 0.0
    %1543 = vmatprep.subr.mxu0 0.0
    %1544 = vmatpush1.msra.mxu0 0.0
    %1545 = vmatprep.mubr.f32.mxu0 0.0
    %1546 = vmatmul.mubr.f32.gmra.mrb[0].mxu0 %v1458
    %v1547 = vpop.f32.mrb[0].mxu0
    %v1548 = vadd.f32 0.0, %v1547
    %v1549 = vpop.f32.mrb[0].mxu0
    %1550 = vmatprep.mubr.f32.mxu0 0.0
    %1551 = vmatmul.mubr.f32.gmra.mrb[0].mxu0 %v1461
    %v1552 = vpop.f32.mrb[0].mxu0
    %v1553 = vadd.f32 0.0, %v1552
    %v1554 = vpop.f32.mrb[0].mxu0
    %1555 = vmatprep.mubr.f32.mxu0 0.0
    %1556 = vmatmul.mubr.f32.gmra.mrb[0].mxu0 %v1464
    %v1557 = vpop.f32.mrb[0].mxu0
    %v1558 = vadd.f32 0.0, %v1557
    %v1559 = vpop.f32.mrb[0].mxu0
    %1560 = vmatprep.mubr.f32.mxu0 0.0
    %1561 = vmatmul.mubr.f32.gmra.mrb[0].mxu0 %v1467
    %v1562 = vpop.f32.mrb[0].mxu0
    %v1563 = vadd.f32 0.0, %v1562
    %v1564 = vpop.f32.mrb[0].mxu0
    %1565 = vmatprep.mubr.f32.mxu0 0.0
    %1566 = vmatmul.mubr.f32.gmra.mrb[0].mxu0 %v1470
    %v1567 = vpop.f32.mrb[0].mxu0
    %v1568 = vadd.f32 0.0, %v1567
    %v1569 = vpop.f32.mrb[0].mxu0
    %1570 = vmatprep.mubr.f32.mxu0 0.0
    %1571 = vmatmul.mubr.f32.gmra.mrb[0].mxu0 %v1473
    %v1572 = vpop.f32.mrb[0].mxu0
    %v1573 = vadd.f32 0.0, %v1572
    %v1574 = vpop.f32.mrb[0].mxu0
    %1575 = vmatprep.mubr.f32.mxu0 0.0
    %1576 = vmatmul.mubr.f32.gmra.mrb[0].mxu0 %v1476
    %v1577 = vpop.f32.mrb[0].mxu0
    %v1578 = vadd.f32 0.0, %v1577
    %v1579 = vpop.f32.mrb[0].mxu0
    %1580 = vmatprep.mubr.f32.mxu0 0.0
    %1581 = vmatmul.mubr.f32.gmra.mrb[0].mxu0 %v1479
    %v1582 = vpop.f32.mrb[0].mxu0
    %v1583 = vadd.f32 0.0, %v1582
    %v1584 = vpop.f32.mrb[0].mxu0
    %1585 = vdwg.mxu0
    %1586 = vrot.lane.b32.xlu0 %v749, 112
    %v1587 = vpop.permute.xlu0 %1586
    %1588 = vrot.lane.b32.xlu0 %v750, 112
    %v1589 = vpop.permute.xlu0 %1588
    %1590 = vrot.lane.b32.xlu0 %v751, 112
    %v1591 = vpop.permute.xlu0 %1590
    %1592 = vrot.lane.b32.xlu0 %v752, 112
    %v1593 = vpop.permute.xlu0 %1592
    %1594 = vrot.lane.b32.xlu0 %v753, 112
    %v1595 = vpop.permute.xlu0 %1594
    %1596 = vrot.lane.b32.xlu0 %v754, 112
    %v1597 = vpop.permute.xlu0 %1596
    %1598 = vrot.lane.b32.xlu0 %v755, 112
    %v1599 = vpop.permute.xlu0 %1598
    %1600 = vrot.lane.b32.xlu0 %v756, 112
    %v1601 = vpop.permute.xlu0 %1600
    %1602 = vrot.lane.b32.xlu0 %v671, 80
    %v1603 = vpop.permute.xlu0 %1602
    %1604 = vrot.lane.b32.xlu0 %v676, 80
    %v1605 = vpop.permute.xlu0 %1604
    %1606 = vrot.lane.b32.xlu0 %v681, 80
    %v1607 = vpop.permute.xlu0 %1606
    %1608 = vrot.lane.b32.xlu0 %v686, 80
    %v1609 = vpop.permute.xlu0 %1608
    %1610 = vrot.lane.b32.xlu0 %v691, 80
    %v1611 = vpop.permute.xlu0 %1610
    %1612 = vrot.lane.b32.xlu0 %v696, 80
    %v1613 = vpop.permute.xlu0 %1612
    %1614 = vrot.lane.b32.xlu0 %v701, 80
    %v1615 = vpop.permute.xlu0 %1614
    %1616 = vrot.lane.b32.xlu0 %v706, 80
    %v1617 = vpop.permute.xlu0 %1616
    %v1618 = vsel %vm51, %v1587, 0
    %v1620 = vsel %vm51, %v1589, 0
    %v1622 = vsel %vm51, %v1591, 0
    %v1624 = vsel %vm51, %v1593, 0
    %v1626 = vsel %vm51, %v1595, 0
    %v1628 = vsel %vm51, %v1597, 0
    %v1630 = vsel %vm51, %v1599, 0
    %v1632 = vsel %vm51, %v1601, 0
    %v1634 = vsel %vm51, %v1603, 0
    %v1636 = vsel %vm51, %v1605, 0
    %v1638 = vsel %vm51, %v1607, 0
    %v1640 = vsel %vm51, %v1609, 0
    %v1642 = vsel %vm51, %v1611, 0
    %v1644 = vsel %vm51, %v1613, 0
    %v1646 = vsel %vm51, %v1615, 0
    %v1648 = vsel %vm51, %v1617, 0
    %1650 = vmatprep.subr.mxu0 0.0
    %1651 = vmatpush1.xpose.msra.mxu0 %v1634
    %1652 = vmatprep.subr.mxu0 0.0
    %1653 = vmatpush1.xpose.msra.mxu0 %v1636
    %1654 = vmatprep.subr.mxu0 0.0
    %1655 = vmatpush1.xpose.msra.mxu0 %v1638
    %1656 = vmatprep.subr.mxu0 0.0
    %1657 = vmatpush1.xpose.msra.mxu0 %v1640
    %1658 = vmatprep.subr.mxu0 0.0
    %1659 = vmatpush1.xpose.msra.mxu0 %v1642
    %1660 = vmatprep.subr.mxu0 0.0
    %1661 = vmatpush1.xpose.msra.mxu0 %v1644
    %1662 = vmatprep.subr.mxu0 0.0
    %1663 = vmatpush1.xpose.msra.mxu0 %v1646
    %1664 = vmatprep.subr.mxu0 0.0
    %1665 = vmatpush1.xpose.msra.mxu0 %v1648
    %1666 = vmatprep.subr.mxu0 0.0
    %1667 = vmatpush1.xpose.msra.mxu0 0.0
    %1668 = vmatprep.subr.mxu0 0.0
    %1669 = vmatpush1.xpose.msra.mxu0 0.0
    %1670 = vmatprep.subr.mxu0 0.0
    %1671 = vmatpush1.xpose.msra.mxu0 0.0
    %1672 = vmatprep.subr.mxu0 0.0
    %1673 = vmatpush1.xpose.msra.mxu0 0.0
    %1674 = vmatprep.subr.mxu0 0.0
    %1675 = vmatpush1.xpose.msra.mxu0 0.0
    %1676 = vmatprep.subr.mxu0 0.0
    %1677 = vmatpush1.xpose.msra.mxu0 0.0
    %1678 = vmatprep.subr.mxu0 0.0
    %1679 = vmatpush1.xpose.msra.mxu0 0.0
    %1680 = vmatprep.subr.mxu0 0.0
    %1681 = vmatpush1.xpose.msra.mxu0 0.0
    %1682 = vmatprep.subr.mxu0 0.0
    %1683 = vmatpush1.xpose.msra.mxu0 0.0
    %1684 = vmatprep.subr.mxu0 0.0
    %1685 = vmatpush1.xpose.msra.mxu0 0.0
    %1686 = vmatprep.subr.mxu0 0.0
    %1687 = vmatpush1.xpose.msra.mxu0 0.0
    %1688 = vmatprep.subr.mxu0 0.0
    %1689 = vmatpush1.xpose.msra.mxu0 0.0
    %1690 = vmatprep.subr.mxu0 0.0
    %1691 = vmatpush1.xpose.msra.mxu0 0.0
    %1692 = vmatprep.subr.mxu0 0.0
    %1693 = vmatpush1.xpose.msra.mxu0 0.0
    %1694 = vmatprep.subr.mxu0 0.0
    %1695 = vmatpush1.xpose.msra.mxu0 0.0
    %1696 = vmatprep.subr.mxu0 0.0
    %1697 = vmatpush1.xpose.msra.mxu0 0.0
    %1698 = vmatprep.subr.mxu0 0.0
    %1699 = vmatpush1.xpose.msra.mxu0 0.0
    %1700 = vmatprep.subr.mxu0 0.0
    %1701 = vmatpush1.xpose.msra.mxu0 0.0
    %1702 = vmatprep.subr.mxu0 0.0
    %1703 = vmatpush1.xpose.msra.mxu0 0.0
    %1704 = vmatprep.subr.mxu0 0.0
    %1705 = vmatpush1.xpose.msra.mxu0 0.0
    %1706 = vmatprep.subr.mxu0 0.0
    %1707 = vmatpush1.xpose.msra.mxu0 0.0
    %1708 = vmatprep.subr.mxu0 0.0
    %1709 = vmatpush1.xpose.msra.mxu0 0.0
    %1710 = vmatprep.subr.mxu0 0.0
    %1711 = vmatpush1.xpose.msra.mxu0 0.0
    %1712 = vmatprep.subr.mxu0 0.0
    %1713 = vmatpush1.xpose.msra.mxu0 0.0
    %1714 = vmatprep.mubr.f32.mxu0 0.0
    %1715 = vmatmul.mubr.f32.gmra.mrb[0].mxu0 %v1618
    %v1716 = vpop.f32.mrb[0].mxu0
    %v1717 = vadd.f32 0.0, %v1716
    %v1718 = vpop.f32.mrb[0].mxu0
    %1719 = vmatprep.mubr.f32.mxu0 0.0
    %1720 = vmatmul.mubr.f32.gmra.mrb[0].mxu0 %v1620
    %v1721 = vpop.f32.mrb[0].mxu0
    %v1722 = vadd.f32 0.0, %v1721
    %v1723 = vpop.f32.mrb[0].mxu0
    %1724 = vmatprep.mubr.f32.mxu0 0.0
    %1725 = vmatmul.mubr.f32.gmra.mrb[0].mxu0 %v1622
    %v1726 = vpop.f32.mrb[0].mxu0
    %v1727 = vadd.f32 0.0, %v1726
    %v1728 = vpop.f32.mrb[0].mxu0
    %1729 = vmatprep.mubr.f32.mxu0 0.0
    %1730 = vmatmul.mubr.f32.gmra.mrb[0].mxu0 %v1624
    %v1731 = vpop.f32.mrb[0].mxu0
    %v1732 = vadd.f32 0.0, %v1731
    %v1733 = vpop.f32.mrb[0].mxu0
    %1734 = vmatprep.mubr.f32.mxu0 0.0
    %1735 = vmatmul.mubr.f32.gmra.mrb[0].mxu0 %v1626
    %v1736 = vpop.f32.mrb[0].mxu0
    %v1737 = vadd.f32 0.0, %v1736
    %v1738 = vpop.f32.mrb[0].mxu0
    %1739 = vmatprep.mubr.f32.mxu0 0.0
    %1740 = vmatmul.mubr.f32.gmra.mrb[0].mxu0 %v1628
    %v1741 = vpop.f32.mrb[0].mxu0
    %v1742 = vadd.f32 0.0, %v1741
    %v1743 = vpop.f32.mrb[0].mxu0
    %1744 = vmatprep.mubr.f32.mxu0 0.0
    %1745 = vmatmul.mubr.f32.gmra.mrb[0].mxu0 %v1630
    %v1746 = vpop.f32.mrb[0].mxu0
    %v1747 = vadd.f32 0.0, %v1746
    %v1748 = vpop.f32.mrb[0].mxu0
    %1749 = vmatprep.mubr.f32.mxu0 0.0
    %1750 = vmatmul.mubr.f32.gmra.mrb[0].mxu0 %v1632
    %v1751 = vpop.f32.mrb[0].mxu0
    %v1752 = vadd.f32 0.0, %v1751
    %v1753 = vpop.f32.mrb[0].mxu0
    %1754 = vdwg.mxu0
    %v1755 = vsel %vm934, %v1717, -inf
    %1756 = vmax.xlane.f32.xlu0 %v1755
    %v1757 = vpop.xlane.xlu0 %1756
    %v1758 = vsel %vm934, %v1722, -inf
    %1759 = vmax.xlane.f32.xlu0 %v1758
    %v1760 = vpop.xlane.xlu0 %1759
    %v1761 = vsel %vm934, %v1727, -inf
    %1762 = vmax.xlane.f32.xlu0 %v1761
    %v1763 = vpop.xlane.xlu0 %1762
    %v1764 = vsel %vm934, %v1732, -inf
    %1765 = vmax.xlane.f32.xlu0 %v1764
    %v1766 = vpop.xlane.xlu0 %1765
    %v1767 = vsel %vm934, %v1737, -inf
    %1768 = vmax.xlane.f32.xlu0 %v1767
    %v1769 = vpop.xlane.xlu0 %1768
    %v1770 = vsel %vm934, %v1742, -inf
    %1771 = vmax.xlane.f32.xlu0 %v1770
    %v1772 = vpop.xlane.xlu0 %1771
    %v1773 = vsel %vm934, %v1747, -inf
    %1774 = vmax.xlane.f32.xlu0 %v1773
    %v1775 = vpop.xlane.xlu0 %1774
    %v1776 = vsel %vm934, %v1752, -inf
    %1777 = vmax.xlane.f32.xlu0 %v1776
    %v1778 = vpop.xlane.xlu0 %1777
    %v1779 = vsub.f32 %v1717, %v1757
    %v1780 = vsub.f32 %v1722, %v1760
    %v1781 = vsub.f32 %v1727, %v1763
    %v1782 = vsub.f32 %v1732, %v1766
    %v1783 = vsub.f32 %v1737, %v1769
    %v1784 = vsub.f32 %v1742, %v1772
    %v1785 = vsub.f32 %v1747, %v1775
    %v1786 = vsub.f32 %v1752, %v1778
    %v1787 = vmul.f32 %v1779, 1.442695
    %v1788 = vpow.pop %v1787
    %v1789 = vmul.f32 %v1780, 1.442695
    %v1790 = vpow.pop %v1789
    %v1791 = vmul.f32 %v1781, 1.442695
    %v1792 = vpow.pop %v1791
    %v1793 = vmul.f32 %v1782, 1.442695
    %v1794 = vpow.pop %v1793
    %v1795 = vmul.f32 %v1783, 1.442695
    %v1796 = vpow.pop %v1795
    %v1797 = vmul.f32 %v1784, 1.442695
    %v1798 = vpow.pop %v1797
    %v1799 = vmul.f32 %v1785, 1.442695
    %v1800 = vpow.pop %v1799
    %v1801 = vmul.f32 %v1786, 1.442695
    %v1802 = vpow.pop %v1801
    %v1803 = vsel %vm934, %v1788, 0.0
    %1804 = vadd.xlane.f32.xlu0 %v1803
    %v1805 = vpop.xlane.xlu0 %1804
    %v1806 = vsel %vm934, %v1790, 0.0
    %1807 = vadd.xlane.f32.xlu0 %v1806
    %v1808 = vpop.xlane.xlu0 %1807
    %v1809 = vsel %vm934, %v1792, 0.0
    %1810 = vadd.xlane.f32.xlu0 %v1809
    %v1811 = vpop.xlane.xlu0 %1810
    %v1812 = vsel %vm934, %v1794, 0.0
    %1813 = vadd.xlane.f32.xlu0 %v1812
    %v1814 = vpop.xlane.xlu0 %1813
    %v1815 = vsel %vm934, %v1796, 0.0
    %1816 = vadd.xlane.f32.xlu0 %v1815
    %v1817 = vpop.xlane.xlu0 %1816
    %v1818 = vsel %vm934, %v1798, 0.0
    %1819 = vadd.xlane.f32.xlu0 %v1818
    %v1820 = vpop.xlane.xlu0 %1819
    %v1821 = vsel %vm934, %v1800, 0.0
    %1822 = vadd.xlane.f32.xlu0 %v1821
    %v1823 = vpop.xlane.xlu0 %1822
    %v1824 = vsel %vm934, %v1802, 0.0
    %1825 = vadd.xlane.f32.xlu0 %v1824
    %v1826 = vpop.xlane.xlu0 %1825
    %v1827 = vrcp.pop %v1805
    %v1828 = vrcp.pop %v1808
    %v1829 = vrcp.pop %v1811
    %v1830 = vrcp.pop %v1814
    %v1831 = vrcp.pop %v1817
    %v1832 = vrcp.pop %v1820
    %v1833 = vrcp.pop %v1823
    %v1834 = vrcp.pop %v1826
    %v1835 = vmul.f32 %v1788, %v1827
    %v1836 = vmul.f32 %v1790, %v1828
    %v1837 = vmul.f32 %v1792, %v1829
    %v1838 = vmul.f32 %v1794, %v1830
    %v1839 = vmul.f32 %v1796, %v1831
    %v1840 = vmul.f32 %v1798, %v1832
    %v1841 = vmul.f32 %v1800, %v1833
    %v1842 = vmul.f32 %v1802, %v1834
    %1843 = vrot.lane.b32.xlu0 %v671, 48
    %v1844 = vpop.permute.xlu0 %1843
    %1845 = vrot.lane.b32.xlu0 %v676, 48
    %v1846 = vpop.permute.xlu0 %1845
    %1847 = vrot.lane.b32.xlu0 %v681, 48
    %v1848 = vpop.permute.xlu0 %1847
    %1849 = vrot.lane.b32.xlu0 %v686, 48
    %v1850 = vpop.permute.xlu0 %1849
    %1851 = vrot.lane.b32.xlu0 %v691, 48
    %v1852 = vpop.permute.xlu0 %1851
    %1853 = vrot.lane.b32.xlu0 %v696, 48
    %v1854 = vpop.permute.xlu0 %1853
    %1855 = vrot.lane.b32.xlu0 %v701, 48
    %v1856 = vpop.permute.xlu0 %1855
    %1857 = vrot.lane.b32.xlu0 %v706, 48
    %v1858 = vpop.permute.xlu0 %1857
    %v1868 = vsel %vm934, %v1835, 0
    %v1871 = vsel %vm934, %v1836, 0
    %v1874 = vsel %vm934, %v1837, 0
    %v1877 = vsel %vm934, %v1838, 0
    %v1880 = vsel %vm934, %v1839, 0
    %v1883 = vsel %vm934, %v1840, 0
    %v1886 = vsel %vm934, %v1841, 0
    %v1889 = vsel %vm934, %v1842, 0
    %1891 = vmatprep.subr.mxu0 0.0
    %1892 = vmatpush1.msra.mxu0 %v1844
    %1893 = vmatprep.subr.mxu0 0.0
    %1894 = vmatpush1.msra.mxu0 %v1846
    %1895 = vmatprep.subr.mxu0 0.0
    %1896 = vmatpush1.msra.mxu0 %v1848
    %1897 = vmatprep.subr.mxu0 0.0
    %1898 = vmatpush1.msra.mxu0 %v1850
    %1899 = vmatprep.subr.mxu0 0.0
    %1900 = vmatpush1.msra.mxu0 %v1852
    %1901 = vmatprep.subr.mxu0 0.0
    %1902 = vmatpush1.msra.mxu0 %v1854
    %1903 = vmatprep.subr.mxu0 0.0
    %1904 = vmatpush1.msra.mxu0 %v1856
    %1905 = vmatprep.subr.mxu0 0.0
    %1906 = vmatpush1.msra.mxu0 %v1858
    %1907 = vmatprep.subr.mxu0 0.0
    %1908 = vmatpush1.msra.mxu0 0.0
    %1909 = vmatprep.subr.mxu0 0.0
    %1910 = vmatpush1.msra.mxu0 0.0
    %1911 = vmatprep.subr.mxu0 0.0
    %1912 = vmatpush1.msra.mxu0 0.0
    %1913 = vmatprep.subr.mxu0 0.0
    %1914 = vmatpush1.msra.mxu0 0.0
    %1915 = vmatprep.subr.mxu0 0.0
    %1916 = vmatpush1.msra.mxu0 0.0
    %1917 = vmatprep.subr.mxu0 0.0
    %1918 = vmatpush1.msra.mxu0 0.0
    %1919 = vmatprep.subr.mxu0 0.0
    %1920 = vmatpush1.msra.mxu0 0.0
    %1921 = vmatprep.subr.mxu0 0.0
    %1922 = vmatpush1.msra.mxu0 0.0
    %1923 = vmatprep.subr.mxu0 0.0
    %1924 = vmatpush1.msra.mxu0 0.0
    %1925 = vmatprep.subr.mxu0 0.0
    %1926 = vmatpush1.msra.mxu0 0.0
    %1927 = vmatprep.subr.mxu0 0.0
    %1928 = vmatpush1.msra.mxu0 0.0
    %1929 = vmatprep.subr.mxu0 0.0
    %1930 = vmatpush1.msra.mxu0 0.0
    %1931 = vmatprep.subr.mxu0 0.0
    %1932 = vmatpush1.msra.mxu0 0.0
    %1933 = vmatprep.subr.mxu0 0.0
    %1934 = vmatpush1.msra.mxu0 0.0
    %1935 = vmatprep.subr.mxu0 0.0
    %1936 = vmatpush1.msra.mxu0 0.0
    %1937 = vmatprep.subr.mxu0 0.0
    %1938 = vmatpush1.msra.mxu0 0.0
    %1939 = vmatprep.subr.mxu0 0.0
    %1940 = vmatpush1.msra.mxu0 0.0
    %1941 = vmatprep.subr.mxu0 0.0
    %1942 = vmatpush1.msra.mxu0 0.0
    %1943 = vmatprep.subr.mxu0 0.0
    %1944 = vmatpush1.msra.mxu0 0.0
    %1945 = vmatprep.subr.mxu0 0.0
    %1946 = vmatpush1.msra.mxu0 0.0
    %1947 = vmatprep.subr.mxu0 0.0
    %1948 = vmatpush1.msra.mxu0 0.0
    %1949 = vmatprep.subr.mxu0 0.0
    %1950 = vmatpush1.msra.mxu0 0.0
    %1951 = vmatprep.subr.mxu0 0.0
    %1952 = vmatpush1.msra.mxu0 0.0
    %1953 = vmatprep.subr.mxu0 0.0
    %1954 = vmatpush1.msra.mxu0 0.0
    %1955 = vmatprep.mubr.f32.mxu0 0.0
    %1956 = vmatmul.mubr.f32.gmra.mrb[0].mxu0 %v1868
    %v1957 = vpop.f32.mrb[0].mxu0
    %v1958 = vadd.f32 0.0, %v1957
    %v1959 = vpop.f32.mrb[0].mxu0
    %1960 = vmatprep.mubr.f32.mxu0 0.0
    %1961 = vmatmul.mubr.f32.gmra.mrb[0].mxu0 %v1871
    %v1962 = vpop.f32.mrb[0].mxu0
    %v1963 = vadd.f32 0.0, %v1962
    %v1964 = vpop.f32.mrb[0].mxu0
    %1965 = vmatprep.mubr.f32.mxu0 0.0
    %1966 = vmatmul.mubr.f32.gmra.mrb[0].mxu0 %v1874
    %v1967 = vpop.f32.mrb[0].mxu0
    %v1968 = vadd.f32 0.0, %v1967
    %v1969 = vpop.f32.mrb[0].mxu0
    %1970 = vmatprep.mubr.f32.mxu0 0.0
    %1971 = vmatmul.mubr.f32.gmra.mrb[0].mxu0 %v1877
    %v1972 = vpop.f32.mrb[0].mxu0
    %v1973 = vadd.f32 0.0, %v1972
    %v1974 = vpop.f32.mrb[0].mxu0
    %1975 = vmatprep.mubr.f32.mxu0 0.0
    %1976 = vmatmul.mubr.f32.gmra.mrb[0].mxu0 %v1880
    %v1977 = vpop.f32.mrb[0].mxu0
    %v1978 = vadd.f32 0.0, %v1977
    %v1979 = vpop.f32.mrb[0].mxu0
    %1980 = vmatprep.mubr.f32.mxu0 0.0
    %1981 = vmatmul.mubr.f32.gmra.mrb[0].mxu0 %v1883
    %v1982 = vpop.f32.mrb[0].mxu0
    %v1983 = vadd.f32 0.0, %v1982
    %v1984 = vpop.f32.mrb[0].mxu0
    %1985 = vmatprep.mubr.f32.mxu0 0.0
    %1986 = vmatmul.mubr.f32.gmra.mrb[0].mxu0 %v1886
    %v1987 = vpop.f32.mrb[0].mxu0
    %v1988 = vadd.f32 0.0, %v1987
    %v1989 = vpop.f32.mrb[0].mxu0
    %1990 = vmatprep.mubr.f32.mxu0 0.0
    %1991 = vmatmul.mubr.f32.gmra.mrb[0].mxu0 %v1889
    %v1992 = vpop.f32.mrb[0].mxu0
    %v1993 = vadd.f32 0.0, %v1992
    %v1994 = vpop.f32.mrb[0].mxu0
    %1995 = vdwg.mxu0
    %1996 = vrot.lane.b32.xlu0 %v749, 104
    %v1997 = vpop.permute.xlu0 %1996
    %1998 = vrot.lane.b32.xlu0 %v750, 104
    %v1999 = vpop.permute.xlu0 %1998
    %2000 = vrot.lane.b32.xlu0 %v751, 104
    %v2001 = vpop.permute.xlu0 %2000
    %2002 = vrot.lane.b32.xlu0 %v752, 104
    %v2003 = vpop.permute.xlu0 %2002
    %2004 = vrot.lane.b32.xlu0 %v753, 104
    %v2005 = vpop.permute.xlu0 %2004
    %2006 = vrot.lane.b32.xlu0 %v754, 104
    %v2007 = vpop.permute.xlu0 %2006
    %2008 = vrot.lane.b32.xlu0 %v755, 104
    %v2009 = vpop.permute.xlu0 %2008
    %2010 = vrot.lane.b32.xlu0 %v756, 104
    %v2011 = vpop.permute.xlu0 %2010
    %2012 = vrot.lane.b32.xlu0 %v671, 72
    %v2013 = vpop.permute.xlu0 %2012
    %2014 = vrot.lane.b32.xlu0 %v676, 72
    %v2015 = vpop.permute.xlu0 %2014
    %2016 = vrot.lane.b32.xlu0 %v681, 72
    %v2017 = vpop.permute.xlu0 %2016
    %2018 = vrot.lane.b32.xlu0 %v686, 72
    %v2019 = vpop.permute.xlu0 %2018
    %2020 = vrot.lane.b32.xlu0 %v691, 72
    %v2021 = vpop.permute.xlu0 %2020
    %2022 = vrot.lane.b32.xlu0 %v696, 72
    %v2023 = vpop.permute.xlu0 %2022
    %2024 = vrot.lane.b32.xlu0 %v701, 72
    %v2025 = vpop.permute.xlu0 %2024
    %2026 = vrot.lane.b32.xlu0 %v706, 72
    %v2027 = vpop.permute.xlu0 %2026
    %v2028 = vsel %vm51, %v1997, 0
    %v2030 = vsel %vm51, %v1999, 0
    %v2032 = vsel %vm51, %v2001, 0
    %v2034 = vsel %vm51, %v2003, 0
    %v2036 = vsel %vm51, %v2005, 0
    %v2038 = vsel %vm51, %v2007, 0
    %v2040 = vsel %vm51, %v2009, 0
    %v2042 = vsel %vm51, %v2011, 0
    %v2044 = vsel %vm51, %v2013, 0
    %v2046 = vsel %vm51, %v2015, 0
    %v2048 = vsel %vm51, %v2017, 0
    %v2050 = vsel %vm51, %v2019, 0
    %v2052 = vsel %vm51, %v2021, 0
    %v2054 = vsel %vm51, %v2023, 0
    %v2056 = vsel %vm51, %v2025, 0
    %v2058 = vsel %vm51, %v2027, 0
    %2060 = vmatprep.subr.mxu0 0.0
    %2061 = vmatpush1.xpose.msra.mxu0 %v2044
    %2062 = vmatprep.subr.mxu0 0.0
    %2063 = vmatpush1.xpose.msra.mxu0 %v2046
    %2064 = vmatprep.subr.mxu0 0.0
    %2065 = vmatpush1.xpose.msra.mxu0 %v2048
    %2066 = vmatprep.subr.mxu0 0.0
    %2067 = vmatpush1.xpose.msra.mxu0 %v2050
    %2068 = vmatprep.subr.mxu0 0.0
    %2069 = vmatpush1.xpose.msra.mxu0 %v2052
    %2070 = vmatprep.subr.mxu0 0.0
    %2071 = vmatpush1.xpose.msra.mxu0 %v2054
    %2072 = vmatprep.subr.mxu0 0.0
    %2073 = vmatpush1.xpose.msra.mxu0 %v2056
    %2074 = vmatprep.subr.mxu0 0.0
    %2075 = vmatpush1.xpose.msra.mxu0 %v2058
    %2076 = vmatprep.subr.mxu0 0.0
    %2077 = vmatpush1.xpose.msra.mxu0 0.0
    %2078 = vmatprep.subr.mxu0 0.0
    %2079 = vmatpush1.xpose.msra.mxu0 0.0
    %2080 = vmatprep.subr.mxu0 0.0
    %2081 = vmatpush1.xpose.msra.mxu0 0.0
    %2082 = vmatprep.subr.mxu0 0.0
    %2083 = vmatpush1.xpose.msra.mxu0 0.0
    %2084 = vmatprep.subr.mxu0 0.0
    %2085 = vmatpush1.xpose.msra.mxu0 0.0
    %2086 = vmatprep.subr.mxu0 0.0
    %2087 = vmatpush1.xpose.msra.mxu0 0.0
    %2088 = vmatprep.subr.mxu0 0.0
    %2089 = vmatpush1.xpose.msra.mxu0 0.0
    %2090 = vmatprep.subr.mxu0 0.0
    %2091 = vmatpush1.xpose.msra.mxu0 0.0
    %2092 = vmatprep.subr.mxu0 0.0
    %2093 = vmatpush1.xpose.msra.mxu0 0.0
    %2094 = vmatprep.subr.mxu0 0.0
    %2095 = vmatpush1.xpose.msra.mxu0 0.0
    %2096 = vmatprep.subr.mxu0 0.0
    %2097 = vmatpush1.xpose.msra.mxu0 0.0
    %2098 = vmatprep.subr.mxu0 0.0
    %2099 = vmatpush1.xpose.msra.mxu0 0.0
    %2100 = vmatprep.subr.mxu0 0.0
    %2101 = vmatpush1.xpose.msra.mxu0 0.0
    %2102 = vmatprep.subr.mxu0 0.0
    %2103 = vmatpush1.xpose.msra.mxu0 0.0
    %2104 = vmatprep.subr.mxu0 0.0
    %2105 = vmatpush1.xpose.msra.mxu0 0.0
    %2106 = vmatprep.subr.mxu0 0.0
    %2107 = vmatpush1.xpose.msra.mxu0 0.0
    %2108 = vmatprep.subr.mxu0 0.0
    %2109 = vmatpush1.xpose.msra.mxu0 0.0
    %2110 = vmatprep.subr.mxu0 0.0
    %2111 = vmatpush1.xpose.msra.mxu0 0.0
    %2112 = vmatprep.subr.mxu0 0.0
    %2113 = vmatpush1.xpose.msra.mxu0 0.0
    %2114 = vmatprep.subr.mxu0 0.0
    %2115 = vmatpush1.xpose.msra.mxu0 0.0
    %2116 = vmatprep.subr.mxu0 0.0
    %2117 = vmatpush1.xpose.msra.mxu0 0.0
    %2118 = vmatprep.subr.mxu0 0.0
    %2119 = vmatpush1.xpose.msra.mxu0 0.0
    %2120 = vmatprep.subr.mxu0 0.0
    %2121 = vmatpush1.xpose.msra.mxu0 0.0
    %2122 = vmatprep.subr.mxu0 0.0
    %2123 = vmatpush1.xpose.msra.mxu0 0.0
    %2124 = vmatprep.mubr.f32.mxu0 0.0
    %2125 = vmatmul.mubr.f32.gmra.mrb[0].mxu0 %v2028
    %v2126 = vpop.f32.mrb[0].mxu0
    %v2127 = vadd.f32 0.0, %v2126
    %v2128 = vpop.f32.mrb[0].mxu0
    %2129 = vmatprep.mubr.f32.mxu0 0.0
    %2130 = vmatmul.mubr.f32.gmra.mrb[0].mxu0 %v2030
    %v2131 = vpop.f32.mrb[0].mxu0
    %v2132 = vadd.f32 0.0, %v2131
    %v2133 = vpop.f32.mrb[0].mxu0
    %2134 = vmatprep.mubr.f32.mxu0 0.0
    %2135 = vmatmul.mubr.f32.gmra.mrb[0].mxu0 %v2032
    %v2136 = vpop.f32.mrb[0].mxu0
    %v2137 = vadd.f32 0.0, %v2136
    %v2138 = vpop.f32.mrb[0].mxu0
    %2139 = vmatprep.mubr.f32.mxu0 0.0
    %2140 = vmatmul.mubr.f32.gmra.mrb[0].mxu0 %v2034
    %v2141 = vpop.f32.mrb[0].mxu0
    %v2142 = vadd.f32 0.0, %v2141
    %v2143 = vpop.f32.mrb[0].mxu0
    %2144 = vmatprep.mubr.f32.mxu0 0.0
    %2145 = vmatmul.mubr.f32.gmra.mrb[0].mxu0 %v2036
    %v2146 = vpop.f32.mrb[0].mxu0
    %v2147 = vadd.f32 0.0, %v2146
    %v2148 = vpop.f32.mrb[0].mxu0
    %2149 = vmatprep.mubr.f32.mxu0 0.0
    %2150 = vmatmul.mubr.f32.gmra.mrb[0].mxu0 %v2038
    %v2151 = vpop.f32.mrb[0].mxu0
    %v2152 = vadd.f32 0.0, %v2151
    %v2153 = vpop.f32.mrb[0].mxu0
    %2154 = vmatprep.mubr.f32.mxu0 0.0
    %2155 = vmatmul.mubr.f32.gmra.mrb[0].mxu0 %v2040
    %v2156 = vpop.f32.mrb[0].mxu0
    %v2157 = vadd.f32 0.0, %v2156
    %v2158 = vpop.f32.mrb[0].mxu0
    %2159 = vmatprep.mubr.f32.mxu0 0.0
    %2160 = vmatmul.mubr.f32.gmra.mrb[0].mxu0 %v2042
    %v2161 = vpop.f32.mrb[0].mxu0
    %v2162 = vadd.f32 0.0, %v2161
    %v2163 = vpop.f32.mrb[0].mxu0
    %2164 = vdwg.mxu0
    %v2165 = vsel %vm934, %v2127, -inf
    %2166 = vmax.xlane.f32.xlu0 %v2165
    %v2167 = vpop.xlane.xlu0 %2166
    %v2168 = vsel %vm934, %v2132, -inf
    %2169 = vmax.xlane.f32.xlu0 %v2168
    %v2170 = vpop.xlane.xlu0 %2169
    %v2171 = vsel %vm934, %v2137, -inf
    %2172 = vmax.xlane.f32.xlu0 %v2171
    %v2173 = vpop.xlane.xlu0 %2172
    %v2174 = vsel %vm934, %v2142, -inf
    %2175 = vmax.xlane.f32.xlu0 %v2174
    %v2176 = vpop.xlane.xlu0 %2175
    %v2177 = vsel %vm934, %v2147, -inf
    %2178 = vmax.xlane.f32.xlu0 %v2177
    %v2179 = vpop.xlane.xlu0 %2178
    %v2180 = vsel %vm934, %v2152, -inf
    %2181 = vmax.xlane.f32.xlu0 %v2180
    %v2182 = vpop.xlane.xlu0 %2181
    %v2183 = vsel %vm934, %v2157, -inf
    %2184 = vmax.xlane.f32.xlu0 %v2183
    %v2185 = vpop.xlane.xlu0 %2184
    %v2186 = vsel %vm934, %v2162, -inf
    %2187 = vmax.xlane.f32.xlu0 %v2186
    %v2188 = vpop.xlane.xlu0 %2187
    %v2189 = vsub.f32 %v2127, %v2167
    %v2190 = vsub.f32 %v2132, %v2170
    %v2191 = vsub.f32 %v2137, %v2173
    %v2192 = vsub.f32 %v2142, %v2176
    %v2193 = vsub.f32 %v2147, %v2179
    %v2194 = vsub.f32 %v2152, %v2182
    %v2195 = vsub.f32 %v2157, %v2185
    %v2196 = vsub.f32 %v2162, %v2188
    %v2197 = vmul.f32 %v2189, 1.442695
    %v2198 = vpow.pop %v2197
    %v2199 = vmul.f32 %v2190, 1.442695
    %v2200 = vpow.pop %v2199
    %v2201 = vmul.f32 %v2191, 1.442695
    %v2202 = vpow.pop %v2201
    %v2203 = vmul.f32 %v2192, 1.442695
    %v2204 = vpow.pop %v2203
    %v2205 = vmul.f32 %v2193, 1.442695
    %v2206 = vpow.pop %v2205
    %v2207 = vmul.f32 %v2194, 1.442695
    %v2208 = vpow.pop %v2207
    %v2209 = vmul.f32 %v2195, 1.442695
    %v2210 = vpow.pop %v2209
    %v2211 = vmul.f32 %v2196, 1.442695
    %v2212 = vpow.pop %v2211
    %v2213 = vsel %vm934, %v2198, 0.0
    %2214 = vadd.xlane.f32.xlu0 %v2213
    %v2215 = vpop.xlane.xlu0 %2214
    %v2216 = vsel %vm934, %v2200, 0.0
    %2217 = vadd.xlane.f32.xlu0 %v2216
    %v2218 = vpop.xlane.xlu0 %2217
    %v2219 = vsel %vm934, %v2202, 0.0
    %2220 = vadd.xlane.f32.xlu0 %v2219
    %v2221 = vpop.xlane.xlu0 %2220
    %v2222 = vsel %vm934, %v2204, 0.0
    %2223 = vadd.xlane.f32.xlu0 %v2222
    %v2224 = vpop.xlane.xlu0 %2223
    %v2225 = vsel %vm934, %v2206, 0.0
    %2226 = vadd.xlane.f32.xlu0 %v2225
    %v2227 = vpop.xlane.xlu0 %2226
    %v2228 = vsel %vm934, %v2208, 0.0
    %2229 = vadd.xlane.f32.xlu0 %v2228
    %v2230 = vpop.xlane.xlu0 %2229
    %v2231 = vsel %vm934, %v2210, 0.0
    %2232 = vadd.xlane.f32.xlu0 %v2231
    %v2233 = vpop.xlane.xlu0 %2232
    %v2234 = vsel %vm934, %v2212, 0.0
    %2235 = vadd.xlane.f32.xlu0 %v2234
    %v2236 = vpop.xlane.xlu0 %2235
    %v2237 = vrcp.pop %v2215
    %v2238 = vrcp.pop %v2218
    %v2239 = vrcp.pop %v2221
    %v2240 = vrcp.pop %v2224
    %v2241 = vrcp.pop %v2227
    %v2242 = vrcp.pop %v2230
    %v2243 = vrcp.pop %v2233
    %v2244 = vrcp.pop %v2236
    %v2245 = vmul.f32 %v2198, %v2237
    %v2246 = vmul.f32 %v2200, %v2238
    %v2247 = vmul.f32 %v2202, %v2239
    %v2248 = vmul.f32 %v2204, %v2240
    %v2249 = vmul.f32 %v2206, %v2241
    %v2250 = vmul.f32 %v2208, %v2242
    %v2251 = vmul.f32 %v2210, %v2243
    %v2252 = vmul.f32 %v2212, %v2244
    %2253 = vrot.lane.b32.xlu0 %v671, 40
    %v2254 = vpop.permute.xlu0 %2253
    %2255 = vrot.lane.b32.xlu0 %v676, 40
    %v2256 = vpop.permute.xlu0 %2255
    %2257 = vrot.lane.b32.xlu0 %v681, 40
    %v2258 = vpop.permute.xlu0 %2257
    %2259 = vrot.lane.b32.xlu0 %v686, 40
    %v2260 = vpop.permute.xlu0 %2259
    %2261 = vrot.lane.b32.xlu0 %v691, 40
    %v2262 = vpop.permute.xlu0 %2261
    %2263 = vrot.lane.b32.xlu0 %v696, 40
    %v2264 = vpop.permute.xlu0 %2263
    %2265 = vrot.lane.b32.xlu0 %v701, 40
    %v2266 = vpop.permute.xlu0 %2265
    %2267 = vrot.lane.b32.xlu0 %v706, 40
    %v2268 = vpop.permute.xlu0 %2267
    %v2278 = vsel %vm934, %v2245, 0
    %v2281 = vsel %vm934, %v2246, 0
    %v2284 = vsel %vm934, %v2247, 0
    %v2287 = vsel %vm934, %v2248, 0
    %v2290 = vsel %vm934, %v2249, 0
    %v2293 = vsel %vm934, %v2250, 0
    %v2296 = vsel %vm934, %v2251, 0
    %v2299 = vsel %vm934, %v2252, 0
    %2301 = vmatprep.subr.mxu0 0.0
    %2302 = vmatpush1.msra.mxu0 %v2254
    %2303 = vmatprep.subr.mxu0 0.0
    %2304 = vmatpush1.msra.mxu0 %v2256
    %2305 = vmatprep.subr.mxu0 0.0
    %2306 = vmatpush1.msra.mxu0 %v2258
    %2307 = vmatprep.subr.mxu0 0.0
    %2308 = vmatpush1.msra.mxu0 %v2260
    %2309 = vmatprep.subr.mxu0 0.0
    %2310 = vmatpush1.msra.mxu0 %v2262
    %2311 = vmatprep.subr.mxu0 0.0
    %2312 = vmatpush1.msra.mxu0 %v2264
    %2313 = vmatprep.subr.mxu0 0.0
    %2314 = vmatpush1.msra.mxu0 %v2266
    %2315 = vmatprep.subr.mxu0 0.0
    %2316 = vmatpush1.msra.mxu0 %v2268
    %2317 = vmatprep.subr.mxu0 0.0
    %2318 = vmatpush1.msra.mxu0 0.0
    %2319 = vmatprep.subr.mxu0 0.0
    %2320 = vmatpush1.msra.mxu0 0.0
    %2321 = vmatprep.subr.mxu0 0.0
    %2322 = vmatpush1.msra.mxu0 0.0
    %2323 = vmatprep.subr.mxu0 0.0
    %2324 = vmatpush1.msra.mxu0 0.0
    %2325 = vmatprep.subr.mxu0 0.0
    %2326 = vmatpush1.msra.mxu0 0.0
    %2327 = vmatprep.subr.mxu0 0.0
    %2328 = vmatpush1.msra.mxu0 0.0
    %2329 = vmatprep.subr.mxu0 0.0
    %2330 = vmatpush1.msra.mxu0 0.0
    %2331 = vmatprep.subr.mxu0 0.0
    %2332 = vmatpush1.msra.mxu0 0.0
    %2333 = vmatprep.subr.mxu0 0.0
    %2334 = vmatpush1.msra.mxu0 0.0
    %2335 = vmatprep.subr.mxu0 0.0
    %2336 = vmatpush1.msra.mxu0 0.0
    %2337 = vmatprep.subr.mxu0 0.0
    %2338 = vmatpush1.msra.mxu0 0.0
    %2339 = vmatprep.subr.mxu0 0.0
    %2340 = vmatpush1.msra.mxu0 0.0
    %2341 = vmatprep.subr.mxu0 0.0
    %2342 = vmatpush1.msra.mxu0 0.0
    %2343 = vmatprep.subr.mxu0 0.0
    %2344 = vmatpush1.msra.mxu0 0.0
    %2345 = vmatprep.subr.mxu0 0.0
    %2346 = vmatpush1.msra.mxu0 0.0
    %2347 = vmatprep.subr.mxu0 0.0
    %2348 = vmatpush1.msra.mxu0 0.0
    %2349 = vmatprep.subr.mxu0 0.0
    %2350 = vmatpush1.msra.mxu0 0.0
    %2351 = vmatprep.subr.mxu0 0.0
    %2352 = vmatpush1.msra.mxu0 0.0
    %2353 = vmatprep.subr.mxu0 0.0
    %2354 = vmatpush1.msra.mxu0 0.0
    %2355 = vmatprep.subr.mxu0 0.0
    %2356 = vmatpush1.msra.mxu0 0.0
    %2357 = vmatprep.subr.mxu0 0.0
    %2358 = vmatpush1.msra.mxu0 0.0
    %2359 = vmatprep.subr.mxu0 0.0
    %2360 = vmatpush1.msra.mxu0 0.0
    %2361 = vmatprep.subr.mxu0 0.0
    %2362 = vmatpush1.msra.mxu0 0.0
    %2363 = vmatprep.subr.mxu0 0.0
    %2364 = vmatpush1.msra.mxu0 0.0
    %2365 = vmatprep.mubr.f32.mxu0 0.0
    %2366 = vmatmul.mubr.f32.gmra.mrb[0].mxu0 %v2278
    %v2367 = vpop.f32.mrb[0].mxu0
    %v2368 = vadd.f32 0.0, %v2367
    %v2369 = vpop.f32.mrb[0].mxu0
    %2370 = vmatprep.mubr.f32.mxu0 0.0
    %2371 = vmatmul.mubr.f32.gmra.mrb[0].mxu0 %v2281
    %v2372 = vpop.f32.mrb[0].mxu0
    %v2373 = vadd.f32 0.0, %v2372
    %v2374 = vpop.f32.mrb[0].mxu0
    %2375 = vmatprep.mubr.f32.mxu0 0.0
    %2376 = vmatmul.mubr.f32.gmra.mrb[0].mxu0 %v2284
    %v2377 = vpop.f32.mrb[0].mxu0
    %v2378 = vadd.f32 0.0, %v2377
    %v2379 = vpop.f32.mrb[0].mxu0
    %2380 = vmatprep.mubr.f32.mxu0 0.0
    %2381 = vmatmul.mubr.f32.gmra.mrb[0].mxu0 %v2287
    %v2382 = vpop.f32.mrb[0].mxu0
    %v2383 = vadd.f32 0.0, %v2382
    %v2384 = vpop.f32.mrb[0].mxu0
    %2385 = vmatprep.mubr.f32.mxu0 0.0
    %2386 = vmatmul.mubr.f32.gmra.mrb[0].mxu0 %v2290
    %v2387 = vpop.f32.mrb[0].mxu0
    %v2388 = vadd.f32 0.0, %v2387
    %v2389 = vpop.f32.mrb[0].mxu0
    %2390 = vmatprep.mubr.f32.mxu0 0.0
    %2391 = vmatmul.mubr.f32.gmra.mrb[0].mxu0 %v2293
    %v2392 = vpop.f32.mrb[0].mxu0
    %v2393 = vadd.f32 0.0, %v2392
    %v2394 = vpop.f32.mrb[0].mxu0
    %2395 = vmatprep.mubr.f32.mxu0 0.0
    %2396 = vmatmul.mubr.f32.gmra.mrb[0].mxu0 %v2296
    %v2397 = vpop.f32.mrb[0].mxu0
    %v2398 = vadd.f32 0.0, %v2397
    %v2399 = vpop.f32.mrb[0].mxu0
    %2400 = vmatprep.mubr.f32.mxu0 0.0
    %2401 = vmatmul.mubr.f32.gmra.mrb[0].mxu0 %v2299
    %v2402 = vpop.f32.mrb[0].mxu0
    %v2403 = vadd.f32 0.0, %v2402
    %v2404 = vpop.f32.mrb[0].mxu0
    %2405 = vdwg.mxu0
    %2414 = vrot.lane.b32.xlu0 %v1548, 8
    %v2415 = vpop.permute.xlu0 %2414
    %2416 = vrot.lane.b32.xlu0 %v1553, 8
    %v2417 = vpop.permute.xlu0 %2416
    %2418 = vrot.lane.b32.xlu0 %v1558, 8
    %v2419 = vpop.permute.xlu0 %2418
    %2420 = vrot.lane.b32.xlu0 %v1563, 8
    %v2421 = vpop.permute.xlu0 %2420
    %2422 = vrot.lane.b32.xlu0 %v1568, 8
    %v2423 = vpop.permute.xlu0 %2422
    %2424 = vrot.lane.b32.xlu0 %v1573, 8
    %v2425 = vpop.permute.xlu0 %2424
    %2426 = vrot.lane.b32.xlu0 %v1578, 8
    %v2427 = vpop.permute.xlu0 %2426
    %2428 = vrot.lane.b32.xlu0 %v1583, 8
    %v2429 = vpop.permute.xlu0 %2428
    %2446 = vrot.lane.b32.xlu0 %v1958, 16
    %v2447 = vpop.permute.xlu0 %2446
    %2448 = vrot.lane.b32.xlu0 %v1963, 16
    %v2449 = vpop.permute.xlu0 %2448
    %2450 = vrot.lane.b32.xlu0 %v1968, 16
    %v2451 = vpop.permute.xlu0 %2450
    %2452 = vrot.lane.b32.xlu0 %v1973, 16
    %v2453 = vpop.permute.xlu0 %2452
    %2454 = vrot.lane.b32.xlu0 %v1978, 16
    %v2455 = vpop.permute.xlu0 %2454
    %2456 = vrot.lane.b32.xlu0 %v1983, 16
    %v2457 = vpop.permute.xlu0 %2456
    %2458 = vrot.lane.b32.xlu0 %v1988, 16
    %v2459 = vpop.permute.xlu0 %2458
    %2460 = vrot.lane.b32.xlu0 %v1993, 16
    %v2461 = vpop.permute.xlu0 %2460
    %2478 = vrot.lane.b32.xlu0 %v2368, 24
    %v2479 = vpop.permute.xlu0 %2478
    %2480 = vrot.lane.b32.xlu0 %v2373, 24
    %v2481 = vpop.permute.xlu0 %2480
    %2482 = vrot.lane.b32.xlu0 %v2378, 24
    %v2483 = vpop.permute.xlu0 %2482
    %2484 = vrot.lane.b32.xlu0 %v2383, 24
    %v2485 = vpop.permute.xlu0 %2484
    %2486 = vrot.lane.b32.xlu0 %v2388, 24
    %v2487 = vpop.permute.xlu0 %2486
    %2488 = vrot.lane.b32.xlu0 %v2393, 24
    %v2489 = vpop.permute.xlu0 %2488
    %2490 = vrot.lane.b32.xlu0 %v2398, 24
    %v2491 = vpop.permute.xlu0 %2490
    %2492 = vrot.lane.b32.xlu0 %v2403, 24
    %v2493 = vpop.permute.xlu0 %2492
    %v2502 = vsel %vm51, %v1138, %v2415
    %v2503 = vsel %vm51, %v1143, %v2417
    %v2504 = vsel %vm51, %v1148, %v2419
    %v2505 = vsel %vm51, %v1153, %v2421
    %v2506 = vsel %vm51, %v1158, %v2423
    %v2507 = vsel %vm51, %v1163, %v2425
    %v2508 = vsel %vm51, %v1168, %v2427
    %v2509 = vsel %vm51, %v1173, %v2429
    %vm2510 = vcmask 130048
    %v2511 = vsel %vm2510, %v2502, %v2447
    %v2512 = vsel %vm2510, %v2503, %v2449
    %v2513 = vsel %vm2510, %v2504, %v2451
    %v2514 = vsel %vm2510, %v2505, %v2453
    %v2515 = vsel %vm2510, %v2506, %v2455
    %v2516 = vsel %vm2510, %v2507, %v2457
    %v2517 = vsel %vm2510, %v2508, %v2459
    %v2518 = vsel %vm2510, %v2509, %v2461
    %vm2519 = vcmask 195584
    %v2520 = vsel %vm2519, %v2511, %v2479
    %v2521 = vsel %vm2519, %v2512, %v2481
    %v2522 = vsel %vm2519, %v2513, %v2483
    %v2523 = vsel %vm2519, %v2514, %v2485
    %v2524 = vsel %vm2519, %v2515, %v2487
    %v2525 = vsel %vm2519, %v2516, %v2489
    %v2526 = vsel %vm2519, %v2517, %v2491
    %v2527 = vsel %vm2519, %v2518, %v2493
    %2536 = vrot.lane.b32.xlu0 %v711, 96
    %v2537 = vpop.permute.xlu0 %2536
    %2538 = vrot.lane.b32.xlu0 %v716, 96
    %v2539 = vpop.permute.xlu0 %2538
    %2540 = vrot.lane.b32.xlu0 %v721, 96
    %v2541 = vpop.permute.xlu0 %2540
    %2542 = vrot.lane.b32.xlu0 %v726, 96
    %v2543 = vpop.permute.xlu0 %2542
    %2544 = vrot.lane.b32.xlu0 %v731, 96
    %v2545 = vpop.permute.xlu0 %2544
    %2546 = vrot.lane.b32.xlu0 %v736, 96
    %v2547 = vpop.permute.xlu0 %2546
    %2548 = vrot.lane.b32.xlu0 %v741, 96
    %v2549 = vpop.permute.xlu0 %2548
    %2550 = vrot.lane.b32.xlu0 %v746, 96
    %v2551 = vpop.permute.xlu0 %2550
    %v2553 = vsel %vm51, %v757, 0
    %v2556 = vsel %vm51, %v758, 0
    %v2559 = vsel %vm51, %v759, 0
    %v2562 = vsel %vm51, %v760, 0
    %v2565 = vsel %vm51, %v761, 0
    %v2568 = vsel %vm51, %v762, 0
    %v2571 = vsel %vm51, %v763, 0
    %v2574 = vsel %vm51, %v764, 0
    %v2576 = vsel %vm51, %v2537, 0
    %v2578 = vsel %vm51, %v2539, 0
    %v2580 = vsel %vm51, %v2541, 0
    %v2582 = vsel %vm51, %v2543, 0
    %v2584 = vsel %vm51, %v2545, 0
    %v2586 = vsel %vm51, %v2547, 0
    %v2588 = vsel %vm51, %v2549, 0
    %v2590 = vsel %vm51, %v2551, 0
    %2592 = vmatprep.subr.mxu0 0.0
    %2593 = vmatpush1.xpose.msra.mxu0 %v2576
    %2594 = vmatprep.subr.mxu0 0.0
    %2595 = vmatpush1.xpose.msra.mxu0 %v2578
    %2596 = vmatprep.subr.mxu0 0.0
    %2597 = vmatpush1.xpose.msra.mxu0 %v2580
    %2598 = vmatprep.subr.mxu0 0.0
    %2599 = vmatpush1.xpose.msra.mxu0 %v2582
    %2600 = vmatprep.subr.mxu0 0.0
    %2601 = vmatpush1.xpose.msra.mxu0 %v2584
    %2602 = vmatprep.subr.mxu0 0.0
    %2603 = vmatpush1.xpose.msra.mxu0 %v2586
    %2604 = vmatprep.subr.mxu0 0.0
    %2605 = vmatpush1.xpose.msra.mxu0 %v2588
    %2606 = vmatprep.subr.mxu0 0.0
    %2607 = vmatpush1.xpose.msra.mxu0 %v2590
    %2608 = vmatprep.subr.mxu0 0.0
    %2609 = vmatpush1.xpose.msra.mxu0 0.0
    %2610 = vmatprep.subr.mxu0 0.0
    %2611 = vmatpush1.xpose.msra.mxu0 0.0
    %2612 = vmatprep.subr.mxu0 0.0
    %2613 = vmatpush1.xpose.msra.mxu0 0.0
    %2614 = vmatprep.subr.mxu0 0.0
    %2615 = vmatpush1.xpose.msra.mxu0 0.0
    %2616 = vmatprep.subr.mxu0 0.0
    %2617 = vmatpush1.xpose.msra.mxu0 0.0
    %2618 = vmatprep.subr.mxu0 0.0
    %2619 = vmatpush1.xpose.msra.mxu0 0.0
    %2620 = vmatprep.subr.mxu0 0.0
    %2621 = vmatpush1.xpose.msra.mxu0 0.0
    %2622 = vmatprep.subr.mxu0 0.0
    %2623 = vmatpush1.xpose.msra.mxu0 0.0
    %2624 = vmatprep.subr.mxu0 0.0
    %2625 = vmatpush1.xpose.msra.mxu0 0.0
    %2626 = vmatprep.subr.mxu0 0.0
    %2627 = vmatpush1.xpose.msra.mxu0 0.0
    %2628 = vmatprep.subr.mxu0 0.0
    %2629 = vmatpush1.xpose.msra.mxu0 0.0
    %2630 = vmatprep.subr.mxu0 0.0
    %2631 = vmatpush1.xpose.msra.mxu0 0.0
    %2632 = vmatprep.subr.mxu0 0.0
    %2633 = vmatpush1.xpose.msra.mxu0 0.0
    %2634 = vmatprep.subr.mxu0 0.0
    %2635 = vmatpush1.xpose.msra.mxu0 0.0
    %2636 = vmatprep.subr.mxu0 0.0
    %2637 = vmatpush1.xpose.msra.mxu0 0.0
    %2638 = vmatprep.subr.mxu0 0.0
    %2639 = vmatpush1.xpose.msra.mxu0 0.0
    %2640 = vmatprep.subr.mxu0 0.0
    %2641 = vmatpush1.xpose.msra.mxu0 0.0
    %2642 = vmatprep.subr.mxu0 0.0
    %2643 = vmatpush1.xpose.msra.mxu0 0.0
    %2644 = vmatprep.subr.mxu0 0.0
    %2645 = vmatpush1.xpose.msra.mxu0 0.0
    %2646 = vmatprep.subr.mxu0 0.0
    %2647 = vmatpush1.xpose.msra.mxu0 0.0
    %2648 = vmatprep.subr.mxu0 0.0
    %2649 = vmatpush1.xpose.msra.mxu0 0.0
    %2650 = vmatprep.subr.mxu0 0.0
    %2651 = vmatpush1.xpose.msra.mxu0 0.0
    %2652 = vmatprep.subr.mxu0 0.0
    %2653 = vmatpush1.xpose.msra.mxu0 0.0
    %2654 = vmatprep.subr.mxu0 0.0
    %2655 = vmatpush1.xpose.msra.mxu0 0.0
    %2656 = vmatprep.mubr.f32.mxu0 0.0
    %2657 = vmatmul.mubr.f32.gmra.mrb[0].mxu0 %v2553
    %v2658 = vpop.f32.mrb[0].mxu0
    %v2659 = vadd.f32 0.0, %v2658
    %v2660 = vpop.f32.mrb[0].mxu0
    %2661 = vmatprep.mubr.f32.mxu0 0.0
    %2662 = vmatmul.mubr.f32.gmra.mrb[0].mxu0 %v2556
    %v2663 = vpop.f32.mrb[0].mxu0
    %v2664 = vadd.f32 0.0, %v2663
    %v2665 = vpop.f32.mrb[0].mxu0
    %2666 = vmatprep.mubr.f32.mxu0 0.0
    %2667 = vmatmul.mubr.f32.gmra.mrb[0].mxu0 %v2559
    %v2668 = vpop.f32.mrb[0].mxu0
    %v2669 = vadd.f32 0.0, %v2668
    %v2670 = vpop.f32.mrb[0].mxu0
    %2671 = vmatprep.mubr.f32.mxu0 0.0
    %2672 = vmatmul.mubr.f32.gmra.mrb[0].mxu0 %v2562
    %v2673 = vpop.f32.mrb[0].mxu0
    %v2674 = vadd.f32 0.0, %v2673
    %v2675 = vpop.f32.mrb[0].mxu0
    %2676 = vmatprep.mubr.f32.mxu0 0.0
    %2677 = vmatmul.mubr.f32.gmra.mrb[0].mxu0 %v2565
    %v2678 = vpop.f32.mrb[0].mxu0
    %v2679 = vadd.f32 0.0, %v2678
    %v2680 = vpop.f32.mrb[0].mxu0
    %2681 = vmatprep.mubr.f32.mxu0 0.0
    %2682 = vmatmul.mubr.f32.gmra.mrb[0].mxu0 %v2568
    %v2683 = vpop.f32.mrb[0].mxu0
    %v2684 = vadd.f32 0.0, %v2683
    %v2685 = vpop.f32.mrb[0].mxu0
    %2686 = vmatprep.mubr.f32.mxu0 0.0
    %2687 = vmatmul.mubr.f32.gmra.mrb[0].mxu0 %v2571
    %v2688 = vpop.f32.mrb[0].mxu0
    %v2689 = vadd.f32 0.0, %v2688
    %v2690 = vpop.f32.mrb[0].mxu0
    %2691 = vmatprep.mubr.f32.mxu0 0.0
    %2692 = vmatmul.mubr.f32.gmra.mrb[0].mxu0 %v2574
    %v2693 = vpop.f32.mrb[0].mxu0
    %v2694 = vadd.f32 0.0, %v2693
    %v2695 = vpop.f32.mrb[0].mxu0
    %2696 = vdwg.mxu0
    %v2697 = vsel %vm934, %v2659, -inf
    %2698 = vmax.xlane.f32.xlu0 %v2697
    %v2699 = vpop.xlane.xlu0 %2698
    %v2700 = vsel %vm934, %v2664, -inf
    %2701 = vmax.xlane.f32.xlu0 %v2700
    %v2702 = vpop.xlane.xlu0 %2701
    %v2703 = vsel %vm934, %v2669, -inf
    %2704 = vmax.xlane.f32.xlu0 %v2703
    %v2705 = vpop.xlane.xlu0 %2704
    %v2706 = vsel %vm934, %v2674, -inf
    %2707 = vmax.xlane.f32.xlu0 %v2706
    %v2708 = vpop.xlane.xlu0 %2707
    %v2709 = vsel %vm934, %v2679, -inf
    %2710 = vmax.xlane.f32.xlu0 %v2709
    %v2711 = vpop.xlane.xlu0 %2710
    %v2712 = vsel %vm934, %v2684, -inf
    %2713 = vmax.xlane.f32.xlu0 %v2712
    %v2714 = vpop.xlane.xlu0 %2713
    %v2715 = vsel %vm934, %v2689, -inf
    %2716 = vmax.xlane.f32.xlu0 %v2715
    %v2717 = vpop.xlane.xlu0 %2716
    %v2718 = vsel %vm934, %v2694, -inf
    %2719 = vmax.xlane.f32.xlu0 %v2718
    %v2720 = vpop.xlane.xlu0 %2719
    %v2721 = vsub.f32 %v2659, %v2699
    %v2722 = vsub.f32 %v2664, %v2702
    %v2723 = vsub.f32 %v2669, %v2705
    %v2724 = vsub.f32 %v2674, %v2708
    %v2725 = vsub.f32 %v2679, %v2711
    %v2726 = vsub.f32 %v2684, %v2714
    %v2727 = vsub.f32 %v2689, %v2717
    %v2728 = vsub.f32 %v2694, %v2720
    %v2729 = vmul.f32 %v2721, 1.442695
    %v2730 = vpow.pop %v2729
    %v2731 = vmul.f32 %v2722, 1.442695
    %v2732 = vpow.pop %v2731
    %v2733 = vmul.f32 %v2723, 1.442695
    %v2734 = vpow.pop %v2733
    %v2735 = vmul.f32 %v2724, 1.442695
    %v2736 = vpow.pop %v2735
    %v2737 = vmul.f32 %v2725, 1.442695
    %v2738 = vpow.pop %v2737
    %v2739 = vmul.f32 %v2726, 1.442695
    %v2740 = vpow.pop %v2739
    %v2741 = vmul.f32 %v2727, 1.442695
    %v2742 = vpow.pop %v2741
    %v2743 = vmul.f32 %v2728, 1.442695
    %v2744 = vpow.pop %v2743
    %v2745 = vsel %vm934, %v2730, 0.0
    %2746 = vadd.xlane.f32.xlu0 %v2745
    %v2747 = vpop.xlane.xlu0 %2746
    %v2748 = vsel %vm934, %v2732, 0.0
    %2749 = vadd.xlane.f32.xlu0 %v2748
    %v2750 = vpop.xlane.xlu0 %2749
    %v2751 = vsel %vm934, %v2734, 0.0
    %2752 = vadd.xlane.f32.xlu0 %v2751
    %v2753 = vpop.xlane.xlu0 %2752
    %v2754 = vsel %vm934, %v2736, 0.0
    %2755 = vadd.xlane.f32.xlu0 %v2754
    %v2756 = vpop.xlane.xlu0 %2755
    %v2757 = vsel %vm934, %v2738, 0.0
    %2758 = vadd.xlane.f32.xlu0 %v2757
    %v2759 = vpop.xlane.xlu0 %2758
    %v2760 = vsel %vm934, %v2740, 0.0
    %2761 = vadd.xlane.f32.xlu0 %v2760
    %v2762 = vpop.xlane.xlu0 %2761
    %v2763 = vsel %vm934, %v2742, 0.0
    %2764 = vadd.xlane.f32.xlu0 %v2763
    %v2765 = vpop.xlane.xlu0 %2764
    %v2766 = vsel %vm934, %v2744, 0.0
    %2767 = vadd.xlane.f32.xlu0 %v2766
    %v2768 = vpop.xlane.xlu0 %2767
    %v2769 = vrcp.pop %v2747
    %v2770 = vrcp.pop %v2750
    %v2771 = vrcp.pop %v2753
    %v2772 = vrcp.pop %v2756
    %v2773 = vrcp.pop %v2759
    %v2774 = vrcp.pop %v2762
    %v2775 = vrcp.pop %v2765
    %v2776 = vrcp.pop %v2768
    %v2777 = vmul.f32 %v2730, %v2769
    %v2778 = vmul.f32 %v2732, %v2770
    %v2779 = vmul.f32 %v2734, %v2771
    %v2780 = vmul.f32 %v2736, %v2772
    %v2781 = vmul.f32 %v2738, %v2773
    %v2782 = vmul.f32 %v2740, %v2774
    %v2783 = vmul.f32 %v2742, %v2775
    %v2784 = vmul.f32 %v2744, %v2776
    %2785 = vrot.lane.b32.xlu0 %v711, 64
    %v2786 = vpop.permute.xlu0 %2785
    %2787 = vrot.lane.b32.xlu0 %v716, 64
    %v2788 = vpop.permute.xlu0 %2787
    %2789 = vrot.lane.b32.xlu0 %v721, 64
    %v2790 = vpop.permute.xlu0 %2789
    %2791 = vrot.lane.b32.xlu0 %v726, 64
    %v2792 = vpop.permute.xlu0 %2791
    %2793 = vrot.lane.b32.xlu0 %v731, 64
    %v2794 = vpop.permute.xlu0 %2793
    %2795 = vrot.lane.b32.xlu0 %v736, 64
    %v2796 = vpop.permute.xlu0 %2795
    %2797 = vrot.lane.b32.xlu0 %v741, 64
    %v2798 = vpop.permute.xlu0 %2797
    %2799 = vrot.lane.b32.xlu0 %v746, 64
    %v2800 = vpop.permute.xlu0 %2799
    %v2810 = vsel %vm934, %v2777, 0
    %v2813 = vsel %vm934, %v2778, 0
    %v2816 = vsel %vm934, %v2779, 0
    %v2819 = vsel %vm934, %v2780, 0
    %v2822 = vsel %vm934, %v2781, 0
    %v2825 = vsel %vm934, %v2782, 0
    %v2828 = vsel %vm934, %v2783, 0
    %v2831 = vsel %vm934, %v2784, 0
    %2833 = vmatprep.subr.mxu0 0.0
    %2834 = vmatpush1.msra.mxu0 %v2786
    %2835 = vmatprep.subr.mxu0 0.0
    %2836 = vmatpush1.msra.mxu0 %v2788
    %2837 = vmatprep.subr.mxu0 0.0
    %2838 = vmatpush1.msra.mxu0 %v2790
    %2839 = vmatprep.subr.mxu0 0.0
    %2840 = vmatpush1.msra.mxu0 %v2792
    %2841 = vmatprep.subr.mxu0 0.0
    %2842 = vmatpush1.msra.mxu0 %v2794
    %2843 = vmatprep.subr.mxu0 0.0
    %2844 = vmatpush1.msra.mxu0 %v2796
    %2845 = vmatprep.subr.mxu0 0.0
    %2846 = vmatpush1.msra.mxu0 %v2798
    %2847 = vmatprep.subr.mxu0 0.0
    %2848 = vmatpush1.msra.mxu0 %v2800
    %2849 = vmatprep.subr.mxu0 0.0
    %2850 = vmatpush1.msra.mxu0 0.0
    %2851 = vmatprep.subr.mxu0 0.0
    %2852 = vmatpush1.msra.mxu0 0.0
    %2853 = vmatprep.subr.mxu0 0.0
    %2854 = vmatpush1.msra.mxu0 0.0
    %2855 = vmatprep.subr.mxu0 0.0
    %2856 = vmatpush1.msra.mxu0 0.0
    %2857 = vmatprep.subr.mxu0 0.0
    %2858 = vmatpush1.msra.mxu0 0.0
    %2859 = vmatprep.subr.mxu0 0.0
    %2860 = vmatpush1.msra.mxu0 0.0
    %2861 = vmatprep.subr.mxu0 0.0
    %2862 = vmatpush1.msra.mxu0 0.0
    %2863 = vmatprep.subr.mxu0 0.0
    %2864 = vmatpush1.msra.mxu0 0.0
    %2865 = vmatprep.subr.mxu0 0.0
    %2866 = vmatpush1.msra.mxu0 0.0
    %2867 = vmatprep.subr.mxu0 0.0
    %2868 = vmatpush1.msra.mxu0 0.0
    %2869 = vmatprep.subr.mxu0 0.0
    %2870 = vmatpush1.msra.mxu0 0.0
    %2871 = vmatprep.subr.mxu0 0.0
    %2872 = vmatpush1.msra.mxu0 0.0
    %2873 = vmatprep.subr.mxu0 0.0
    %2874 = vmatpush1.msra.mxu0 0.0
    %2875 = vmatprep.subr.mxu0 0.0
    %2876 = vmatpush1.msra.mxu0 0.0
    %2877 = vmatprep.subr.mxu0 0.0
    %2878 = vmatpush1.msra.mxu0 0.0
    %2879 = vmatprep.subr.mxu0 0.0
    %2880 = vmatpush1.msra.mxu0 0.0
    %2881 = vmatprep.subr.mxu0 0.0
    %2882 = vmatpush1.msra.mxu0 0.0
    %2883 = vmatprep.subr.mxu0 0.0
    %2884 = vmatpush1.msra.mxu0 0.0
    %2885 = vmatprep.subr.mxu0 0.0
    %2886 = vmatpush1.msra.mxu0 0.0
    %2887 = vmatprep.subr.mxu0 0.0
    %2888 = vmatpush1.msra.mxu0 0.0
    %2889 = vmatprep.subr.mxu0 0.0
    %2890 = vmatpush1.msra.mxu0 0.0
    %2891 = vmatprep.subr.mxu0 0.0
    %2892 = vmatpush1.msra.mxu0 0.0
    %2893 = vmatprep.subr.mxu0 0.0
    %2894 = vmatpush1.msra.mxu0 0.0
    %2895 = vmatprep.subr.mxu0 0.0
    %2896 = vmatpush1.msra.mxu0 0.0
    %2897 = vmatprep.mubr.f32.mxu0 0.0
    %2898 = vmatmul.mubr.f32.gmra.mrb[0].mxu0 %v2810
    %v2899 = vpop.f32.mrb[0].mxu0
    %v2900 = vadd.f32 0.0, %v2899
    %v2901 = vpop.f32.mrb[0].mxu0
    %2902 = vmatprep.mubr.f32.mxu0 0.0
    %2903 = vmatmul.mubr.f32.gmra.mrb[0].mxu0 %v2813
    %v2904 = vpop.f32.mrb[0].mxu0
    %v2905 = vadd.f32 0.0, %v2904
    %v2906 = vpop.f32.mrb[0].mxu0
    %2907 = vmatprep.mubr.f32.mxu0 0.0
    %2908 = vmatmul.mubr.f32.gmra.mrb[0].mxu0 %v2816
    %v2909 = vpop.f32.mrb[0].mxu0
    %v2910 = vadd.f32 0.0, %v2909
    %v2911 = vpop.f32.mrb[0].mxu0
    %2912 = vmatprep.mubr.f32.mxu0 0.0
    %2913 = vmatmul.mubr.f32.gmra.mrb[0].mxu0 %v2819
    %v2914 = vpop.f32.mrb[0].mxu0
    %v2915 = vadd.f32 0.0, %v2914
    %v2916 = vpop.f32.mrb[0].mxu0
    %2917 = vmatprep.mubr.f32.mxu0 0.0
    %2918 = vmatmul.mubr.f32.gmra.mrb[0].mxu0 %v2822
    %v2919 = vpop.f32.mrb[0].mxu0
    %v2920 = vadd.f32 0.0, %v2919
    %v2921 = vpop.f32.mrb[0].mxu0
    %2922 = vmatprep.mubr.f32.mxu0 0.0
    %2923 = vmatmul.mubr.f32.gmra.mrb[0].mxu0 %v2825
    %v2924 = vpop.f32.mrb[0].mxu0
    %v2925 = vadd.f32 0.0, %v2924
    %v2926 = vpop.f32.mrb[0].mxu0
    %2927 = vmatprep.mubr.f32.mxu0 0.0
    %2928 = vmatmul.mubr.f32.gmra.mrb[0].mxu0 %v2828
    %v2929 = vpop.f32.mrb[0].mxu0
    %v2930 = vadd.f32 0.0, %v2929
    %v2931 = vpop.f32.mrb[0].mxu0
    %2932 = vmatprep.mubr.f32.mxu0 0.0
    %2933 = vmatmul.mubr.f32.gmra.mrb[0].mxu0 %v2831
    %v2934 = vpop.f32.mrb[0].mxu0
    %v2935 = vadd.f32 0.0, %v2934
    %v2936 = vpop.f32.mrb[0].mxu0
    %2937 = vdwg.mxu0
    %2938 = vrot.lane.b32.xlu0 %v757, 120
    %v2939 = vpop.permute.xlu0 %2938
    %2940 = vrot.lane.b32.xlu0 %v758, 120
    %v2941 = vpop.permute.xlu0 %2940
    %2942 = vrot.lane.b32.xlu0 %v759, 120
    %v2943 = vpop.permute.xlu0 %2942
    %2944 = vrot.lane.b32.xlu0 %v760, 120
    %v2945 = vpop.permute.xlu0 %2944
    %2946 = vrot.lane.b32.xlu0 %v761, 120
    %v2947 = vpop.permute.xlu0 %2946
    %2948 = vrot.lane.b32.xlu0 %v762, 120
    %v2949 = vpop.permute.xlu0 %2948
    %2950 = vrot.lane.b32.xlu0 %v763, 120
    %v2951 = vpop.permute.xlu0 %2950
    %2952 = vrot.lane.b32.xlu0 %v764, 120
    %v2953 = vpop.permute.xlu0 %2952
    %2954 = vrot.lane.b32.xlu0 %v711, 88
    %v2955 = vpop.permute.xlu0 %2954
    %2956 = vrot.lane.b32.xlu0 %v716, 88
    %v2957 = vpop.permute.xlu0 %2956
    %2958 = vrot.lane.b32.xlu0 %v721, 88
    %v2959 = vpop.permute.xlu0 %2958
    %2960 = vrot.lane.b32.xlu0 %v726, 88
    %v2961 = vpop.permute.xlu0 %2960
    %2962 = vrot.lane.b32.xlu0 %v731, 88
    %v2963 = vpop.permute.xlu0 %2962
    %2964 = vrot.lane.b32.xlu0 %v736, 88
    %v2965 = vpop.permute.xlu0 %2964
    %2966 = vrot.lane.b32.xlu0 %v741, 88
    %v2967 = vpop.permute.xlu0 %2966
    %2968 = vrot.lane.b32.xlu0 %v746, 88
    %v2969 = vpop.permute.xlu0 %2968
    %v2970 = vsel %vm51, %v2939, 0
    %v2972 = vsel %vm51, %v2941, 0
    %v2974 = vsel %vm51, %v2943, 0
    %v2976 = vsel %vm51, %v2945, 0
    %v2978 = vsel %vm51, %v2947, 0
    %v2980 = vsel %vm51, %v2949, 0
    %v2982 = vsel %vm51, %v2951, 0
    %v2984 = vsel %vm51, %v2953, 0
    %v2986 = vsel %vm51, %v2955, 0
    %v2988 = vsel %vm51, %v2957, 0
    %v2990 = vsel %vm51, %v2959, 0
    %v2992 = vsel %vm51, %v2961, 0
    %v2994 = vsel %vm51, %v2963, 0
    %v2996 = vsel %vm51, %v2965, 0
    %v2998 = vsel %vm51, %v2967, 0
    %v3000 = vsel %vm51, %v2969, 0
    %3002 = vmatprep.subr.mxu0 0.0
    %3003 = vmatpush1.xpose.msra.mxu0 %v2986
    %3004 = vmatprep.subr.mxu0 0.0
    %3005 = vmatpush1.xpose.msra.mxu0 %v2988
    %3006 = vmatprep.subr.mxu0 0.0
    %3007 = vmatpush1.xpose.msra.mxu0 %v2990
    %3008 = vmatprep.subr.mxu0 0.0
    %3009 = vmatpush1.xpose.msra.mxu0 %v2992
    %3010 = vmatprep.subr.mxu0 0.0
    %3011 = vmatpush1.xpose.msra.mxu0 %v2994
    %3012 = vmatprep.subr.mxu0 0.0
    %3013 = vmatpush1.xpose.msra.mxu0 %v2996
    %3014 = vmatprep.subr.mxu0 0.0
    %3015 = vmatpush1.xpose.msra.mxu0 %v2998
    %3016 = vmatprep.subr.mxu0 0.0
    %3017 = vmatpush1.xpose.msra.mxu0 %v3000
    %3018 = vmatprep.subr.mxu0 0.0
    %3019 = vmatpush1.xpose.msra.mxu0 0.0
    %3020 = vmatprep.subr.mxu0 0.0
    %3021 = vmatpush1.xpose.msra.mxu0 0.0
    %3022 = vmatprep.subr.mxu0 0.0
    %3023 = vmatpush1.xpose.msra.mxu0 0.0
    %3024 = vmatprep.subr.mxu0 0.0
    %3025 = vmatpush1.xpose.msra.mxu0 0.0
    %3026 = vmatprep.subr.mxu0 0.0
    %3027 = vmatpush1.xpose.msra.mxu0 0.0
    %3028 = vmatprep.subr.mxu0 0.0
    %3029 = vmatpush1.xpose.msra.mxu0 0.0
    %3030 = vmatprep.subr.mxu0 0.0
    %3031 = vmatpush1.xpose.msra.mxu0 0.0
    %3032 = vmatprep.subr.mxu0 0.0
    %3033 = vmatpush1.xpose.msra.mxu0 0.0
    %3034 = vmatprep.subr.mxu0 0.0
    %3035 = vmatpush1.xpose.msra.mxu0 0.0
    %3036 = vmatprep.subr.mxu0 0.0
    %3037 = vmatpush1.xpose.msra.mxu0 0.0
    %3038 = vmatprep.subr.mxu0 0.0
    %3039 = vmatpush1.xpose.msra.mxu0 0.0
    %3040 = vmatprep.subr.mxu0 0.0
    %3041 = vmatpush1.xpose.msra.mxu0 0.0
    %3042 = vmatprep.subr.mxu0 0.0
    %3043 = vmatpush1.xpose.msra.mxu0 0.0
    %3044 = vmatprep.subr.mxu0 0.0
    %3045 = vmatpush1.xpose.msra.mxu0 0.0
    %3046 = vmatprep.subr.mxu0 0.0
    %3047 = vmatpush1.xpose.msra.mxu0 0.0
    %3048 = vmatprep.subr.mxu0 0.0
    %3049 = vmatpush1.xpose.msra.mxu0 0.0
    %3050 = vmatprep.subr.mxu0 0.0
    %3051 = vmatpush1.xpose.msra.mxu0 0.0
    %3052 = vmatprep.subr.mxu0 0.0
    %3053 = vmatpush1.xpose.msra.mxu0 0.0
    %3054 = vmatprep.subr.mxu0 0.0
    %3055 = vmatpush1.xpose.msra.mxu0 0.0
    %3056 = vmatprep.subr.mxu0 0.0
    %3057 = vmatpush1.xpose.msra.mxu0 0.0
    %3058 = vmatprep.subr.mxu0 0.0
    %3059 = vmatpush1.xpose.msra.mxu0 0.0
    %3060 = vmatprep.subr.mxu0 0.0
    %3061 = vmatpush1.xpose.msra.mxu0 0.0
    %3062 = vmatprep.subr.mxu0 0.0
    %3063 = vmatpush1.xpose.msra.mxu0 0.0
    %3064 = vmatprep.subr.mxu0 0.0
    %3065 = vmatpush1.xpose.msra.mxu0 0.0
    %3066 = vmatprep.mubr.f32.mxu0 0.0
    %3067 = vmatmul.mubr.f32.gmra.mrb[0].mxu0 %v2970
    %v3068 = vpop.f32.mrb[0].mxu0
    %v3069 = vadd.f32 0.0, %v3068
    %v3070 = vpop.f32.mrb[0].mxu0
    %3071 = vmatprep.mubr.f32.mxu0 0.0
    %3072 = vmatmul.mubr.f32.gmra.mrb[0].mxu0 %v2972
    %v3073 = vpop.f32.mrb[0].mxu0
    %v3074 = vadd.f32 0.0, %v3073
    %v3075 = vpop.f32.mrb[0].mxu0
    %3076 = vmatprep.mubr.f32.mxu0 0.0
    %3077 = vmatmul.mubr.f32.gmra.mrb[0].mxu0 %v2974
    %v3078 = vpop.f32.mrb[0].mxu0
    %v3079 = vadd.f32 0.0, %v3078
    %v3080 = vpop.f32.mrb[0].mxu0
    %3081 = vmatprep.mubr.f32.mxu0 0.0
    %3082 = vmatmul.mubr.f32.gmra.mrb[0].mxu0 %v2976
    %v3083 = vpop.f32.mrb[0].mxu0
    %v3084 = vadd.f32 0.0, %v3083
    %v3085 = vpop.f32.mrb[0].mxu0
    %3086 = vmatprep.mubr.f32.mxu0 0.0
    %3087 = vmatmul.mubr.f32.gmra.mrb[0].mxu0 %v2978
    %v3088 = vpop.f32.mrb[0].mxu0
    %v3089 = vadd.f32 0.0, %v3088
    %v3090 = vpop.f32.mrb[0].mxu0
    %3091 = vmatprep.mubr.f32.mxu0 0.0
    %3092 = vmatmul.mubr.f32.gmra.mrb[0].mxu0 %v2980
    %v3093 = vpop.f32.mrb[0].mxu0
    %v3094 = vadd.f32 0.0, %v3093
    %v3095 = vpop.f32.mrb[0].mxu0
    %3096 = vmatprep.mubr.f32.mxu0 0.0
    %3097 = vmatmul.mubr.f32.gmra.mrb[0].mxu0 %v2982
    %v3098 = vpop.f32.mrb[0].mxu0
    %v3099 = vadd.f32 0.0, %v3098
    %v3100 = vpop.f32.mrb[0].mxu0
    %3101 = vmatprep.mubr.f32.mxu0 0.0
    %3102 = vmatmul.mubr.f32.gmra.mrb[0].mxu0 %v2984
    %v3103 = vpop.f32.mrb[0].mxu0
    %v3104 = vadd.f32 0.0, %v3103
    %v3105 = vpop.f32.mrb[0].mxu0
    %3106 = vdwg.mxu0
    %v3107 = vsel %vm934, %v3069, -inf
    %3108 = vmax.xlane.f32.xlu0 %v3107
    %v3109 = vpop.xlane.xlu0 %3108
    %v3110 = vsel %vm934, %v3074, -inf
    %3111 = vmax.xlane.f32.xlu0 %v3110
    %v3112 = vpop.xlane.xlu0 %3111
    %v3113 = vsel %vm934, %v3079, -inf
    %3114 = vmax.xlane.f32.xlu0 %v3113
    %v3115 = vpop.xlane.xlu0 %3114
    %v3116 = vsel %vm934, %v3084, -inf
    %3117 = vmax.xlane.f32.xlu0 %v3116
    %v3118 = vpop.xlane.xlu0 %3117
    %v3119 = vsel %vm934, %v3089, -inf
    %3120 = vmax.xlane.f32.xlu0 %v3119
    %v3121 = vpop.xlane.xlu0 %3120
    %v3122 = vsel %vm934, %v3094, -inf
    %3123 = vmax.xlane.f32.xlu0 %v3122
    %v3124 = vpop.xlane.xlu0 %3123
    %v3125 = vsel %vm934, %v3099, -inf
    %3126 = vmax.xlane.f32.xlu0 %v3125
    %v3127 = vpop.xlane.xlu0 %3126
    %v3128 = vsel %vm934, %v3104, -inf
    %3129 = vmax.xlane.f32.xlu0 %v3128
    %v3130 = vpop.xlane.xlu0 %3129
    %v3131 = vsub.f32 %v3069, %v3109
    %v3132 = vsub.f32 %v3074, %v3112
    %v3133 = vsub.f32 %v3079, %v3115
    %v3134 = vsub.f32 %v3084, %v3118
    %v3135 = vsub.f32 %v3089, %v3121
    %v3136 = vsub.f32 %v3094, %v3124
    %v3137 = vsub.f32 %v3099, %v3127
    %v3138 = vsub.f32 %v3104, %v3130
    %v3139 = vmul.f32 %v3131, 1.442695
    %v3140 = vpow.pop %v3139
    %v3141 = vmul.f32 %v3132, 1.442695
    %v3142 = vpow.pop %v3141
    %v3143 = vmul.f32 %v3133, 1.442695
    %v3144 = vpow.pop %v3143
    %v3145 = vmul.f32 %v3134, 1.442695
    %v3146 = vpow.pop %v3145
    %v3147 = vmul.f32 %v3135, 1.442695
    %v3148 = vpow.pop %v3147
    %v3149 = vmul.f32 %v3136, 1.442695
    %v3150 = vpow.pop %v3149
    %v3151 = vmul.f32 %v3137, 1.442695
    %v3152 = vpow.pop %v3151
    %v3153 = vmul.f32 %v3138, 1.442695
    %v3154 = vpow.pop %v3153
    %v3155 = vsel %vm934, %v3140, 0.0
    %3156 = vadd.xlane.f32.xlu0 %v3155
    %v3157 = vpop.xlane.xlu0 %3156
    %v3158 = vsel %vm934, %v3142, 0.0
    %3159 = vadd.xlane.f32.xlu0 %v3158
    %v3160 = vpop.xlane.xlu0 %3159
    %v3161 = vsel %vm934, %v3144, 0.0
    %3162 = vadd.xlane.f32.xlu0 %v3161
    %v3163 = vpop.xlane.xlu0 %3162
    %v3164 = vsel %vm934, %v3146, 0.0
    %3165 = vadd.xlane.f32.xlu0 %v3164
    %v3166 = vpop.xlane.xlu0 %3165
    %v3167 = vsel %vm934, %v3148, 0.0
    %3168 = vadd.xlane.f32.xlu0 %v3167
    %v3169 = vpop.xlane.xlu0 %3168
    %v3170 = vsel %vm934, %v3150, 0.0
    %3171 = vadd.xlane.f32.xlu0 %v3170
    %v3172 = vpop.xlane.xlu0 %3171
    %v3173 = vsel %vm934, %v3152, 0.0
    %3174 = vadd.xlane.f32.xlu0 %v3173
    %v3175 = vpop.xlane.xlu0 %3174
    %v3176 = vsel %vm934, %v3154, 0.0
    %3177 = vadd.xlane.f32.xlu0 %v3176
    %v3178 = vpop.xlane.xlu0 %3177
    %v3179 = vrcp.pop %v3157
    %v3180 = vrcp.pop %v3160
    %v3181 = vrcp.pop %v3163
    %v3182 = vrcp.pop %v3166
    %v3183 = vrcp.pop %v3169
    %v3184 = vrcp.pop %v3172
    %v3185 = vrcp.pop %v3175
    %v3186 = vrcp.pop %v3178
    %v3187 = vmul.f32 %v3140, %v3179
    %v3188 = vmul.f32 %v3142, %v3180
    %v3189 = vmul.f32 %v3144, %v3181
    %v3190 = vmul.f32 %v3146, %v3182
    %v3191 = vmul.f32 %v3148, %v3183
    %v3192 = vmul.f32 %v3150, %v3184
    %v3193 = vmul.f32 %v3152, %v3185
    %v3194 = vmul.f32 %v3154, %v3186
    %3195 = vrot.lane.b32.xlu0 %v711, 56
    %v3196 = vpop.permute.xlu0 %3195
    %3197 = vrot.lane.b32.xlu0 %v716, 56
    %v3198 = vpop.permute.xlu0 %3197
    %3199 = vrot.lane.b32.xlu0 %v721, 56
    %v3200 = vpop.permute.xlu0 %3199
    %3201 = vrot.lane.b32.xlu0 %v726, 56
    %v3202 = vpop.permute.xlu0 %3201
    %3203 = vrot.lane.b32.xlu0 %v731, 56
    %v3204 = vpop.permute.xlu0 %3203
    %3205 = vrot.lane.b32.xlu0 %v736, 56
    %v3206 = vpop.permute.xlu0 %3205
    %3207 = vrot.lane.b32.xlu0 %v741, 56
    %v3208 = vpop.permute.xlu0 %3207
    %3209 = vrot.lane.b32.xlu0 %v746, 56
    %v3210 = vpop.permute.xlu0 %3209
    %v3220 = vsel %vm934, %v3187, 0
    %v3223 = vsel %vm934, %v3188, 0
    %v3226 = vsel %vm934, %v3189, 0
    %v3229 = vsel %vm934, %v3190, 0
    %v3232 = vsel %vm934, %v3191, 0
    %v3235 = vsel %vm934, %v3192, 0
    %v3238 = vsel %vm934, %v3193, 0
    %v3241 = vsel %vm934, %v3194, 0
    %3243 = vmatprep.subr.mxu0 0.0
    %3244 = vmatpush1.msra.mxu0 %v3196
    %3245 = vmatprep.subr.mxu0 0.0
    %3246 = vmatpush1.msra.mxu0 %v3198
    %3247 = vmatprep.subr.mxu0 0.0
    %3248 = vmatpush1.msra.mxu0 %v3200
    %3249 = vmatprep.subr.mxu0 0.0
    %3250 = vmatpush1.msra.mxu0 %v3202
    %3251 = vmatprep.subr.mxu0 0.0
    %3252 = vmatpush1.msra.mxu0 %v3204
    %3253 = vmatprep.subr.mxu0 0.0
    %3254 = vmatpush1.msra.mxu0 %v3206
    %3255 = vmatprep.subr.mxu0 0.0
    %3256 = vmatpush1.msra.mxu0 %v3208
    %3257 = vmatprep.subr.mxu0 0.0
    %3258 = vmatpush1.msra.mxu0 %v3210
    %3259 = vmatprep.subr.mxu0 0.0
    %3260 = vmatpush1.msra.mxu0 0.0
    %3261 = vmatprep.subr.mxu0 0.0
    %3262 = vmatpush1.msra.mxu0 0.0
    %3263 = vmatprep.subr.mxu0 0.0
    %3264 = vmatpush1.msra.mxu0 0.0
    %3265 = vmatprep.subr.mxu0 0.0
    %3266 = vmatpush1.msra.mxu0 0.0
    %3267 = vmatprep.subr.mxu0 0.0
    %3268 = vmatpush1.msra.mxu0 0.0
    %3269 = vmatprep.subr.mxu0 0.0
    %3270 = vmatpush1.msra.mxu0 0.0
    %3271 = vmatprep.subr.mxu0 0.0
    %3272 = vmatpush1.msra.mxu0 0.0
    %3273 = vmatprep.subr.mxu0 0.0
    %3274 = vmatpush1.msra.mxu0 0.0
    %3275 = vmatprep.subr.mxu0 0.0
    %3276 = vmatpush1.msra.mxu0 0.0
    %3277 = vmatprep.subr.mxu0 0.0
    %3278 = vmatpush1.msra.mxu0 0.0
    %3279 = vmatprep.subr.mxu0 0.0
    %3280 = vmatpush1.msra.mxu0 0.0
    %3281 = vmatprep.subr.mxu0 0.0
    %3282 = vmatpush1.msra.mxu0 0.0
    %3283 = vmatprep.subr.mxu0 0.0
    %3284 = vmatpush1.msra.mxu0 0.0
    %3285 = vmatprep.subr.mxu0 0.0
    %3286 = vmatpush1.msra.mxu0 0.0
    %3287 = vmatprep.subr.mxu0 0.0
    %3288 = vmatpush1.msra.mxu0 0.0
    %3289 = vmatprep.subr.mxu0 0.0
    %3290 = vmatpush1.msra.mxu0 0.0
    %3291 = vmatprep.subr.mxu0 0.0
    %3292 = vmatpush1.msra.mxu0 0.0
    %3293 = vmatprep.subr.mxu0 0.0
    %3294 = vmatpush1.msra.mxu0 0.0
    %3295 = vmatprep.subr.mxu0 0.0
    %3296 = vmatpush1.msra.mxu0 0.0
    %3297 = vmatprep.subr.mxu0 0.0
    %3298 = vmatpush1.msra.mxu0 0.0
    %3299 = vmatprep.subr.mxu0 0.0
    %3300 = vmatpush1.msra.mxu0 0.0
    %3301 = vmatprep.subr.mxu0 0.0
    %3302 = vmatpush1.msra.mxu0 0.0
    %3303 = vmatprep.subr.mxu0 0.0
    %3304 = vmatpush1.msra.mxu0 0.0
    %3305 = vmatprep.subr.mxu0 0.0
    %3306 = vmatpush1.msra.mxu0 0.0
    %3307 = vmatprep.mubr.f32.mxu0 0.0
    %3308 = vmatmul.mubr.f32.gmra.mrb[0].mxu0 %v3220
    %v3309 = vpop.f32.mrb[0].mxu0
    %v3310 = vadd.f32 0.0, %v3309
    %v3311 = vpop.f32.mrb[0].mxu0
    %3312 = vmatprep.mubr.f32.mxu0 0.0
    %3313 = vmatmul.mubr.f32.gmra.mrb[0].mxu0 %v3223
    %v3314 = vpop.f32.mrb[0].mxu0
    %v3315 = vadd.f32 0.0, %v3314
    %v3316 = vpop.f32.mrb[0].mxu0
    %3317 = vmatprep.mubr.f32.mxu0 0.0
    %3318 = vmatmul.mubr.f32.gmra.mrb[0].mxu0 %v3226
    %v3319 = vpop.f32.mrb[0].mxu0
    %v3320 = vadd.f32 0.0, %v3319
    %v3321 = vpop.f32.mrb[0].mxu0
    %3322 = vmatprep.mubr.f32.mxu0 0.0
    %3323 = vmatmul.mubr.f32.gmra.mrb[0].mxu0 %v3229
    %v3324 = vpop.f32.mrb[0].mxu0
    %v3325 = vadd.f32 0.0, %v3324
    %v3326 = vpop.f32.mrb[0].mxu0
    %3327 = vmatprep.mubr.f32.mxu0 0.0
    %3328 = vmatmul.mubr.f32.gmra.mrb[0].mxu0 %v3232
    %v3329 = vpop.f32.mrb[0].mxu0
    %v3330 = vadd.f32 0.0, %v3329
    %v3331 = vpop.f32.mrb[0].mxu0
    %3332 = vmatprep.mubr.f32.mxu0 0.0
    %3333 = vmatmul.mubr.f32.gmra.mrb[0].mxu0 %v3235
    %v3334 = vpop.f32.mrb[0].mxu0
    %v3335 = vadd.f32 0.0, %v3334
    %v3336 = vpop.f32.mrb[0].mxu0
    %3337 = vmatprep.mubr.f32.mxu0 0.0
    %3338 = vmatmul.mubr.f32.gmra.mrb[0].mxu0 %v3238
    %v3339 = vpop.f32.mrb[0].mxu0
    %v3340 = vadd.f32 0.0, %v3339
    %v3341 = vpop.f32.mrb[0].mxu0
    %3342 = vmatprep.mubr.f32.mxu0 0.0
    %3343 = vmatmul.mubr.f32.gmra.mrb[0].mxu0 %v3241
    %v3344 = vpop.f32.mrb[0].mxu0
    %v3345 = vadd.f32 0.0, %v3344
    %v3346 = vpop.f32.mrb[0].mxu0
    %3347 = vdwg.mxu0
    %3348 = vrot.lane.b32.xlu0 %v757, 112
    %v3349 = vpop.permute.xlu0 %3348
    %3350 = vrot.lane.b32.xlu0 %v758, 112
    %v3351 = vpop.permute.xlu0 %3350
    %3352 = vrot.lane.b32.xlu0 %v759, 112
    %v3353 = vpop.permute.xlu0 %3352
    %3354 = vrot.lane.b32.xlu0 %v760, 112
    %v3355 = vpop.permute.xlu0 %3354
    %3356 = vrot.lane.b32.xlu0 %v761, 112
    %v3357 = vpop.permute.xlu0 %3356
    %3358 = vrot.lane.b32.xlu0 %v762, 112
    %v3359 = vpop.permute.xlu0 %3358
    %3360 = vrot.lane.b32.xlu0 %v763, 112
    %v3361 = vpop.permute.xlu0 %3360
    %3362 = vrot.lane.b32.xlu0 %v764, 112
    %v3363 = vpop.permute.xlu0 %3362
    %3364 = vrot.lane.b32.xlu0 %v711, 80
    %v3365 = vpop.permute.xlu0 %3364
    %3366 = vrot.lane.b32.xlu0 %v716, 80
    %v3367 = vpop.permute.xlu0 %3366
    %3368 = vrot.lane.b32.xlu0 %v721, 80
    %v3369 = vpop.permute.xlu0 %3368
    %3370 = vrot.lane.b32.xlu0 %v726, 80
    %v3371 = vpop.permute.xlu0 %3370
    %3372 = vrot.lane.b32.xlu0 %v731, 80
    %v3373 = vpop.permute.xlu0 %3372
    %3374 = vrot.lane.b32.xlu0 %v736, 80
    %v3375 = vpop.permute.xlu0 %3374
    %3376 = vrot.lane.b32.xlu0 %v741, 80
    %v3377 = vpop.permute.xlu0 %3376
    %3378 = vrot.lane.b32.xlu0 %v746, 80
    %v3379 = vpop.permute.xlu0 %3378
    %v3380 = vsel %vm51, %v3349, 0
    %v3382 = vsel %vm51, %v3351, 0
    %v3384 = vsel %vm51, %v3353, 0
    %v3386 = vsel %vm51, %v3355, 0
    %v3388 = vsel %vm51, %v3357, 0
    %v3390 = vsel %vm51, %v3359, 0
    %v3392 = vsel %vm51, %v3361, 0
    %v3394 = vsel %vm51, %v3363, 0
    %v3396 = vsel %vm51, %v3365, 0
    %v3398 = vsel %vm51, %v3367, 0
    %v3400 = vsel %vm51, %v3369, 0
    %v3402 = vsel %vm51, %v3371, 0
    %v3404 = vsel %vm51, %v3373, 0
    %v3406 = vsel %vm51, %v3375, 0
    %v3408 = vsel %vm51, %v3377, 0
    %v3410 = vsel %vm51, %v3379, 0
    %3412 = vmatprep.subr.mxu0 0.0
    %3413 = vmatpush1.xpose.msra.mxu0 %v3396
    %3414 = vmatprep.subr.mxu0 0.0
    %3415 = vmatpush1.xpose.msra.mxu0 %v3398
    %3416 = vmatprep.subr.mxu0 0.0
    %3417 = vmatpush1.xpose.msra.mxu0 %v3400
    %3418 = vmatprep.subr.mxu0 0.0
    %3419 = vmatpush1.xpose.msra.mxu0 %v3402
    %3420 = vmatprep.subr.mxu0 0.0
    %3421 = vmatpush1.xpose.msra.mxu0 %v3404
    %3422 = vmatprep.subr.mxu0 0.0
    %3423 = vmatpush1.xpose.msra.mxu0 %v3406
    %3424 = vmatprep.subr.mxu0 0.0
    %3425 = vmatpush1.xpose.msra.mxu0 %v3408
    %3426 = vmatprep.subr.mxu0 0.0
    %3427 = vmatpush1.xpose.msra.mxu0 %v3410
    %3428 = vmatprep.subr.mxu0 0.0
    %3429 = vmatpush1.xpose.msra.mxu0 0.0
    %3430 = vmatprep.subr.mxu0 0.0
    %3431 = vmatpush1.xpose.msra.mxu0 0.0
    %3432 = vmatprep.subr.mxu0 0.0
    %3433 = vmatpush1.xpose.msra.mxu0 0.0
    %3434 = vmatprep.subr.mxu0 0.0
    %3435 = vmatpush1.xpose.msra.mxu0 0.0
    %3436 = vmatprep.subr.mxu0 0.0
    %3437 = vmatpush1.xpose.msra.mxu0 0.0
    %3438 = vmatprep.subr.mxu0 0.0
    %3439 = vmatpush1.xpose.msra.mxu0 0.0
    %3440 = vmatprep.subr.mxu0 0.0
    %3441 = vmatpush1.xpose.msra.mxu0 0.0
    %3442 = vmatprep.subr.mxu0 0.0
    %3443 = vmatpush1.xpose.msra.mxu0 0.0
    %3444 = vmatprep.subr.mxu0 0.0
    %3445 = vmatpush1.xpose.msra.mxu0 0.0
    %3446 = vmatprep.subr.mxu0 0.0
    %3447 = vmatpush1.xpose.msra.mxu0 0.0
    %3448 = vmatprep.subr.mxu0 0.0
    %3449 = vmatpush1.xpose.msra.mxu0 0.0
    %3450 = vmatprep.subr.mxu0 0.0
    %3451 = vmatpush1.xpose.msra.mxu0 0.0
    %3452 = vmatprep.subr.mxu0 0.0
    %3453 = vmatpush1.xpose.msra.mxu0 0.0
    %3454 = vmatprep.subr.mxu0 0.0
    %3455 = vmatpush1.xpose.msra.mxu0 0.0
    %3456 = vmatprep.subr.mxu0 0.0
    %3457 = vmatpush1.xpose.msra.mxu0 0.0
    %3458 = vmatprep.subr.mxu0 0.0
    %3459 = vmatpush1.xpose.msra.mxu0 0.0
    %3460 = vmatprep.subr.mxu0 0.0
    %3461 = vmatpush1.xpose.msra.mxu0 0.0
    %3462 = vmatprep.subr.mxu0 0.0
    %3463 = vmatpush1.xpose.msra.mxu0 0.0
    %3464 = vmatprep.subr.mxu0 0.0
    %3465 = vmatpush1.xpose.msra.mxu0 0.0
    %3466 = vmatprep.subr.mxu0 0.0
    %3467 = vmatpush1.xpose.msra.mxu0 0.0
    %3468 = vmatprep.subr.mxu0 0.0
    %3469 = vmatpush1.xpose.msra.mxu0 0.0
    %3470 = vmatprep.subr.mxu0 0.0
    %3471 = vmatpush1.xpose.msra.mxu0 0.0
    %3472 = vmatprep.subr.mxu0 0.0
    %3473 = vmatpush1.xpose.msra.mxu0 0.0
    %3474 = vmatprep.subr.mxu0 0.0
    %3475 = vmatpush1.xpose.msra.mxu0 0.0
    %3476 = vmatprep.mubr.f32.mxu0 0.0
    %3477 = vmatmul.mubr.f32.gmra.mrb[0].mxu0 %v3380
    %v3478 = vpop.f32.mrb[0].mxu0
    %v3479 = vadd.f32 0.0, %v3478
    %v3480 = vpop.f32.mrb[0].mxu0
    %3481 = vmatprep.mubr.f32.mxu0 0.0
    %3482 = vmatmul.mubr.f32.gmra.mrb[0].mxu0 %v3382
    %v3483 = vpop.f32.mrb[0].mxu0
    %v3484 = vadd.f32 0.0, %v3483
    %v3485 = vpop.f32.mrb[0].mxu0
    %3486 = vmatprep.mubr.f32.mxu0 0.0
    %3487 = vmatmul.mubr.f32.gmra.mrb[0].mxu0 %v3384
    %v3488 = vpop.f32.mrb[0].mxu0
    %v3489 = vadd.f32 0.0, %v3488
    %v3490 = vpop.f32.mrb[0].mxu0
    %3491 = vmatprep.mubr.f32.mxu0 0.0
    %3492 = vmatmul.mubr.f32.gmra.mrb[0].mxu0 %v3386
    %v3493 = vpop.f32.mrb[0].mxu0
    %v3494 = vadd.f32 0.0, %v3493
    %v3495 = vpop.f32.mrb[0].mxu0
    %3496 = vmatprep.mubr.f32.mxu0 0.0
    %3497 = vmatmul.mubr.f32.gmra.mrb[0].mxu0 %v3388
    %v3498 = vpop.f32.mrb[0].mxu0
    %v3499 = vadd.f32 0.0, %v3498
    %v3500 = vpop.f32.mrb[0].mxu0
    %3501 = vmatprep.mubr.f32.mxu0 0.0
    %3502 = vmatmul.mubr.f32.gmra.mrb[0].mxu0 %v3390
    %v3503 = vpop.f32.mrb[0].mxu0
    %v3504 = vadd.f32 0.0, %v3503
    %v3505 = vpop.f32.mrb[0].mxu0
    %3506 = vmatprep.mubr.f32.mxu0 0.0
    %3507 = vmatmul.mubr.f32.gmra.mrb[0].mxu0 %v3392
    %v3508 = vpop.f32.mrb[0].mxu0
    %v3509 = vadd.f32 0.0, %v3508
    %v3510 = vpop.f32.mrb[0].mxu0
    %3511 = vmatprep.mubr.f32.mxu0 0.0
    %3512 = vmatmul.mubr.f32.gmra.mrb[0].mxu0 %v3394
    %v3513 = vpop.f32.mrb[0].mxu0
    %v3514 = vadd.f32 0.0, %v3513
    %v3515 = vpop.f32.mrb[0].mxu0
    %3516 = vdwg.mxu0
    %v3517 = vsel %vm934, %v3479, -inf
    %3518 = vmax.xlane.f32.xlu0 %v3517
    %v3519 = vpop.xlane.xlu0 %3518
    %v3520 = vsel %vm934, %v3484, -inf
    %3521 = vmax.xlane.f32.xlu0 %v3520
    %v3522 = vpop.xlane.xlu0 %3521
    %v3523 = vsel %vm934, %v3489, -inf
    %3524 = vmax.xlane.f32.xlu0 %v3523
    %v3525 = vpop.xlane.xlu0 %3524
    %v3526 = vsel %vm934, %v3494, -inf
    %3527 = vmax.xlane.f32.xlu0 %v3526
    %v3528 = vpop.xlane.xlu0 %3527
    %v3529 = vsel %vm934, %v3499, -inf
    %3530 = vmax.xlane.f32.xlu0 %v3529
    %v3531 = vpop.xlane.xlu0 %3530
    %v3532 = vsel %vm934, %v3504, -inf
    %3533 = vmax.xlane.f32.xlu0 %v3532
    %v3534 = vpop.xlane.xlu0 %3533
    %v3535 = vsel %vm934, %v3509, -inf
    %3536 = vmax.xlane.f32.xlu0 %v3535
    %v3537 = vpop.xlane.xlu0 %3536
    %v3538 = vsel %vm934, %v3514, -inf
    %3539 = vmax.xlane.f32.xlu0 %v3538
    %v3540 = vpop.xlane.xlu0 %3539
    %v3541 = vsub.f32 %v3479, %v3519
    %v3542 = vsub.f32 %v3484, %v3522
    %v3543 = vsub.f32 %v3489, %v3525
    %v3544 = vsub.f32 %v3494, %v3528
    %v3545 = vsub.f32 %v3499, %v3531
    %v3546 = vsub.f32 %v3504, %v3534
    %v3547 = vsub.f32 %v3509, %v3537
    %v3548 = vsub.f32 %v3514, %v3540
    %v3549 = vmul.f32 %v3541, 1.442695
    %v3550 = vpow.pop %v3549
    %v3551 = vmul.f32 %v3542, 1.442695
    %v3552 = vpow.pop %v3551
    %v3553 = vmul.f32 %v3543, 1.442695
    %v3554 = vpow.pop %v3553
    %v3555 = vmul.f32 %v3544, 1.442695
    %v3556 = vpow.pop %v3555
    %v3557 = vmul.f32 %v3545, 1.442695
    %v3558 = vpow.pop %v3557
    %v3559 = vmul.f32 %v3546, 1.442695
    %v3560 = vpow.pop %v3559
    %v3561 = vmul.f32 %v3547, 1.442695
    %v3562 = vpow.pop %v3561
    %v3563 = vmul.f32 %v3548, 1.442695
    %v3564 = vpow.pop %v3563
    %v3565 = vsel %vm934, %v3550, 0.0
    %3566 = vadd.xlane.f32.xlu0 %v3565
    %v3567 = vpop.xlane.xlu0 %3566
    %v3568 = vsel %vm934, %v3552, 0.0
    %3569 = vadd.xlane.f32.xlu0 %v3568
    %v3570 = vpop.xlane.xlu0 %3569
    %v3571 = vsel %vm934, %v3554, 0.0
    %3572 = vadd.xlane.f32.xlu0 %v3571
    %v3573 = vpop.xlane.xlu0 %3572
    %v3574 = vsel %vm934, %v3556, 0.0
    %3575 = vadd.xlane.f32.xlu0 %v3574
    %v3576 = vpop.xlane.xlu0 %3575
    %v3577 = vsel %vm934, %v3558, 0.0
    %3578 = vadd.xlane.f32.xlu0 %v3577
    %v3579 = vpop.xlane.xlu0 %3578
    %v3580 = vsel %vm934, %v3560, 0.0
    %3581 = vadd.xlane.f32.xlu0 %v3580
    %v3582 = vpop.xlane.xlu0 %3581
    %v3583 = vsel %vm934, %v3562, 0.0
    %3584 = vadd.xlane.f32.xlu0 %v3583
    %v3585 = vpop.xlane.xlu0 %3584
    %v3586 = vsel %vm934, %v3564, 0.0
    %3587 = vadd.xlane.f32.xlu0 %v3586
    %v3588 = vpop.xlane.xlu0 %3587
    %v3589 = vrcp.pop %v3567
    %v3590 = vrcp.pop %v3570
    %v3591 = vrcp.pop %v3573
    %v3592 = vrcp.pop %v3576
    %v3593 = vrcp.pop %v3579
    %v3594 = vrcp.pop %v3582
    %v3595 = vrcp.pop %v3585
    %v3596 = vrcp.pop %v3588
    %v3597 = vmul.f32 %v3550, %v3589
    %v3598 = vmul.f32 %v3552, %v3590
    %v3599 = vmul.f32 %v3554, %v3591
    %v3600 = vmul.f32 %v3556, %v3592
    %v3601 = vmul.f32 %v3558, %v3593
    %v3602 = vmul.f32 %v3560, %v3594
    %v3603 = vmul.f32 %v3562, %v3595
    %v3604 = vmul.f32 %v3564, %v3596
    %3605 = vrot.lane.b32.xlu0 %v711, 48
    %v3606 = vpop.permute.xlu0 %3605
    %3607 = vrot.lane.b32.xlu0 %v716, 48
    %v3608 = vpop.permute.xlu0 %3607
    %3609 = vrot.lane.b32.xlu0 %v721, 48
    %v3610 = vpop.permute.xlu0 %3609
    %3611 = vrot.lane.b32.xlu0 %v726, 48
    %v3612 = vpop.permute.xlu0 %3611
    %3613 = vrot.lane.b32.xlu0 %v731, 48
    %v3614 = vpop.permute.xlu0 %3613
    %3615 = vrot.lane.b32.xlu0 %v736, 48
    %v3616 = vpop.permute.xlu0 %3615
    %3617 = vrot.lane.b32.xlu0 %v741, 48
    %v3618 = vpop.permute.xlu0 %3617
    %3619 = vrot.lane.b32.xlu0 %v746, 48
    %v3620 = vpop.permute.xlu0 %3619
    %v3630 = vsel %vm934, %v3597, 0
    %v3633 = vsel %vm934, %v3598, 0
    %v3636 = vsel %vm934, %v3599, 0
    %v3639 = vsel %vm934, %v3600, 0
    %v3642 = vsel %vm934, %v3601, 0
    %v3645 = vsel %vm934, %v3602, 0
    %v3648 = vsel %vm934, %v3603, 0
    %v3651 = vsel %vm934, %v3604, 0
    %3653 = vmatprep.subr.mxu0 0.0
    %3654 = vmatpush1.msra.mxu0 %v3606
    %3655 = vmatprep.subr.mxu0 0.0
    %3656 = vmatpush1.msra.mxu0 %v3608
    %3657 = vmatprep.subr.mxu0 0.0
    %3658 = vmatpush1.msra.mxu0 %v3610
    %3659 = vmatprep.subr.mxu0 0.0
    %3660 = vmatpush1.msra.mxu0 %v3612
    %3661 = vmatprep.subr.mxu0 0.0
    %3662 = vmatpush1.msra.mxu0 %v3614
    %3663 = vmatprep.subr.mxu0 0.0
    %3664 = vmatpush1.msra.mxu0 %v3616
    %3665 = vmatprep.subr.mxu0 0.0
    %3666 = vmatpush1.msra.mxu0 %v3618
    %3667 = vmatprep.subr.mxu0 0.0
    %3668 = vmatpush1.msra.mxu0 %v3620
    %3669 = vmatprep.subr.mxu0 0.0
    %3670 = vmatpush1.msra.mxu0 0.0
    %3671 = vmatprep.subr.mxu0 0.0
    %3672 = vmatpush1.msra.mxu0 0.0
    %3673 = vmatprep.subr.mxu0 0.0
    %3674 = vmatpush1.msra.mxu0 0.0
    %3675 = vmatprep.subr.mxu0 0.0
    %3676 = vmatpush1.msra.mxu0 0.0
    %3677 = vmatprep.subr.mxu0 0.0
    %3678 = vmatpush1.msra.mxu0 0.0
    %3679 = vmatprep.subr.mxu0 0.0
    %3680 = vmatpush1.msra.mxu0 0.0
    %3681 = vmatprep.subr.mxu0 0.0
    %3682 = vmatpush1.msra.mxu0 0.0
    %3683 = vmatprep.subr.mxu0 0.0
    %3684 = vmatpush1.msra.mxu0 0.0
    %3685 = vmatprep.subr.mxu0 0.0
    %3686 = vmatpush1.msra.mxu0 0.0
    %3687 = vmatprep.subr.mxu0 0.0
    %3688 = vmatpush1.msra.mxu0 0.0
    %3689 = vmatprep.subr.mxu0 0.0
    %3690 = vmatpush1.msra.mxu0 0.0
    %3691 = vmatprep.subr.mxu0 0.0
    %3692 = vmatpush1.msra.mxu0 0.0
    %3693 = vmatprep.subr.mxu0 0.0
    %3694 = vmatpush1.msra.mxu0 0.0
    %3695 = vmatprep.subr.mxu0 0.0
    %3696 = vmatpush1.msra.mxu0 0.0
    %3697 = vmatprep.subr.mxu0 0.0
    %3698 = vmatpush1.msra.mxu0 0.0
    %3699 = vmatprep.subr.mxu0 0.0
    %3700 = vmatpush1.msra.mxu0 0.0
    %3701 = vmatprep.subr.mxu0 0.0
    %3702 = vmatpush1.msra.mxu0 0.0
    %3703 = vmatprep.subr.mxu0 0.0
    %3704 = vmatpush1.msra.mxu0 0.0
    %3705 = vmatprep.subr.mxu0 0.0
    %3706 = vmatpush1.msra.mxu0 0.0
    %3707 = vmatprep.subr.mxu0 0.0
    %3708 = vmatpush1.msra.mxu0 0.0
    %3709 = vmatprep.subr.mxu0 0.0
    %3710 = vmatpush1.msra.mxu0 0.0
    %3711 = vmatprep.subr.mxu0 0.0
    %3712 = vmatpush1.msra.mxu0 0.0
    %3713 = vmatprep.subr.mxu0 0.0
    %3714 = vmatpush1.msra.mxu0 0.0
    %3715 = vmatprep.subr.mxu0 0.0
    %3716 = vmatpush1.msra.mxu0 0.0
    %3717 = vmatprep.mubr.f32.mxu0 0.0
    %3718 = vmatmul.mubr.f32.gmra.mrb[0].mxu0 %v3630
    %v3719 = vpop.f32.mrb[0].mxu0
    %v3720 = vadd.f32 0.0, %v3719
    %v3721 = vpop.f32.mrb[0].mxu0
    %3722 = vmatprep.mubr.f32.mxu0 0.0
    %3723 = vmatmul.mubr.f32.gmra.mrb[0].mxu0 %v3633
    %v3724 = vpop.f32.mrb[0].mxu0
    %v3725 = vadd.f32 0.0, %v3724
    %v3726 = vpop.f32.mrb[0].mxu0
    %3727 = vmatprep.mubr.f32.mxu0 0.0
    %3728 = vmatmul.mubr.f32.gmra.mrb[0].mxu0 %v3636
    %v3729 = vpop.f32.mrb[0].mxu0
    %v3730 = vadd.f32 0.0, %v3729
    %v3731 = vpop.f32.mrb[0].mxu0
    %3732 = vmatprep.mubr.f32.mxu0 0.0
    %3733 = vmatmul.mubr.f32.gmra.mrb[0].mxu0 %v3639
    %v3734 = vpop.f32.mrb[0].mxu0
    %v3735 = vadd.f32 0.0, %v3734
    %v3736 = vpop.f32.mrb[0].mxu0
    %3737 = vmatprep.mubr.f32.mxu0 0.0
    %3738 = vmatmul.mubr.f32.gmra.mrb[0].mxu0 %v3642
    %v3739 = vpop.f32.mrb[0].mxu0
    %v3740 = vadd.f32 0.0, %v3739
    %v3741 = vpop.f32.mrb[0].mxu0
    %3742 = vmatprep.mubr.f32.mxu0 0.0
    %3743 = vmatmul.mubr.f32.gmra.mrb[0].mxu0 %v3645
    %v3744 = vpop.f32.mrb[0].mxu0
    %v3745 = vadd.f32 0.0, %v3744
    %v3746 = vpop.f32.mrb[0].mxu0
    %3747 = vmatprep.mubr.f32.mxu0 0.0
    %3748 = vmatmul.mubr.f32.gmra.mrb[0].mxu0 %v3648
    %v3749 = vpop.f32.mrb[0].mxu0
    %v3750 = vadd.f32 0.0, %v3749
    %v3751 = vpop.f32.mrb[0].mxu0
    %3752 = vmatprep.mubr.f32.mxu0 0.0
    %3753 = vmatmul.mubr.f32.gmra.mrb[0].mxu0 %v3651
    %v3754 = vpop.f32.mrb[0].mxu0
    %v3755 = vadd.f32 0.0, %v3754
    %v3756 = vpop.f32.mrb[0].mxu0
    %3757 = vdwg.mxu0
    %3758 = vrot.lane.b32.xlu0 %v757, 104
    %v3759 = vpop.permute.xlu0 %3758
    %3760 = vrot.lane.b32.xlu0 %v758, 104
    %v3761 = vpop.permute.xlu0 %3760
    %3762 = vrot.lane.b32.xlu0 %v759, 104
    %v3763 = vpop.permute.xlu0 %3762
    %3764 = vrot.lane.b32.xlu0 %v760, 104
    %v3765 = vpop.permute.xlu0 %3764
    %3766 = vrot.lane.b32.xlu0 %v761, 104
    %v3767 = vpop.permute.xlu0 %3766
    %3768 = vrot.lane.b32.xlu0 %v762, 104
    %v3769 = vpop.permute.xlu0 %3768
    %3770 = vrot.lane.b32.xlu0 %v763, 104
    %v3771 = vpop.permute.xlu0 %3770
    %3772 = vrot.lane.b32.xlu0 %v764, 104
    %v3773 = vpop.permute.xlu0 %3772
    %3774 = vrot.lane.b32.xlu0 %v711, 72
    %v3775 = vpop.permute.xlu0 %3774
    %3776 = vrot.lane.b32.xlu0 %v716, 72
    %v3777 = vpop.permute.xlu0 %3776
    %3778 = vrot.lane.b32.xlu0 %v721, 72
    %v3779 = vpop.permute.xlu0 %3778
    %3780 = vrot.lane.b32.xlu0 %v726, 72
    %v3781 = vpop.permute.xlu0 %3780
    %3782 = vrot.lane.b32.xlu0 %v731, 72
    %v3783 = vpop.permute.xlu0 %3782
    %3784 = vrot.lane.b32.xlu0 %v736, 72
    %v3785 = vpop.permute.xlu0 %3784
    %3786 = vrot.lane.b32.xlu0 %v741, 72
    %v3787 = vpop.permute.xlu0 %3786
    %3788 = vrot.lane.b32.xlu0 %v746, 72
    %v3789 = vpop.permute.xlu0 %3788
    %v3790 = vsel %vm51, %v3759, 0
    %v3792 = vsel %vm51, %v3761, 0
    %v3794 = vsel %vm51, %v3763, 0
    %v3796 = vsel %vm51, %v3765, 0
    %v3798 = vsel %vm51, %v3767, 0
    %v3800 = vsel %vm51, %v3769, 0
    %v3802 = vsel %vm51, %v3771, 0
    %v3804 = vsel %vm51, %v3773, 0
    %v3806 = vsel %vm51, %v3775, 0
    %v3808 = vsel %vm51, %v3777, 0
    %v3810 = vsel %vm51, %v3779, 0
    %v3812 = vsel %vm51, %v3781, 0
    %v3814 = vsel %vm51, %v3783, 0
    %v3816 = vsel %vm51, %v3785, 0
    %v3818 = vsel %vm51, %v3787, 0
    %v3820 = vsel %vm51, %v3789, 0
    %3822 = vmatprep.subr.mxu0 0.0
    %3823 = vmatpush1.xpose.msra.mxu0 %v3806
    %3824 = vmatprep.subr.mxu0 0.0
    %3825 = vmatpush1.xpose.msra.mxu0 %v3808
    %3826 = vmatprep.subr.mxu0 0.0
    %3827 = vmatpush1.xpose.msra.mxu0 %v3810
    %3828 = vmatprep.subr.mxu0 0.0
    %3829 = vmatpush1.xpose.msra.mxu0 %v3812
    %3830 = vmatprep.subr.mxu0 0.0
    %3831 = vmatpush1.xpose.msra.mxu0 %v3814
    %3832 = vmatprep.subr.mxu0 0.0
    %3833 = vmatpush1.xpose.msra.mxu0 %v3816
    %3834 = vmatprep.subr.mxu0 0.0
    %3835 = vmatpush1.xpose.msra.mxu0 %v3818
    %3836 = vmatprep.subr.mxu0 0.0
    %3837 = vmatpush1.xpose.msra.mxu0 %v3820
    %3838 = vmatprep.subr.mxu0 0.0
    %3839 = vmatpush1.xpose.msra.mxu0 0.0
    %3840 = vmatprep.subr.mxu0 0.0
    %3841 = vmatpush1.xpose.msra.mxu0 0.0
    %3842 = vmatprep.subr.mxu0 0.0
    %3843 = vmatpush1.xpose.msra.mxu0 0.0
    %3844 = vmatprep.subr.mxu0 0.0
    %3845 = vmatpush1.xpose.msra.mxu0 0.0
    %3846 = vmatprep.subr.mxu0 0.0
    %3847 = vmatpush1.xpose.msra.mxu0 0.0
    %3848 = vmatprep.subr.mxu0 0.0
    %3849 = vmatpush1.xpose.msra.mxu0 0.0
    %3850 = vmatprep.subr.mxu0 0.0
    %3851 = vmatpush1.xpose.msra.mxu0 0.0
    %3852 = vmatprep.subr.mxu0 0.0
    %3853 = vmatpush1.xpose.msra.mxu0 0.0
    %3854 = vmatprep.subr.mxu0 0.0
    %3855 = vmatpush1.xpose.msra.mxu0 0.0
    %3856 = vmatprep.subr.mxu0 0.0
    %3857 = vmatpush1.xpose.msra.mxu0 0.0
    %3858 = vmatprep.subr.mxu0 0.0
    %3859 = vmatpush1.xpose.msra.mxu0 0.0
    %3860 = vmatprep.subr.mxu0 0.0
    %3861 = vmatpush1.xpose.msra.mxu0 0.0
    %3862 = vmatprep.subr.mxu0 0.0
    %3863 = vmatpush1.xpose.msra.mxu0 0.0
    %3864 = vmatprep.subr.mxu0 0.0
    %3865 = vmatpush1.xpose.msra.mxu0 0.0
    %3866 = vmatprep.subr.mxu0 0.0
    %3867 = vmatpush1.xpose.msra.mxu0 0.0
    %3868 = vmatprep.subr.mxu0 0.0
    %3869 = vmatpush1.xpose.msra.mxu0 0.0
    %3870 = vmatprep.subr.mxu0 0.0
    %3871 = vmatpush1.xpose.msra.mxu0 0.0
    %3872 = vmatprep.subr.mxu0 0.0
    %3873 = vmatpush1.xpose.msra.mxu0 0.0
    %3874 = vmatprep.subr.mxu0 0.0
    %3875 = vmatpush1.xpose.msra.mxu0 0.0
    %3876 = vmatprep.subr.mxu0 0.0
    %3877 = vmatpush1.xpose.msra.mxu0 0.0
    %3878 = vmatprep.subr.mxu0 0.0
    %3879 = vmatpush1.xpose.msra.mxu0 0.0
    %3880 = vmatprep.subr.mxu0 0.0
    %3881 = vmatpush1.xpose.msra.mxu0 0.0
    %3882 = vmatprep.subr.mxu0 0.0
    %3883 = vmatpush1.xpose.msra.mxu0 0.0
    %3884 = vmatprep.subr.mxu0 0.0
    %3885 = vmatpush1.xpose.msra.mxu0 0.0
    %3886 = vmatprep.mubr.f32.mxu0 0.0
    %3887 = vmatmul.mubr.f32.gmra.mrb[0].mxu0 %v3790
    %v3888 = vpop.f32.mrb[0].mxu0
    %v3889 = vadd.f32 0.0, %v3888
    %v3890 = vpop.f32.mrb[0].mxu0
    %3891 = vmatprep.mubr.f32.mxu0 0.0
    %3892 = vmatmul.mubr.f32.gmra.mrb[0].mxu0 %v3792
    %v3893 = vpop.f32.mrb[0].mxu0
    %v3894 = vadd.f32 0.0, %v3893
    %v3895 = vpop.f32.mrb[0].mxu0
    %3896 = vmatprep.mubr.f32.mxu0 0.0
    %3897 = vmatmul.mubr.f32.gmra.mrb[0].mxu0 %v3794
    %v3898 = vpop.f32.mrb[0].mxu0
    %v3899 = vadd.f32 0.0, %v3898
    %v3900 = vpop.f32.mrb[0].mxu0
    %3901 = vmatprep.mubr.f32.mxu0 0.0
    %3902 = vmatmul.mubr.f32.gmra.mrb[0].mxu0 %v3796
    %v3903 = vpop.f32.mrb[0].mxu0
    %v3904 = vadd.f32 0.0, %v3903
    %v3905 = vpop.f32.mrb[0].mxu0
    %3906 = vmatprep.mubr.f32.mxu0 0.0
    %3907 = vmatmul.mubr.f32.gmra.mrb[0].mxu0 %v3798
    %v3908 = vpop.f32.mrb[0].mxu0
    %v3909 = vadd.f32 0.0, %v3908
    %v3910 = vpop.f32.mrb[0].mxu0
    %3911 = vmatprep.mubr.f32.mxu0 0.0
    %3912 = vmatmul.mubr.f32.gmra.mrb[0].mxu0 %v3800
    %v3913 = vpop.f32.mrb[0].mxu0
    %v3914 = vadd.f32 0.0, %v3913
    %v3915 = vpop.f32.mrb[0].mxu0
    %3916 = vmatprep.mubr.f32.mxu0 0.0
    %3917 = vmatmul.mubr.f32.gmra.mrb[0].mxu0 %v3802
    %v3918 = vpop.f32.mrb[0].mxu0
    %v3919 = vadd.f32 0.0, %v3918
    %v3920 = vpop.f32.mrb[0].mxu0
    %3921 = vmatprep.mubr.f32.mxu0 0.0
    %3922 = vmatmul.mubr.f32.gmra.mrb[0].mxu0 %v3804
    %v3923 = vpop.f32.mrb[0].mxu0
    %v3924 = vadd.f32 0.0, %v3923
    %v3925 = vpop.f32.mrb[0].mxu0
    %3926 = vdwg.mxu0
    %v3927 = vsel %vm934, %v3889, -inf
    %3928 = vmax.xlane.f32.xlu0 %v3927
    %v3929 = vpop.xlane.xlu0 %3928
    %v3930 = vsel %vm934, %v3894, -inf
    %3931 = vmax.xlane.f32.xlu0 %v3930
    %v3932 = vpop.xlane.xlu0 %3931
    %v3933 = vsel %vm934, %v3899, -inf
    %3934 = vmax.xlane.f32.xlu0 %v3933
    %v3935 = vpop.xlane.xlu0 %3934
    %v3936 = vsel %vm934, %v3904, -inf
    %3937 = vmax.xlane.f32.xlu0 %v3936
    %v3938 = vpop.xlane.xlu0 %3937
    %v3939 = vsel %vm934, %v3909, -inf
    %3940 = vmax.xlane.f32.xlu0 %v3939
    %v3941 = vpop.xlane.xlu0 %3940
    %v3942 = vsel %vm934, %v3914, -inf
    %3943 = vmax.xlane.f32.xlu0 %v3942
    %v3944 = vpop.xlane.xlu0 %3943
    %v3945 = vsel %vm934, %v3919, -inf
    %3946 = vmax.xlane.f32.xlu0 %v3945
    %v3947 = vpop.xlane.xlu0 %3946
    %v3948 = vsel %vm934, %v3924, -inf
    %3949 = vmax.xlane.f32.xlu0 %v3948
    %v3950 = vpop.xlane.xlu0 %3949
    %v3951 = vsub.f32 %v3889, %v3929
    %v3952 = vsub.f32 %v3894, %v3932
    %v3953 = vsub.f32 %v3899, %v3935
    %v3954 = vsub.f32 %v3904, %v3938
    %v3955 = vsub.f32 %v3909, %v3941
    %v3956 = vsub.f32 %v3914, %v3944
    %v3957 = vsub.f32 %v3919, %v3947
    %v3958 = vsub.f32 %v3924, %v3950
    %v3959 = vmul.f32 %v3951, 1.442695
    %v3960 = vpow.pop %v3959
    %v3961 = vmul.f32 %v3952, 1.442695
    %v3962 = vpow.pop %v3961
    %v3963 = vmul.f32 %v3953, 1.442695
    %v3964 = vpow.pop %v3963
    %v3965 = vmul.f32 %v3954, 1.442695
    %v3966 = vpow.pop %v3965
    %v3967 = vmul.f32 %v3955, 1.442695
    %v3968 = vpow.pop %v3967
    %v3969 = vmul.f32 %v3956, 1.442695
    %v3970 = vpow.pop %v3969
    %v3971 = vmul.f32 %v3957, 1.442695
    %v3972 = vpow.pop %v3971
    %v3973 = vmul.f32 %v3958, 1.442695
    %v3974 = vpow.pop %v3973
    %v3975 = vsel %vm934, %v3960, 0.0
    %3976 = vadd.xlane.f32.xlu0 %v3975
    %v3977 = vpop.xlane.xlu0 %3976
    %v3978 = vsel %vm934, %v3962, 0.0
    %3979 = vadd.xlane.f32.xlu0 %v3978
    %v3980 = vpop.xlane.xlu0 %3979
    %v3981 = vsel %vm934, %v3964, 0.0
    %3982 = vadd.xlane.f32.xlu0 %v3981
    %v3983 = vpop.xlane.xlu0 %3982
    %v3984 = vsel %vm934, %v3966, 0.0
    %3985 = vadd.xlane.f32.xlu0 %v3984
    %v3986 = vpop.xlane.xlu0 %3985
    %v3987 = vsel %vm934, %v3968, 0.0
    %3988 = vadd.xlane.f32.xlu0 %v3987
    %v3989 = vpop.xlane.xlu0 %3988
    %v3990 = vsel %vm934, %v3970, 0.0
    %3991 = vadd.xlane.f32.xlu0 %v3990
    %v3992 = vpop.xlane.xlu0 %3991
    %v3993 = vsel %vm934, %v3972, 0.0
    %3994 = vadd.xlane.f32.xlu0 %v3993
    %v3995 = vpop.xlane.xlu0 %3994
    %v3996 = vsel %vm934, %v3974, 0.0
    %3997 = vadd.xlane.f32.xlu0 %v3996
    %v3998 = vpop.xlane.xlu0 %3997
    %v3999 = vrcp.pop %v3977
    %v4000 = vrcp.pop %v3980
    %v4001 = vrcp.pop %v3983
    %v4002 = vrcp.pop %v3986
    %v4003 = vrcp.pop %v3989
    %v4004 = vrcp.pop %v3992
    %v4005 = vrcp.pop %v3995
    %v4006 = vrcp.pop %v3998
    %v4007 = vmul.f32 %v3960, %v3999
    %v4008 = vmul.f32 %v3962, %v4000
    %v4009 = vmul.f32 %v3964, %v4001
    %v4010 = vmul.f32 %v3966, %v4002
    %v4011 = vmul.f32 %v3968, %v4003
    %v4012 = vmul.f32 %v3970, %v4004
    %v4013 = vmul.f32 %v3972, %v4005
    %v4014 = vmul.f32 %v3974, %v4006
    %4015 = vrot.lane.b32.xlu0 %v711, 40
    %v4016 = vpop.permute.xlu0 %4015
    %4017 = vrot.lane.b32.xlu0 %v716, 40
    %v4018 = vpop.permute.xlu0 %4017
    %4019 = vrot.lane.b32.xlu0 %v721, 40
    %v4020 = vpop.permute.xlu0 %4019
    %4021 = vrot.lane.b32.xlu0 %v726, 40
    %v4022 = vpop.permute.xlu0 %4021
    %4023 = vrot.lane.b32.xlu0 %v731, 40
    %v4024 = vpop.permute.xlu0 %4023
    %4025 = vrot.lane.b32.xlu0 %v736, 40
    %v4026 = vpop.permute.xlu0 %4025
    %4027 = vrot.lane.b32.xlu0 %v741, 40
    %v4028 = vpop.permute.xlu0 %4027
    %4029 = vrot.lane.b32.xlu0 %v746, 40
    %v4030 = vpop.permute.xlu0 %4029
    %v4040 = vsel %vm934, %v4007, 0
    %v4043 = vsel %vm934, %v4008, 0
    %v4046 = vsel %vm934, %v4009, 0
    %v4049 = vsel %vm934, %v4010, 0
    %v4052 = vsel %vm934, %v4011, 0
    %v4055 = vsel %vm934, %v4012, 0
    %v4058 = vsel %vm934, %v4013, 0
    %v4061 = vsel %vm934, %v4014, 0
    %4063 = vmatprep.subr.mxu0 0.0
    %4064 = vmatpush1.msra.mxu0 %v4016
    %4065 = vmatprep.subr.mxu0 0.0
    %4066 = vmatpush1.msra.mxu0 %v4018
    %4067 = vmatprep.subr.mxu0 0.0
    %4068 = vmatpush1.msra.mxu0 %v4020
    %4069 = vmatprep.subr.mxu0 0.0
    %4070 = vmatpush1.msra.mxu0 %v4022
    %4071 = vmatprep.subr.mxu0 0.0
    %4072 = vmatpush1.msra.mxu0 %v4024
    %4073 = vmatprep.subr.mxu0 0.0
    %4074 = vmatpush1.msra.mxu0 %v4026
    %4075 = vmatprep.subr.mxu0 0.0
    %4076 = vmatpush1.msra.mxu0 %v4028
    %4077 = vmatprep.subr.mxu0 0.0
    %4078 = vmatpush1.msra.mxu0 %v4030
    %4079 = vmatprep.subr.mxu0 0.0
    %4080 = vmatpush1.msra.mxu0 0.0
    %4081 = vmatprep.subr.mxu0 0.0
    %4082 = vmatpush1.msra.mxu0 0.0
    %4083 = vmatprep.subr.mxu0 0.0
    %4084 = vmatpush1.msra.mxu0 0.0
    %4085 = vmatprep.subr.mxu0 0.0
    %4086 = vmatpush1.msra.mxu0 0.0
    %4087 = vmatprep.subr.mxu0 0.0
    %4088 = vmatpush1.msra.mxu0 0.0
    %4089 = vmatprep.subr.mxu0 0.0
    %4090 = vmatpush1.msra.mxu0 0.0
    %4091 = vmatprep.subr.mxu0 0.0
    %4092 = vmatpush1.msra.mxu0 0.0
    %4093 = vmatprep.subr.mxu0 0.0
    %4094 = vmatpush1.msra.mxu0 0.0
    %4095 = vmatprep.subr.mxu0 0.0
    %4096 = vmatpush1.msra.mxu0 0.0
    %4097 = vmatprep.subr.mxu0 0.0
    %4098 = vmatpush1.msra.mxu0 0.0
    %4099 = vmatprep.subr.mxu0 0.0
    %4100 = vmatpush1.msra.mxu0 0.0
    %4101 = vmatprep.subr.mxu0 0.0
    %4102 = vmatpush1.msra.mxu0 0.0
    %4103 = vmatprep.subr.mxu0 0.0
    %4104 = vmatpush1.msra.mxu0 0.0
    %4105 = vmatprep.subr.mxu0 0.0
    %4106 = vmatpush1.msra.mxu0 0.0
    %4107 = vmatprep.subr.mxu0 0.0
    %4108 = vmatpush1.msra.mxu0 0.0
    %4109 = vmatprep.subr.mxu0 0.0
    %4110 = vmatpush1.msra.mxu0 0.0
    %4111 = vmatprep.subr.mxu0 0.0
    %4112 = vmatpush1.msra.mxu0 0.0
    %4113 = vmatprep.subr.mxu0 0.0
    %4114 = vmatpush1.msra.mxu0 0.0
    %4115 = vmatprep.subr.mxu0 0.0
    %4116 = vmatpush1.msra.mxu0 0.0
    %4117 = vmatprep.subr.mxu0 0.0
    %4118 = vmatpush1.msra.mxu0 0.0
    %4119 = vmatprep.subr.mxu0 0.0
    %4120 = vmatpush1.msra.mxu0 0.0
    %4121 = vmatprep.subr.mxu0 0.0
    %4122 = vmatpush1.msra.mxu0 0.0
    %4123 = vmatprep.subr.mxu0 0.0
    %4124 = vmatpush1.msra.mxu0 0.0
    %4125 = vmatprep.subr.mxu0 0.0
    %4126 = vmatpush1.msra.mxu0 0.0
    %4127 = vmatprep.mubr.f32.mxu0 0.0
    %4128 = vmatmul.mubr.f32.gmra.mrb[0].mxu0 %v4040
    %v4129 = vpop.f32.mrb[0].mxu0
    %v4130 = vadd.f32 0.0, %v4129
    %v4131 = vpop.f32.mrb[0].mxu0
    %4132 = vmatprep.mubr.f32.mxu0 0.0
    %4133 = vmatmul.mubr.f32.gmra.mrb[0].mxu0 %v4043
    %v4134 = vpop.f32.mrb[0].mxu0
    %v4135 = vadd.f32 0.0, %v4134
    %v4136 = vpop.f32.mrb[0].mxu0
    %4137 = vmatprep.mubr.f32.mxu0 0.0
    %4138 = vmatmul.mubr.f32.gmra.mrb[0].mxu0 %v4046
    %v4139 = vpop.f32.mrb[0].mxu0
    %v4140 = vadd.f32 0.0, %v4139
    %v4141 = vpop.f32.mrb[0].mxu0
    %4142 = vmatprep.mubr.f32.mxu0 0.0
    %4143 = vmatmul.mubr.f32.gmra.mrb[0].mxu0 %v4049
    %v4144 = vpop.f32.mrb[0].mxu0
    %v4145 = vadd.f32 0.0, %v4144
    %v4146 = vpop.f32.mrb[0].mxu0
    %4147 = vmatprep.mubr.f32.mxu0 0.0
    %4148 = vmatmul.mubr.f32.gmra.mrb[0].mxu0 %v4052
    %v4149 = vpop.f32.mrb[0].mxu0
    %v4150 = vadd.f32 0.0, %v4149
    %v4151 = vpop.f32.mrb[0].mxu0
    %4152 = vmatprep.mubr.f32.mxu0 0.0
    %4153 = vmatmul.mubr.f32.gmra.mrb[0].mxu0 %v4055
    %v4154 = vpop.f32.mrb[0].mxu0
    %v4155 = vadd.f32 0.0, %v4154
    %v4156 = vpop.f32.mrb[0].mxu0
    %4157 = vmatprep.mubr.f32.mxu0 0.0
    %4158 = vmatmul.mubr.f32.gmra.mrb[0].mxu0 %v4058
    %v4159 = vpop.f32.mrb[0].mxu0
    %v4160 = vadd.f32 0.0, %v4159
    %v4161 = vpop.f32.mrb[0].mxu0
    %4162 = vmatprep.mubr.f32.mxu0 0.0
    %4163 = vmatmul.mubr.f32.gmra.mrb[0].mxu0 %v4061
    %v4164 = vpop.f32.mrb[0].mxu0
    %v4165 = vadd.f32 0.0, %v4164
    %v4166 = vpop.f32.mrb[0].mxu0
    %4167 = vdwg.mxu0
    %4176 = vrot.lane.b32.xlu0 %v3310, 8
    %v4177 = vpop.permute.xlu0 %4176
    %4178 = vrot.lane.b32.xlu0 %v3315, 8
    %v4179 = vpop.permute.xlu0 %4178
    %4180 = vrot.lane.b32.xlu0 %v3320, 8
    %v4181 = vpop.permute.xlu0 %4180
    %4182 = vrot.lane.b32.xlu0 %v3325, 8
    %v4183 = vpop.permute.xlu0 %4182
    %4184 = vrot.lane.b32.xlu0 %v3330, 8
    %v4185 = vpop.permute.xlu0 %4184
    %4186 = vrot.lane.b32.xlu0 %v3335, 8
    %v4187 = vpop.permute.xlu0 %4186
    %4188 = vrot.lane.b32.xlu0 %v3340, 8
    %v4189 = vpop.permute.xlu0 %4188
    %4190 = vrot.lane.b32.xlu0 %v3345, 8
    %v4191 = vpop.permute.xlu0 %4190
    %4208 = vrot.lane.b32.xlu0 %v3720, 16
    %v4209 = vpop.permute.xlu0 %4208
    %4210 = vrot.lane.b32.xlu0 %v3725, 16
    %v4211 = vpop.permute.xlu0 %4210
    %4212 = vrot.lane.b32.xlu0 %v3730, 16
    %v4213 = vpop.permute.xlu0 %4212
    %4214 = vrot.lane.b32.xlu0 %v3735, 16
    %v4215 = vpop.permute.xlu0 %4214
    %4216 = vrot.lane.b32.xlu0 %v3740, 16
    %v4217 = vpop.permute.xlu0 %4216
    %4218 = vrot.lane.b32.xlu0 %v3745, 16
    %v4219 = vpop.permute.xlu0 %4218
    %4220 = vrot.lane.b32.xlu0 %v3750, 16
    %v4221 = vpop.permute.xlu0 %4220
    %4222 = vrot.lane.b32.xlu0 %v3755, 16
    %v4223 = vpop.permute.xlu0 %4222
    %4240 = vrot.lane.b32.xlu0 %v4130, 24
    %v4241 = vpop.permute.xlu0 %4240
    %4242 = vrot.lane.b32.xlu0 %v4135, 24
    %v4243 = vpop.permute.xlu0 %4242
    %4244 = vrot.lane.b32.xlu0 %v4140, 24
    %v4245 = vpop.permute.xlu0 %4244
    %4246 = vrot.lane.b32.xlu0 %v4145, 24
    %v4247 = vpop.permute.xlu0 %4246
    %4248 = vrot.lane.b32.xlu0 %v4150, 24
    %v4249 = vpop.permute.xlu0 %4248
    %4250 = vrot.lane.b32.xlu0 %v4155, 24
    %v4251 = vpop.permute.xlu0 %4250
    %4252 = vrot.lane.b32.xlu0 %v4160, 24
    %v4253 = vpop.permute.xlu0 %4252
    %4254 = vrot.lane.b32.xlu0 %v4165, 24
    %v4255 = vpop.permute.xlu0 %4254
    %v4264 = vsel %vm51, %v2900, %v4177
    %v4265 = vsel %vm51, %v2905, %v4179
    %v4266 = vsel %vm51, %v2910, %v4181
    %v4267 = vsel %vm51, %v2915, %v4183
    %v4268 = vsel %vm51, %v2920, %v4185
    %v4269 = vsel %vm51, %v2925, %v4187
    %v4270 = vsel %vm51, %v2930, %v4189
    %v4271 = vsel %vm51, %v2935, %v4191
    %v4272 = vsel %vm2510, %v4264, %v4209
    %v4273 = vsel %vm2510, %v4265, %v4211
    %v4274 = vsel %vm2510, %v4266, %v4213
    %v4275 = vsel %vm2510, %v4267, %v4215
    %v4276 = vsel %vm2510, %v4268, %v4217
    %v4277 = vsel %vm2510, %v4269, %v4219
    %v4278 = vsel %vm2510, %v4270, %v4221
    %v4279 = vsel %vm2510, %v4271, %v4223
    %v4280 = vsel %vm2519, %v4272, %v4241
    %v4281 = vsel %vm2519, %v4273, %v4243
    %v4282 = vsel %vm2519, %v4274, %v4245
    %v4283 = vsel %vm2519, %v4275, %v4247
    %v4284 = vsel %vm2519, %v4276, %v4249
    %v4285 = vsel %vm2519, %v4277, %v4251
    %v4286 = vsel %vm2519, %v4278, %v4253
    %v4287 = vsel %vm2519, %v4279, %v4255
    %4292 = vrot.lane.b32.xlu0 %v521, 32
    %v4293 = vpop.permute.xlu0 %4292
    %4294 = vrot.lane.b32.xlu0 %v522, 32
    %v4295 = vpop.permute.xlu0 %4294
    %4296 = vrot.lane.b32.xlu0 %v523, 32
    %v4297 = vpop.permute.xlu0 %4296
    %4298 = vrot.lane.b32.xlu0 %v524, 32
    %v4299 = vpop.permute.xlu0 %4298
    %4305 = vrot.lane.b32.xlu0 %v555, 32
    %v4306 = vpop.permute.xlu0 %4305
    %v4309 = vsel %vm271, %v2520, 0
    %v4312 = vsel %vm271, %v2521, 0
    %v4315 = vsel %vm271, %v2522, 0
    %v4318 = vsel %vm271, %v2523, 0
    %v4321 = vsel %vm271, %v2524, 0
    %v4324 = vsel %vm271, %v2525, 0
    %v4327 = vsel %vm271, %v2526, 0
    %v4330 = vsel %vm271, %v2527, 0
    %v4333 = vsel %vm271, %v4280, 0
    %v4336 = vsel %vm271, %v4281, 0
    %v4339 = vsel %vm271, %v4282, 0
    %v4342 = vsel %vm271, %v4283, 0
    %v4345 = vsel %vm271, %v4284, 0
    %v4348 = vsel %vm271, %v4285, 0
    %v4351 = vsel %vm271, %v4286, 0
    %v4354 = vsel %vm271, %v4287, 0
    %4356 = vmatprep.subr.mxu0 0.0
    %4357 = vmatpush1.msra.mxu0 %v4293
    %4358 = vmatprep.subr.mxu0 0.0
    %4359 = vmatpush1.msra.mxu0 %v4295
    %4360 = vmatprep.subr.mxu0 0.0
    %4361 = vmatpush1.msra.mxu0 %v4297
    %4362 = vmatprep.subr.mxu0 0.0
    %4363 = vmatpush1.msra.mxu0 %v4299
    %4364 = vmatprep.subr.mxu0 0.0
    %4365 = vmatpush1.msra.mxu0 0.0
    %4366 = vmatprep.subr.mxu0 0.0
    %4367 = vmatpush1.msra.mxu0 0.0
    %4368 = vmatprep.subr.mxu0 0.0
    %4369 = vmatpush1.msra.mxu0 0.0
    %4370 = vmatprep.subr.mxu0 0.0
    %4371 = vmatpush1.msra.mxu0 0.0
    %4372 = vmatprep.subr.mxu0 0.0
    %4373 = vmatpush1.msra.mxu0 0.0
    %4374 = vmatprep.subr.mxu0 0.0
    %4375 = vmatpush1.msra.mxu0 0.0
    %4376 = vmatprep.subr.mxu0 0.0
    %4377 = vmatpush1.msra.mxu0 0.0
    %4378 = vmatprep.subr.mxu0 0.0
    %4379 = vmatpush1.msra.mxu0 0.0
    %4380 = vmatprep.subr.mxu0 0.0
    %4381 = vmatpush1.msra.mxu0 0.0
    %4382 = vmatprep.subr.mxu0 0.0
    %4383 = vmatpush1.msra.mxu0 0.0
    %4384 = vmatprep.subr.mxu0 0.0
    %4385 = vmatpush1.msra.mxu0 0.0
    %4386 = vmatprep.subr.mxu0 0.0
    %4387 = vmatpush1.msra.mxu0 0.0
    %4388 = vmatprep.subr.mxu0 0.0
    %4389 = vmatpush1.msra.mxu0 0.0
    %4390 = vmatprep.subr.mxu0 0.0
    %4391 = vmatpush1.msra.mxu0 0.0
    %4392 = vmatprep.subr.mxu0 0.0
    %4393 = vmatpush1.msra.mxu0 0.0
    %4394 = vmatprep.subr.mxu0 0.0
    %4395 = vmatpush1.msra.mxu0 0.0
    %4396 = vmatprep.subr.mxu0 0.0
    %4397 = vmatpush1.msra.mxu0 0.0
    %4398 = vmatprep.subr.mxu0 0.0
    %4399 = vmatpush1.msra.mxu0 0.0
    %4400 = vmatprep.subr.mxu0 0.0
    %4401 = vmatpush1.msra.mxu0 0.0
    %4402 = vmatprep.subr.mxu0 0.0
    %4403 = vmatpush1.msra.mxu0 0.0
    %4404 = vmatprep.subr.mxu0 0.0
    %4405 = vmatpush1.msra.mxu0 0.0
    %4406 = vmatprep.subr.mxu0 0.0
    %4407 = vmatpush1.msra.mxu0 0.0
    %4408 = vmatprep.subr.mxu0 0.0
    %4409 = vmatpush1.msra.mxu0 0.0
    %4410 = vmatprep.subr.mxu0 0.0
    %4411 = vmatpush1.msra.mxu0 0.0
    %4412 = vmatprep.subr.mxu0 0.0
    %4413 = vmatpush1.msra.mxu0 0.0
    %4414 = vmatprep.subr.mxu0 0.0
    %4415 = vmatpush1.msra.mxu0 0.0
    %4416 = vmatprep.subr.mxu0 0.0
    %4417 = vmatpush1.msra.mxu0 0.0
    %4418 = vmatprep.subr.mxu0 0.0
    %4419 = vmatpush1.msra.mxu0 0.0
    %4420 = vmatprep.mubr.f32.mxu0 0.0
    %4421 = vmatmul.mubr.f32.gmra.mrb[0].mxu0 %v4309
    %v4422 = vpop.f32.mrb[0].mxu0
    %v4423 = vadd.f32 %v4306, %v4422
    %v4424 = vpop.f32.mrb[0].mxu0
    %4425 = vmatprep.mubr.f32.mxu0 0.0
    %4426 = vmatmul.mubr.f32.gmra.mrb[0].mxu0 %v4312
    %v4427 = vpop.f32.mrb[0].mxu0
    %v4428 = vadd.f32 %v4306, %v4427
    %v4429 = vpop.f32.mrb[0].mxu0
    %4430 = vmatprep.mubr.f32.mxu0 0.0
    %4431 = vmatmul.mubr.f32.gmra.mrb[0].mxu0 %v4315
    %v4432 = vpop.f32.mrb[0].mxu0
    %v4433 = vadd.f32 %v4306, %v4432
    %v4434 = vpop.f32.mrb[0].mxu0
    %4435 = vmatprep.mubr.f32.mxu0 0.0
    %4436 = vmatmul.mubr.f32.gmra.mrb[0].mxu0 %v4318
    %v4437 = vpop.f32.mrb[0].mxu0
    %v4438 = vadd.f32 %v4306, %v4437
    %v4439 = vpop.f32.mrb[0].mxu0
    %4440 = vmatprep.mubr.f32.mxu0 0.0
    %4441 = vmatmul.mubr.f32.gmra.mrb[0].mxu0 %v4321
    %v4442 = vpop.f32.mrb[0].mxu0
    %v4443 = vadd.f32 %v4306, %v4442
    %v4444 = vpop.f32.mrb[0].mxu0
    %4445 = vmatprep.mubr.f32.mxu0 0.0
    %4446 = vmatmul.mubr.f32.gmra.mrb[0].mxu0 %v4324
    %v4447 = vpop.f32.mrb[0].mxu0
    %v4448 = vadd.f32 %v4306, %v4447
    %v4449 = vpop.f32.mrb[0].mxu0
    %4450 = vmatprep.mubr.f32.mxu0 0.0
    %4451 = vmatmul.mubr.f32.gmra.mrb[0].mxu0 %v4327
    %v4452 = vpop.f32.mrb[0].mxu0
    %v4453 = vadd.f32 %v4306, %v4452
    %v4454 = vpop.f32.mrb[0].mxu0
    %4455 = vmatprep.mubr.f32.mxu0 0.0
    %4456 = vmatmul.mubr.f32.gmra.mrb[0].mxu0 %v4330
    %v4457 = vpop.f32.mrb[0].mxu0
    %v4458 = vadd.f32 %v4306, %v4457
    %v4459 = vpop.f32.mrb[0].mxu0
    %4460 = vmatprep.mubr.f32.mxu0 0.0
    %4461 = vmatmul.mubr.f32.gmra.mrb[0].mxu0 %v4333
    %v4462 = vpop.f32.mrb[0].mxu0
    %v4463 = vadd.f32 %v4306, %v4462
    %v4464 = vpop.f32.mrb[0].mxu0
    %4465 = vmatprep.mubr.f32.mxu0 0.0
    %4466 = vmatmul.mubr.f32.gmra.mrb[0].mxu0 %v4336
    %v4467 = vpop.f32.mrb[0].mxu0
    %v4468 = vadd.f32 %v4306, %v4467
    %v4469 = vpop.f32.mrb[0].mxu0
    %4470 = vmatprep.mubr.f32.mxu0 0.0
    %4471 = vmatmul.mubr.f32.gmra.mrb[0].mxu0 %v4339
    %v4472 = vpop.f32.mrb[0].mxu0
    %v4473 = vadd.f32 %v4306, %v4472
    %v4474 = vpop.f32.mrb[0].mxu0
    %4475 = vmatprep.mubr.f32.mxu0 0.0
    %4476 = vmatmul.mubr.f32.gmra.mrb[0].mxu0 %v4342
    %v4477 = vpop.f32.mrb[0].mxu0
    %v4478 = vadd.f32 %v4306, %v4477
    %v4479 = vpop.f32.mrb[0].mxu0
    %4480 = vmatprep.mubr.f32.mxu0 0.0
    %4481 = vmatmul.mubr.f32.gmra.mrb[0].mxu0 %v4345
    %v4482 = vpop.f32.mrb[0].mxu0
    %v4483 = vadd.f32 %v4306, %v4482
    %v4484 = vpop.f32.mrb[0].mxu0
    %4485 = vmatprep.mubr.f32.mxu0 0.0
    %4486 = vmatmul.mubr.f32.gmra.mrb[0].mxu0 %v4348
    %v4487 = vpop.f32.mrb[0].mxu0
    %v4488 = vadd.f32 %v4306, %v4487
    %v4489 = vpop.f32.mrb[0].mxu0
    %4490 = vmatprep.mubr.f32.mxu0 0.0
    %4491 = vmatmul.mubr.f32.gmra.mrb[0].mxu0 %v4351
    %v4492 = vpop.f32.mrb[0].mxu0
    %v4493 = vadd.f32 %v4306, %v4492
    %v4494 = vpop.f32.mrb[0].mxu0
    %4495 = vmatprep.mubr.f32.mxu0 0.0
    %4496 = vmatmul.mubr.f32.gmra.mrb[0].mxu0 %v4354
    %v4497 = vpop.f32.mrb[0].mxu0
    %v4498 = vadd.f32 %v4306, %v4497
    %v4499 = vpop.f32.mrb[0].mxu0
    %4500 = vdwg.mxu0
    %v4501 = vadd.f32 %v505, %v4423
    %v4502 = vadd.f32 %v506, %v4428
    %v4503 = vadd.f32 %v507, %v4433
    %v4504 = vadd.f32 %v508, %v4438
    %v4505 = vadd.f32 %v509, %v4443
    %v4506 = vadd.f32 %v510, %v4448
    %v4507 = vadd.f32 %v511, %v4453
    %v4508 = vadd.f32 %v512, %v4458
    %v4509 = vadd.f32 %v513, %v4463
    %v4510 = vadd.f32 %v514, %v4468
    %v4511 = vadd.f32 %v515, %v4473
    %v4512 = vadd.f32 %v516, %v4478
    %v4513 = vadd.f32 %v517, %v4483
    %v4514 = vadd.f32 %v518, %v4488
    %v4515 = vadd.f32 %v519, %v4493
    %v4516 = vadd.f32 %v520, %v4498
    %v4517 = vsel %vm271, %v4501, 0.0
    %4518 = vadd.xlane.f32.xlu0 %v4517
    %v4519 = vpop.xlane.xlu0 %4518
    %v4520 = vsel %vm271, %v4502, 0.0
    %4521 = vadd.xlane.f32.xlu0 %v4520
    %v4522 = vpop.xlane.xlu0 %4521
    %v4523 = vsel %vm271, %v4503, 0.0
    %4524 = vadd.xlane.f32.xlu0 %v4523
    %v4525 = vpop.xlane.xlu0 %4524
    %v4526 = vsel %vm271, %v4504, 0.0
    %4527 = vadd.xlane.f32.xlu0 %v4526
    %v4528 = vpop.xlane.xlu0 %4527
    %v4529 = vsel %vm271, %v4505, 0.0
    %4530 = vadd.xlane.f32.xlu0 %v4529
    %v4531 = vpop.xlane.xlu0 %4530
    %v4532 = vsel %vm271, %v4506, 0.0
    %4533 = vadd.xlane.f32.xlu0 %v4532
    %v4534 = vpop.xlane.xlu0 %4533
    %v4535 = vsel %vm271, %v4507, 0.0
    %4536 = vadd.xlane.f32.xlu0 %v4535
    %v4537 = vpop.xlane.xlu0 %4536
    %v4538 = vsel %vm271, %v4508, 0.0
    %4539 = vadd.xlane.f32.xlu0 %v4538
    %v4540 = vpop.xlane.xlu0 %4539
    %v4541 = vsel %vm271, %v4509, 0.0
    %4542 = vadd.xlane.f32.xlu0 %v4541
    %v4543 = vpop.xlane.xlu0 %4542
    %v4544 = vsel %vm271, %v4510, 0.0
    %4545 = vadd.xlane.f32.xlu0 %v4544
    %v4546 = vpop.xlane.xlu0 %4545
    %v4547 = vsel %vm271, %v4511, 0.0
    %4548 = vadd.xlane.f32.xlu0 %v4547
    %v4549 = vpop.xlane.xlu0 %4548
    %v4550 = vsel %vm271, %v4512, 0.0
    %4551 = vadd.xlane.f32.xlu0 %v4550
    %v4552 = vpop.xlane.xlu0 %4551
    %v4553 = vsel %vm271, %v4513, 0.0
    %4554 = vadd.xlane.f32.xlu0 %v4553
    %v4555 = vpop.xlane.xlu0 %4554
    %v4556 = vsel %vm271, %v4514, 0.0
    %4557 = vadd.xlane.f32.xlu0 %v4556
    %v4558 = vpop.xlane.xlu0 %4557
    %v4559 = vsel %vm271, %v4515, 0.0
    %4560 = vadd.xlane.f32.xlu0 %v4559
    %v4561 = vpop.xlane.xlu0 %4560
    %v4562 = vsel %vm271, %v4516, 0.0
    %4563 = vadd.xlane.f32.xlu0 %v4562
    %v4564 = vpop.xlane.xlu0 %4563
    %v4565 = vmul.f32 %v4519, %v320
    %v4566 = vmul.f32 %v4522, %v320
    %v4567 = vmul.f32 %v4525, %v320
    %v4568 = vmul.f32 %v4528, %v320
    %v4569 = vmul.f32 %v4531, %v320
    %v4570 = vmul.f32 %v4534, %v320
    %v4571 = vmul.f32 %v4537, %v320
    %v4572 = vmul.f32 %v4540, %v320
    %v4573 = vmul.f32 %v4543, %v320
    %v4574 = vmul.f32 %v4546, %v320
    %v4575 = vmul.f32 %v4549, %v320
    %v4576 = vmul.f32 %v4552, %v320
    %v4577 = vmul.f32 %v4555, %v320
    %v4578 = vmul.f32 %v4558, %v320
    %v4579 = vmul.f32 %v4561, %v320
    %v4580 = vmul.f32 %v4564, %v320
    %v4581 = vsub.f32 %v4501, %v4565
    %v4582 = vsub.f32 %v4502, %v4566
    %v4583 = vsub.f32 %v4503, %v4567
    %v4584 = vsub.f32 %v4504, %v4568
    %v4585 = vsub.f32 %v4505, %v4569
    %v4586 = vsub.f32 %v4506, %v4570
    %v4587 = vsub.f32 %v4507, %v4571
    %v4588 = vsub.f32 %v4508, %v4572
    %v4589 = vsub.f32 %v4509, %v4573
    %v4590 = vsub.f32 %v4510, %v4574
    %v4591 = vsub.f32 %v4511, %v4575
    %v4592 = vsub.f32 %v4512, %v4576
    %v4593 = vsub.f32 %v4513, %v4577
    %v4594 = vsub.f32 %v4514, %v4578
    %v4595 = vsub.f32 %v4515, %v4579
    %v4596 = vsub.f32 %v4516, %v4580
    %v4597 = vmul.f32 %v4581, %v4581
    %v4598 = vmul.f32 %v4582, %v4582
    %v4599 = vmul.f32 %v4583, %v4583
    %v4600 = vmul.f32 %v4584, %v4584
    %v4601 = vmul.f32 %v4585, %v4585
    %v4602 = vmul.f32 %v4586, %v4586
    %v4603 = vmul.f32 %v4587, %v4587
    %v4604 = vmul.f32 %v4588, %v4588
    %v4605 = vmul.f32 %v4589, %v4589
    %v4606 = vmul.f32 %v4590, %v4590
    %v4607 = vmul.f32 %v4591, %v4591
    %v4608 = vmul.f32 %v4592, %v4592
    %v4609 = vmul.f32 %v4593, %v4593
    %v4610 = vmul.f32 %v4594, %v4594
    %v4611 = vmul.f32 %v4595, %v4595
    %v4612 = vmul.f32 %v4596, %v4596
    %v4613 = vsel %vm271, %v4597, 0.0
    %4614 = vadd.xlane.f32.xlu0 %v4613
    %v4615 = vpop.xlane.xlu0 %4614
    %v4616 = vsel %vm271, %v4598, 0.0
    %4617 = vadd.xlane.f32.xlu0 %v4616
    %v4618 = vpop.xlane.xlu0 %4617
    %v4619 = vsel %vm271, %v4599, 0.0
    %4620 = vadd.xlane.f32.xlu0 %v4619
    %v4621 = vpop.xlane.xlu0 %4620
    %v4622 = vsel %vm271, %v4600, 0.0
    %4623 = vadd.xlane.f32.xlu0 %v4622
    %v4624 = vpop.xlane.xlu0 %4623
    %v4625 = vsel %vm271, %v4601, 0.0
    %4626 = vadd.xlane.f32.xlu0 %v4625
    %v4627 = vpop.xlane.xlu0 %4626
    %v4628 = vsel %vm271, %v4602, 0.0
    %4629 = vadd.xlane.f32.xlu0 %v4628
    %v4630 = vpop.xlane.xlu0 %4629
    %v4631 = vsel %vm271, %v4603, 0.0
    %4632 = vadd.xlane.f32.xlu0 %v4631
    %v4633 = vpop.xlane.xlu0 %4632
    %v4634 = vsel %vm271, %v4604, 0.0
    %4635 = vadd.xlane.f32.xlu0 %v4634
    %v4636 = vpop.xlane.xlu0 %4635
    %v4637 = vsel %vm271, %v4605, 0.0
    %4638 = vadd.xlane.f32.xlu0 %v4637
    %v4639 = vpop.xlane.xlu0 %4638
    %v4640 = vsel %vm271, %v4606, 0.0
    %4641 = vadd.xlane.f32.xlu0 %v4640
    %v4642 = vpop.xlane.xlu0 %4641
    %v4643 = vsel %vm271, %v4607, 0.0
    %4644 = vadd.xlane.f32.xlu0 %v4643
    %v4645 = vpop.xlane.xlu0 %4644
    %v4646 = vsel %vm271, %v4608, 0.0
    %4647 = vadd.xlane.f32.xlu0 %v4646
    %v4648 = vpop.xlane.xlu0 %4647
    %v4649 = vsel %vm271, %v4609, 0.0
    %4650 = vadd.xlane.f32.xlu0 %v4649
    %v4651 = vpop.xlane.xlu0 %4650
    %v4652 = vsel %vm271, %v4610, 0.0
    %4653 = vadd.xlane.f32.xlu0 %v4652
    %v4654 = vpop.xlane.xlu0 %4653
    %v4655 = vsel %vm271, %v4611, 0.0
    %4656 = vadd.xlane.f32.xlu0 %v4655
    %v4657 = vpop.xlane.xlu0 %4656
    %v4658 = vsel %vm271, %v4612, 0.0
    %4659 = vadd.xlane.f32.xlu0 %v4658
    %v4660 = vpop.xlane.xlu0 %4659
    %v4661 = vmul.f32 %v4615, %v320
    %v4662 = vmul.f32 %v4618, %v320
    %v4663 = vmul.f32 %v4621, %v320
    %v4664 = vmul.f32 %v4624, %v320
    %v4665 = vmul.f32 %v4627, %v320
    %v4666 = vmul.f32 %v4630, %v320
    %v4667 = vmul.f32 %v4633, %v320
    %v4668 = vmul.f32 %v4636, %v320
    %v4669 = vmul.f32 %v4639, %v320
    %v4670 = vmul.f32 %v4642, %v320
    %v4671 = vmul.f32 %v4645, %v320
    %v4672 = vmul.f32 %v4648, %v320
    %v4673 = vmul.f32 %v4651, %v320
    %v4674 = vmul.f32 %v4654, %v320
    %v4675 = vmul.f32 %v4657, %v320
    %v4676 = vmul.f32 %v4660, %v320
    %v4677 = vadd.f32 %v4661, 1e-12
    %v4678 = vadd.f32 %v4662, 1e-12
    %v4679 = vadd.f32 %v4663, 1e-12
    %v4680 = vadd.f32 %v4664, 1e-12
    %v4681 = vadd.f32 %v4665, 1e-12
    %v4682 = vadd.f32 %v4666, 1e-12
    %v4683 = vadd.f32 %v4667, 1e-12
    %v4684 = vadd.f32 %v4668, 1e-12
    %v4685 = vadd.f32 %v4669, 1e-12
    %v4686 = vadd.f32 %v4670, 1e-12
    %v4687 = vadd.f32 %v4671, 1e-12
    %v4688 = vadd.f32 %v4672, 1e-12
    %v4689 = vadd.f32 %v4673, 1e-12
    %v4690 = vadd.f32 %v4674, 1e-12
    %v4691 = vadd.f32 %v4675, 1e-12
    %v4692 = vadd.f32 %v4676, 1e-12
    %v4693 = vrsqrt.pop %v4677
    %v4694 = vrsqrt.pop %v4678
    %v4695 = vrsqrt.pop %v4679
    %v4696 = vrsqrt.pop %v4680
    %v4697 = vrsqrt.pop %v4681
    %v4698 = vrsqrt.pop %v4682
    %v4699 = vrsqrt.pop %v4683
    %v4700 = vrsqrt.pop %v4684
    %v4701 = vrsqrt.pop %v4685
    %v4702 = vrsqrt.pop %v4686
    %v4703 = vrsqrt.pop %v4687
    %v4704 = vrsqrt.pop %v4688
    %v4705 = vrsqrt.pop %v4689
    %v4706 = vrsqrt.pop %v4690
    %v4707 = vrsqrt.pop %v4691
    %v4708 = vrsqrt.pop %v4692
    %v4709 = vmul.f32 %v4581, %v4693
    %v4710 = vmul.f32 %v4582, %v4694
    %v4711 = vmul.f32 %v4583, %v4695
    %v4712 = vmul.f32 %v4584, %v4696
    %v4713 = vmul.f32 %v4585, %v4697
    %v4714 = vmul.f32 %v4586, %v4698
    %v4715 = vmul.f32 %v4587, %v4699
    %v4716 = vmul.f32 %v4588, %v4700
    %v4717 = vmul.f32 %v4589, %v4701
    %v4718 = vmul.f32 %v4590, %v4702
    %v4719 = vmul.f32 %v4591, %v4703
    %v4720 = vmul.f32 %v4592, %v4704
    %v4721 = vmul.f32 %v4593, %v4705
    %v4722 = vmul.f32 %v4594, %v4706
    %v4723 = vmul.f32 %v4595, %v4707
    %v4724 = vmul.f32 %v4596, %v4708
    %v4725 = vlaneseq
    %v4726 = vshrl.u32 %v4725, 7
    %v4727 = vsub.s32 0, %v4726
    %v4728 = vrot.slane %v546, %v4727
    %v4729 = vmul.f32 %v4709, %v4728
    %v4730 = vmul.f32 %v4710, %v4728
    %v4731 = vmul.f32 %v4711, %v4728
    %v4732 = vmul.f32 %v4712, %v4728
    %v4733 = vmul.f32 %v4713, %v4728
    %v4734 = vmul.f32 %v4714, %v4728
    %v4735 = vmul.f32 %v4715, %v4728
    %v4736 = vmul.f32 %v4716, %v4728
    %v4737 = vmul.f32 %v4717, %v4728
    %v4738 = vmul.f32 %v4718, %v4728
    %v4739 = vmul.f32 %v4719, %v4728
    %v4740 = vmul.f32 %v4720, %v4728
    %v4741 = vmul.f32 %v4721, %v4728
    %v4742 = vmul.f32 %v4722, %v4728
    %v4743 = vmul.f32 %v4723, %v4728
    %v4744 = vmul.f32 %v4724, %v4728
    %v4745 = vlaneseq
    %v4746 = vshrl.u32 %v4745, 7
    %v4747 = vsub.s32 0, %v4746
    %v4748 = vrot.slane %v547, %v4747
    %v4749 = vadd.f32 %v4729, %v4748
    %v4750 = vadd.f32 %v4730, %v4748
    %v4751 = vadd.f32 %v4731, %v4748
    %v4752 = vadd.f32 %v4732, %v4748
    %v4753 = vadd.f32 %v4733, %v4748
    %v4754 = vadd.f32 %v4734, %v4748
    %v4755 = vadd.f32 %v4735, %v4748
    %v4756 = vadd.f32 %v4736, %v4748
    %v4757 = vadd.f32 %v4737, %v4748
    %v4758 = vadd.f32 %v4738, %v4748
    %v4759 = vadd.f32 %v4739, %v4748
    %v4760 = vadd.f32 %v4740, %v4748
    %v4761 = vadd.f32 %v4741, %v4748
    %v4762 = vadd.f32 %v4742, %v4748
    %v4763 = vadd.f32 %v4743, %v4748
    %v4764 = vadd.f32 %v4744, %v4748
    %v4765 = vlaneseq
    %v4766 = vshrl.u32 %v4765, 7
    %v4767 = vsub.s32 0, %v4766
    %v4768 = vrot.slane %v548, %v4767
    %v4770 = vsel %vm271, %v4749, 0
    %v4773 = vsel %vm271, %v4750, 0
    %v4776 = vsel %vm271, %v4751, 0
    %v4779 = vsel %vm271, %v4752, 0
    %v4782 = vsel %vm271, %v4753, 0
    %v4785 = vsel %vm271, %v4754, 0
    %v4788 = vsel %vm271, %v4755, 0
    %v4791 = vsel %vm271, %v4756, 0
    %v4794 = vsel %vm271, %v4757, 0
    %v4797 = vsel %vm271, %v4758, 0
    %v4800 = vsel %vm271, %v4759, 0
    %v4803 = vsel %vm271, %v4760, 0
    %v4806 = vsel %vm271, %v4761, 0
    %v4809 = vsel %vm271, %v4762, 0
    %v4812 = vsel %vm271, %v4763, 0
    %v4815 = vsel %vm271, %v4764, 0
    %4817 = vmatprep.subr.mxu0 0.0
    %4818 = vmatpush1.msra.mxu0 %v525
    %4819 = vmatprep.subr.mxu0 0.0
    %4820 = vmatpush1.msra.mxu0 %v526
    %4821 = vmatprep.subr.mxu0 0.0
    %4822 = vmatpush1.msra.mxu0 %v527
    %4823 = vmatprep.subr.mxu0 0.0
    %4824 = vmatpush1.msra.mxu0 %v528
    %4825 = vmatprep.subr.mxu0 0.0
    %4826 = vmatpush1.msra.mxu0 0.0
    %4827 = vmatprep.subr.mxu0 0.0
    %4828 = vmatpush1.msra.mxu0 0.0
    %4829 = vmatprep.subr.mxu0 0.0
    %4830 = vmatpush1.msra.mxu0 0.0
    %4831 = vmatprep.subr.mxu0 0.0
    %4832 = vmatpush1.msra.mxu0 0.0
    %4833 = vmatprep.subr.mxu0 0.0
    %4834 = vmatpush1.msra.mxu0 0.0
    %4835 = vmatprep.subr.mxu0 0.0
    %4836 = vmatpush1.msra.mxu0 0.0
    %4837 = vmatprep.subr.mxu0 0.0
    %4838 = vmatpush1.msra.mxu0 0.0
    %4839 = vmatprep.subr.mxu0 0.0
    %4840 = vmatpush1.msra.mxu0 0.0
    %4841 = vmatprep.subr.mxu0 0.0
    %4842 = vmatpush1.msra.mxu0 0.0
    %4843 = vmatprep.subr.mxu0 0.0
    %4844 = vmatpush1.msra.mxu0 0.0
    %4845 = vmatprep.subr.mxu0 0.0
    %4846 = vmatpush1.msra.mxu0 0.0
    %4847 = vmatprep.subr.mxu0 0.0
    %4848 = vmatpush1.msra.mxu0 0.0
    %4849 = vmatprep.subr.mxu0 0.0
    %4850 = vmatpush1.msra.mxu0 0.0
    %4851 = vmatprep.subr.mxu0 0.0
    %4852 = vmatpush1.msra.mxu0 0.0
    %4853 = vmatprep.subr.mxu0 0.0
    %4854 = vmatpush1.msra.mxu0 0.0
    %4855 = vmatprep.subr.mxu0 0.0
    %4856 = vmatpush1.msra.mxu0 0.0
    %4857 = vmatprep.subr.mxu0 0.0
    %4858 = vmatpush1.msra.mxu0 0.0
    %4859 = vmatprep.subr.mxu0 0.0
    %4860 = vmatpush1.msra.mxu0 0.0
    %4861 = vmatprep.subr.mxu0 0.0
    %4862 = vmatpush1.msra.mxu0 0.0
    %4863 = vmatprep.subr.mxu0 0.0
    %4864 = vmatpush1.msra.mxu0 0.0
    %4865 = vmatprep.subr.mxu0 0.0
    %4866 = vmatpush1.msra.mxu0 0.0
    %4867 = vmatprep.subr.mxu0 0.0
    %4868 = vmatpush1.msra.mxu0 0.0
    %4869 = vmatprep.subr.mxu0 0.0
    %4870 = vmatpush1.msra.mxu0 0.0
    %4871 = vmatprep.subr.mxu0 0.0
    %4872 = vmatpush1.msra.mxu0 0.0
    %4873 = vmatprep.subr.mxu0 0.0
    %4874 = vmatpush1.msra.mxu0 0.0
    %4875 = vmatprep.subr.mxu0 0.0
    %4876 = vmatpush1.msra.mxu0 0.0
    %4877 = vmatprep.subr.mxu0 0.0
    %4878 = vmatpush1.msra.mxu0 0.0
    %4879 = vmatprep.subr.mxu0 0.0
    %4880 = vmatpush1.msra.mxu0 0.0
    %4881 = vmatprep.mubr.f32.mxu0 0.0
    %4882 = vmatmul.mubr.f32.gmra.mrb[0].mxu0 %v4770
    %v4883 = vpop.f32.mrb[0].mxu0
    %v4884 = vadd.f32 %v4768, %v4883
    %v4885 = vpop.f32.mrb[0].mxu0
    %4886 = vmatprep.mubr.f32.mxu0 0.0
    %4887 = vmatmul.mubr.f32.gmra.mrb[0].mxu0 %v4773
    %v4888 = vpop.f32.mrb[0].mxu0
    %v4889 = vadd.f32 %v4768, %v4888
    %v4890 = vpop.f32.mrb[0].mxu0
    %4891 = vmatprep.mubr.f32.mxu0 0.0
    %4892 = vmatmul.mubr.f32.gmra.mrb[0].mxu0 %v4776
    %v4893 = vpop.f32.mrb[0].mxu0
    %v4894 = vadd.f32 %v4768, %v4893
    %v4895 = vpop.f32.mrb[0].mxu0
    %4896 = vmatprep.mubr.f32.mxu0 0.0
    %4897 = vmatmul.mubr.f32.gmra.mrb[0].mxu0 %v4779
    %v4898 = vpop.f32.mrb[0].mxu0
    %v4899 = vadd.f32 %v4768, %v4898
    %v4900 = vpop.f32.mrb[0].mxu0
    %4901 = vmatprep.mubr.f32.mxu0 0.0
    %4902 = vmatmul.mubr.f32.gmra.mrb[0].mxu0 %v4782
    %v4903 = vpop.f32.mrb[0].mxu0
    %v4904 = vadd.f32 %v4768, %v4903
    %v4905 = vpop.f32.mrb[0].mxu0
    %4906 = vmatprep.mubr.f32.mxu0 0.0
    %4907 = vmatmul.mubr.f32.gmra.mrb[0].mxu0 %v4785
    %v4908 = vpop.f32.mrb[0].mxu0
    %v4909 = vadd.f32 %v4768, %v4908
    %v4910 = vpop.f32.mrb[0].mxu0
    %4911 = vmatprep.mubr.f32.mxu0 0.0
    %4912 = vmatmul.mubr.f32.gmra.mrb[0].mxu0 %v4788
    %v4913 = vpop.f32.mrb[0].mxu0
    %v4914 = vadd.f32 %v4768, %v4913
    %v4915 = vpop.f32.mrb[0].mxu0
    %4916 = vmatprep.mubr.f32.mxu0 0.0
    %4917 = vmatmul.mubr.f32.gmra.mrb[0].mxu0 %v4791
    %v4918 = vpop.f32.mrb[0].mxu0
    %v4919 = vadd.f32 %v4768, %v4918
    %v4920 = vpop.f32.mrb[0].mxu0
    %4921 = vmatprep.mubr.f32.mxu0 0.0
    %4922 = vmatmul.mubr.f32.gmra.mrb[0].mxu0 %v4794
    %v4923 = vpop.f32.mrb[0].mxu0
    %v4924 = vadd.f32 %v4768, %v4923
    %v4925 = vpop.f32.mrb[0].mxu0
    %4926 = vmatprep.mubr.f32.mxu0 0.0
    %4927 = vmatmul.mubr.f32.gmra.mrb[0].mxu0 %v4797
    %v4928 = vpop.f32.mrb[0].mxu0
    %v4929 = vadd.f32 %v4768, %v4928
    %v4930 = vpop.f32.mrb[0].mxu0
    %4931 = vmatprep.mubr.f32.mxu0 0.0
    %4932 = vmatmul.mubr.f32.gmra.mrb[0].mxu0 %v4800
    %v4933 = vpop.f32.mrb[0].mxu0
    %v4934 = vadd.f32 %v4768, %v4933
    %v4935 = vpop.f32.mrb[0].mxu0
    %4936 = vmatprep.mubr.f32.mxu0 0.0
    %4937 = vmatmul.mubr.f32.gmra.mrb[0].mxu0 %v4803
    %v4938 = vpop.f32.mrb[0].mxu0
    %v4939 = vadd.f32 %v4768, %v4938
    %v4940 = vpop.f32.mrb[0].mxu0
    %4941 = vmatprep.mubr.f32.mxu0 0.0
    %4942 = vmatmul.mubr.f32.gmra.mrb[0].mxu0 %v4806
    %v4943 = vpop.f32.mrb[0].mxu0
    %v4944 = vadd.f32 %v4768, %v4943
    %v4945 = vpop.f32.mrb[0].mxu0
    %4946 = vmatprep.mubr.f32.mxu0 0.0
    %4947 = vmatmul.mubr.f32.gmra.mrb[0].mxu0 %v4809
    %v4948 = vpop.f32.mrb[0].mxu0
    %v4949 = vadd.f32 %v4768, %v4948
    %v4950 = vpop.f32.mrb[0].mxu0
    %4951 = vmatprep.mubr.f32.mxu0 0.0
    %4952 = vmatmul.mubr.f32.gmra.mrb[0].mxu0 %v4812
    %v4953 = vpop.f32.mrb[0].mxu0
    %v4954 = vadd.f32 %v4768, %v4953
    %v4955 = vpop.f32.mrb[0].mxu0
    %4956 = vmatprep.mubr.f32.mxu0 0.0
    %4957 = vmatmul.mubr.f32.gmra.mrb[0].mxu0 %v4815
    %v4958 = vpop.f32.mrb[0].mxu0
    %v4959 = vadd.f32 %v4768, %v4958
    %v4960 = vpop.f32.mrb[0].mxu0
    %4961 = vdwg.mxu0
    %v4962 = vmul.f32 %v4884, %v4884
    %v4963 = vmul.f32 %v4889, %v4889
    %v4964 = vmul.f32 %v4894, %v4894
    %v4965 = vmul.f32 %v4899, %v4899
    %v4966 = vmul.f32 %v4904, %v4904
    %v4967 = vmul.f32 %v4909, %v4909
    %v4968 = vmul.f32 %v4914, %v4914
    %v4969 = vmul.f32 %v4919, %v4919
    %v4970 = vmul.f32 %v4924, %v4924
    %v4971 = vmul.f32 %v4929, %v4929
    %v4972 = vmul.f32 %v4934, %v4934
    %v4973 = vmul.f32 %v4939, %v4939
    %v4974 = vmul.f32 %v4944, %v4944
    %v4975 = vmul.f32 %v4949, %v4949
    %v4976 = vmul.f32 %v4954, %v4954
    %v4977 = vmul.f32 %v4959, %v4959
    %v4978 = vmul.f32 %v4884, %v4962
    %v4979 = vmul.f32 %v4889, %v4963
    %v4980 = vmul.f32 %v4894, %v4964
    %v4981 = vmul.f32 %v4899, %v4965
    %v4982 = vmul.f32 %v4904, %v4966
    %v4983 = vmul.f32 %v4909, %v4967
    %v4984 = vmul.f32 %v4914, %v4968
    %v4985 = vmul.f32 %v4919, %v4969
    %v4986 = vmul.f32 %v4924, %v4970
    %v4987 = vmul.f32 %v4929, %v4971
    %v4988 = vmul.f32 %v4934, %v4972
    %v4989 = vmul.f32 %v4939, %v4973
    %v4990 = vmul.f32 %v4944, %v4974
    %v4991 = vmul.f32 %v4949, %v4975
    %v4992 = vmul.f32 %v4954, %v4976
    %v4993 = vmul.f32 %v4959, %v4977
    %v4994 = vmul.f32 %v4978, 0.044715
    %v4995 = vmul.f32 %v4979, 0.044715
    %v4996 = vmul.f32 %v4980, 0.044715
    %v4997 = vmul.f32 %v4981, 0.044715
    %v4998 = vmul.f32 %v4982, 0.044715
    %v4999 = vmul.f32 %v4983, 0.044715
    %v5000 = vmul.f32 %v4984, 0.044715
    %v5001 = vmul.f32 %v4985, 0.044715
    %v5002 = vmul.f32 %v4986, 0.044715
    %v5003 = vmul.f32 %v4987, 0.044715
    %v5004 = vmul.f32 %v4988, 0.044715
    %v5005 = vmul.f32 %v4989, 0.044715
    %v5006 = vmul.f32 %v4990, 0.044715
    %v5007 = vmul.f32 %v4991, 0.044715
    %v5008 = vmul.f32 %v4992, 0.044715
    %v5009 = vmul.f32 %v4993, 0.044715
    %v5010 = vadd.f32 %v4884, %v4994
    %v5011 = vadd.f32 %v4889, %v4995
    %v5012 = vadd.f32 %v4894, %v4996
    %v5013 = vadd.f32 %v4899, %v4997
    %v5014 = vadd.f32 %v4904, %v4998
    %v5015 = vadd.f32 %v4909, %v4999
    %v5016 = vadd.f32 %v4914, %v5000
    %v5017 = vadd.f32 %v4919, %v5001
    %v5018 = vadd.f32 %v4924, %v5002
    %v5019 = vadd.f32 %v4929, %v5003
    %v5020 = vadd.f32 %v4934, %v5004
    %v5021 = vadd.f32 %v4939, %v5005
    %v5022 = vadd.f32 %v4944, %v5006
    %v5023 = vadd.f32 %v4949, %v5007
    %v5024 = vadd.f32 %v4954, %v5008
    %v5025 = vadd.f32 %v4959, %v5009
    %v5026 = vmul.f32 %v5010, 0.7978846
    %v5027 = vmul.f32 %v5011, 0.7978846
    %v5028 = vmul.f32 %v5012, 0.7978846
    %v5029 = vmul.f32 %v5013, 0.7978846
    %v5030 = vmul.f32 %v5014, 0.7978846
    %v5031 = vmul.f32 %v5015, 0.7978846
    %v5032 = vmul.f32 %v5016, 0.7978846
    %v5033 = vmul.f32 %v5017, 0.7978846
    %v5034 = vmul.f32 %v5018, 0.7978846
    %v5035 = vmul.f32 %v5019, 0.7978846
    %v5036 = vmul.f32 %v5020, 0.7978846
    %v5037 = vmul.f32 %v5021, 0.7978846
    %v5038 = vmul.f32 %v5022, 0.7978846
    %v5039 = vmul.f32 %v5023, 0.7978846
    %v5040 = vmul.f32 %v5024, 0.7978846
    %v5041 = vmul.f32 %v5025, 0.7978846
    %v5042 = vtanh.pop %v5026
    %v5043 = vtanh.pop %v5027
    %v5044 = vtanh.pop %v5028
    %v5045 = vtanh.pop %v5029
    %v5046 = vtanh.pop %v5030
    %v5047 = vtanh.pop %v5031
    %v5048 = vtanh.pop %v5032
    %v5049 = vtanh.pop %v5033
    %v5050 = vtanh.pop %v5034
    %v5051 = vtanh.pop %v5035
    %v5052 = vtanh.pop %v5036
    %v5053 = vtanh.pop %v5037
    %v5054 = vtanh.pop %v5038
    %v5055 = vtanh.pop %v5039
    %v5056 = vtanh.pop %v5040
    %v5057 = vtanh.pop %v5041
    %v5058 = vadd.f32 %v5042, 1.0
    %v5059 = vadd.f32 %v5043, 1.0
    %v5060 = vadd.f32 %v5044, 1.0
    %v5061 = vadd.f32 %v5045, 1.0
    %v5062 = vadd.f32 %v5046, 1.0
    %v5063 = vadd.f32 %v5047, 1.0
    %v5064 = vadd.f32 %v5048, 1.0
    %v5065 = vadd.f32 %v5049, 1.0
    %v5066 = vadd.f32 %v5050, 1.0
    %v5067 = vadd.f32 %v5051, 1.0
    %v5068 = vadd.f32 %v5052, 1.0
    %v5069 = vadd.f32 %v5053, 1.0
    %v5070 = vadd.f32 %v5054, 1.0
    %v5071 = vadd.f32 %v5055, 1.0
    %v5072 = vadd.f32 %v5056, 1.0
    %v5073 = vadd.f32 %v5057, 1.0
    %v5074 = vmul.f32 %v5058, 0.5
    %v5075 = vmul.f32 %v5059, 0.5
    %v5076 = vmul.f32 %v5060, 0.5
    %v5077 = vmul.f32 %v5061, 0.5
    %v5078 = vmul.f32 %v5062, 0.5
    %v5079 = vmul.f32 %v5063, 0.5
    %v5080 = vmul.f32 %v5064, 0.5
    %v5081 = vmul.f32 %v5065, 0.5
    %v5082 = vmul.f32 %v5066, 0.5
    %v5083 = vmul.f32 %v5067, 0.5
    %v5084 = vmul.f32 %v5068, 0.5
    %v5085 = vmul.f32 %v5069, 0.5
    %v5086 = vmul.f32 %v5070, 0.5
    %v5087 = vmul.f32 %v5071, 0.5
    %v5088 = vmul.f32 %v5072, 0.5
    %v5089 = vmul.f32 %v5073, 0.5
    %v5090 = vmul.f32 %v4884, %v5074
    %v5091 = vmul.f32 %v4889, %v5075
    %v5092 = vmul.f32 %v4894, %v5076
    %v5093 = vmul.f32 %v4899, %v5077
    %v5094 = vmul.f32 %v4904, %v5078
    %v5095 = vmul.f32 %v4909, %v5079
    %v5096 = vmul.f32 %v4914, %v5080
    %v5097 = vmul.f32 %v4919, %v5081
    %v5098 = vmul.f32 %v4924, %v5082
    %v5099 = vmul.f32 %v4929, %v5083
    %v5100 = vmul.f32 %v4934, %v5084
    %v5101 = vmul.f32 %v4939, %v5085
    %v5102 = vmul.f32 %v4944, %v5086
    %v5103 = vmul.f32 %v4949, %v5087
    %v5104 = vmul.f32 %v4954, %v5088
    %v5105 = vmul.f32 %v4959, %v5089
    %v5106 = vlaneseq
    %v5107 = vshrl.u32 %v5106, 7
    %v5108 = vsub.s32 0, %v5107
    %v5109 = vrot.slane %v549, %v5108
    %5110 = vmatprep.subr.mxu0 0.0
    %5111 = vmatpush1.msra.mxu0 %v529
    %5112 = vmatprep.subr.mxu0 0.0
    %5113 = vmatpush1.msra.mxu0 %v530
    %5114 = vmatprep.subr.mxu0 0.0
    %5115 = vmatpush1.msra.mxu0 %v531
    %5116 = vmatprep.subr.mxu0 0.0
    %5117 = vmatpush1.msra.mxu0 %v532
    %5118 = vmatprep.subr.mxu0 0.0
    %5119 = vmatpush1.msra.mxu0 %v533
    %5120 = vmatprep.subr.mxu0 0.0
    %5121 = vmatpush1.msra.mxu0 %v534
    %5122 = vmatprep.subr.mxu0 0.0
    %5123 = vmatpush1.msra.mxu0 %v535
    %5124 = vmatprep.subr.mxu0 0.0
    %5125 = vmatpush1.msra.mxu0 %v536
    %5126 = vmatprep.subr.mxu0 0.0
    %5127 = vmatpush1.msra.mxu0 %v537
    %5128 = vmatprep.subr.mxu0 0.0
    %5129 = vmatpush1.msra.mxu0 %v538
    %5130 = vmatprep.subr.mxu0 0.0
    %5131 = vmatpush1.msra.mxu0 %v539
    %5132 = vmatprep.subr.mxu0 0.0
    %5133 = vmatpush1.msra.mxu0 %v540
    %5134 = vmatprep.subr.mxu0 0.0
    %5135 = vmatpush1.msra.mxu0 %v541
    %5136 = vmatprep.subr.mxu0 0.0
    %5137 = vmatpush1.msra.mxu0 %v542
    %5138 = vmatprep.subr.mxu0 0.0
    %5139 = vmatpush1.msra.mxu0 %v543
    %5140 = vmatprep.subr.mxu0 0.0
    %5141 = vmatpush1.msra.mxu0 %v544
    %5142 = vmatprep.subr.mxu0 0.0
    %5143 = vmatpush1.msra.mxu0 0.0
    %5144 = vmatprep.subr.mxu0 0.0
    %5145 = vmatpush1.msra.mxu0 0.0
    %5146 = vmatprep.subr.mxu0 0.0
    %5147 = vmatpush1.msra.mxu0 0.0
    %5148 = vmatprep.subr.mxu0 0.0
    %5149 = vmatpush1.msra.mxu0 0.0
    %5150 = vmatprep.subr.mxu0 0.0
    %5151 = vmatpush1.msra.mxu0 0.0
    %5152 = vmatprep.subr.mxu0 0.0
    %5153 = vmatpush1.msra.mxu0 0.0
    %5154 = vmatprep.subr.mxu0 0.0
    %5155 = vmatpush1.msra.mxu0 0.0
    %5156 = vmatprep.subr.mxu0 0.0
    %5157 = vmatpush1.msra.mxu0 0.0
    %5158 = vmatprep.subr.mxu0 0.0
    %5159 = vmatpush1.msra.mxu0 0.0
    %5160 = vmatprep.subr.mxu0 0.0
    %5161 = vmatpush1.msra.mxu0 0.0
    %5162 = vmatprep.subr.mxu0 0.0
    %5163 = vmatpush1.msra.mxu0 0.0
    %5164 = vmatprep.subr.mxu0 0.0
    %5165 = vmatpush1.msra.mxu0 0.0
    %5166 = vmatprep.subr.mxu0 0.0
    %5167 = vmatpush1.msra.mxu0 0.0
    %5168 = vmatprep.subr.mxu0 0.0
    %5169 = vmatpush1.msra.mxu0 0.0
    %5170 = vmatprep.subr.mxu0 0.0
    %5171 = vmatpush1.msra.mxu0 0.0
    %5172 = vmatprep.subr.mxu0 0.0
    %5173 = vmatpush1.msra.mxu0 0.0
    %5174 = vmatprep.mubr.f32.mxu0 0.0
    %5175 = vmatmul.mubr.f32.gmra.mrb[0].mxu0 %v5090
    %v5176 = vpop.f32.mrb[0].mxu0
    %v5177 = vadd.f32 %v5109, %v5176
    %v5178 = vpop.f32.mrb[0].mxu0
    %5179 = vmatprep.mubr.f32.mxu0 0.0
    %5180 = vmatmul.mubr.f32.gmra.mrb[0].mxu0 %v5091
    %v5181 = vpop.f32.mrb[0].mxu0
    %v5182 = vadd.f32 %v5109, %v5181
    %v5183 = vpop.f32.mrb[0].mxu0
    %5184 = vmatprep.mubr.f32.mxu0 0.0
    %5185 = vmatmul.mubr.f32.gmra.mrb[0].mxu0 %v5092
    %v5186 = vpop.f32.mrb[0].mxu0
    %v5187 = vadd.f32 %v5109, %v5186
    %v5188 = vpop.f32.mrb[0].mxu0
    %5189 = vmatprep.mubr.f32.mxu0 0.0
    %5190 = vmatmul.mubr.f32.gmra.mrb[0].mxu0 %v5093
    %v5191 = vpop.f32.mrb[0].mxu0
    %v5192 = vadd.f32 %v5109, %v5191
    %v5193 = vpop.f32.mrb[0].mxu0
    %5194 = vmatprep.mubr.f32.mxu0 0.0
    %5195 = vmatmul.mubr.f32.gmra.mrb[0].mxu0 %v5094
    %v5196 = vpop.f32.mrb[0].mxu0
    %v5197 = vadd.f32 %v5109, %v5196
    %v5198 = vpop.f32.mrb[0].mxu0
    %5199 = vmatprep.mubr.f32.mxu0 0.0
    %5200 = vmatmul.mubr.f32.gmra.mrb[0].mxu0 %v5095
    %v5201 = vpop.f32.mrb[0].mxu0
    %v5202 = vadd.f32 %v5109, %v5201
    %v5203 = vpop.f32.mrb[0].mxu0
    %5204 = vmatprep.mubr.f32.mxu0 0.0
    %5205 = vmatmul.mubr.f32.gmra.mrb[0].mxu0 %v5096
    %v5206 = vpop.f32.mrb[0].mxu0
    %v5207 = vadd.f32 %v5109, %v5206
    %v5208 = vpop.f32.mrb[0].mxu0
    %5209 = vmatprep.mubr.f32.mxu0 0.0
    %5210 = vmatmul.mubr.f32.gmra.mrb[0].mxu0 %v5097
    %v5211 = vpop.f32.mrb[0].mxu0
    %v5212 = vadd.f32 %v5109, %v5211
    %v5213 = vpop.f32.mrb[0].mxu0
    %5214 = vmatprep.mubr.f32.mxu0 0.0
    %5215 = vmatmul.mubr.f32.gmra.mrb[0].mxu0 %v5098
    %v5216 = vpop.f32.mrb[0].mxu0
    %v5217 = vadd.f32 %v5109, %v5216
    %v5218 = vpop.f32.mrb[0].mxu0
    %5219 = vmatprep.mubr.f32.mxu0 0.0
    %5220 = vmatmul.mubr.f32.gmra.mrb[0].mxu0 %v5099
    %v5221 = vpop.f32.mrb[0].mxu0
    %v5222 = vadd.f32 %v5109, %v5221
    %v5223 = vpop.f32.mrb[0].mxu0
    %5224 = vmatprep.mubr.f32.mxu0 0.0
    %5225 = vmatmul.mubr.f32.gmra.mrb[0].mxu0 %v5100
    %v5226 = vpop.f32.mrb[0].mxu0
    %v5227 = vadd.f32 %v5109, %v5226
    %v5228 = vpop.f32.mrb[0].mxu0
    %5229 = vmatprep.mubr.f32.mxu0 0.0
    %5230 = vmatmul.mubr.f32.gmra.mrb[0].mxu0 %v5101
    %v5231 = vpop.f32.mrb[0].mxu0
    %v5232 = vadd.f32 %v5109, %v5231
    %v5233 = vpop.f32.mrb[0].mxu0
    %5234 = vmatprep.mubr.f32.mxu0 0.0
    %5235 = vmatmul.mubr.f32.gmra.mrb[0].mxu0 %v5102
    %v5236 = vpop.f32.mrb[0].mxu0
    %v5237 = vadd.f32 %v5109, %v5236
    %v5238 = vpop.f32.mrb[0].mxu0
    %5239 = vmatprep.mubr.f32.mxu0 0.0
    %5240 = vmatmul.mubr.f32.gmra.mrb[0].mxu0 %v5103
    %v5241 = vpop.f32.mrb[0].mxu0
    %v5242 = vadd.f32 %v5109, %v5241
    %v5243 = vpop.f32.mrb[0].mxu0
    %5244 = vmatprep.mubr.f32.mxu0 0.0
    %5245 = vmatmul.mubr.f32.gmra.mrb[0].mxu0 %v5104
    %v5246 = vpop.f32.mrb[0].mxu0
    %v5247 = vadd.f32 %v5109, %v5246
    %v5248 = vpop.f32.mrb[0].mxu0
    %5249 = vmatprep.mubr.f32.mxu0 0.0
    %5250 = vmatmul.mubr.f32.gmra.mrb[0].mxu0 %v5105
    %v5251 = vpop.f32.mrb[0].mxu0
    %v5252 = vadd.f32 %v5109, %v5251
    %v5253 = vpop.f32.mrb[0].mxu0
    %5254 = vdwg.mxu0
    %v5255 = vadd.f32 %v4749, %v5177
    %v5256 = vadd.f32 %v4750, %v5182
    %v5257 = vadd.f32 %v4751, %v5187
    %v5258 = vadd.f32 %v4752, %v5192
    %v5259 = vadd.f32 %v4753, %v5197
    %v5260 = vadd.f32 %v4754, %v5202
    %v5261 = vadd.f32 %v4755, %v5207
    %v5262 = vadd.f32 %v4756, %v5212
    %v5263 = vadd.f32 %v4757, %v5217
    %v5264 = vadd.f32 %v4758, %v5222
    %v5265 = vadd.f32 %v4759, %v5227
    %v5266 = vadd.f32 %v4760, %v5232
    %v5267 = vadd.f32 %v4761, %v5237
    %v5268 = vadd.f32 %v4762, %v5242
    %v5269 = vadd.f32 %v4763, %v5247
    %v5270 = vadd.f32 %v4764, %v5252
    %v5271 = vsel %vm271, %v5255, 0.0
    %5272 = vadd.xlane.f32.xlu0 %v5271
    %v5273 = vpop.xlane.xlu0 %5272
    %v5274 = vsel %vm271, %v5256, 0.0
    %5275 = vadd.xlane.f32.xlu0 %v5274
    %v5276 = vpop.xlane.xlu0 %5275
    %v5277 = vsel %vm271, %v5257, 0.0
    %5278 = vadd.xlane.f32.xlu0 %v5277
    %v5279 = vpop.xlane.xlu0 %5278
    %v5280 = vsel %vm271, %v5258, 0.0
    %5281 = vadd.xlane.f32.xlu0 %v5280
    %v5282 = vpop.xlane.xlu0 %5281
    %v5283 = vsel %vm271, %v5259, 0.0
    %5284 = vadd.xlane.f32.xlu0 %v5283
    %v5285 = vpop.xlane.xlu0 %5284
    %v5286 = vsel %vm271, %v5260, 0.0
    %5287 = vadd.xlane.f32.xlu0 %v5286
    %v5288 = vpop.xlane.xlu0 %5287
    %v5289 = vsel %vm271, %v5261, 0.0
    %5290 = vadd.xlane.f32.xlu0 %v5289
    %v5291 = vpop.xlane.xlu0 %5290
    %v5292 = vsel %vm271, %v5262, 0.0
    %5293 = vadd.xlane.f32.xlu0 %v5292
    %v5294 = vpop.xlane.xlu0 %5293
    %v5295 = vsel %vm271, %v5263, 0.0
    %5296 = vadd.xlane.f32.xlu0 %v5295
    %v5297 = vpop.xlane.xlu0 %5296
    %v5298 = vsel %vm271, %v5264, 0.0
    %5299 = vadd.xlane.f32.xlu0 %v5298
    %v5300 = vpop.xlane.xlu0 %5299
    %v5301 = vsel %vm271, %v5265, 0.0
    %5302 = vadd.xlane.f32.xlu0 %v5301
    %v5303 = vpop.xlane.xlu0 %5302
    %v5304 = vsel %vm271, %v5266, 0.0
    %5305 = vadd.xlane.f32.xlu0 %v5304
    %v5306 = vpop.xlane.xlu0 %5305
    %v5307 = vsel %vm271, %v5267, 0.0
    %5308 = vadd.xlane.f32.xlu0 %v5307
    %v5309 = vpop.xlane.xlu0 %5308
    %v5310 = vsel %vm271, %v5268, 0.0
    %5311 = vadd.xlane.f32.xlu0 %v5310
    %v5312 = vpop.xlane.xlu0 %5311
    %v5313 = vsel %vm271, %v5269, 0.0
    %5314 = vadd.xlane.f32.xlu0 %v5313
    %v5315 = vpop.xlane.xlu0 %5314
    %v5316 = vsel %vm271, %v5270, 0.0
    %5317 = vadd.xlane.f32.xlu0 %v5316
    %v5318 = vpop.xlane.xlu0 %5317
    %v5319 = vmul.f32 %v5273, %v320
    %v5320 = vmul.f32 %v5276, %v320
    %v5321 = vmul.f32 %v5279, %v320
    %v5322 = vmul.f32 %v5282, %v320
    %v5323 = vmul.f32 %v5285, %v320
    %v5324 = vmul.f32 %v5288, %v320
    %v5325 = vmul.f32 %v5291, %v320
    %v5326 = vmul.f32 %v5294, %v320
    %v5327 = vmul.f32 %v5297, %v320
    %v5328 = vmul.f32 %v5300, %v320
    %v5329 = vmul.f32 %v5303, %v320
    %v5330 = vmul.f32 %v5306, %v320
    %v5331 = vmul.f32 %v5309, %v320
    %v5332 = vmul.f32 %v5312, %v320
    %v5333 = vmul.f32 %v5315, %v320
    %v5334 = vmul.f32 %v5318, %v320
    %v5335 = vsub.f32 %v5255, %v5319
    %v5336 = vsub.f32 %v5256, %v5320
    %v5337 = vsub.f32 %v5257, %v5321
    %v5338 = vsub.f32 %v5258, %v5322
    %v5339 = vsub.f32 %v5259, %v5323
    %v5340 = vsub.f32 %v5260, %v5324
    %v5341 = vsub.f32 %v5261, %v5325
    %v5342 = vsub.f32 %v5262, %v5326
    %v5343 = vsub.f32 %v5263, %v5327
    %v5344 = vsub.f32 %v5264, %v5328
    %v5345 = vsub.f32 %v5265, %v5329
    %v5346 = vsub.f32 %v5266, %v5330
    %v5347 = vsub.f32 %v5267, %v5331
    %v5348 = vsub.f32 %v5268, %v5332
    %v5349 = vsub.f32 %v5269, %v5333
    %v5350 = vsub.f32 %v5270, %v5334
    %v5351 = vmul.f32 %v5335, %v5335
    %v5352 = vmul.f32 %v5336, %v5336
    %v5353 = vmul.f32 %v5337, %v5337
    %v5354 = vmul.f32 %v5338, %v5338
    %v5355 = vmul.f32 %v5339, %v5339
    %v5356 = vmul.f32 %v5340, %v5340
    %v5357 = vmul.f32 %v5341, %v5341
    %v5358 = vmul.f32 %v5342, %v5342
    %v5359 = vmul.f32 %v5343, %v5343
    %v5360 = vmul.f32 %v5344, %v5344
    %v5361 = vmul.f32 %v5345, %v5345
    %v5362 = vmul.f32 %v5346, %v5346
    %v5363 = vmul.f32 %v5347, %v5347
    %v5364 = vmul.f32 %v5348, %v5348
    %v5365 = vmul.f32 %v5349, %v5349
    %v5366 = vmul.f32 %v5350, %v5350
    %v5367 = vsel %vm271, %v5351, 0.0
    %5368 = vadd.xlane.f32.xlu0 %v5367
    %v5369 = vpop.xlane.xlu0 %5368
    %v5370 = vsel %vm271, %v5352, 0.0
    %5371 = vadd.xlane.f32.xlu0 %v5370
    %v5372 = vpop.xlane.xlu0 %5371
    %v5373 = vsel %vm271, %v5353, 0.0
    %5374 = vadd.xlane.f32.xlu0 %v5373
    %v5375 = vpop.xlane.xlu0 %5374
    %v5376 = vsel %vm271, %v5354, 0.0
    %5377 = vadd.xlane.f32.xlu0 %v5376
    %v5378 = vpop.xlane.xlu0 %5377
    %v5379 = vsel %vm271, %v5355, 0.0
    %5380 = vadd.xlane.f32.xlu0 %v5379
    %v5381 = vpop.xlane.xlu0 %5380
    %v5382 = vsel %vm271, %v5356, 0.0
    %5383 = vadd.xlane.f32.xlu0 %v5382
    %v5384 = vpop.xlane.xlu0 %5383
    %v5385 = vsel %vm271, %v5357, 0.0
    %5386 = vadd.xlane.f32.xlu0 %v5385
    %v5387 = vpop.xlane.xlu0 %5386
    %v5388 = vsel %vm271, %v5358, 0.0
    %5389 = vadd.xlane.f32.xlu0 %v5388
    %v5390 = vpop.xlane.xlu0 %5389
    %v5391 = vsel %vm271, %v5359, 0.0
    %5392 = vadd.xlane.f32.xlu0 %v5391
    %v5393 = vpop.xlane.xlu0 %5392
    %v5394 = vsel %vm271, %v5360, 0.0
    %5395 = vadd.xlane.f32.xlu0 %v5394
    %v5396 = vpop.xlane.xlu0 %5395
    %v5397 = vsel %vm271, %v5361, 0.0
    %5398 = vadd.xlane.f32.xlu0 %v5397
    %v5399 = vpop.xlane.xlu0 %5398
    %v5400 = vsel %vm271, %v5362, 0.0
    %5401 = vadd.xlane.f32.xlu0 %v5400
    %v5402 = vpop.xlane.xlu0 %5401
    %v5403 = vsel %vm271, %v5363, 0.0
    %5404 = vadd.xlane.f32.xlu0 %v5403
    %v5405 = vpop.xlane.xlu0 %5404
    %v5406 = vsel %vm271, %v5364, 0.0
    %5407 = vadd.xlane.f32.xlu0 %v5406
    %v5408 = vpop.xlane.xlu0 %5407
    %v5409 = vsel %vm271, %v5365, 0.0
    %5410 = vadd.xlane.f32.xlu0 %v5409
    %v5411 = vpop.xlane.xlu0 %5410
    %v5412 = vsel %vm271, %v5366, 0.0
    %5413 = vadd.xlane.f32.xlu0 %v5412
    %v5414 = vpop.xlane.xlu0 %5413
    %v5415 = vmul.f32 %v5369, %v320
    %v5416 = vmul.f32 %v5372, %v320
    %v5417 = vmul.f32 %v5375, %v320
    %v5418 = vmul.f32 %v5378, %v320
    %v5419 = vmul.f32 %v5381, %v320
    %v5420 = vmul.f32 %v5384, %v320
    %v5421 = vmul.f32 %v5387, %v320
    %v5422 = vmul.f32 %v5390, %v320
    %v5423 = vmul.f32 %v5393, %v320
    %v5424 = vmul.f32 %v5396, %v320
    %v5425 = vmul.f32 %v5399, %v320
    %v5426 = vmul.f32 %v5402, %v320
    %v5427 = vmul.f32 %v5405, %v320
    %v5428 = vmul.f32 %v5408, %v320
    %v5429 = vmul.f32 %v5411, %v320
    %v5430 = vmul.f32 %v5414, %v320
    %v5431 = vadd.f32 %v5415, 1e-12
    %v5432 = vadd.f32 %v5416, 1e-12
    %v5433 = vadd.f32 %v5417, 1e-12
    %v5434 = vadd.f32 %v5418, 1e-12
    %v5435 = vadd.f32 %v5419, 1e-12
    %v5436 = vadd.f32 %v5420, 1e-12
    %v5437 = vadd.f32 %v5421, 1e-12
    %v5438 = vadd.f32 %v5422, 1e-12
    %v5439 = vadd.f32 %v5423, 1e-12
    %v5440 = vadd.f32 %v5424, 1e-12
    %v5441 = vadd.f32 %v5425, 1e-12
    %v5442 = vadd.f32 %v5426, 1e-12
    %v5443 = vadd.f32 %v5427, 1e-12
    %v5444 = vadd.f32 %v5428, 1e-12
    %v5445 = vadd.f32 %v5429, 1e-12
    %v5446 = vadd.f32 %v5430, 1e-12
    %v5447 = vrsqrt.pop %v5431
    %v5448 = vrsqrt.pop %v5432
    %v5449 = vrsqrt.pop %v5433
    %v5450 = vrsqrt.pop %v5434
    %v5451 = vrsqrt.pop %v5435
    %v5452 = vrsqrt.pop %v5436
    %v5453 = vrsqrt.pop %v5437
    %v5454 = vrsqrt.pop %v5438
    %v5455 = vrsqrt.pop %v5439
    %v5456 = vrsqrt.pop %v5440
    %v5457 = vrsqrt.pop %v5441
    %v5458 = vrsqrt.pop %v5442
    %v5459 = vrsqrt.pop %v5443
    %v5460 = vrsqrt.pop %v5444
    %v5461 = vrsqrt.pop %v5445
    %v5462 = vrsqrt.pop %v5446
    %v5463 = vmul.f32 %v5335, %v5447
    %v5464 = vmul.f32 %v5336, %v5448
    %v5465 = vmul.f32 %v5337, %v5449
    %v5466 = vmul.f32 %v5338, %v5450
    %v5467 = vmul.f32 %v5339, %v5451
    %v5468 = vmul.f32 %v5340, %v5452
    %v5469 = vmul.f32 %v5341, %v5453
    %v5470 = vmul.f32 %v5342, %v5454
    %v5471 = vmul.f32 %v5343, %v5455
    %v5472 = vmul.f32 %v5344, %v5456
    %v5473 = vmul.f32 %v5345, %v5457
    %v5474 = vmul.f32 %v5346, %v5458
    %v5475 = vmul.f32 %v5347, %v5459
    %v5476 = vmul.f32 %v5348, %v5460
    %v5477 = vmul.f32 %v5349, %v5461
    %v5478 = vmul.f32 %v5350, %v5462
    %v5479 = vlaneseq
    %v5480 = vshrl.u32 %v5479, 7
    %v5481 = vsub.s32 0, %v5480
    %v5482 = vrot.slane %v550, %v5481
    %v5483 = vmul.f32 %v5463, %v5482
    %v5484 = vmul.f32 %v5464, %v5482
    %v5485 = vmul.f32 %v5465, %v5482
    %v5486 = vmul.f32 %v5466, %v5482
    %v5487 = vmul.f32 %v5467, %v5482
    %v5488 = vmul.f32 %v5468, %v5482
    %v5489 = vmul.f32 %v5469, %v5482
    %v5490 = vmul.f32 %v5470, %v5482
    %v5491 = vmul.f32 %v5471, %v5482
    %v5492 = vmul.f32 %v5472, %v5482
    %v5493 = vmul.f32 %v5473, %v5482
    %v5494 = vmul.f32 %v5474, %v5482
    %v5495 = vmul.f32 %v5475, %v5482
    %v5496 = vmul.f32 %v5476, %v5482
    %v5497 = vmul.f32 %v5477, %v5482
    %v5498 = vmul.f32 %v5478, %v5482
    %v5499 = vlaneseq
    %v5500 = vshrl.u32 %v5499, 7
    %v5501 = vsub.s32 0, %v5500
    %v5502 = vrot.slane %v551, %v5501
    %v5503 = vadd.f32 %v5483, %v5502
    %v5504 = vadd.f32 %v5484, %v5502
    %v5505 = vadd.f32 %v5485, %v5502
    %v5506 = vadd.f32 %v5486, %v5502
    %v5507 = vadd.f32 %v5487, %v5502
    %v5508 = vadd.f32 %v5488, %v5502
    %v5509 = vadd.f32 %v5489, %v5502
    %v5510 = vadd.f32 %v5490, %v5502
    %v5511 = vadd.f32 %v5491, %v5502
    %v5512 = vadd.f32 %v5492, %v5502
    %v5513 = vadd.f32 %v5493, %v5502
    %v5514 = vadd.f32 %v5494, %v5502
    %v5515 = vadd.f32 %v5495, %v5502
    %v5516 = vadd.f32 %v5496, %v5502
    %v5517 = vadd.f32 %v5497, %v5502
    %v5518 = vadd.f32 %v5498, %v5502
    %v5519 = vld [vmem:[#allocation2 + $0xe8] sm:$0xff]
    %v5520 = vld [vmem:[#allocation2 + $0xf0] sm:$0xff]
    %v5521 = vld [vmem:[#allocation2 + $0xf8] sm:$0xff]
    %v5522 = vld [vmem:[#allocation2 + $0x100] sm:$0xff]
    %v5523 = vld [vmem:[#allocation2 + $0x108] sm:$0xff]
    %v5524 = vld [vmem:[#allocation2 + $0x110] sm:$0xff]
    %v5525 = vld [vmem:[#allocation2 + $0x118] sm:$0xff]
    %v5526 = vld [vmem:[#allocation2 + $0x120] sm:$0xff]
    %v5527 = vld [vmem:[#allocation2 + $0x128] sm:$0xff]
    %v5528 = vld [vmem:[#allocation2 + $0x130] sm:$0xff]
    %v5529 = vld [vmem:[#allocation2 + $0x138] sm:$0xff]
    %v5530 = vld [vmem:[#allocation2 + $0x140] sm:$0xff]
    %v5531 = vld [vmem:[#allocation2 + $0x148] sm:$0xff]
    %v5532 = vld [vmem:[#allocation2 + $0x150] sm:$0xff]
    %v5533 = vld [vmem:[#allocation2 + $0x158] sm:$0xff]
    %v5534 = vld [vmem:[#allocation2 + $0x160] sm:$0xff]
    %v5535 = vld [vmem:[#allocation2 + $0x168] sm:$0xff]
    %v5536 = vld [vmem:[#allocation2 + $0x170] sm:$0xff]
    %v5537 = vld [vmem:[#allocation2 + $0x178] sm:$0xff]
    %v5538 = vld [vmem:[#allocation2 + $0x180] sm:$0xff]
    %v5539 = vld [vmem:[#allocation2 + $0x188] sm:$0xff]
    %v5540 = vld [vmem:[#allocation2 + $0x190] sm:$0xff]
    %v5541 = vld [vmem:[#allocation2 + $0x198] sm:$0xff]
    %v5542 = vld [vmem:[#allocation2 + $0x1a0] sm:$0xff]
    %v5543 = vld [vmem:[%s2 + $0x4b] sm:$0x1]
    %v5544 = vld [vmem:[%s2 + $0x4c] sm:$0x1]
    %v5545 = vld [vmem:[%s2 + $0x4d] sm:$0x1]
    %v5546 = vld [vmem:[%s2 + $0x4e] sm:$0x1]
    %v5547 = vld [vmem:[%s2 + $0x4f] sm:$0x1]
    %v5548 = vld [vmem:[%s2 + $0x50] sm:$0x1]
    %v5549 = vld [vmem:[%s2 + $0x51] sm:$0x1]
    %v5550 = vlaneseq
    %v5551 = vshrl.u32 %v5550, 7
    %v5552 = vsub.s32 0, %v5551
    %v5553 = vrot.slane %v5543, %v5552
    %v5555 = vsel %vm271, %v5503, 0
    %v5558 = vsel %vm271, %v5504, 0
    %v5561 = vsel %vm271, %v5505, 0
    %v5564 = vsel %vm271, %v5506, 0
    %v5567 = vsel %vm271, %v5507, 0
    %v5570 = vsel %vm271, %v5508, 0
    %v5573 = vsel %vm271, %v5509, 0
    %v5576 = vsel %vm271, %v5510, 0
    %v5579 = vsel %vm271, %v5511, 0
    %v5582 = vsel %vm271, %v5512, 0
    %v5585 = vsel %vm271, %v5513, 0
    %v5588 = vsel %vm271, %v5514, 0
    %v5591 = vsel %vm271, %v5515, 0
    %v5594 = vsel %vm271, %v5516, 0
    %v5597 = vsel %vm271, %v5517, 0
    %v5600 = vsel %vm271, %v5518, 0
    %5602 = vmatprep.subr.mxu0 0.0
    %5603 = vmatpush1.msra.mxu0 %v5519
    %5604 = vmatprep.subr.mxu0 0.0
    %5605 = vmatpush1.msra.mxu0 %v5520
    %5606 = vmatprep.subr.mxu0 0.0
    %5607 = vmatpush1.msra.mxu0 %v5521
    %5608 = vmatprep.subr.mxu0 0.0
    %5609 = vmatpush1.msra.mxu0 %v5522
    %5610 = vmatprep.subr.mxu0 0.0
    %5611 = vmatpush1.msra.mxu0 0.0
    %5612 = vmatprep.subr.mxu0 0.0
    %5613 = vmatpush1.msra.mxu0 0.0
    %5614 = vmatprep.subr.mxu0 0.0
    %5615 = vmatpush1.msra.mxu0 0.0
    %5616 = vmatprep.subr.mxu0 0.0
    %5617 = vmatpush1.msra.mxu0 0.0
    %5618 = vmatprep.subr.mxu0 0.0
    %5619 = vmatpush1.msra.mxu0 0.0
    %5620 = vmatprep.subr.mxu0 0.0
    %5621 = vmatpush1.msra.mxu0 0.0
    %5622 = vmatprep.subr.mxu0 0.0
    %5623 = vmatpush1.msra.mxu0 0.0
    %5624 = vmatprep.subr.mxu0 0.0
    %5625 = vmatpush1.msra.mxu0 0.0
    %5626 = vmatprep.subr.mxu0 0.0
    %5627 = vmatpush1.msra.mxu0 0.0
    %5628 = vmatprep.subr.mxu0 0.0
    %5629 = vmatpush1.msra.mxu0 0.0
    %5630 = vmatprep.subr.mxu0 0.0
    %5631 = vmatpush1.msra.mxu0 0.0
    %5632 = vmatprep.subr.mxu0 0.0
    %5633 = vmatpush1.msra.mxu0 0.0
    %5634 = vmatprep.subr.mxu0 0.0
    %5635 = vmatpush1.msra.mxu0 0.0
    %5636 = vmatprep.subr.mxu0 0.0
    %5637 = vmatpush1.msra.mxu0 0.0
    %5638 = vmatprep.subr.mxu0 0.0
    %5639 = vmatpush1.msra.mxu0 0.0
    %5640 = vmatprep.subr.mxu0 0.0
    %5641 = vmatpush1.msra.mxu0 0.0
    %5642 = vmatprep.subr.mxu0 0.0
    %5643 = vmatpush1.msra.mxu0 0.0
    %5644 = vmatprep.subr.mxu0 0.0
    %5645 = vmatpush1.msra.mxu0 0.0
    %5646 = vmatprep.subr.mxu0 0.0
    %5647 = vmatpush1.msra.mxu0 0.0
    %5648 = vmatprep.subr.mxu0 0.0
    %5649 = vmatpush1.msra.mxu0 0.0
    %5650 = vmatprep.subr.mxu0 0.0
    %5651 = vmatpush1.msra.mxu0 0.0
    %5652 = vmatprep.subr.mxu0 0.0
    %5653 = vmatpush1.msra.mxu0 0.0
    %5654 = vmatprep.subr.mxu0 0.0
    %5655 = vmatpush1.msra.mxu0 0.0
    %5656 = vmatprep.subr.mxu0 0.0
    %5657 = vmatpush1.msra.mxu0 0.0
    %5658 = vmatprep.subr.mxu0 0.0
    %5659 = vmatpush1.msra.mxu0 0.0
    %5660 = vmatprep.subr.mxu0 0.0
    %5661 = vmatpush1.msra.mxu0 0.0
    %5662 = vmatprep.subr.mxu0 0.0
    %5663 = vmatpush1.msra.mxu0 0.0
    %5664 = vmatprep.subr.mxu0 0.0
    %5665 = vmatpush1.msra.mxu0 0.0
    %5666 = vmatprep.mubr.f32.mxu0 0.0
    %5667 = vmatmul.mubr.f32.gmra.mrb[0].mxu0 %v5555
    %v5668 = vpop.f32.mrb[0].mxu0
    %v5669 = vadd.f32 %v5553, %v5668
    %v5670 = vpop.f32.mrb[0].mxu0
    %5671 = vmatprep.mubr.f32.mxu0 0.0
    %5672 = vmatmul.mubr.f32.gmra.mrb[0].mxu0 %v5558
    %v5673 = vpop.f32.mrb[0].mxu0
    %v5674 = vadd.f32 %v5553, %v5673
    %v5675 = vpop.f32.mrb[0].mxu0
    %5676 = vmatprep.mubr.f32.mxu0 0.0
    %5677 = vmatmul.mubr.f32.gmra.mrb[0].mxu0 %v5561
    %v5678 = vpop.f32.mrb[0].mxu0
    %v5679 = vadd.f32 %v5553, %v5678
    %v5680 = vpop.f32.mrb[0].mxu0
    %5681 = vmatprep.mubr.f32.mxu0 0.0
    %5682 = vmatmul.mubr.f32.gmra.mrb[0].mxu0 %v5564
    %v5683 = vpop.f32.mrb[0].mxu0
    %v5684 = vadd.f32 %v5553, %v5683
    %v5685 = vpop.f32.mrb[0].mxu0
    %5686 = vmatprep.mubr.f32.mxu0 0.0
    %5687 = vmatmul.mubr.f32.gmra.mrb[0].mxu0 %v5567
    %v5688 = vpop.f32.mrb[0].mxu0
    %v5689 = vadd.f32 %v5553, %v5688
    %v5690 = vpop.f32.mrb[0].mxu0
    %5691 = vmatprep.mubr.f32.mxu0 0.0
    %5692 = vmatmul.mubr.f32.gmra.mrb[0].mxu0 %v5570
    %v5693 = vpop.f32.mrb[0].mxu0
    %v5694 = vadd.f32 %v5553, %v5693
    %v5695 = vpop.f32.mrb[0].mxu0
    %5696 = vmatprep.mubr.f32.mxu0 0.0
    %5697 = vmatmul.mubr.f32.gmra.mrb[0].mxu0 %v5573
    %v5698 = vpop.f32.mrb[0].mxu0
    %v5699 = vadd.f32 %v5553, %v5698
    %v5700 = vpop.f32.mrb[0].mxu0
    %5701 = vmatprep.mubr.f32.mxu0 0.0
    %5702 = vmatmul.mubr.f32.gmra.mrb[0].mxu0 %v5576
    %v5703 = vpop.f32.mrb[0].mxu0
    %v5704 = vadd.f32 %v5553, %v5703
    %v5705 = vpop.f32.mrb[0].mxu0
    %5706 = vmatprep.mubr.f32.mxu0 0.0
    %5707 = vmatmul.mubr.f32.gmra.mrb[0].mxu0 %v5579
    %v5708 = vpop.f32.mrb[0].mxu0
    %v5709 = vadd.f32 %v5553, %v5708
    %v5710 = vpop.f32.mrb[0].mxu0
    %5711 = vmatprep.mubr.f32.mxu0 0.0
    %5712 = vmatmul.mubr.f32.gmra.mrb[0].mxu0 %v5582
    %v5713 = vpop.f32.mrb[0].mxu0
    %v5714 = vadd.f32 %v5553, %v5713
    %v5715 = vpop.f32.mrb[0].mxu0
    %5716 = vmatprep.mubr.f32.mxu0 0.0
    %5717 = vmatmul.mubr.f32.gmra.mrb[0].mxu0 %v5585
    %v5718 = vpop.f32.mrb[0].mxu0
    %v5719 = vadd.f32 %v5553, %v5718
    %v5720 = vpop.f32.mrb[0].mxu0
    %5721 = vmatprep.mubr.f32.mxu0 0.0
    %5722 = vmatmul.mubr.f32.gmra.mrb[0].mxu0 %v5588
    %v5723 = vpop.f32.mrb[0].mxu0
    %v5724 = vadd.f32 %v5553, %v5723
    %v5725 = vpop.f32.mrb[0].mxu0
    %5726 = vmatprep.mubr.f32.mxu0 0.0
    %5727 = vmatmul.mubr.f32.gmra.mrb[0].mxu0 %v5591
    %v5728 = vpop.f32.mrb[0].mxu0
    %v5729 = vadd.f32 %v5553, %v5728
    %v5730 = vpop.f32.mrb[0].mxu0
    %5731 = vmatprep.mubr.f32.mxu0 0.0
    %5732 = vmatmul.mubr.f32.gmra.mrb[0].mxu0 %v5594
    %v5733 = vpop.f32.mrb[0].mxu0
    %v5734 = vadd.f32 %v5553, %v5733
    %v5735 = vpop.f32.mrb[0].mxu0
    %5736 = vmatprep.mubr.f32.mxu0 0.0
    %5737 = vmatmul.mubr.f32.gmra.mrb[0].mxu0 %v5597
    %v5738 = vpop.f32.mrb[0].mxu0
    %v5739 = vadd.f32 %v5553, %v5738
    %v5740 = vpop.f32.mrb[0].mxu0
    %5741 = vmatprep.mubr.f32.mxu0 0.0
    %5742 = vmatmul.mubr.f32.gmra.mrb[0].mxu0 %v5600
    %v5743 = vpop.f32.mrb[0].mxu0
    %v5744 = vadd.f32 %v5553, %v5743
    %v5745 = vpop.f32.mrb[0].mxu0
    %5746 = vdwg.mxu0
    %v5747 = vmul.f32 %v5669, 0.35355338
    %v5748 = vmul.f32 %v5674, 0.35355338
    %v5749 = vmul.f32 %v5679, 0.35355338
    %v5750 = vmul.f32 %v5684, 0.35355338
    %v5751 = vmul.f32 %v5689, 0.35355338
    %v5752 = vmul.f32 %v5694, 0.35355338
    %v5753 = vmul.f32 %v5699, 0.35355338
    %v5754 = vmul.f32 %v5704, 0.35355338
    %v5755 = vmul.f32 %v5709, 0.35355338
    %v5756 = vmul.f32 %v5714, 0.35355338
    %v5757 = vmul.f32 %v5719, 0.35355338
    %v5758 = vmul.f32 %v5724, 0.35355338
    %v5759 = vmul.f32 %v5729, 0.35355338
    %v5760 = vmul.f32 %v5734, 0.35355338
    %v5761 = vmul.f32 %v5739, 0.35355338
    %v5762 = vmul.f32 %v5744, 0.35355338
    %5771 = vrot.lane.b32.xlu0 %v5669, 96
    %v5772 = vpop.permute.xlu0 %5771
    %5773 = vrot.lane.b32.xlu0 %v5674, 96
    %v5774 = vpop.permute.xlu0 %5773
    %5775 = vrot.lane.b32.xlu0 %v5679, 96
    %v5776 = vpop.permute.xlu0 %5775
    %5777 = vrot.lane.b32.xlu0 %v5684, 96
    %v5778 = vpop.permute.xlu0 %5777
    %5779 = vrot.lane.b32.xlu0 %v5689, 96
    %v5780 = vpop.permute.xlu0 %5779
    %5781 = vrot.lane.b32.xlu0 %v5694, 96
    %v5782 = vpop.permute.xlu0 %5781
    %5783 = vrot.lane.b32.xlu0 %v5699, 96
    %v5784 = vpop.permute.xlu0 %5783
    %5785 = vrot.lane.b32.xlu0 %v5704, 96
    %v5786 = vpop.permute.xlu0 %5785
    %v5788 = vsel %vm51, %v5747, 0
    %v5791 = vsel %vm51, %v5748, 0
    %v5794 = vsel %vm51, %v5749, 0
    %v5797 = vsel %vm51, %v5750, 0
    %v5800 = vsel %vm51, %v5751, 0
    %v5803 = vsel %vm51, %v5752, 0
    %v5806 = vsel %vm51, %v5753, 0
    %v5809 = vsel %vm51, %v5754, 0
    %v5811 = vsel %vm51, %v5772, 0
    %v5813 = vsel %vm51, %v5774, 0
    %v5815 = vsel %vm51, %v5776, 0
    %v5817 = vsel %vm51, %v5778, 0
    %v5819 = vsel %vm51, %v5780, 0
    %v5821 = vsel %vm51, %v5782, 0
    %v5823 = vsel %vm51, %v5784, 0
    %v5825 = vsel %vm51, %v5786, 0
    %5827 = vmatprep.subr.mxu0 0.0
    %5828 = vmatpush1.xpose.msra.mxu0 %v5811
    %5829 = vmatprep.subr.mxu0 0.0
    %5830 = vmatpush1.xpose.msra.mxu0 %v5813
    %5831 = vmatprep.subr.mxu0 0.0
    %5832 = vmatpush1.xpose.msra.mxu0 %v5815
    %5833 = vmatprep.subr.mxu0 0.0
    %5834 = vmatpush1.xpose.msra.mxu0 %v5817
    %5835 = vmatprep.subr.mxu0 0.0
    %5836 = vmatpush1.xpose.msra.mxu0 %v5819
    %5837 = vmatprep.subr.mxu0 0.0
    %5838 = vmatpush1.xpose.msra.mxu0 %v5821
    %5839 = vmatprep.subr.mxu0 0.0
    %5840 = vmatpush1.xpose.msra.mxu0 %v5823
    %5841 = vmatprep.subr.mxu0 0.0
    %5842 = vmatpush1.xpose.msra.mxu0 %v5825
    %5843 = vmatprep.subr.mxu0 0.0
    %5844 = vmatpush1.xpose.msra.mxu0 0.0
    %5845 = vmatprep.subr.mxu0 0.0
    %5846 = vmatpush1.xpose.msra.mxu0 0.0
    %5847 = vmatprep.subr.mxu0 0.0
    %5848 = vmatpush1.xpose.msra.mxu0 0.0
    %5849 = vmatprep.subr.mxu0 0.0
    %5850 = vmatpush1.xpose.msra.mxu0 0.0
    %5851 = vmatprep.subr.mxu0 0.0
    %5852 = vmatpush1.xpose.msra.mxu0 0.0
    %5853 = vmatprep.subr.mxu0 0.0
    %5854 = vmatpush1.xpose.msra.mxu0 0.0
    %5855 = vmatprep.subr.mxu0 0.0
    %5856 = vmatpush1.xpose.msra.mxu0 0.0
    %5857 = vmatprep.subr.mxu0 0.0
    %5858 = vmatpush1.xpose.msra.mxu0 0.0
    %5859 = vmatprep.subr.mxu0 0.0
    %5860 = vmatpush1.xpose.msra.mxu0 0.0
    %5861 = vmatprep.subr.mxu0 0.0
    %5862 = vmatpush1.xpose.msra.mxu0 0.0
    %5863 = vmatprep.subr.mxu0 0.0
    %5864 = vmatpush1.xpose.msra.mxu0 0.0
    %5865 = vmatprep.subr.mxu0 0.0
    %5866 = vmatpush1.xpose.msra.mxu0 0.0
    %5867 = vmatprep.subr.mxu0 0.0
    %5868 = vmatpush1.xpose.msra.mxu0 0.0
    %5869 = vmatprep.subr.mxu0 0.0
    %5870 = vmatpush1.xpose.msra.mxu0 0.0
    %5871 = vmatprep.subr.mxu0 0.0
    %5872 = vmatpush1.xpose.msra.mxu0 0.0
    %5873 = vmatprep.subr.mxu0 0.0
    %5874 = vmatpush1.xpose.msra.mxu0 0.0
    %5875 = vmatprep.subr.mxu0 0.0
    %5876 = vmatpush1.xpose.msra.mxu0 0.0
    %5877 = vmatprep.subr.mxu0 0.0
    %5878 = vmatpush1.xpose.msra.mxu0 0.0
    %5879 = vmatprep.subr.mxu0 0.0
    %5880 = vmatpush1.xpose.msra.mxu0 0.0
    %5881 = vmatprep.subr.mxu0 0.0
    %5882 = vmatpush1.xpose.msra.mxu0 0.0
    %5883 = vmatprep.subr.mxu0 0.0
    %5884 = vmatpush1.xpose.msra.mxu0 0.0
    %5885 = vmatprep.subr.mxu0 0.0
    %5886 = vmatpush1.xpose.msra.mxu0 0.0
    %5887 = vmatprep.subr.mxu0 0.0
    %5888 = vmatpush1.xpose.msra.mxu0 0.0
    %5889 = vmatprep.subr.mxu0 0.0
    %5890 = vmatpush1.xpose.msra.mxu0 0.0
    %5891 = vmatprep.mubr.f32.mxu0 0.0
    %5892 = vmatmul.mubr.f32.gmra.mrb[0].mxu0 %v5788
    %v5893 = vpop.f32.mrb[0].mxu0
    %v5894 = vadd.f32 0.0, %v5893
    %v5895 = vpop.f32.mrb[0].mxu0
    %5896 = vmatprep.mubr.f32.mxu0 0.0
    %5897 = vmatmul.mubr.f32.gmra.mrb[0].mxu0 %v5791
    %v5898 = vpop.f32.mrb[0].mxu0
    %v5899 = vadd.f32 0.0, %v5898
    %v5900 = vpop.f32.mrb[0].mxu0
    %5901 = vmatprep.mubr.f32.mxu0 0.0
    %5902 = vmatmul.mubr.f32.gmra.mrb[0].mxu0 %v5794
    %v5903 = vpop.f32.mrb[0].mxu0
    %v5904 = vadd.f32 0.0, %v5903
    %v5905 = vpop.f32.mrb[0].mxu0
    %5906 = vmatprep.mubr.f32.mxu0 0.0
    %5907 = vmatmul.mubr.f32.gmra.mrb[0].mxu0 %v5797
    %v5908 = vpop.f32.mrb[0].mxu0
    %v5909 = vadd.f32 0.0, %v5908
    %v5910 = vpop.f32.mrb[0].mxu0
    %5911 = vmatprep.mubr.f32.mxu0 0.0
    %5912 = vmatmul.mubr.f32.gmra.mrb[0].mxu0 %v5800
    %v5913 = vpop.f32.mrb[0].mxu0
    %v5914 = vadd.f32 0.0, %v5913
    %v5915 = vpop.f32.mrb[0].mxu0
    %5916 = vmatprep.mubr.f32.mxu0 0.0
    %5917 = vmatmul.mubr.f32.gmra.mrb[0].mxu0 %v5803
    %v5918 = vpop.f32.mrb[0].mxu0
    %v5919 = vadd.f32 0.0, %v5918
    %v5920 = vpop.f32.mrb[0].mxu0
    %5921 = vmatprep.mubr.f32.mxu0 0.0
    %5922 = vmatmul.mubr.f32.gmra.mrb[0].mxu0 %v5806
    %v5923 = vpop.f32.mrb[0].mxu0
    %v5924 = vadd.f32 0.0, %v5923
    %v5925 = vpop.f32.mrb[0].mxu0
    %5926 = vmatprep.mubr.f32.mxu0 0.0
    %5927 = vmatmul.mubr.f32.gmra.mrb[0].mxu0 %v5809
    %v5928 = vpop.f32.mrb[0].mxu0
    %v5929 = vadd.f32 0.0, %v5928
    %v5930 = vpop.f32.mrb[0].mxu0
    %5931 = vdwg.mxu0
    %v5932 = vsel %vm934, %v5894, -inf
    %5933 = vmax.xlane.f32.xlu0 %v5932
    %v5934 = vpop.xlane.xlu0 %5933
    %v5935 = vsel %vm934, %v5899, -inf
    %5936 = vmax.xlane.f32.xlu0 %v5935
    %v5937 = vpop.xlane.xlu0 %5936
    %v5938 = vsel %vm934, %v5904, -inf
    %5939 = vmax.xlane.f32.xlu0 %v5938
    %v5940 = vpop.xlane.xlu0 %5939
    %v5941 = vsel %vm934, %v5909, -inf
    %5942 = vmax.xlane.f32.xlu0 %v5941
    %v5943 = vpop.xlane.xlu0 %5942
    %v5944 = vsel %vm934, %v5914, -inf
    %5945 = vmax.xlane.f32.xlu0 %v5944
    %v5946 = vpop.xlane.xlu0 %5945
    %v5947 = vsel %vm934, %v5919, -inf
    %5948 = vmax.xlane.f32.xlu0 %v5947
    %v5949 = vpop.xlane.xlu0 %5948
    %v5950 = vsel %vm934, %v5924, -inf
    %5951 = vmax.xlane.f32.xlu0 %v5950
    %v5952 = vpop.xlane.xlu0 %5951
    %v5953 = vsel %vm934, %v5929, -inf
    %5954 = vmax.xlane.f32.xlu0 %v5953
    %v5955 = vpop.xlane.xlu0 %5954
    %v5956 = vsub.f32 %v5894, %v5934
    %v5957 = vsub.f32 %v5899, %v5937
    %v5958 = vsub.f32 %v5904, %v5940
    %v5959 = vsub.f32 %v5909, %v5943
    %v5960 = vsub.f32 %v5914, %v5946
    %v5961 = vsub.f32 %v5919, %v5949
    %v5962 = vsub.f32 %v5924, %v5952
    %v5963 = vsub.f32 %v5929, %v5955
    %v5964 = vmul.f32 %v5956, 1.442695
    %v5965 = vpow.pop %v5964
    %v5966 = vmul.f32 %v5957, 1.442695
    %v5967 = vpow.pop %v5966
    %v5968 = vmul.f32 %v5958, 1.442695
    %v5969 = vpow.pop %v5968
    %v5970 = vmul.f32 %v5959, 1.442695
    %v5971 = vpow.pop %v5970
    %v5972 = vmul.f32 %v5960, 1.442695
    %v5973 = vpow.pop %v5972
    %v5974 = vmul.f32 %v5961, 1.442695
    %v5975 = vpow.pop %v5974
    %v5976 = vmul.f32 %v5962, 1.442695
    %v5977 = vpow.pop %v5976
    %v5978 = vmul.f32 %v5963, 1.442695
    %v5979 = vpow.pop %v5978
    %v5980 = vsel %vm934, %v5965, 0.0
    %5981 = vadd.xlane.f32.xlu0 %v5980
    %v5982 = vpop.xlane.xlu0 %5981
    %v5983 = vsel %vm934, %v5967, 0.0
    %5984 = vadd.xlane.f32.xlu0 %v5983
    %v5985 = vpop.xlane.xlu0 %5984
    %v5986 = vsel %vm934, %v5969, 0.0
    %5987 = vadd.xlane.f32.xlu0 %v5986
    %v5988 = vpop.xlane.xlu0 %5987
    %v5989 = vsel %vm934, %v5971, 0.0
    %5990 = vadd.xlane.f32.xlu0 %v5989
    %v5991 = vpop.xlane.xlu0 %5990
    %v5992 = vsel %vm934, %v5973, 0.0
    %5993 = vadd.xlane.f32.xlu0 %v5992
    %v5994 = vpop.xlane.xlu0 %5993
    %v5995 = vsel %vm934, %v5975, 0.0
    %5996 = vadd.xlane.f32.xlu0 %v5995
    %v5997 = vpop.xlane.xlu0 %5996
    %v5998 = vsel %vm934, %v5977, 0.0
    %5999 = vadd.xlane.f32.xlu0 %v5998
    %v6000 = vpop.xlane.xlu0 %5999
    %v6001 = vsel %vm934, %v5979, 0.0
    %6002 = vadd.xlane.f32.xlu0 %v6001
    %v6003 = vpop.xlane.xlu0 %6002
    %v6004 = vrcp.pop %v5982
    %v6005 = vrcp.pop %v5985
    %v6006 = vrcp.pop %v5988
    %v6007 = vrcp.pop %v5991
    %v6008 = vrcp.pop %v5994
    %v6009 = vrcp.pop %v5997
    %v6010 = vrcp.pop %v6000
    %v6011 = vrcp.pop %v6003
    %v6012 = vmul.f32 %v5965, %v6004
    %v6013 = vmul.f32 %v5967, %v6005
    %v6014 = vmul.f32 %v5969, %v6006
    %v6015 = vmul.f32 %v5971, %v6007
    %v6016 = vmul.f32 %v5973, %v6008
    %v6017 = vmul.f32 %v5975, %v6009
    %v6018 = vmul.f32 %v5977, %v6010
    %v6019 = vmul.f32 %v5979, %v6011
    %6020 = vrot.lane.b32.xlu0 %v5669, 64
    %v6021 = vpop.permute.xlu0 %6020
    %6022 = vrot.lane.b32.xlu0 %v5674, 64
    %v6023 = vpop.permute.xlu0 %6022
    %6024 = vrot.lane.b32.xlu0 %v5679, 64
    %v6025 = vpop.permute.xlu0 %6024
    %6026 = vrot.lane.b32.xlu0 %v5684, 64
    %v6027 = vpop.permute.xlu0 %6026
    %6028 = vrot.lane.b32.xlu0 %v5689, 64
    %v6029 = vpop.permute.xlu0 %6028
    %6030 = vrot.lane.b32.xlu0 %v5694, 64
    %v6031 = vpop.permute.xlu0 %6030
    %6032 = vrot.lane.b32.xlu0 %v5699, 64
    %v6033 = vpop.permute.xlu0 %6032
    %6034 = vrot.lane.b32.xlu0 %v5704, 64
    %v6035 = vpop.permute.xlu0 %6034
    %v6045 = vsel %vm934, %v6012, 0
    %v6048 = vsel %vm934, %v6013, 0
    %v6051 = vsel %vm934, %v6014, 0
    %v6054 = vsel %vm934, %v6015, 0
    %v6057 = vsel %vm934, %v6016, 0
    %v6060 = vsel %vm934, %v6017, 0
    %v6063 = vsel %vm934, %v6018, 0
    %v6066 = vsel %vm934, %v6019, 0
    %6068 = vmatprep.subr.mxu0 0.0
    %6069 = vmatpush1.msra.mxu0 %v6021
    %6070 = vmatprep.subr.mxu0 0.0
    %6071 = vmatpush1.msra.mxu0 %v6023
    %6072 = vmatprep.subr.mxu0 0.0
    %6073 = vmatpush1.msra.mxu0 %v6025
    %6074 = vmatprep.subr.mxu0 0.0
    %6075 = vmatpush1.msra.mxu0 %v6027
    %6076 = vmatprep.subr.mxu0 0.0
    %6077 = vmatpush1.msra.mxu0 %v6029
    %6078 = vmatprep.subr.mxu0 0.0
    %6079 = vmatpush1.msra.mxu0 %v6031
    %6080 = vmatprep.subr.mxu0 0.0
    %6081 = vmatpush1.msra.mxu0 %v6033
    %6082 = vmatprep.subr.mxu0 0.0
    %6083 = vmatpush1.msra.mxu0 %v6035
    %6084 = vmatprep.subr.mxu0 0.0
    %6085 = vmatpush1.msra.mxu0 0.0
    %6086 = vmatprep.subr.mxu0 0.0
    %6087 = vmatpush1.msra.mxu0 0.0
    %6088 = vmatprep.subr.mxu0 0.0
    %6089 = vmatpush1.msra.mxu0 0.0
    %6090 = vmatprep.subr.mxu0 0.0
    %6091 = vmatpush1.msra.mxu0 0.0
    %6092 = vmatprep.subr.mxu0 0.0
    %6093 = vmatpush1.msra.mxu0 0.0
    %6094 = vmatprep.subr.mxu0 0.0
    %6095 = vmatpush1.msra.mxu0 0.0
    %6096 = vmatprep.subr.mxu0 0.0
    %6097 = vmatpush1.msra.mxu0 0.0
    %6098 = vmatprep.subr.mxu0 0.0
    %6099 = vmatpush1.msra.mxu0 0.0
    %6100 = vmatprep.subr.mxu0 0.0
    %6101 = vmatpush1.msra.mxu0 0.0
    %6102 = vmatprep.subr.mxu0 0.0
    %6103 = vmatpush1.msra.mxu0 0.0
    %6104 = vmatprep.subr.mxu0 0.0
    %6105 = vmatpush1.msra.mxu0 0.0
    %6106 = vmatprep.subr.mxu0 0.0
    %6107 = vmatpush1.msra.mxu0 0.0
    %6108 = vmatprep.subr.mxu0 0.0
    %6109 = vmatpush1.msra.mxu0 0.0
    %6110 = vmatprep.subr.mxu0 0.0
    %6111 = vmatpush1.msra.mxu0 0.0
    %6112 = vmatprep.subr.mxu0 0.0
    %6113 = vmatpush1.msra.mxu0 0.0
    %6114 = vmatprep.subr.mxu0 0.0
    %6115 = vmatpush1.msra.mxu0 0.0
    %6116 = vmatprep.subr.mxu0 0.0
    %6117 = vmatpush1.msra.mxu0 0.0
    %6118 = vmatprep.subr.mxu0 0.0
    %6119 = vmatpush1.msra.mxu0 0.0
    %6120 = vmatprep.subr.mxu0 0.0
    %6121 = vmatpush1.msra.mxu0 0.0
    %6122 = vmatprep.subr.mxu0 0.0
    %6123 = vmatpush1.msra.mxu0 0.0
    %6124 = vmatprep.subr.mxu0 0.0
    %6125 = vmatpush1.msra.mxu0 0.0
    %6126 = vmatprep.subr.mxu0 0.0
    %6127 = vmatpush1.msra.mxu0 0.0
    %6128 = vmatprep.subr.mxu0 0.0
    %6129 = vmatpush1.msra.mxu0 0.0
    %6130 = vmatprep.subr.mxu0 0.0
    %6131 = vmatpush1.msra.mxu0 0.0
    %6132 = vmatprep.mubr.f32.mxu0 0.0
    %6133 = vmatmul.mubr.f32.gmra.mrb[0].mxu0 %v6045
    %v6134 = vpop.f32.mrb[0].mxu0
    %v6135 = vadd.f32 0.0, %v6134
    %v6136 = vpop.f32.mrb[0].mxu0
    %6137 = vmatprep.mubr.f32.mxu0 0.0
    %6138 = vmatmul.mubr.f32.gmra.mrb[0].mxu0 %v6048
    %v6139 = vpop.f32.mrb[0].mxu0
    %v6140 = vadd.f32 0.0, %v6139
    %v6141 = vpop.f32.mrb[0].mxu0
    %6142 = vmatprep.mubr.f32.mxu0 0.0
    %6143 = vmatmul.mubr.f32.gmra.mrb[0].mxu0 %v6051
    %v6144 = vpop.f32.mrb[0].mxu0
    %v6145 = vadd.f32 0.0, %v6144
    %v6146 = vpop.f32.mrb[0].mxu0
    %6147 = vmatprep.mubr.f32.mxu0 0.0
    %6148 = vmatmul.mubr.f32.gmra.mrb[0].mxu0 %v6054
    %v6149 = vpop.f32.mrb[0].mxu0
    %v6150 = vadd.f32 0.0, %v6149
    %v6151 = vpop.f32.mrb[0].mxu0
    %6152 = vmatprep.mubr.f32.mxu0 0.0
    %6153 = vmatmul.mubr.f32.gmra.mrb[0].mxu0 %v6057
    %v6154 = vpop.f32.mrb[0].mxu0
    %v6155 = vadd.f32 0.0, %v6154
    %v6156 = vpop.f32.mrb[0].mxu0
    %6157 = vmatprep.mubr.f32.mxu0 0.0
    %6158 = vmatmul.mubr.f32.gmra.mrb[0].mxu0 %v6060
    %v6159 = vpop.f32.mrb[0].mxu0
    %v6160 = vadd.f32 0.0, %v6159
    %v6161 = vpop.f32.mrb[0].mxu0
    %6162 = vmatprep.mubr.f32.mxu0 0.0
    %6163 = vmatmul.mubr.f32.gmra.mrb[0].mxu0 %v6063
    %v6164 = vpop.f32.mrb[0].mxu0
    %v6165 = vadd.f32 0.0, %v6164
    %v6166 = vpop.f32.mrb[0].mxu0
    %6167 = vmatprep.mubr.f32.mxu0 0.0
    %6168 = vmatmul.mubr.f32.gmra.mrb[0].mxu0 %v6066
    %v6169 = vpop.f32.mrb[0].mxu0
    %v6170 = vadd.f32 0.0, %v6169
    %v6171 = vpop.f32.mrb[0].mxu0
    %6172 = vdwg.mxu0
    %6173 = vrot.lane.b32.xlu0 %v5747, 120
    %v6174 = vpop.permute.xlu0 %6173
    %6175 = vrot.lane.b32.xlu0 %v5748, 120
    %v6176 = vpop.permute.xlu0 %6175
    %6177 = vrot.lane.b32.xlu0 %v5749, 120
    %v6178 = vpop.permute.xlu0 %6177
    %6179 = vrot.lane.b32.xlu0 %v5750, 120
    %v6180 = vpop.permute.xlu0 %6179
    %6181 = vrot.lane.b32.xlu0 %v5751, 120
    %v6182 = vpop.permute.xlu0 %6181
    %6183 = vrot.lane.b32.xlu0 %v5752, 120
    %v6184 = vpop.permute.xlu0 %6183
    %6185 = vrot.lane.b32.xlu0 %v5753, 120
    %v6186 = vpop.permute.xlu0 %6185
    %6187 = vrot.lane.b32.xlu0 %v5754, 120
    %v6188 = vpop.permute.xlu0 %6187
    %6189 = vrot.lane.b32.xlu0 %v5669, 88
    %v6190 = vpop.permute.xlu0 %6189
    %6191 = vrot.lane.b32.xlu0 %v5674, 88
    %v6192 = vpop.permute.xlu0 %6191
    %6193 = vrot.lane.b32.xlu0 %v5679, 88
    %v6194 = vpop.permute.xlu0 %6193
    %6195 = vrot.lane.b32.xlu0 %v5684, 88
    %v6196 = vpop.permute.xlu0 %6195
    %6197 = vrot.lane.b32.xlu0 %v5689, 88
    %v6198 = vpop.permute.xlu0 %6197
    %6199 = vrot.lane.b32.xlu0 %v5694, 88
    %v6200 = vpop.permute.xlu0 %6199
    %6201 = vrot.lane.b32.xlu0 %v5699, 88
    %v6202 = vpop.permute.xlu0 %6201
    %6203 = vrot.lane.b32.xlu0 %v5704, 88
    %v6204 = vpop.permute.xlu0 %6203
    %v6205 = vsel %vm51, %v6174, 0
    %v6207 = vsel %vm51, %v6176, 0
    %v6209 = vsel %vm51, %v6178, 0
    %v6211 = vsel %vm51, %v6180, 0
    %v6213 = vsel %vm51, %v6182, 0
    %v6215 = vsel %vm51, %v6184, 0
    %v6217 = vsel %vm51, %v6186, 0
    %v6219 = vsel %vm51, %v6188, 0
    %v6221 = vsel %vm51, %v6190, 0
    %v6223 = vsel %vm51, %v6192, 0
    %v6225 = vsel %vm51, %v6194, 0
    %v6227 = vsel %vm51, %v6196, 0
    %v6229 = vsel %vm51, %v6198, 0
    %v6231 = vsel %vm51, %v6200, 0
    %v6233 = vsel %vm51, %v6202, 0
    %v6235 = vsel %vm51, %v6204, 0
    %6237 = vmatprep.subr.mxu0 0.0
    %6238 = vmatpush1.xpose.msra.mxu0 %v6221
    %6239 = vmatprep.subr.mxu0 0.0
    %6240 = vmatpush1.xpose.msra.mxu0 %v6223
    %6241 = vmatprep.subr.mxu0 0.0
    %6242 = vmatpush1.xpose.msra.mxu0 %v6225
    %6243 = vmatprep.subr.mxu0 0.0
    %6244 = vmatpush1.xpose.msra.mxu0 %v6227
    %6245 = vmatprep.subr.mxu0 0.0
    %6246 = vmatpush1.xpose.msra.mxu0 %v6229
    %6247 = vmatprep.subr.mxu0 0.0
    %6248 = vmatpush1.xpose.msra.mxu0 %v6231
    %6249 = vmatprep.subr.mxu0 0.0
    %6250 = vmatpush1.xpose.msra.mxu0 %v6233
    %6251 = vmatprep.subr.mxu0 0.0
    %6252 = vmatpush1.xpose.msra.mxu0 %v6235
    %6253 = vmatprep.subr.mxu0 0.0
    %6254 = vmatpush1.xpose.msra.mxu0 0.0
    %6255 = vmatprep.subr.mxu0 0.0
    %6256 = vmatpush1.xpose.msra.mxu0 0.0
    %6257 = vmatprep.subr.mxu0 0.0
    %6258 = vmatpush1.xpose.msra.mxu0 0.0
    %6259 = vmatprep.subr.mxu0 0.0
    %6260 = vmatpush1.xpose.msra.mxu0 0.0
    %6261 = vmatprep.subr.mxu0 0.0
    %6262 = vmatpush1.xpose.msra.mxu0 0.0
    %6263 = vmatprep.subr.mxu0 0.0
    %6264 = vmatpush1.xpose.msra.mxu0 0.0
    %6265 = vmatprep.subr.mxu0 0.0
    %6266 = vmatpush1.xpose.msra.mxu0 0.0
    %6267 = vmatprep.subr.mxu0 0.0
    %6268 = vmatpush1.xpose.msra.mxu0 0.0
    %6269 = vmatprep.subr.mxu0 0.0
    %6270 = vmatpush1.xpose.msra.mxu0 0.0
    %6271 = vmatprep.subr.mxu0 0.0
    %6272 = vmatpush1.xpose.msra.mxu0 0.0
    %6273 = vmatprep.subr.mxu0 0.0
    %6274 = vmatpush1.xpose.msra.mxu0 0.0
    %6275 = vmatprep.subr.mxu0 0.0
    %6276 = vmatpush1.xpose.msra.mxu0 0.0
    %6277 = vmatprep.subr.mxu0 0.0
    %6278 = vmatpush1.xpose.msra.mxu0 0.0
    %6279 = vmatprep.subr.mxu0 0.0
    %6280 = vmatpush1.xpose.msra.mxu0 0.0
    %6281 = vmatprep.subr.mxu0 0.0
    %6282 = vmatpush1.xpose.msra.mxu0 0.0
    %6283 = vmatprep.subr.mxu0 0.0
    %6284 = vmatpush1.xpose.msra.mxu0 0.0
    %6285 = vmatprep.subr.mxu0 0.0
    %6286 = vmatpush1.xpose.msra.mxu0 0.0
    %6287 = vmatprep.subr.mxu0 0.0
    %6288 = vmatpush1.xpose.msra.mxu0 0.0
    %6289 = vmatprep.subr.mxu0 0.0
    %6290 = vmatpush1.xpose.msra.mxu0 0.0
    %6291 = vmatprep.subr.mxu0 0.0
    %6292 = vmatpush1.xpose.msra.mxu0 0.0
    %6293 = vmatprep.subr.mxu0 0.0
    %6294 = vmatpush1.xpose.msra.mxu0 0.0
    %6295 = vmatprep.subr.mxu0 0.0
    %6296 = vmatpush1.xpose.msra.mxu0 0.0
    %6297 = vmatprep.subr.mxu0 0.0
    %6298 = vmatpush1.xpose.msra.mxu0 0.0
    %6299 = vmatprep.subr.mxu0 0.0
    %6300 = vmatpush1.xpose.msra.mxu0 0.0
    %6301 = vmatprep.mubr.f32.mxu0 0.0
    %6302 = vmatmul.mubr.f32.gmra.mrb[0].mxu0 %v6205
    %v6303 = vpop.f32.mrb[0].mxu0
    %v6304 = vadd.f32 0.0, %v6303
    %v6305 = vpop.f32.mrb[0].mxu0
    %6306 = vmatprep.mubr.f32.mxu0 0.0
    %6307 = vmatmul.mubr.f32.gmra.mrb[0].mxu0 %v6207
    %v6308 = vpop.f32.mrb[0].mxu0
    %v6309 = vadd.f32 0.0, %v6308
    %v6310 = vpop.f32.mrb[0].mxu0
    %6311 = vmatprep.mubr.f32.mxu0 0.0
    %6312 = vmatmul.mubr.f32.gmra.mrb[0].mxu0 %v6209
    %v6313 = vpop.f32.mrb[0].mxu0
    %v6314 = vadd.f32 0.0, %v6313
    %v6315 = vpop.f32.mrb[0].mxu0
    %6316 = vmatprep.mubr.f32.mxu0 0.0
    %6317 = vmatmul.mubr.f32.gmra.mrb[0].mxu0 %v6211
    %v6318 = vpop.f32.mrb[0].mxu0
    %v6319 = vadd.f32 0.0, %v6318
    %v6320 = vpop.f32.mrb[0].mxu0
    %6321 = vmatprep.mubr.f32.mxu0 0.0
    %6322 = vmatmul.mubr.f32.gmra.mrb[0].mxu0 %v6213
    %v6323 = vpop.f32.mrb[0].mxu0
    %v6324 = vadd.f32 0.0, %v6323
    %v6325 = vpop.f32.mrb[0].mxu0
    %6326 = vmatprep.mubr.f32.mxu0 0.0
    %6327 = vmatmul.mubr.f32.gmra.mrb[0].mxu0 %v6215
    %v6328 = vpop.f32.mrb[0].mxu0
    %v6329 = vadd.f32 0.0, %v6328
    %v6330 = vpop.f32.mrb[0].mxu0
    %6331 = vmatprep.mubr.f32.mxu0 0.0
    %6332 = vmatmul.mubr.f32.gmra.mrb[0].mxu0 %v6217
    %v6333 = vpop.f32.mrb[0].mxu0
    %v6334 = vadd.f32 0.0, %v6333
    %v6335 = vpop.f32.mrb[0].mxu0
    %6336 = vmatprep.mubr.f32.mxu0 0.0
    %6337 = vmatmul.mubr.f32.gmra.mrb[0].mxu0 %v6219
    %v6338 = vpop.f32.mrb[0].mxu0
    %v6339 = vadd.f32 0.0, %v6338
    %v6340 = vpop.f32.mrb[0].mxu0
    %6341 = vdwg.mxu0
    %v6342 = vsel %vm934, %v6304, -inf
    %6343 = vmax.xlane.f32.xlu0 %v6342
    %v6344 = vpop.xlane.xlu0 %6343
    %v6345 = vsel %vm934, %v6309, -inf
    %6346 = vmax.xlane.f32.xlu0 %v6345
    %v6347 = vpop.xlane.xlu0 %6346
    %v6348 = vsel %vm934, %v6314, -inf
    %6349 = vmax.xlane.f32.xlu0 %v6348
    %v6350 = vpop.xlane.xlu0 %6349
    %v6351 = vsel %vm934, %v6319, -inf
    %6352 = vmax.xlane.f32.xlu0 %v6351
    %v6353 = vpop.xlane.xlu0 %6352
    %v6354 = vsel %vm934, %v6324, -inf
    %6355 = vmax.xlane.f32.xlu0 %v6354
    %v6356 = vpop.xlane.xlu0 %6355
    %v6357 = vsel %vm934, %v6329, -inf
    %6358 = vmax.xlane.f32.xlu0 %v6357
    %v6359 = vpop.xlane.xlu0 %6358
    %v6360 = vsel %vm934, %v6334, -inf
    %6361 = vmax.xlane.f32.xlu0 %v6360
    %v6362 = vpop.xlane.xlu0 %6361
    %v6363 = vsel %vm934, %v6339, -inf
    %6364 = vmax.xlane.f32.xlu0 %v6363
    %v6365 = vpop.xlane.xlu0 %6364
    %v6366 = vsub.f32 %v6304, %v6344
    %v6367 = vsub.f32 %v6309, %v6347
    %v6368 = vsub.f32 %v6314, %v6350
    %v6369 = vsub.f32 %v6319, %v6353
    %v6370 = vsub.f32 %v6324, %v6356
    %v6371 = vsub.f32 %v6329, %v6359
    %v6372 = vsub.f32 %v6334, %v6362
    %v6373 = vsub.f32 %v6339, %v6365
    %v6374 = vmul.f32 %v6366, 1.442695
    %v6375 = vpow.pop %v6374
    %v6376 = vmul.f32 %v6367, 1.442695
    %v6377 = vpow.pop %v6376
    %v6378 = vmul.f32 %v6368, 1.442695
    %v6379 = vpow.pop %v6378
    %v6380 = vmul.f32 %v6369, 1.442695
    %v6381 = vpow.pop %v6380
    %v6382 = vmul.f32 %v6370, 1.442695
    %v6383 = vpow.pop %v6382
    %v6384 = vmul.f32 %v6371, 1.442695
    %v6385 = vpow.pop %v6384
    %v6386 = vmul.f32 %v6372, 1.442695
    %v6387 = vpow.pop %v6386
    %v6388 = vmul.f32 %v6373, 1.442695
    %v6389 = vpow.pop %v6388
    %v6390 = vsel %vm934, %v6375, 0.0
    %6391 = vadd.xlane.f32.xlu0 %v6390
    %v6392 = vpop.xlane.xlu0 %6391
    %v6393 = vsel %vm934, %v6377, 0.0
    %6394 = vadd.xlane.f32.xlu0 %v6393
    %v6395 = vpop.xlane.xlu0 %6394
    %v6396 = vsel %vm934, %v6379, 0.0
    %6397 = vadd.xlane.f32.xlu0 %v6396
    %v6398 = vpop.xlane.xlu0 %6397
    %v6399 = vsel %vm934, %v6381, 0.0
    %6400 = vadd.xlane.f32.xlu0 %v6399
    %v6401 = vpop.xlane.xlu0 %6400
    %v6402 = vsel %vm934, %v6383, 0.0
    %6403 = vadd.xlane.f32.xlu0 %v6402
    %v6404 = vpop.xlane.xlu0 %6403
    %v6405 = vsel %vm934, %v6385, 0.0
    %6406 = vadd.xlane.f32.xlu0 %v6405
    %v6407 = vpop.xlane.xlu0 %6406
    %v6408 = vsel %vm934, %v6387, 0.0
    %6409 = vadd.xlane.f32.xlu0 %v6408
    %v6410 = vpop.xlane.xlu0 %6409
    %v6411 = vsel %vm934, %v6389, 0.0
    %6412 = vadd.xlane.f32.xlu0 %v6411
    %v6413 = vpop.xlane.xlu0 %6412
    %v6414 = vrcp.pop %v6392
    %v6415 = vrcp.pop %v6395
    %v6416 = vrcp.pop %v6398
    %v6417 = vrcp.pop %v6401
    %v6418 = vrcp.pop %v6404
    %v6419 = vrcp.pop %v6407
    %v6420 = vrcp.pop %v6410
    %v6421 = vrcp.pop %v6413
    %v6422 = vmul.f32 %v6375, %v6414
    %v6423 = vmul.f32 %v6377, %v6415
    %v6424 = vmul.f32 %v6379, %v6416
    %v6425 = vmul.f32 %v6381, %v6417
    %v6426 = vmul.f32 %v6383, %v6418
    %v6427 = vmul.f32 %v6385, %v6419
    %v6428 = vmul.f32 %v6387, %v6420
    %v6429 = vmul.f32 %v6389, %v6421
    %6430 = vrot.lane.b32.xlu0 %v5669, 56
    %v6431 = vpop.permute.xlu0 %6430
    %6432 = vrot.lane.b32.xlu0 %v5674, 56
    %v6433 = vpop.permute.xlu0 %6432
    %6434 = vrot.lane.b32.xlu0 %v5679, 56
    %v6435 = vpop.permute.xlu0 %6434
    %6436 = vrot.lane.b32.xlu0 %v5684, 56
    %v6437 = vpop.permute.xlu0 %6436
    %6438 = vrot.lane.b32.xlu0 %v5689, 56
    %v6439 = vpop.permute.xlu0 %6438
    %6440 = vrot.lane.b32.xlu0 %v5694, 56
    %v6441 = vpop.permute.xlu0 %6440
    %6442 = vrot.lane.b32.xlu0 %v5699, 56
    %v6443 = vpop.permute.xlu0 %6442
    %6444 = vrot.lane.b32.xlu0 %v5704, 56
    %v6445 = vpop.permute.xlu0 %6444
    %v6455 = vsel %vm934, %v6422, 0
    %v6458 = vsel %vm934, %v6423, 0
    %v6461 = vsel %vm934, %v6424, 0
    %v6464 = vsel %vm934, %v6425, 0
    %v6467 = vsel %vm934, %v6426, 0
    %v6470 = vsel %vm934, %v6427, 0
    %v6473 = vsel %vm934, %v6428, 0
    %v6476 = vsel %vm934, %v6429, 0
    %6478 = vmatprep.subr.mxu0 0.0
    %6479 = vmatpush1.msra.mxu0 %v6431
    %6480 = vmatprep.subr.mxu0 0.0
    %6481 = vmatpush1.msra.mxu0 %v6433
    %6482 = vmatprep.subr.mxu0 0.0
    %6483 = vmatpush1.msra.mxu0 %v6435
    %6484 = vmatprep.subr.mxu0 0.0
    %6485 = vmatpush1.msra.mxu0 %v6437
    %6486 = vmatprep.subr.mxu0 0.0
    %6487 = vmatpush1.msra.mxu0 %v6439
    %6488 = vmatprep.subr.mxu0 0.0
    %6489 = vmatpush1.msra.mxu0 %v6441
    %6490 = vmatprep.subr.mxu0 0.0
    %6491 = vmatpush1.msra.mxu0 %v6443
    %6492 = vmatprep.subr.mxu0 0.0
    %6493 = vmatpush1.msra.mxu0 %v6445
    %6494 = vmatprep.subr.mxu0 0.0
    %6495 = vmatpush1.msra.mxu0 0.0
    %6496 = vmatprep.subr.mxu0 0.0
    %6497 = vmatpush1.msra.mxu0 0.0
    %6498 = vmatprep.subr.mxu0 0.0
    %6499 = vmatpush1.msra.mxu0 0.0
    %6500 = vmatprep.subr.mxu0 0.0
    %6501 = vmatpush1.msra.mxu0 0.0
    %6502 = vmatprep.subr.mxu0 0.0
    %6503 = vmatpush1.msra.mxu0 0.0
    %6504 = vmatprep.subr.mxu0 0.0
    %6505 = vmatpush1.msra.mxu0 0.0
    %6506 = vmatprep.subr.mxu0 0.0
    %6507 = vmatpush1.msra.mxu0 0.0
    %6508 = vmatprep.subr.mxu0 0.0
    %6509 = vmatpush1.msra.mxu0 0.0
    %6510 = vmatprep.subr.mxu0 0.0
    %6511 = vmatpush1.msra.mxu0 0.0
    %6512 = vmatprep.subr.mxu0 0.0
    %6513 = vmatpush1.msra.mxu0 0.0
    %6514 = vmatprep.subr.mxu0 0.0
    %6515 = vmatpush1.msra.mxu0 0.0
    %6516 = vmatprep.subr.mxu0 0.0
    %6517 = vmatpush1.msra.mxu0 0.0
    %6518 = vmatprep.subr.mxu0 0.0
    %6519 = vmatpush1.msra.mxu0 0.0
    %6520 = vmatprep.subr.mxu0 0.0
    %6521 = vmatpush1.msra.mxu0 0.0
    %6522 = vmatprep.subr.mxu0 0.0
    %6523 = vmatpush1.msra.mxu0 0.0
    %6524 = vmatprep.subr.mxu0 0.0
    %6525 = vmatpush1.msra.mxu0 0.0
    %6526 = vmatprep.subr.mxu0 0.0
    %6527 = vmatpush1.msra.mxu0 0.0
    %6528 = vmatprep.subr.mxu0 0.0
    %6529 = vmatpush1.msra.mxu0 0.0
    %6530 = vmatprep.subr.mxu0 0.0
    %6531 = vmatpush1.msra.mxu0 0.0
    %6532 = vmatprep.subr.mxu0 0.0
    %6533 = vmatpush1.msra.mxu0 0.0
    %6534 = vmatprep.subr.mxu0 0.0
    %6535 = vmatpush1.msra.mxu0 0.0
    %6536 = vmatprep.subr.mxu0 0.0
    %6537 = vmatpush1.msra.mxu0 0.0
    %6538 = vmatprep.subr.mxu0 0.0
    %6539 = vmatpush1.msra.mxu0 0.0
    %6540 = vmatprep.subr.mxu0 0.0
    %6541 = vmatpush1.msra.mxu0 0.0
    %6542 = vmatprep.mubr.f32.mxu0 0.0
    %6543 = vmatmul.mubr.f32.gmra.mrb[0].mxu0 %v6455
    %v6544 = vpop.f32.mrb[0].mxu0
    %v6545 = vadd.f32 0.0, %v6544
    %v6546 = vpop.f32.mrb[0].mxu0
    %6547 = vmatprep.mubr.f32.mxu0 0.0
    %6548 = vmatmul.mubr.f32.gmra.mrb[0].mxu0 %v6458
    %v6549 = vpop.f32.mrb[0].mxu0
    %v6550 = vadd.f32 0.0, %v6549
    %v6551 = vpop.f32.mrb[0].mxu0
    %6552 = vmatprep.mubr.f32.mxu0 0.0
    %6553 = vmatmul.mubr.f32.gmra.mrb[0].mxu0 %v6461
    %v6554 = vpop.f32.mrb[0].mxu0
    %v6555 = vadd.f32 0.0, %v6554
    %v6556 = vpop.f32.mrb[0].mxu0
    %6557 = vmatprep.mubr.f32.mxu0 0.0
    %6558 = vmatmul.mubr.f32.gmra.mrb[0].mxu0 %v6464
    %v6559 = vpop.f32.mrb[0].mxu0
    %v6560 = vadd.f32 0.0, %v6559
    %v6561 = vpop.f32.mrb[0].mxu0
    %6562 = vmatprep.mubr.f32.mxu0 0.0
    %6563 = vmatmul.mubr.f32.gmra.mrb[0].mxu0 %v6467
    %v6564 = vpop.f32.mrb[0].mxu0
    %v6565 = vadd.f32 0.0, %v6564
    %v6566 = vpop.f32.mrb[0].mxu0
    %6567 = vmatprep.mubr.f32.mxu0 0.0
    %6568 = vmatmul.mubr.f32.gmra.mrb[0].mxu0 %v6470
    %v6569 = vpop.f32.mrb[0].mxu0
    %v6570 = vadd.f32 0.0, %v6569
    %v6571 = vpop.f32.mrb[0].mxu0
    %6572 = vmatprep.mubr.f32.mxu0 0.0
    %6573 = vmatmul.mubr.f32.gmra.mrb[0].mxu0 %v6473
    %v6574 = vpop.f32.mrb[0].mxu0
    %v6575 = vadd.f32 0.0, %v6574
    %v6576 = vpop.f32.mrb[0].mxu0
    %6577 = vmatprep.mubr.f32.mxu0 0.0
    %6578 = vmatmul.mubr.f32.gmra.mrb[0].mxu0 %v6476
    %v6579 = vpop.f32.mrb[0].mxu0
    %v6580 = vadd.f32 0.0, %v6579
    %v6581 = vpop.f32.mrb[0].mxu0
    %6582 = vdwg.mxu0
    %6583 = vrot.lane.b32.xlu0 %v5747, 112
    %v6584 = vpop.permute.xlu0 %6583
    %6585 = vrot.lane.b32.xlu0 %v5748, 112
    %v6586 = vpop.permute.xlu0 %6585
    %6587 = vrot.lane.b32.xlu0 %v5749, 112
    %v6588 = vpop.permute.xlu0 %6587
    %6589 = vrot.lane.b32.xlu0 %v5750, 112
    %v6590 = vpop.permute.xlu0 %6589
    %6591 = vrot.lane.b32.xlu0 %v5751, 112
    %v6592 = vpop.permute.xlu0 %6591
    %6593 = vrot.lane.b32.xlu0 %v5752, 112
    %v6594 = vpop.permute.xlu0 %6593
    %6595 = vrot.lane.b32.xlu0 %v5753, 112
    %v6596 = vpop.permute.xlu0 %6595
    %6597 = vrot.lane.b32.xlu0 %v5754, 112
    %v6598 = vpop.permute.xlu0 %6597
    %6599 = vrot.lane.b32.xlu0 %v5669, 80
    %v6600 = vpop.permute.xlu0 %6599
    %6601 = vrot.lane.b32.xlu0 %v5674, 80
    %v6602 = vpop.permute.xlu0 %6601
    %6603 = vrot.lane.b32.xlu0 %v5679, 80
    %v6604 = vpop.permute.xlu0 %6603
    %6605 = vrot.lane.b32.xlu0 %v5684, 80
    %v6606 = vpop.permute.xlu0 %6605
    %6607 = vrot.lane.b32.xlu0 %v5689, 80
    %v6608 = vpop.permute.xlu0 %6607
    %6609 = vrot.lane.b32.xlu0 %v5694, 80
    %v6610 = vpop.permute.xlu0 %6609
    %6611 = vrot.lane.b32.xlu0 %v5699, 80
    %v6612 = vpop.permute.xlu0 %6611
    %6613 = vrot.lane.b32.xlu0 %v5704, 80
    %v6614 = vpop.permute.xlu0 %6613
    %v6615 = vsel %vm51, %v6584, 0
    %v6617 = vsel %vm51, %v6586, 0
    %v6619 = vsel %vm51, %v6588, 0
    %v6621 = vsel %vm51, %v6590, 0
    %v6623 = vsel %vm51, %v6592, 0
    %v6625 = vsel %vm51, %v6594, 0
    %v6627 = vsel %vm51, %v6596, 0
    %v6629 = vsel %vm51, %v6598, 0
    %v6631 = vsel %vm51, %v6600, 0
    %v6633 = vsel %vm51, %v6602, 0
    %v6635 = vsel %vm51, %v6604, 0
    %v6637 = vsel %vm51, %v6606, 0
    %v6639 = vsel %vm51, %v6608, 0
    %v6641 = vsel %vm51, %v6610, 0
    %v6643 = vsel %vm51, %v6612, 0
    %v6645 = vsel %vm51, %v6614, 0
    %6647 = vmatprep.subr.mxu0 0.0
    %6648 = vmatpush1.xpose.msra.mxu0 %v6631
    %6649 = vmatprep.subr.mxu0 0.0
    %6650 = vmatpush1.xpose.msra.mxu0 %v6633
    %6651 = vmatprep.subr.mxu0 0.0
    %6652 = vmatpush1.xpose.msra.mxu0 %v6635
    %6653 = vmatprep.subr.mxu0 0.0
    %6654 = vmatpush1.xpose.msra.mxu0 %v6637
    %6655 = vmatprep.subr.mxu0 0.0
    %6656 = vmatpush1.xpose.msra.mxu0 %v6639
    %6657 = vmatprep.subr.mxu0 0.0
    %6658 = vmatpush1.xpose.msra.mxu0 %v6641
    %6659 = vmatprep.subr.mxu0 0.0
    %6660 = vmatpush1.xpose.msra.mxu0 %v6643
    %6661 = vmatprep.subr.mxu0 0.0
    %6662 = vmatpush1.xpose.msra.mxu0 %v6645
    %6663 = vmatprep.subr.mxu0 0.0
    %6664 = vmatpush1.xpose.msra.mxu0 0.0
    %6665 = vmatprep.subr.mxu0 0.0
    %6666 = vmatpush1.xpose.msra.mxu0 0.0
    %6667 = vmatprep.subr.mxu0 0.0
    %6668 = vmatpush1.xpose.msra.mxu0 0.0
    %6669 = vmatprep.subr.mxu0 0.0
    %6670 = vmatpush1.xpose.msra.mxu0 0.0
    %6671 = vmatprep.subr.mxu0 0.0
    %6672 = vmatpush1.xpose.msra.mxu0 0.0
    %6673 = vmatprep.subr.mxu0 0.0
    %6674 = vmatpush1.xpose.msra.mxu0 0.0
    %6675 = vmatprep.subr.mxu0 0.0
    %6676 = vmatpush1.xpose.msra.mxu0 0.0
    %6677 = vmatprep.subr.mxu0 0.0
    %6678 = vmatpush1.xpose.msra.mxu0 0.0
    %6679 = vmatprep.subr.mxu0 0.0
    %6680 = vmatpush1.xpose.msra.mxu0 0.0
    %6681 = vmatprep.subr.mxu0 0.0
    %6682 = vmatpush1.xpose.msra.mxu0 0.0
    %6683 = vmatprep.subr.mxu0 0.0
    %6684 = vmatpush1.xpose.msra.mxu0 0.0
    %6685 = vmatprep.subr.mxu0 0.0
    %6686 = vmatpush1.xpose.msra.mxu0 0.0
    %6687 = vmatprep.subr.mxu0 0.0
    %6688 = vmatpush1.xpose.msra.mxu0 0.0
    %6689 = vmatprep.subr.mxu0 0.0
    %6690 = vmatpush1.xpose.msra.mxu0 0.0
    %6691 = vmatprep.subr.mxu0 0.0
    %6692 = vmatpush1.xpose.msra.mxu0 0.0
    %6693 = vmatprep.subr.mxu0 0.0
    %6694 = vmatpush1.xpose.msra.mxu0 0.0
    %6695 = vmatprep.subr.mxu0 0.0
    %6696 = vmatpush1.xpose.msra.mxu0 0.0
    %6697 = vmatprep.subr.mxu0 0.0
    %6698 = vmatpush1.xpose.msra.mxu0 0.0
    %6699 = vmatprep.subr.mxu0 0.0
    %6700 = vmatpush1.xpose.msra.mxu0 0.0
    %6701 = vmatprep.subr.mxu0 0.0
    %6702 = vmatpush1.xpose.msra.mxu0 0.0
    %6703 = vmatprep.subr.mxu0 0.0
    %6704 = vmatpush1.xpose.msra.mxu0 0.0
    %6705 = vmatprep.subr.mxu0 0.0
    %6706 = vmatpush1.xpose.msra.mxu0 0.0
    %6707 = vmatprep.subr.mxu0 0.0
    %6708 = vmatpush1.xpose.msra.mxu0 0.0
    %6709 = vmatprep.subr.mxu0 0.0
    %6710 = vmatpush1.xpose.msra.mxu0 0.0
    %6711 = vmatprep.mubr.f32.mxu0 0.0
    %6712 = vmatmul.mubr.f32.gmra.mrb[0].mxu0 %v6615
    %v6713 = vpop.f32.mrb[0].mxu0
    %v6714 = vadd.f32 0.0, %v6713
    %v6715 = vpop.f32.mrb[0].mxu0
    %6716 = vmatprep.mubr.f32.mxu0 0.0
    %6717 = vmatmul.mubr.f32.gmra.mrb[0].mxu0 %v6617
    %v6718 = vpop.f32.mrb[0].mxu0
    %v6719 = vadd.f32 0.0, %v6718
    %v6720 = vpop.f32.mrb[0].mxu0
    %6721 = vmatprep.mubr.f32.mxu0 0.0
    %6722 = vmatmul.mubr.f32.gmra.mrb[0].mxu0 %v6619
    %v6723 = vpop.f32.mrb[0].mxu0
    %v6724 = vadd.f32 0.0, %v6723
    %v6725 = vpop.f32.mrb[0].mxu0
    %6726 = vmatprep.mubr.f32.mxu0 0.0
    %6727 = vmatmul.mubr.f32.gmra.mrb[0].mxu0 %v6621
    %v6728 = vpop.f32.mrb[0].mxu0
    %v6729 = vadd.f32 0.0, %v6728
    %v6730 = vpop.f32.mrb[0].mxu0
    %6731 = vmatprep.mubr.f32.mxu0 0.0
    %6732 = vmatmul.mubr.f32.gmra.mrb[0].mxu0 %v6623
    %v6733 = vpop.f32.mrb[0].mxu0
    %v6734 = vadd.f32 0.0, %v6733
    %v6735 = vpop.f32.mrb[0].mxu0
    %6736 = vmatprep.mubr.f32.mxu0 0.0
    %6737 = vmatmul.mubr.f32.gmra.mrb[0].mxu0 %v6625
    %v6738 = vpop.f32.mrb[0].mxu0
    %v6739 = vadd.f32 0.0, %v6738
    %v6740 = vpop.f32.mrb[0].mxu0
    %6741 = vmatprep.mubr.f32.mxu0 0.0
    %6742 = vmatmul.mubr.f32.gmra.mrb[0].mxu0 %v6627
    %v6743 = vpop.f32.mrb[0].mxu0
    %v6744 = vadd.f32 0.0, %v6743
    %v6745 = vpop.f32.mrb[0].mxu0
    %6746 = vmatprep.mubr.f32.mxu0 0.0
    %6747 = vmatmul.mubr.f32.gmra.mrb[0].mxu0 %v6629
    %v6748 = vpop.f32.mrb[0].mxu0
    %v6749 = vadd.f32 0.0, %v6748
    %v6750 = vpop.f32.mrb[0].mxu0
    %6751 = vdwg.mxu0
    %v6752 = vsel %vm934, %v6714, -inf
    %6753 = vmax.xlane.f32.xlu0 %v6752
    %v6754 = vpop.xlane.xlu0 %6753
    %v6755 = vsel %vm934, %v6719, -inf
    %6756 = vmax.xlane.f32.xlu0 %v6755
    %v6757 = vpop.xlane.xlu0 %6756
    %v6758 = vsel %vm934, %v6724, -inf
    %6759 = vmax.xlane.f32.xlu0 %v6758
    %v6760 = vpop.xlane.xlu0 %6759
    %v6761 = vsel %vm934, %v6729, -inf
    %6762 = vmax.xlane.f32.xlu0 %v6761
    %v6763 = vpop.xlane.xlu0 %6762
    %v6764 = vsel %vm934, %v6734, -inf
    %6765 = vmax.xlane.f32.xlu0 %v6764
    %v6766 = vpop.xlane.xlu0 %6765
    %v6767 = vsel %vm934, %v6739, -inf
    %6768 = vmax.xlane.f32.xlu0 %v6767
    %v6769 = vpop.xlane.xlu0 %6768
    %v6770 = vsel %vm934, %v6744, -inf
    %6771 = vmax.xlane.f32.xlu0 %v6770
    %v6772 = vpop.xlane.xlu0 %6771
    %v6773 = vsel %vm934, %v6749, -inf
    %6774 = vmax.xlane.f32.xlu0 %v6773
    %v6775 = vpop.xlane.xlu0 %6774
    %v6776 = vsub.f32 %v6714, %v6754
    %v6777 = vsub.f32 %v6719, %v6757
    %v6778 = vsub.f32 %v6724, %v6760
    %v6779 = vsub.f32 %v6729, %v6763
    %v6780 = vsub.f32 %v6734, %v6766
    %v6781 = vsub.f32 %v6739, %v6769
    %v6782 = vsub.f32 %v6744, %v6772
    %v6783 = vsub.f32 %v6749, %v6775
    %v6784 = vmul.f32 %v6776, 1.442695
    %v6785 = vpow.pop %v6784
    %v6786 = vmul.f32 %v6777, 1.442695
    %v6787 = vpow.pop %v6786
    %v6788 = vmul.f32 %v6778, 1.442695
    %v6789 = vpow.pop %v6788
    %v6790 = vmul.f32 %v6779, 1.442695
    %v6791 = vpow.pop %v6790
    %v6792 = vmul.f32 %v6780, 1.442695
    %v6793 = vpow.pop %v6792
    %v6794 = vmul.f32 %v6781, 1.442695
    %v6795 = vpow.pop %v6794
    %v6796 = vmul.f32 %v6782, 1.442695
    %v6797 = vpow.pop %v6796
    %v6798 = vmul.f32 %v6783, 1.442695
    %v6799 = vpow.pop %v6798
    %v6800 = vsel %vm934, %v6785, 0.0
    %6801 = vadd.xlane.f32.xlu0 %v6800
    %v6802 = vpop.xlane.xlu0 %6801
    %v6803 = vsel %vm934, %v6787, 0.0
    %6804 = vadd.xlane.f32.xlu0 %v6803
    %v6805 = vpop.xlane.xlu0 %6804
    %v6806 = vsel %vm934, %v6789, 0.0
    %6807 = vadd.xlane.f32.xlu0 %v6806
    %v6808 = vpop.xlane.xlu0 %6807
    %v6809 = vsel %vm934, %v6791, 0.0
    %6810 = vadd.xlane.f32.xlu0 %v6809
    %v6811 = vpop.xlane.xlu0 %6810
    %v6812 = vsel %vm934, %v6793, 0.0
    %6813 = vadd.xlane.f32.xlu0 %v6812
    %v6814 = vpop.xlane.xlu0 %6813
    %v6815 = vsel %vm934, %v6795, 0.0
    %6816 = vadd.xlane.f32.xlu0 %v6815
    %v6817 = vpop.xlane.xlu0 %6816
    %v6818 = vsel %vm934, %v6797, 0.0
    %6819 = vadd.xlane.f32.xlu0 %v6818
    %v6820 = vpop.xlane.xlu0 %6819
    %v6821 = vsel %vm934, %v6799, 0.0
    %6822 = vadd.xlane.f32.xlu0 %v6821
    %v6823 = vpop.xlane.xlu0 %6822
    %v6824 = vrcp.pop %v6802
    %v6825 = vrcp.pop %v6805
    %v6826 = vrcp.pop %v6808
    %v6827 = vrcp.pop %v6811
    %v6828 = vrcp.pop %v6814
    %v6829 = vrcp.pop %v6817
    %v6830 = vrcp.pop %v6820
    %v6831 = vrcp.pop %v6823
    %v6832 = vmul.f32 %v6785, %v6824
    %v6833 = vmul.f32 %v6787, %v6825
    %v6834 = vmul.f32 %v6789, %v6826
    %v6835 = vmul.f32 %v6791, %v6827
    %v6836 = vmul.f32 %v6793, %v6828
    %v6837 = vmul.f32 %v6795, %v6829
    %v6838 = vmul.f32 %v6797, %v6830
    %v6839 = vmul.f32 %v6799, %v6831
    %6840 = vrot.lane.b32.xlu0 %v5669, 48
    %v6841 = vpop.permute.xlu0 %6840
    %6842 = vrot.lane.b32.xlu0 %v5674, 48
    %v6843 = vpop.permute.xlu0 %6842
    %6844 = vrot.lane.b32.xlu0 %v5679, 48
    %v6845 = vpop.permute.xlu0 %6844
    %6846 = vrot.lane.b32.xlu0 %v5684, 48
    %v6847 = vpop.permute.xlu0 %6846
    %6848 = vrot.lane.b32.xlu0 %v5689, 48
    %v6849 = vpop.permute.xlu0 %6848
    %6850 = vrot.lane.b32.xlu0 %v5694, 48
    %v6851 = vpop.permute.xlu0 %6850
    %6852 = vrot.lane.b32.xlu0 %v5699, 48
    %v6853 = vpop.permute.xlu0 %6852
    %6854 = vrot.lane.b32.xlu0 %v5704, 48
    %v6855 = vpop.permute.xlu0 %6854
    %v6865 = vsel %vm934, %v6832, 0
    %v6868 = vsel %vm934, %v6833, 0
    %v6871 = vsel %vm934, %v6834, 0
    %v6874 = vsel %vm934, %v6835, 0
    %v6877 = vsel %vm934, %v6836, 0
    %v6880 = vsel %vm934, %v6837, 0
    %v6883 = vsel %vm934, %v6838, 0
    %v6886 = vsel %vm934, %v6839, 0
    %6888 = vmatprep.subr.mxu0 0.0
    %6889 = vmatpush1.msra.mxu0 %v6841
    %6890 = vmatprep.subr.mxu0 0.0
    %6891 = vmatpush1.msra.mxu0 %v6843
    %6892 = vmatprep.subr.mxu0 0.0
    %6893 = vmatpush1.msra.mxu0 %v6845
    %6894 = vmatprep.subr.mxu0 0.0
    %6895 = vmatpush1.msra.mxu0 %v6847
    %6896 = vmatprep.subr.mxu0 0.0
    %6897 = vmatpush1.msra.mxu0 %v6849
    %6898 = vmatprep.subr.mxu0 0.0
    %6899 = vmatpush1.msra.mxu0 %v6851
    %6900 = vmatprep.subr.mxu0 0.0
    %6901 = vmatpush1.msra.mxu0 %v6853
    %6902 = vmatprep.subr.mxu0 0.0
    %6903 = vmatpush1.msra.mxu0 %v6855
    %6904 = vmatprep.subr.mxu0 0.0
    %6905 = vmatpush1.msra.mxu0 0.0
    %6906 = vmatprep.subr.mxu0 0.0
    %6907 = vmatpush1.msra.mxu0 0.0
    %6908 = vmatprep.subr.mxu0 0.0
    %6909 = vmatpush1.msra.mxu0 0.0
    %6910 = vmatprep.subr.mxu0 0.0
    %6911 = vmatpush1.msra.mxu0 0.0
    %6912 = vmatprep.subr.mxu0 0.0
    %6913 = vmatpush1.msra.mxu0 0.0
    %6914 = vmatprep.subr.mxu0 0.0
    %6915 = vmatpush1.msra.mxu0 0.0
    %6916 = vmatprep.subr.mxu0 0.0
    %6917 = vmatpush1.msra.mxu0 0.0
    %6918 = vmatprep.subr.mxu0 0.0
    %6919 = vmatpush1.msra.mxu0 0.0
    %6920 = vmatprep.subr.mxu0 0.0
    %6921 = vmatpush1.msra.mxu0 0.0
    %6922 = vmatprep.subr.mxu0 0.0
    %6923 = vmatpush1.msra.mxu0 0.0
    %6924 = vmatprep.subr.mxu0 0.0
    %6925 = vmatpush1.msra.mxu0 0.0
    %6926 = vmatprep.subr.mxu0 0.0
    %6927 = vmatpush1.msra.mxu0 0.0
    %6928 = vmatprep.subr.mxu0 0.0
    %6929 = vmatpush1.msra.mxu0 0.0
    %6930 = vmatprep.subr.mxu0 0.0
    %6931 = vmatpush1.msra.mxu0 0.0
    %6932 = vmatprep.subr.mxu0 0.0
    %6933 = vmatpush1.msra.mxu0 0.0
    %6934 = vmatprep.subr.mxu0 0.0
    %6935 = vmatpush1.msra.mxu0 0.0
    %6936 = vmatprep.subr.mxu0 0.0
    %6937 = vmatpush1.msra.mxu0 0.0
    %6938 = vmatprep.subr.mxu0 0.0
    %6939 = vmatpush1.msra.mxu0 0.0
    %6940 = vmatprep.subr.mxu0 0.0
    %6941 = vmatpush1.msra.mxu0 0.0
    %6942 = vmatprep.subr.mxu0 0.0
    %6943 = vmatpush1.msra.mxu0 0.0
    %6944 = vmatprep.subr.mxu0 0.0
    %6945 = vmatpush1.msra.mxu0 0.0
    %6946 = vmatprep.subr.mxu0 0.0
    %6947 = vmatpush1.msra.mxu0 0.0
    %6948 = vmatprep.subr.mxu0 0.0
    %6949 = vmatpush1.msra.mxu0 0.0
    %6950 = vmatprep.subr.mxu0 0.0
    %6951 = vmatpush1.msra.mxu0 0.0
    %6952 = vmatprep.mubr.f32.mxu0 0.0
    %6953 = vmatmul.mubr.f32.gmra.mrb[0].mxu0 %v6865
    %v6954 = vpop.f32.mrb[0].mxu0
    %v6955 = vadd.f32 0.0, %v6954
    %v6956 = vpop.f32.mrb[0].mxu0
    %6957 = vmatprep.mubr.f32.mxu0 0.0
    %6958 = vmatmul.mubr.f32.gmra.mrb[0].mxu0 %v6868
    %v6959 = vpop.f32.mrb[0].mxu0
    %v6960 = vadd.f32 0.0, %v6959
    %v6961 = vpop.f32.mrb[0].mxu0
    %6962 = vmatprep.mubr.f32.mxu0 0.0
    %6963 = vmatmul.mubr.f32.gmra.mrb[0].mxu0 %v6871
    %v6964 = vpop.f32.mrb[0].mxu0
    %v6965 = vadd.f32 0.0, %v6964
    %v6966 = vpop.f32.mrb[0].mxu0
    %6967 = vmatprep.mubr.f32.mxu0 0.0
    %6968 = vmatmul.mubr.f32.gmra.mrb[0].mxu0 %v6874
    %v6969 = vpop.f32.mrb[0].mxu0
    %v6970 = vadd.f32 0.0, %v6969
    %v6971 = vpop.f32.mrb[0].mxu0
    %6972 = vmatprep.mubr.f32.mxu0 0.0
    %6973 = vmatmul.mubr.f32.gmra.mrb[0].mxu0 %v6877
    %v6974 = vpop.f32.mrb[0].mxu0
    %v6975 = vadd.f32 0.0, %v6974
    %v6976 = vpop.f32.mrb[0].mxu0
    %6977 = vmatprep.mubr.f32.mxu0 0.0
    %6978 = vmatmul.mubr.f32.gmra.mrb[0].mxu0 %v6880
    %v6979 = vpop.f32.mrb[0].mxu0
    %v6980 = vadd.f32 0.0, %v6979
    %v6981 = vpop.f32.mrb[0].mxu0
    %6982 = vmatprep.mubr.f32.mxu0 0.0
    %6983 = vmatmul.mubr.f32.gmra.mrb[0].mxu0 %v6883
    %v6984 = vpop.f32.mrb[0].mxu0
    %v6985 = vadd.f32 0.0, %v6984
    %v6986 = vpop.f32.mrb[0].mxu0
    %6987 = vmatprep.mubr.f32.mxu0 0.0
    %6988 = vmatmul.mubr.f32.gmra.mrb[0].mxu0 %v6886
    %v6989 = vpop.f32.mrb[0].mxu0
    %v6990 = vadd.f32 0.0, %v6989
    %v6991 = vpop.f32.mrb[0].mxu0
    %6992 = vdwg.mxu0
    %6993 = vrot.lane.b32.xlu0 %v5747, 104
    %v6994 = vpop.permute.xlu0 %6993
    %6995 = vrot.lane.b32.xlu0 %v5748, 104
    %v6996 = vpop.permute.xlu0 %6995
    %6997 = vrot.lane.b32.xlu0 %v5749, 104
    %v6998 = vpop.permute.xlu0 %6997
    %6999 = vrot.lane.b32.xlu0 %v5750, 104
    %v7000 = vpop.permute.xlu0 %6999
    %7001 = vrot.lane.b32.xlu0 %v5751, 104
    %v7002 = vpop.permute.xlu0 %7001
    %7003 = vrot.lane.b32.xlu0 %v5752, 104
    %v7004 = vpop.permute.xlu0 %7003
    %7005 = vrot.lane.b32.xlu0 %v5753, 104
    %v7006 = vpop.permute.xlu0 %7005
    %7007 = vrot.lane.b32.xlu0 %v5754, 104
    %v7008 = vpop.permute.xlu0 %7007
    %7009 = vrot.lane.b32.xlu0 %v5669, 72
    %v7010 = vpop.permute.xlu0 %7009
    %7011 = vrot.lane.b32.xlu0 %v5674, 72
    %v7012 = vpop.permute.xlu0 %7011
    %7013 = vrot.lane.b32.xlu0 %v5679, 72
    %v7014 = vpop.permute.xlu0 %7013
    %7015 = vrot.lane.b32.xlu0 %v5684, 72
    %v7016 = vpop.permute.xlu0 %7015
    %7017 = vrot.lane.b32.xlu0 %v5689, 72
    %v7018 = vpop.permute.xlu0 %7017
    %7019 = vrot.lane.b32.xlu0 %v5694, 72
    %v7020 = vpop.permute.xlu0 %7019
    %7021 = vrot.lane.b32.xlu0 %v5699, 72
    %v7022 = vpop.permute.xlu0 %7021
    %7023 = vrot.lane.b32.xlu0 %v5704, 72
    %v7024 = vpop.permute.xlu0 %7023
    %v7025 = vsel %vm51, %v6994, 0
    %v7027 = vsel %vm51, %v6996, 0
    %v7029 = vsel %vm51, %v6998, 0
    %v7031 = vsel %vm51, %v7000, 0
    %v7033 = vsel %vm51, %v7002, 0
    %v7035 = vsel %vm51, %v7004, 0
    %v7037 = vsel %vm51, %v7006, 0
    %v7039 = vsel %vm51, %v7008, 0
    %v7041 = vsel %vm51, %v7010, 0
    %v7043 = vsel %vm51, %v7012, 0
    %v7045 = vsel %vm51, %v7014, 0
    %v7047 = vsel %vm51, %v7016, 0
    %v7049 = vsel %vm51, %v7018, 0
    %v7051 = vsel %vm51, %v7020, 0
    %v7053 = vsel %vm51, %v7022, 0
    %v7055 = vsel %vm51, %v7024, 0
    %7057 = vmatprep.subr.mxu0 0.0
    %7058 = vmatpush1.xpose.msra.mxu0 %v7041
    %7059 = vmatprep.subr.mxu0 0.0
    %7060 = vmatpush1.xpose.msra.mxu0 %v7043
    %7061 = vmatprep.subr.mxu0 0.0
    %7062 = vmatpush1.xpose.msra.mxu0 %v7045
    %7063 = vmatprep.subr.mxu0 0.0
    %7064 = vmatpush1.xpose.msra.mxu0 %v7047
    %7065 = vmatprep.subr.mxu0 0.0
    %7066 = vmatpush1.xpose.msra.mxu0 %v7049
    %7067 = vmatprep.subr.mxu0 0.0
    %7068 = vmatpush1.xpose.msra.mxu0 %v7051
    %7069 = vmatprep.subr.mxu0 0.0
    %7070 = vmatpush1.xpose.msra.mxu0 %v7053
    %7071 = vmatprep.subr.mxu0 0.0
    %7072 = vmatpush1.xpose.msra.mxu0 %v7055
    %7073 = vmatprep.subr.mxu0 0.0
    %7074 = vmatpush1.xpose.msra.mxu0 0.0
    %7075 = vmatprep.subr.mxu0 0.0
    %7076 = vmatpush1.xpose.msra.mxu0 0.0
    %7077 = vmatprep.subr.mxu0 0.0
    %7078 = vmatpush1.xpose.msra.mxu0 0.0
    %7079 = vmatprep.subr.mxu0 0.0
    %7080 = vmatpush1.xpose.msra.mxu0 0.0
    %7081 = vmatprep.subr.mxu0 0.0
    %7082 = vmatpush1.xpose.msra.mxu0 0.0
    %7083 = vmatprep.subr.mxu0 0.0
    %7084 = vmatpush1.xpose.msra.mxu0 0.0
    %7085 = vmatprep.subr.mxu0 0.0
    %7086 = vmatpush1.xpose.msra.mxu0 0.0
    %7087 = vmatprep.subr.mxu0 0.0
    %7088 = vmatpush1.xpose.msra.mxu0 0.0
    %7089 = vmatprep.subr.mxu0 0.0
    %7090 = vmatpush1.xpose.msra.mxu0 0.0
    %7091 = vmatprep.subr.mxu0 0.0
    %7092 = vmatpush1.xpose.msra.mxu0 0.0
    %7093 = vmatprep.subr.mxu0 0.0
    %7094 = vmatpush1.xpose.msra.mxu0 0.0
    %7095 = vmatprep.subr.mxu0 0.0
    %7096 = vmatpush1.xpose.msra.mxu0 0.0
    %7097 = vmatprep.subr.mxu0 0.0
    %7098 = vmatpush1.xpose.msra.mxu0 0.0
    %7099 = vmatprep.subr.mxu0 0.0
    %7100 = vmatpush1.xpose.msra.mxu0 0.0
    %7101 = vmatprep.subr.mxu0 0.0
    %7102 = vmatpush1.xpose.msra.mxu0 0.0
    %7103 = vmatprep.subr.mxu0 0.0
    %7104 = vmatpush1.xpose.msra.mxu0 0.0
    %7105 = vmatprep.subr.mxu0 0.0
    %7106 = vmatpush1.xpose.msra.mxu0 0.0
    %7107 = vmatprep.subr.mxu0 0.0
    %7108 = vmatpush1.xpose.msra.mxu0 0.0
    %7109 = vmatprep.subr.mxu0 0.0
    %7110 = vmatpush1.xpose.msra.mxu0 0.0
    %7111 = vmatprep.subr.mxu0 0.0
    %7112 = vmatpush1.xpose.msra.mxu0 0.0
    %7113 = vmatprep.subr.mxu0 0.0
    %7114 = vmatpush1.xpose.msra.mxu0 0.0
    %7115 = vmatprep.subr.mxu0 0.0
    %7116 = vmatpush1.xpose.msra.mxu0 0.0
    %7117 = vmatprep.subr.mxu0 0.0
    %7118 = vmatpush1.xpose.msra.mxu0 0.0
    %7119 = vmatprep.subr.mxu0 0.0
    %7120 = vmatpush1.xpose.msra.mxu0 0.0
    %7121 = vmatprep.mubr.f32.mxu0 0.0
    %7122 = vmatmul.mubr.f32.gmra.mrb[0].mxu0 %v7025
    %v7123 = vpop.f32.mrb[0].mxu0
    %v7124 = vadd.f32 0.0, %v7123
    %v7125 = vpop.f32.mrb[0].mxu0
    %7126 = vmatprep.mubr.f32.mxu0 0.0
    %7127 = vmatmul.mubr.f32.gmra.mrb[0].mxu0 %v7027
    %v7128 = vpop.f32.mrb[0].mxu0
    %v7129 = vadd.f32 0.0, %v7128
    %v7130 = vpop.f32.mrb[0].mxu0
    %7131 = vmatprep.mubr.f32.mxu0 0.0
    %7132 = vmatmul.mubr.f32.gmra.mrb[0].mxu0 %v7029
    %v7133 = vpop.f32.mrb[0].mxu0
    %v7134 = vadd.f32 0.0, %v7133
    %v7135 = vpop.f32.mrb[0].mxu0
    %7136 = vmatprep.mubr.f32.mxu0 0.0
    %7137 = vmatmul.mubr.f32.gmra.mrb[0].mxu0 %v7031
    %v7138 = vpop.f32.mrb[0].mxu0
    %v7139 = vadd.f32 0.0, %v7138
    %v7140 = vpop.f32.mrb[0].mxu0
    %7141 = vmatprep.mubr.f32.mxu0 0.0
    %7142 = vmatmul.mubr.f32.gmra.mrb[0].mxu0 %v7033
    %v7143 = vpop.f32.mrb[0].mxu0
    %v7144 = vadd.f32 0.0, %v7143
    %v7145 = vpop.f32.mrb[0].mxu0
    %7146 = vmatprep.mubr.f32.mxu0 0.0
    %7147 = vmatmul.mubr.f32.gmra.mrb[0].mxu0 %v7035
    %v7148 = vpop.f32.mrb[0].mxu0
    %v7149 = vadd.f32 0.0, %v7148
    %v7150 = vpop.f32.mrb[0].mxu0
    %7151 = vmatprep.mubr.f32.mxu0 0.0
    %7152 = vmatmul.mubr.f32.gmra.mrb[0].mxu0 %v7037
    %v7153 = vpop.f32.mrb[0].mxu0
    %v7154 = vadd.f32 0.0, %v7153
    %v7155 = vpop.f32.mrb[0].mxu0
    %7156 = vmatprep.mubr.f32.mxu0 0.0
    %7157 = vmatmul.mubr.f32.gmra.mrb[0].mxu0 %v7039
    %v7158 = vpop.f32.mrb[0].mxu0
    %v7159 = vadd.f32 0.0, %v7158
    %v7160 = vpop.f32.mrb[0].mxu0
    %7161 = vdwg.mxu0
    %v7162 = vsel %vm934, %v7124, -inf
    %7163 = vmax.xlane.f32.xlu0 %v7162
    %v7164 = vpop.xlane.xlu0 %7163
    %v7165 = vsel %vm934, %v7129, -inf
    %7166 = vmax.xlane.f32.xlu0 %v7165
    %v7167 = vpop.xlane.xlu0 %7166
    %v7168 = vsel %vm934, %v7134, -inf
    %7169 = vmax.xlane.f32.xlu0 %v7168
    %v7170 = vpop.xlane.xlu0 %7169
    %v7171 = vsel %vm934, %v7139, -inf
    %7172 = vmax.xlane.f32.xlu0 %v7171
    %v7173 = vpop.xlane.xlu0 %7172
    %v7174 = vsel %vm934, %v7144, -inf
    %7175 = vmax.xlane.f32.xlu0 %v7174
    %v7176 = vpop.xlane.xlu0 %7175
    %v7177 = vsel %vm934, %v7149, -inf
    %7178 = vmax.xlane.f32.xlu0 %v7177
    %v7179 = vpop.xlane.xlu0 %7178
    %v7180 = vsel %vm934, %v7154, -inf
    %7181 = vmax.xlane.f32.xlu0 %v7180
    %v7182 = vpop.xlane.xlu0 %7181
    %v7183 = vsel %vm934, %v7159, -inf
    %7184 = vmax.xlane.f32.xlu0 %v7183
    %v7185 = vpop.xlane.xlu0 %7184
    %v7186 = vsub.f32 %v7124, %v7164
    %v7187 = vsub.f32 %v7129, %v7167
    %v7188 = vsub.f32 %v7134, %v7170
    %v7189 = vsub.f32 %v7139, %v7173
    %v7190 = vsub.f32 %v7144, %v7176
    %v7191 = vsub.f32 %v7149, %v7179
    %v7192 = vsub.f32 %v7154, %v7182
    %v7193 = vsub.f32 %v7159, %v7185
    %v7194 = vmul.f32 %v7186, 1.442695
    %v7195 = vpow.pop %v7194
    %v7196 = vmul.f32 %v7187, 1.442695
    %v7197 = vpow.pop %v7196
    %v7198 = vmul.f32 %v7188, 1.442695
    %v7199 = vpow.pop %v7198
    %v7200 = vmul.f32 %v7189, 1.442695
    %v7201 = vpow.pop %v7200
    %v7202 = vmul.f32 %v7190, 1.442695
    %v7203 = vpow.pop %v7202
    %v7204 = vmul.f32 %v7191, 1.442695
    %v7205 = vpow.pop %v7204
    %v7206 = vmul.f32 %v7192, 1.442695
    %v7207 = vpow.pop %v7206
    %v7208 = vmul.f32 %v7193, 1.442695
    %v7209 = vpow.pop %v7208
    %v7210 = vsel %vm934, %v7195, 0.0
    %7211 = vadd.xlane.f32.xlu0 %v7210
    %v7212 = vpop.xlane.xlu0 %7211
    %v7213 = vsel %vm934, %v7197, 0.0
    %7214 = vadd.xlane.f32.xlu0 %v7213
    %v7215 = vpop.xlane.xlu0 %7214
    %v7216 = vsel %vm934, %v7199, 0.0
    %7217 = vadd.xlane.f32.xlu0 %v7216
    %v7218 = vpop.xlane.xlu0 %7217
    %v7219 = vsel %vm934, %v7201, 0.0
    %7220 = vadd.xlane.f32.xlu0 %v7219
    %v7221 = vpop.xlane.xlu0 %7220
    %v7222 = vsel %vm934, %v7203, 0.0
    %7223 = vadd.xlane.f32.xlu0 %v7222
    %v7224 = vpop.xlane.xlu0 %7223
    %v7225 = vsel %vm934, %v7205, 0.0
    %7226 = vadd.xlane.f32.xlu0 %v7225
    %v7227 = vpop.xlane.xlu0 %7226
    %v7228 = vsel %vm934, %v7207, 0.0
    %7229 = vadd.xlane.f32.xlu0 %v7228
    %v7230 = vpop.xlane.xlu0 %7229
    %v7231 = vsel %vm934, %v7209, 0.0
    %7232 = vadd.xlane.f32.xlu0 %v7231
    %v7233 = vpop.xlane.xlu0 %7232
    %v7234 = vrcp.pop %v7212
    %v7235 = vrcp.pop %v7215
    %v7236 = vrcp.pop %v7218
    %v7237 = vrcp.pop %v7221
    %v7238 = vrcp.pop %v7224
    %v7239 = vrcp.pop %v7227
    %v7240 = vrcp.pop %v7230
    %v7241 = vrcp.pop %v7233
    %v7242 = vmul.f32 %v7195, %v7234
    %v7243 = vmul.f32 %v7197, %v7235
    %v7244 = vmul.f32 %v7199, %v7236
    %v7245 = vmul.f32 %v7201, %v7237
    %v7246 = vmul.f32 %v7203, %v7238
    %v7247 = vmul.f32 %v7205, %v7239
    %v7248 = vmul.f32 %v7207, %v7240
    %v7249 = vmul.f32 %v7209, %v7241
    %7250 = vrot.lane.b32.xlu0 %v5669, 40
    %v7251 = vpop.permute.xlu0 %7250
    %7252 = vrot.lane.b32.xlu0 %v5674, 40
    %v7253 = vpop.permute.xlu0 %7252
    %7254 = vrot.lane.b32.xlu0 %v5679, 40
    %v7255 = vpop.permute.xlu0 %7254
    %7256 = vrot.lane.b32.xlu0 %v5684, 40
    %v7257 = vpop.permute.xlu0 %7256
    %7258 = vrot.lane.b32.xlu0 %v5689, 40
    %v7259 = vpop.permute.xlu0 %7258
    %7260 = vrot.lane.b32.xlu0 %v5694, 40
    %v7261 = vpop.permute.xlu0 %7260
    %7262 = vrot.lane.b32.xlu0 %v5699, 40
    %v7263 = vpop.permute.xlu0 %7262
    %7264 = vrot.lane.b32.xlu0 %v5704, 40
    %v7265 = vpop.permute.xlu0 %7264
    %v7275 = vsel %vm934, %v7242, 0
    %v7278 = vsel %vm934, %v7243, 0
    %v7281 = vsel %vm934, %v7244, 0
    %v7284 = vsel %vm934, %v7245, 0
    %v7287 = vsel %vm934, %v7246, 0
    %v7290 = vsel %vm934, %v7247, 0
    %v7293 = vsel %vm934, %v7248, 0
    %v7296 = vsel %vm934, %v7249, 0
    %7298 = vmatprep.subr.mxu0 0.0
    %7299 = vmatpush1.msra.mxu0 %v7251
    %7300 = vmatprep.subr.mxu0 0.0
    %7301 = vmatpush1.msra.mxu0 %v7253
    %7302 = vmatprep.subr.mxu0 0.0
    %7303 = vmatpush1.msra.mxu0 %v7255
    %7304 = vmatprep.subr.mxu0 0.0
    %7305 = vmatpush1.msra.mxu0 %v7257
    %7306 = vmatprep.subr.mxu0 0.0
    %7307 = vmatpush1.msra.mxu0 %v7259
    %7308 = vmatprep.subr.mxu0 0.0
    %7309 = vmatpush1.msra.mxu0 %v7261
    %7310 = vmatprep.subr.mxu0 0.0
    %7311 = vmatpush1.msra.mxu0 %v7263
    %7312 = vmatprep.subr.mxu0 0.0
    %7313 = vmatpush1.msra.mxu0 %v7265
    %7314 = vmatprep.subr.mxu0 0.0
    %7315 = vmatpush1.msra.mxu0 0.0
    %7316 = vmatprep.subr.mxu0 0.0
    %7317 = vmatpush1.msra.mxu0 0.0
    %7318 = vmatprep.subr.mxu0 0.0
    %7319 = vmatpush1.msra.mxu0 0.0
    %7320 = vmatprep.subr.mxu0 0.0
    %7321 = vmatpush1.msra.mxu0 0.0
    %7322 = vmatprep.subr.mxu0 0.0
    %7323 = vmatpush1.msra.mxu0 0.0
    %7324 = vmatprep.subr.mxu0 0.0
    %7325 = vmatpush1.msra.mxu0 0.0
    %7326 = vmatprep.subr.mxu0 0.0
    %7327 = vmatpush1.msra.mxu0 0.0
    %7328 = vmatprep.subr.mxu0 0.0
    %7329 = vmatpush1.msra.mxu0 0.0
    %7330 = vmatprep.subr.mxu0 0.0
    %7331 = vmatpush1.msra.mxu0 0.0
    %7332 = vmatprep.subr.mxu0 0.0
    %7333 = vmatpush1.msra.mxu0 0.0
    %7334 = vmatprep.subr.mxu0 0.0
    %7335 = vmatpush1.msra.mxu0 0.0
    %7336 = vmatprep.subr.mxu0 0.0
    %7337 = vmatpush1.msra.mxu0 0.0
    %7338 = vmatprep.subr.mxu0 0.0
    %7339 = vmatpush1.msra.mxu0 0.0
    %7340 = vmatprep.subr.mxu0 0.0
    %7341 = vmatpush1.msra.mxu0 0.0
    %7342 = vmatprep.subr.mxu0 0.0
    %7343 = vmatpush1.msra.mxu0 0.0
    %7344 = vmatprep.subr.mxu0 0.0
    %7345 = vmatpush1.msra.mxu0 0.0
    %7346 = vmatprep.subr.mxu0 0.0
    %7347 = vmatpush1.msra.mxu0 0.0
    %7348 = vmatprep.subr.mxu0 0.0
    %7349 = vmatpush1.msra.mxu0 0.0
    %7350 = vmatprep.subr.mxu0 0.0
    %7351 = vmatpush1.msra.mxu0 0.0
    %7352 = vmatprep.subr.mxu0 0.0
    %7353 = vmatpush1.msra.mxu0 0.0
    %7354 = vmatprep.subr.mxu0 0.0
    %7355 = vmatpush1.msra.mxu0 0.0
    %7356 = vmatprep.subr.mxu0 0.0
    %7357 = vmatpush1.msra.mxu0 0.0
    %7358 = vmatprep.subr.mxu0 0.0
    %7359 = vmatpush1.msra.mxu0 0.0
    %7360 = vmatprep.subr.mxu0 0.0
    %7361 = vmatpush1.msra.mxu0 0.0
    %7362 = vmatprep.mubr.f32.mxu0 0.0
    %7363 = vmatmul.mubr.f32.gmra.mrb[0].mxu0 %v7275
    %v7364 = vpop.f32.mrb[0].mxu0
    %v7365 = vadd.f32 0.0, %v7364
    %v7366 = vpop.f32.mrb[0].mxu0
    %7367 = vmatprep.mubr.f32.mxu0 0.0
    %7368 = vmatmul.mubr.f32.gmra.mrb[0].mxu0 %v7278
    %v7369 = vpop.f32.mrb[0].mxu0
    %v7370 = vadd.f32 0.0, %v7369
    %v7371 = vpop.f32.mrb[0].mxu0
    %7372 = vmatprep.mubr.f32.mxu0 0.0
    %7373 = vmatmul.mubr.f32.gmra.mrb[0].mxu0 %v7281
    %v7374 = vpop.f32.mrb[0].mxu0
    %v7375 = vadd.f32 0.0, %v7374
    %v7376 = vpop.f32.mrb[0].mxu0
    %7377 = vmatprep.mubr.f32.mxu0 0.0
    %7378 = vmatmul.mubr.f32.gmra.mrb[0].mxu0 %v7284
    %v7379 = vpop.f32.mrb[0].mxu0
    %v7380 = vadd.f32 0.0, %v7379
    %v7381 = vpop.f32.mrb[0].mxu0
    %7382 = vmatprep.mubr.f32.mxu0 0.0
    %7383 = vmatmul.mubr.f32.gmra.mrb[0].mxu0 %v7287
    %v7384 = vpop.f32.mrb[0].mxu0
    %v7385 = vadd.f32 0.0, %v7384
    %v7386 = vpop.f32.mrb[0].mxu0
    %7387 = vmatprep.mubr.f32.mxu0 0.0
    %7388 = vmatmul.mubr.f32.gmra.mrb[0].mxu0 %v7290
    %v7389 = vpop.f32.mrb[0].mxu0
    %v7390 = vadd.f32 0.0, %v7389
    %v7391 = vpop.f32.mrb[0].mxu0
    %7392 = vmatprep.mubr.f32.mxu0 0.0
    %7393 = vmatmul.mubr.f32.gmra.mrb[0].mxu0 %v7293
    %v7394 = vpop.f32.mrb[0].mxu0
    %v7395 = vadd.f32 0.0, %v7394
    %v7396 = vpop.f32.mrb[0].mxu0
    %7397 = vmatprep.mubr.f32.mxu0 0.0
    %7398 = vmatmul.mubr.f32.gmra.mrb[0].mxu0 %v7296
    %v7399 = vpop.f32.mrb[0].mxu0
    %v7400 = vadd.f32 0.0, %v7399
    %v7401 = vpop.f32.mrb[0].mxu0
    %7402 = vdwg.mxu0
    %7411 = vrot.lane.b32.xlu0 %v6545, 8
    %v7412 = vpop.permute.xlu0 %7411
    %7413 = vrot.lane.b32.xlu0 %v6550, 8
    %v7414 = vpop.permute.xlu0 %7413
    %7415 = vrot.lane.b32.xlu0 %v6555, 8
    %v7416 = vpop.permute.xlu0 %7415
    %7417 = vrot.lane.b32.xlu0 %v6560, 8
    %v7418 = vpop.permute.xlu0 %7417
    %7419 = vrot.lane.b32.xlu0 %v6565, 8
    %v7420 = vpop.permute.xlu0 %7419
    %7421 = vrot.lane.b32.xlu0 %v6570, 8
    %v7422 = vpop.permute.xlu0 %7421
    %7423 = vrot.lane.b32.xlu0 %v6575, 8
    %v7424 = vpop.permute.xlu0 %7423
    %7425 = vrot.lane.b32.xlu0 %v6580, 8
    %v7426 = vpop.permute.xlu0 %7425
    %7443 = vrot.lane.b32.xlu0 %v6955, 16
    %v7444 = vpop.permute.xlu0 %7443
    %7445 = vrot.lane.b32.xlu0 %v6960, 16
    %v7446 = vpop.permute.xlu0 %7445
    %7447 = vrot.lane.b32.xlu0 %v6965, 16
    %v7448 = vpop.permute.xlu0 %7447
    %7449 = vrot.lane.b32.xlu0 %v6970, 16
    %v7450 = vpop.permute.xlu0 %7449
    %7451 = vrot.lane.b32.xlu0 %v6975, 16
    %v7452 = vpop.permute.xlu0 %7451
    %7453 = vrot.lane.b32.xlu0 %v6980, 16
    %v7454 = vpop.permute.xlu0 %7453
    %7455 = vrot.lane.b32.xlu0 %v6985, 16
    %v7456 = vpop.permute.xlu0 %7455
    %7457 = vrot.lane.b32.xlu0 %v6990, 16
    %v7458 = vpop.permute.xlu0 %7457
    %7475 = vrot.lane.b32.xlu0 %v7365, 24
    %v7476 = vpop.permute.xlu0 %7475
    %7477 = vrot.lane.b32.xlu0 %v7370, 24
    %v7478 = vpop.permute.xlu0 %7477
    %7479 = vrot.lane.b32.xlu0 %v7375, 24
    %v7480 = vpop.permute.xlu0 %7479
    %7481 = vrot.lane.b32.xlu0 %v7380, 24
    %v7482 = vpop.permute.xlu0 %7481
    %7483 = vrot.lane.b32.xlu0 %v7385, 24
    %v7484 = vpop.permute.xlu0 %7483
    %7485 = vrot.lane.b32.xlu0 %v7390, 24
    %v7486 = vpop.permute.xlu0 %7485
    %7487 = vrot.lane.b32.xlu0 %v7395, 24
    %v7488 = vpop.permute.xlu0 %7487
    %7489 = vrot.lane.b32.xlu0 %v7400, 24
    %v7490 = vpop.permute.xlu0 %7489
    %v7499 = vsel %vm51, %v6135, %v7412
    %v7500 = vsel %vm51, %v6140, %v7414
    %v7501 = vsel %vm51, %v6145, %v7416
    %v7502 = vsel %vm51, %v6150, %v7418
    %v7503 = vsel %vm51, %v6155, %v7420
    %v7504 = vsel %vm51, %v6160, %v7422
    %v7505 = vsel %vm51, %v6165, %v7424
    %v7506 = vsel %vm51, %v6170, %v7426
    %v7507 = vsel %vm2510, %v7499, %v7444
    %v7508 = vsel %vm2510, %v7500, %v7446
    %v7509 = vsel %vm2510, %v7501, %v7448
    %v7510 = vsel %vm2510, %v7502, %v7450
    %v7511 = vsel %vm2510, %v7503, %v7452
    %v7512 = vsel %vm2510, %v7504, %v7454
    %v7513 = vsel %vm2510, %v7505, %v7456
    %v7514 = vsel %vm2510, %v7506, %v7458
    %v7515 = vsel %vm2519, %v7507, %v7476
    %v7516 = vsel %vm2519, %v7508, %v7478
    %v7517 = vsel %vm2519, %v7509, %v7480
    %v7518 = vsel %vm2519, %v7510, %v7482
    %v7519 = vsel %vm2519, %v7511, %v7484
    %v7520 = vsel %vm2519, %v7512, %v7486
    %v7521 = vsel %vm2519, %v7513, %v7488
    %v7522 = vsel %vm2519, %v7514, %v7490
    %7531 = vrot.lane.b32.xlu0 %v5709, 96
    %v7532 = vpop.permute.xlu0 %7531
    %7533 = vrot.lane.b32.xlu0 %v5714, 96
    %v7534 = vpop.permute.xlu0 %7533
    %7535 = vrot.lane.b32.xlu0 %v5719, 96
    %v7536 = vpop.permute.xlu0 %7535
    %7537 = vrot.lane.b32.xlu0 %v5724, 96
    %v7538 = vpop.permute.xlu0 %7537
    %7539 = vrot.lane.b32.xlu0 %v5729, 96
    %v7540 = vpop.permute.xlu0 %7539
    %7541 = vrot.lane.b32.xlu0 %v5734, 96
    %v7542 = vpop.permute.xlu0 %7541
    %7543 = vrot.lane.b32.xlu0 %v5739, 96
    %v7544 = vpop.permute.xlu0 %7543
    %7545 = vrot.lane.b32.xlu0 %v5744, 96
    %v7546 = vpop.permute.xlu0 %7545
    %v7548 = vsel %vm51, %v5755, 0
    %v7551 = vsel %vm51, %v5756, 0
    %v7554 = vsel %vm51, %v5757, 0
    %v7557 = vsel %vm51, %v5758, 0
    %v7560 = vsel %vm51, %v5759, 0
    %v7563 = vsel %vm51, %v5760, 0
    %v7566 = vsel %vm51, %v5761, 0
    %v7569 = vsel %vm51, %v5762, 0
    %v7571 = vsel %vm51, %v7532, 0
    %v7573 = vsel %vm51, %v7534, 0
    %v7575 = vsel %vm51, %v7536, 0
    %v7577 = vsel %vm51, %v7538, 0
    %v7579 = vsel %vm51, %v7540, 0
    %v7581 = vsel %vm51, %v7542, 0
    %v7583 = vsel %vm51, %v7544, 0
    %v7585 = vsel %vm51, %v7546, 0
    %7587 = vmatprep.subr.mxu0 0.0
    %7588 = vmatpush1.xpose.msra.mxu0 %v7571
    %7589 = vmatprep.subr.mxu0 0.0
    %7590 = vmatpush1.xpose.msra.mxu0 %v7573
    %7591 = vmatprep.subr.mxu0 0.0
    %7592 = vmatpush1.xpose.msra.mxu0 %v7575
    %7593 = vmatprep.subr.mxu0 0.0
    %7594 = vmatpush1.xpose.msra.mxu0 %v7577
    %7595 = vmatprep.subr.mxu0 0.0
    %7596 = vmatpush1.xpose.msra.mxu0 %v7579
    %7597 = vmatprep.subr.mxu0 0.0
    %7598 = vmatpush1.xpose.msra.mxu0 %v7581
    %7599 = vmatprep.subr.mxu0 0.0
    %7600 = vmatpush1.xpose.msra.mxu0 %v7583
    %7601 = vmatprep.subr.mxu0 0.0
    %7602 = vmatpush1.xpose.msra.mxu0 %v7585
    %7603 = vmatprep.subr.mxu0 0.0
    %7604 = vmatpush1.xpose.msra.mxu0 0.0
    %7605 = vmatprep.subr.mxu0 0.0
    %7606 = vmatpush1.xpose.msra.mxu0 0.0
    %7607 = vmatprep.subr.mxu0 0.0
    %7608 = vmatpush1.xpose.msra.mxu0 0.0
    %7609 = vmatprep.subr.mxu0 0.0
    %7610 = vmatpush1.xpose.msra.mxu0 0.0
    %7611 = vmatprep.subr.mxu0 0.0
    %7612 = vmatpush1.xpose.msra.mxu0 0.0
    %7613 = vmatprep.subr.mxu0 0.0
    %7614 = vmatpush1.xpose.msra.mxu0 0.0
    %7615 = vmatprep.subr.mxu0 0.0
    %7616 = vmatpush1.xpose.msra.mxu0 0.0
    %7617 = vmatprep.subr.mxu0 0.0
    %7618 = vmatpush1.xpose.msra.mxu0 0.0
    %7619 = vmatprep.subr.mxu0 0.0
    %7620 = vmatpush1.xpose.msra.mxu0 0.0
    %7621 = vmatprep.subr.mxu0 0.0
    %7622 = vmatpush1.xpose.msra.mxu0 0.0
    %7623 = vmatprep.subr.mxu0 0.0
    %7624 = vmatpush1.xpose.msra.mxu0 0.0
    %7625 = vmatprep.subr.mxu0 0.0
    %7626 = vmatpush1.xpose.msra.mxu0 0.0
    %7627 = vmatprep.subr.mxu0 0.0
    %7628 = vmatpush1.xpose.msra.mxu0 0.0
    %7629 = vmatprep.subr.mxu0 0.0
    %7630 = vmatpush1.xpose.msra.mxu0 0.0
    %7631 = vmatprep.subr.mxu0 0.0
    %7632 = vmatpush1.xpose.msra.mxu0 0.0
    %7633 = vmatprep.subr.mxu0 0.0
    %7634 = vmatpush1.xpose.msra.mxu0 0.0
    %7635 = vmatprep.subr.mxu0 0.0
    %7636 = vmatpush1.xpose.msra.mxu0 0.0
    %7637 = vmatprep.subr.mxu0 0.0
    %7638 = vmatpush1.xpose.msra.mxu0 0.0
    %7639 = vmatprep.subr.mxu0 0.0
    %7640 = vmatpush1.xpose.msra.mxu0 0.0
    %7641 = vmatprep.subr.mxu0 0.0
    %7642 = vmatpush1.xpose.msra.mxu0 0.0
    %7643 = vmatprep.subr.mxu0 0.0
    %7644 = vmatpush1.xpose.msra.mxu0 0.0
    %7645 = vmatprep.subr.mxu0 0.0
    %7646 = vmatpush1.xpose.msra.mxu0 0.0
    %7647 = vmatprep.subr.mxu0 0.0
    %7648 = vmatpush1.xpose.msra.mxu0 0.0
    %7649 = vmatprep.subr.mxu0 0.0
    %7650 = vmatpush1.xpose.msra.mxu0 0.0
    %7651 = vmatprep.mubr.f32.mxu0 0.0
    %7652 = vmatmul.mubr.f32.gmra.mrb[0].mxu0 %v7548
    %v7653 = vpop.f32.mrb[0].mxu0
    %v7654 = vadd.f32 0.0, %v7653
    %v7655 = vpop.f32.mrb[0].mxu0
    %7656 = vmatprep.mubr.f32.mxu0 0.0
    %7657 = vmatmul.mubr.f32.gmra.mrb[0].mxu0 %v7551
    %v7658 = vpop.f32.mrb[0].mxu0
    %v7659 = vadd.f32 0.0, %v7658
    %v7660 = vpop.f32.mrb[0].mxu0
    %7661 = vmatprep.mubr.f32.mxu0 0.0
    %7662 = vmatmul.mubr.f32.gmra.mrb[0].mxu0 %v7554
    %v7663 = vpop.f32.mrb[0].mxu0
    %v7664 = vadd.f32 0.0, %v7663
    %v7665 = vpop.f32.mrb[0].mxu0
    %7666 = vmatprep.mubr.f32.mxu0 0.0
    %7667 = vmatmul.mubr.f32.gmra.mrb[0].mxu0 %v7557
    %v7668 = vpop.f32.mrb[0].mxu0
    %v7669 = vadd.f32 0.0, %v7668
    %v7670 = vpop.f32.mrb[0].mxu0
    %7671 = vmatprep.mubr.f32.mxu0 0.0
    %7672 = vmatmul.mubr.f32.gmra.mrb[0].mxu0 %v7560
    %v7673 = vpop.f32.mrb[0].mxu0
    %v7674 = vadd.f32 0.0, %v7673
    %v7675 = vpop.f32.mrb[0].mxu0
    %7676 = vmatprep.mubr.f32.mxu0 0.0
    %7677 = vmatmul.mubr.f32.gmra.mrb[0].mxu0 %v7563
    %v7678 = vpop.f32.mrb[0].mxu0
    %v7679 = vadd.f32 0.0, %v7678
    %v7680 = vpop.f32.mrb[0].mxu0
    %7681 = vmatprep.mubr.f32.mxu0 0.0
    %7682 = vmatmul.mubr.f32.gmra.mrb[0].mxu0 %v7566
    %v7683 = vpop.f32.mrb[0].mxu0
    %v7684 = vadd.f32 0.0, %v7683
    %v7685 = vpop.f32.mrb[0].mxu0
    %7686 = vmatprep.mubr.f32.mxu0 0.0
    %7687 = vmatmul.mubr.f32.gmra.mrb[0].mxu0 %v7569
    %v7688 = vpop.f32.mrb[0].mxu0
    %v7689 = vadd.f32 0.0, %v7688
    %v7690 = vpop.f32.mrb[0].mxu0
    %7691 = vdwg.mxu0
    %v7692 = vsel %vm934, %v7654, -inf
    %7693 = vmax.xlane.f32.xlu0 %v7692
    %v7694 = vpop.xlane.xlu0 %7693
    %v7695 = vsel %vm934, %v7659, -inf
    %7696 = vmax.xlane.f32.xlu0 %v7695
    %v7697 = vpop.xlane.xlu0 %7696
    %v7698 = vsel %vm934, %v7664, -inf
    %7699 = vmax.xlane.f32.xlu0 %v7698
    %v7700 = vpop.xlane.xlu0 %7699
    %v7701 = vsel %vm934, %v7669, -inf
    %7702 = vmax.xlane.f32.xlu0 %v7701
    %v7703 = vpop.xlane.xlu0 %7702
    %v7704 = vsel %vm934, %v7674, -inf
    %7705 = vmax.xlane.f32.xlu0 %v7704
    %v7706 = vpop.xlane.xlu0 %7705
    %v7707 = vsel %vm934, %v7679, -inf
    %7708 = vmax.xlane.f32.xlu0 %v7707
    %v7709 = vpop.xlane.xlu0 %7708
    %v7710 = vsel %vm934, %v7684, -inf
    %7711 = vmax.xlane.f32.xlu0 %v7710
    %v7712 = vpop.xlane.xlu0 %7711
    %v7713 = vsel %vm934, %v7689, -inf
    %7714 = vmax.xlane.f32.xlu0 %v7713
    %v7715 = vpop.xlane.xlu0 %7714
    %v7716 = vsub.f32 %v7654, %v7694
    %v7717 = vsub.f32 %v7659, %v7697
    %v7718 = vsub.f32 %v7664, %v7700
    %v7719 = vsub.f32 %v7669, %v7703
    %v7720 = vsub.f32 %v7674, %v7706
    %v7721 = vsub.f32 %v7679, %v7709
    %v7722 = vsub.f32 %v7684, %v7712
    %v7723 = vsub.f32 %v7689, %v7715
    %v7724 = vmul.f32 %v7716, 1.442695
    %v7725 = vpow.pop %v7724
    %v7726 = vmul.f32 %v7717, 1.442695
    %v7727 = vpow.pop %v7726
    %v7728 = vmul.f32 %v7718, 1.442695
    %v7729 = vpow.pop %v7728
    %v7730 = vmul.f32 %v7719, 1.442695
    %v7731 = vpow.pop %v7730
    %v7732 = vmul.f32 %v7720, 1.442695
    %v7733 = vpow.pop %v7732
    %v7734 = vmul.f32 %v7721, 1.442695
    %v7735 = vpow.pop %v7734
    %v7736 = vmul.f32 %v7722, 1.442695
    %v7737 = vpow.pop %v7736
    %v7738 = vmul.f32 %v7723, 1.442695
    %v7739 = vpow.pop %v7738
    %v7740 = vsel %vm934, %v7725, 0.0
    %7741 = vadd.xlane.f32.xlu0 %v7740
    %v7742 = vpop.xlane.xlu0 %7741
    %v7743 = vsel %vm934, %v7727, 0.0
    %7744 = vadd.xlane.f32.xlu0 %v7743
    %v7745 = vpop.xlane.xlu0 %7744
    %v7746 = vsel %vm934, %v7729, 0.0
    %7747 = vadd.xlane.f32.xlu0 %v7746
    %v7748 = vpop.xlane.xlu0 %7747
    %v7749 = vsel %vm934, %v7731, 0.0
    %7750 = vadd.xlane.f32.xlu0 %v7749
    %v7751 = vpop.xlane.xlu0 %7750
    %v7752 = vsel %vm934, %v7733, 0.0
    %7753 = vadd.xlane.f32.xlu0 %v7752
    %v7754 = vpop.xlane.xlu0 %7753
    %v7755 = vsel %vm934, %v7735, 0.0
    %7756 = vadd.xlane.f32.xlu0 %v7755
    %v7757 = vpop.xlane.xlu0 %7756
    %v7758 = vsel %vm934, %v7737, 0.0
    %7759 = vadd.xlane.f32.xlu0 %v7758
    %v7760 = vpop.xlane.xlu0 %7759
    %v7761 = vsel %vm934, %v7739, 0.0
    %7762 = vadd.xlane.f32.xlu0 %v7761
    %v7763 = vpop.xlane.xlu0 %7762
    %v7764 = vrcp.pop %v7742
    %v7765 = vrcp.pop %v7745
    %v7766 = vrcp.pop %v7748
    %v7767 = vrcp.pop %v7751
    %v7768 = vrcp.pop %v7754
    %v7769 = vrcp.pop %v7757
    %v7770 = vrcp.pop %v7760
    %v7771 = vrcp.pop %v7763
    %v7772 = vmul.f32 %v7725, %v7764
    %v7773 = vmul.f32 %v7727, %v7765
    %v7774 = vmul.f32 %v7729, %v7766
    %v7775 = vmul.f32 %v7731, %v7767
    %v7776 = vmul.f32 %v7733, %v7768
    %v7777 = vmul.f32 %v7735, %v7769
    %v7778 = vmul.f32 %v7737, %v7770
    %v7779 = vmul.f32 %v7739, %v7771
    %7780 = vrot.lane.b32.xlu0 %v5709, 64
    %v7781 = vpop.permute.xlu0 %7780
    %7782 = vrot.lane.b32.xlu0 %v5714, 64
    %v7783 = vpop.permute.xlu0 %7782
    %7784 = vrot.lane.b32.xlu0 %v5719, 64
    %v7785 = vpop.permute.xlu0 %7784
    %7786 = vrot.lane.b32.xlu0 %v5724, 64
    %v7787 = vpop.permute.xlu0 %7786
    %7788 = vrot.lane.b32.xlu0 %v5729, 64
    %v7789 = vpop.permute.xlu0 %7788
    %7790 = vrot.lane.b32.xlu0 %v5734, 64
    %v7791 = vpop.permute.xlu0 %7790
    %7792 = vrot.lane.b32.xlu0 %v5739, 64
    %v7793 = vpop.permute.xlu0 %7792
    %7794 = vrot.lane.b32.xlu0 %v5744, 64
    %v7795 = vpop.permute.xlu0 %7794
    %v7805 = vsel %vm934, %v7772, 0
    %v7808 = vsel %vm934, %v7773, 0
    %v7811 = vsel %vm934, %v7774, 0
    %v7814 = vsel %vm934, %v7775, 0
    %v7817 = vsel %vm934, %v7776, 0
    %v7820 = vsel %vm934, %v7777, 0
    %v7823 = vsel %vm934, %v7778, 0
    %v7826 = vsel %vm934, %v7779, 0
    %7828 = vmatprep.subr.mxu0 0.0
    %7829 = vmatpush1.msra.mxu0 %v7781
    %7830 = vmatprep.subr.mxu0 0.0
    %7831 = vmatpush1.msra.mxu0 %v7783
    %7832 = vmatprep.subr.mxu0 0.0
    %7833 = vmatpush1.msra.mxu0 %v7785
    %7834 = vmatprep.subr.mxu0 0.0
    %7835 = vmatpush1.msra.mxu0 %v7787
    %7836 = vmatprep.subr.mxu0 0.0
    %7837 = vmatpush1.msra.mxu0 %v7789
    %7838 = vmatprep.subr.mxu0 0.0
    %7839 = vmatpush1.msra.mxu0 %v7791
    %7840 = vmatprep.subr.mxu0 0.0
    %7841 = vmatpush1.msra.mxu0 %v7793
    %7842 = vmatprep.subr.mxu0 0.0
    %7843 = vmatpush1.msra.mxu0 %v7795
    %7844 = vmatprep.subr.mxu0 0.0
    %7845 = vmatpush1.msra.mxu0 0.0
    %7846 = vmatprep.subr.mxu0 0.0
    %7847 = vmatpush1.msra.mxu0 0.0
    %7848 = vmatprep.subr.mxu0 0.0
    %7849 = vmatpush1.msra.mxu0 0.0
    %7850 = vmatprep.subr.mxu0 0.0
    %7851 = vmatpush1.msra.mxu0 0.0
    %7852 = vmatprep.subr.mxu0 0.0
    %7853 = vmatpush1.msra.mxu0 0.0
    %7854 = vmatprep.subr.mxu0 0.0
    %7855 = vmatpush1.msra.mxu0 0.0
    %7856 = vmatprep.subr.mxu0 0.0
    %7857 = vmatpush1.msra.mxu0 0.0
    %7858 = vmatprep.subr.mxu0 0.0
    %7859 = vmatpush1.msra.mxu0 0.0
    %7860 = vmatprep.subr.mxu0 0.0
    %7861 = vmatpush1.msra.mxu0 0.0
    %7862 = vmatprep.subr.mxu0 0.0
    %7863 = vmatpush1.msra.mxu0 0.0
    %7864 = vmatprep.subr.mxu0 0.0
    %7865 = vmatpush1.msra.mxu0 0.0
    %7866 = vmatprep.subr.mxu0 0.0
    %7867 = vmatpush1.msra.mxu0 0.0
    %7868 = vmatprep.subr.mxu0 0.0
    %7869 = vmatpush1.msra.mxu0 0.0
    %7870 = vmatprep.subr.mxu0 0.0
    %7871 = vmatpush1.msra.mxu0 0.0
    %7872 = vmatprep.subr.mxu0 0.0
    %7873 = vmatpush1.msra.mxu0 0.0
    %7874 = vmatprep.subr.mxu0 0.0
    %7875 = vmatpush1.msra.mxu0 0.0
    %7876 = vmatprep.subr.mxu0 0.0
    %7877 = vmatpush1.msra.mxu0 0.0
    %7878 = vmatprep.subr.mxu0 0.0
    %7879 = vmatpush1.msra.mxu0 0.0
    %7880 = vmatprep.subr.mxu0 0.0
    %7881 = vmatpush1.msra.mxu0 0.0
    %7882 = vmatprep.subr.mxu0 0.0
    %7883 = vmatpush1.msra.mxu0 0.0
    %7884 = vmatprep.subr.mxu0 0.0
    %7885 = vmatpush1.msra.mxu0 0.0
    %7886 = vmatprep.subr.mxu0 0.0
    %7887 = vmatpush1.msra.mxu0 0.0
    %7888 = vmatprep.subr.mxu0 0.0
    %7889 = vmatpush1.msra.mxu0 0.0
    %7890 = vmatprep.subr.mxu0 0.0
    %7891 = vmatpush1.msra.mxu0 0.0
    %7892 = vmatprep.mubr.f32.mxu0 0.0
    %7893 = vmatmul.mubr.f32.gmra.mrb[0].mxu0 %v7805
    %v7894 = vpop.f32.mrb[0].mxu0
    %v7895 = vadd.f32 0.0, %v7894
    %v7896 = vpop.f32.mrb[0].mxu0
    %7897 = vmatprep.mubr.f32.mxu0 0.0
    %7898 = vmatmul.mubr.f32.gmra.mrb[0].mxu0 %v7808
    %v7899 = vpop.f32.mrb[0].mxu0
    %v7900 = vadd.f32 0.0, %v7899
    %v7901 = vpop.f32.mrb[0].mxu0
    %7902 = vmatprep.mubr.f32.mxu0 0.0
    %7903 = vmatmul.mubr.f32.gmra.mrb[0].mxu0 %v7811
    %v7904 = vpop.f32.mrb[0].mxu0
    %v7905 = vadd.f32 0.0, %v7904
    %v7906 = vpop.f32.mrb[0].mxu0
    %7907 = vmatprep.mubr.f32.mxu0 0.0
    %7908 = vmatmul.mubr.f32.gmra.mrb[0].mxu0 %v7814
    %v7909 = vpop.f32.mrb[0].mxu0
    %v7910 = vadd.f32 0.0, %v7909
    %v7911 = vpop.f32.mrb[0].mxu0
    %7912 = vmatprep.mubr.f32.mxu0 0.0
    %7913 = vmatmul.mubr.f32.gmra.mrb[0].mxu0 %v7817
    %v7914 = vpop.f32.mrb[0].mxu0
    %v7915 = vadd.f32 0.0, %v7914
    %v7916 = vpop.f32.mrb[0].mxu0
    %7917 = vmatprep.mubr.f32.mxu0 0.0
    %7918 = vmatmul.mubr.f32.gmra.mrb[0].mxu0 %v7820
    %v7919 = vpop.f32.mrb[0].mxu0
    %v7920 = vadd.f32 0.0, %v7919
    %v7921 = vpop.f32.mrb[0].mxu0
    %7922 = vmatprep.mubr.f32.mxu0 0.0
    %7923 = vmatmul.mubr.f32.gmra.mrb[0].mxu0 %v7823
    %v7924 = vpop.f32.mrb[0].mxu0
    %v7925 = vadd.f32 0.0, %v7924
    %v7926 = vpop.f32.mrb[0].mxu0
    %7927 = vmatprep.mubr.f32.mxu0 0.0
    %7928 = vmatmul.mubr.f32.gmra.mrb[0].mxu0 %v7826
    %v7929 = vpop.f32.mrb[0].mxu0
    %v7930 = vadd.f32 0.0, %v7929
    %v7931 = vpop.f32.mrb[0].mxu0
    %7932 = vdwg.mxu0
    %7933 = vrot.lane.b32.xlu0 %v5755, 120
    %v7934 = vpop.permute.xlu0 %7933
    %7935 = vrot.lane.b32.xlu0 %v5756, 120
    %v7936 = vpop.permute.xlu0 %7935
    %7937 = vrot.lane.b32.xlu0 %v5757, 120
    %v7938 = vpop.permute.xlu0 %7937
    %7939 = vrot.lane.b32.xlu0 %v5758, 120
    %v7940 = vpop.permute.xlu0 %7939
    %7941 = vrot.lane.b32.xlu0 %v5759, 120
    %v7942 = vpop.permute.xlu0 %7941
    %7943 = vrot.lane.b32.xlu0 %v5760, 120
    %v7944 = vpop.permute.xlu0 %7943
    %7945 = vrot.lane.b32.xlu0 %v5761, 120
    %v7946 = vpop.permute.xlu0 %7945
    %7947 = vrot.lane.b32.xlu0 %v5762, 120
    %v7948 = vpop.permute.xlu0 %7947
    %7949 = vrot.lane.b32.xlu0 %v5709, 88
    %v7950 = vpop.permute.xlu0 %7949
    %7951 = vrot.lane.b32.xlu0 %v5714, 88
    %v7952 = vpop.permute.xlu0 %7951
    %7953 = vrot.lane.b32.xlu0 %v5719, 88
    %v7954 = vpop.permute.xlu0 %7953
    %7955 = vrot.lane.b32.xlu0 %v5724, 88
    %v7956 = vpop.permute.xlu0 %7955
    %7957 = vrot.lane.b32.xlu0 %v5729, 88
    %v7958 = vpop.permute.xlu0 %7957
    %7959 = vrot.lane.b32.xlu0 %v5734, 88
    %v7960 = vpop.permute.xlu0 %7959
    %7961 = vrot.lane.b32.xlu0 %v5739, 88
    %v7962 = vpop.permute.xlu0 %7961
    %7963 = vrot.lane.b32.xlu0 %v5744, 88
    %v7964 = vpop.permute.xlu0 %7963
    %v7965 = vsel %vm51, %v7934, 0
    %v7967 = vsel %vm51, %v7936, 0
    %v7969 = vsel %vm51, %v7938, 0
    %v7971 = vsel %vm51, %v7940, 0
    %v7973 = vsel %vm51, %v7942, 0
    %v7975 = vsel %vm51, %v7944, 0
    %v7977 = vsel %vm51, %v7946, 0
    %v7979 = vsel %vm51, %v7948, 0
    %v7981 = vsel %vm51, %v7950, 0
    %v7983 = vsel %vm51, %v7952, 0
    %v7985 = vsel %vm51, %v7954, 0
    %v7987 = vsel %vm51, %v7956, 0
    %v7989 = vsel %vm51, %v7958, 0
    %v7991 = vsel %vm51, %v7960, 0
    %v7993 = vsel %vm51, %v7962, 0
    %v7995 = vsel %vm51, %v7964, 0
    %7997 = vmatprep.subr.mxu0 0.0
    %7998 = vmatpush1.xpose.msra.mxu0 %v7981
    %7999 = vmatprep.subr.mxu0 0.0
    %8000 = vmatpush1.xpose.msra.mxu0 %v7983
    %8001 = vmatprep.subr.mxu0 0.0
    %8002 = vmatpush1.xpose.msra.mxu0 %v7985
    %8003 = vmatprep.subr.mxu0 0.0
    %8004 = vmatpush1.xpose.msra.mxu0 %v7987
    %8005 = vmatprep.subr.mxu0 0.0
    %8006 = vmatpush1.xpose.msra.mxu0 %v7989
    %8007 = vmatprep.subr.mxu0 0.0
    %8008 = vmatpush1.xpose.msra.mxu0 %v7991
    %8009 = vmatprep.subr.mxu0 0.0
    %8010 = vmatpush1.xpose.msra.mxu0 %v7993
    %8011 = vmatprep.subr.mxu0 0.0
    %8012 = vmatpush1.xpose.msra.mxu0 %v7995
    %8013 = vmatprep.subr.mxu0 0.0
    %8014 = vmatpush1.xpose.msra.mxu0 0.0
    %8015 = vmatprep.subr.mxu0 0.0
    %8016 = vmatpush1.xpose.msra.mxu0 0.0
    %8017 = vmatprep.subr.mxu0 0.0
    %8018 = vmatpush1.xpose.msra.mxu0 0.0
    %8019 = vmatprep.subr.mxu0 0.0
    %8020 = vmatpush1.xpose.msra.mxu0 0.0
    %8021 = vmatprep.subr.mxu0 0.0
    %8022 = vmatpush1.xpose.msra.mxu0 0.0
    %8023 = vmatprep.subr.mxu0 0.0
    %8024 = vmatpush1.xpose.msra.mxu0 0.0
    %8025 = vmatprep.subr.mxu0 0.0
    %8026 = vmatpush1.xpose.msra.mxu0 0.0
    %8027 = vmatprep.subr.mxu0 0.0
    %8028 = vmatpush1.xpose.msra.mxu0 0.0
    %8029 = vmatprep.subr.mxu0 0.0
    %8030 = vmatpush1.xpose.msra.mxu0 0.0
    %8031 = vmatprep.subr.mxu0 0.0
    %8032 = vmatpush1.xpose.msra.mxu0 0.0
    %8033 = vmatprep.subr.mxu0 0.0
    %8034 = vmatpush1.xpose.msra.mxu0 0.0
    %8035 = vmatprep.subr.mxu0 0.0
    %8036 = vmatpush1.xpose.msra.mxu0 0.0
    %8037 = vmatprep.subr.mxu0 0.0
    %8038 = vmatpush1.xpose.msra.mxu0 0.0
    %8039 = vmatprep.subr.mxu0 0.0
    %8040 = vmatpush1.xpose.msra.mxu0 0.0
    %8041 = vmatprep.subr.mxu0 0.0
    %8042 = vmatpush1.xpose.msra.mxu0 0.0
    %8043 = vmatprep.subr.mxu0 0.0
    %8044 = vmatpush1.xpose.msra.mxu0 0.0
    %8045 = vmatprep.subr.mxu0 0.0
    %8046 = vmatpush1.xpose.msra.mxu0 0.0
    %8047 = vmatprep.subr.mxu0 0.0
    %8048 = vmatpush1.xpose.msra.mxu0 0.0
    %8049 = vmatprep.subr.mxu0 0.0
    %8050 = vmatpush1.xpose.msra.mxu0 0.0
    %8051 = vmatprep.subr.mxu0 0.0
    %8052 = vmatpush1.xpose.msra.mxu0 0.0
    %8053 = vmatprep.subr.mxu0 0.0
    %8054 = vmatpush1.xpose.msra.mxu0 0.0
    %8055 = vmatprep.subr.mxu0 0.0
    %8056 = vmatpush1.xpose.msra.mxu0 0.0
    %8057 = vmatprep.subr.mxu0 0.0
    %8058 = vmatpush1.xpose.msra.mxu0 0.0
    %8059 = vmatprep.subr.mxu0 0.0
    %8060 = vmatpush1.xpose.msra.mxu0 0.0
    %8061 = vmatprep.mubr.f32.mxu0 0.0
    %8062 = vmatmul.mubr.f32.gmra.mrb[0].mxu0 %v7965
    %v8063 = vpop.f32.mrb[0].mxu0
    %v8064 = vadd.f32 0.0, %v8063
    %v8065 = vpop.f32.mrb[0].mxu0
    %8066 = vmatprep.mubr.f32.mxu0 0.0
    %8067 = vmatmul.mubr.f32.gmra.mrb[0].mxu0 %v7967
    %v8068 = vpop.f32.mrb[0].mxu0
    %v8069 = vadd.f32 0.0, %v8068
    %v8070 = vpop.f32.mrb[0].mxu0
    %8071 = vmatprep.mubr.f32.mxu0 0.0
    %8072 = vmatmul.mubr.f32.gmra.mrb[0].mxu0 %v7969
    %v8073 = vpop.f32.mrb[0].mxu0
    %v8074 = vadd.f32 0.0, %v8073
    %v8075 = vpop.f32.mrb[0].mxu0
    %8076 = vmatprep.mubr.f32.mxu0 0.0
    %8077 = vmatmul.mubr.f32.gmra.mrb[0].mxu0 %v7971
    %v8078 = vpop.f32.mrb[0].mxu0
    %v8079 = vadd.f32 0.0, %v8078
    %v8080 = vpop.f32.mrb[0].mxu0
    %8081 = vmatprep.mubr.f32.mxu0 0.0
    %8082 = vmatmul.mubr.f32.gmra.mrb[0].mxu0 %v7973
    %v8083 = vpop.f32.mrb[0].mxu0
    %v8084 = vadd.f32 0.0, %v8083
    %v8085 = vpop.f32.mrb[0].mxu0
    %8086 = vmatprep.mubr.f32.mxu0 0.0
    %8087 = vmatmul.mubr.f32.gmra.mrb[0].mxu0 %v7975
    %v8088 = vpop.f32.mrb[0].mxu0
    %v8089 = vadd.f32 0.0, %v8088
    %v8090 = vpop.f32.mrb[0].mxu0
    %8091 = vmatprep.mubr.f32.mxu0 0.0
    %8092 = vmatmul.mubr.f32.gmra.mrb[0].mxu0 %v7977
    %v8093 = vpop.f32.mrb[0].mxu0
    %v8094 = vadd.f32 0.0, %v8093
    %v8095 = vpop.f32.mrb[0].mxu0
    %8096 = vmatprep.mubr.f32.mxu0 0.0
    %8097 = vmatmul.mubr.f32.gmra.mrb[0].mxu0 %v7979
    %v8098 = vpop.f32.mrb[0].mxu0
    %v8099 = vadd.f32 0.0, %v8098
    %v8100 = vpop.f32.mrb[0].mxu0
    %8101 = vdwg.mxu0
    %v8102 = vsel %vm934, %v8064, -inf
    %8103 = vmax.xlane.f32.xlu0 %v8102
    %v8104 = vpop.xlane.xlu0 %8103
    %v8105 = vsel %vm934, %v8069, -inf
    %8106 = vmax.xlane.f32.xlu0 %v8105
    %v8107 = vpop.xlane.xlu0 %8106
    %v8108 = vsel %vm934, %v8074, -inf
    %8109 = vmax.xlane.f32.xlu0 %v8108
    %v8110 = vpop.xlane.xlu0 %8109
    %v8111 = vsel %vm934, %v8079, -inf
    %8112 = vmax.xlane.f32.xlu0 %v8111
    %v8113 = vpop.xlane.xlu0 %8112
    %v8114 = vsel %vm934, %v8084, -inf
    %8115 = vmax.xlane.f32.xlu0 %v8114
    %v8116 = vpop.xlane.xlu0 %8115
    %v8117 = vsel %vm934, %v8089, -inf
    %8118 = vmax.xlane.f32.xlu0 %v8117
    %v8119 = vpop.xlane.xlu0 %8118
    %v8120 = vsel %vm934, %v8094, -inf
    %8121 = vmax.xlane.f32.xlu0 %v8120
    %v8122 = vpop.xlane.xlu0 %8121
    %v8123 = vsel %vm934, %v8099, -inf
    %8124 = vmax.xlane.f32.xlu0 %v8123
    %v8125 = vpop.xlane.xlu0 %8124
    %v8126 = vsub.f32 %v8064, %v8104
    %v8127 = vsub.f32 %v8069, %v8107
    %v8128 = vsub.f32 %v8074, %v8110
    %v8129 = vsub.f32 %v8079, %v8113
    %v8130 = vsub.f32 %v8084, %v8116
    %v8131 = vsub.f32 %v8089, %v8119
    %v8132 = vsub.f32 %v8094, %v8122
    %v8133 = vsub.f32 %v8099, %v8125
    %v8134 = vmul.f32 %v8126, 1.442695
    %v8135 = vpow.pop %v8134
    %v8136 = vmul.f32 %v8127, 1.442695
    %v8137 = vpow.pop %v8136
    %v8138 = vmul.f32 %v8128, 1.442695
    %v8139 = vpow.pop %v8138
    %v8140 = vmul.f32 %v8129, 1.442695
    %v8141 = vpow.pop %v8140
    %v8142 = vmul.f32 %v8130, 1.442695
    %v8143 = vpow.pop %v8142
    %v8144 = vmul.f32 %v8131, 1.442695
    %v8145 = vpow.pop %v8144
    %v8146 = vmul.f32 %v8132, 1.442695
    %v8147 = vpow.pop %v8146
    %v8148 = vmul.f32 %v8133, 1.442695
    %v8149 = vpow.pop %v8148
    %v8150 = vsel %vm934, %v8135, 0.0
    %8151 = vadd.xlane.f32.xlu0 %v8150
    %v8152 = vpop.xlane.xlu0 %8151
    %v8153 = vsel %vm934, %v8137, 0.0
    %8154 = vadd.xlane.f32.xlu0 %v8153
    %v8155 = vpop.xlane.xlu0 %8154
    %v8156 = vsel %vm934, %v8139, 0.0
    %8157 = vadd.xlane.f32.xlu0 %v8156
    %v8158 = vpop.xlane.xlu0 %8157
    %v8159 = vsel %vm934, %v8141, 0.0
    %8160 = vadd.xlane.f32.xlu0 %v8159
    %v8161 = vpop.xlane.xlu0 %8160
    %v8162 = vsel %vm934, %v8143, 0.0
    %8163 = vadd.xlane.f32.xlu0 %v8162
    %v8164 = vpop.xlane.xlu0 %8163
    %v8165 = vsel %vm934, %v8145, 0.0
    %8166 = vadd.xlane.f32.xlu0 %v8165
    %v8167 = vpop.xlane.xlu0 %8166
    %v8168 = vsel %vm934, %v8147, 0.0
    %8169 = vadd.xlane.f32.xlu0 %v8168
    %v8170 = vpop.xlane.xlu0 %8169
    %v8171 = vsel %vm934, %v8149, 0.0
    %8172 = vadd.xlane.f32.xlu0 %v8171
    %v8173 = vpop.xlane.xlu0 %8172
    %v8174 = vrcp.pop %v8152
    %v8175 = vrcp.pop %v8155
    %v8176 = vrcp.pop %v8158
    %v8177 = vrcp.pop %v8161
    %v8178 = vrcp.pop %v8164
    %v8179 = vrcp.pop %v8167
    %v8180 = vrcp.pop %v8170
    %v8181 = vrcp.pop %v8173
    %v8182 = vmul.f32 %v8135, %v8174
    %v8183 = vmul.f32 %v8137, %v8175
    %v8184 = vmul.f32 %v8139, %v8176
    %v8185 = vmul.f32 %v8141, %v8177
    %v8186 = vmul.f32 %v8143, %v8178
    %v8187 = vmul.f32 %v8145, %v8179
    %v8188 = vmul.f32 %v8147, %v8180
    %v8189 = vmul.f32 %v8149, %v8181
    %8190 = vrot.lane.b32.xlu0 %v5709, 56
    %v8191 = vpop.permute.xlu0 %8190
    %8192 = vrot.lane.b32.xlu0 %v5714, 56
    %v8193 = vpop.permute.xlu0 %8192
    %8194 = vrot.lane.b32.xlu0 %v5719, 56
    %v8195 = vpop.permute.xlu0 %8194
    %8196 = vrot.lane.b32.xlu0 %v5724, 56
    %v8197 = vpop.permute.xlu0 %8196
    %8198 = vrot.lane.b32.xlu0 %v5729, 56
    %v8199 = vpop.permute.xlu0 %8198
    %8200 = vrot.lane.b32.xlu0 %v5734, 56
    %v8201 = vpop.permute.xlu0 %8200
    %8202 = vrot.lane.b32.xlu0 %v5739, 56
    %v8203 = vpop.permute.xlu0 %8202
    %8204 = vrot.lane.b32.xlu0 %v5744, 56
    %v8205 = vpop.permute.xlu0 %8204
    %v8215 = vsel %vm934, %v8182, 0
    %v8218 = vsel %vm934, %v8183, 0
    %v8221 = vsel %vm934, %v8184, 0
    %v8224 = vsel %vm934, %v8185, 0
    %v8227 = vsel %vm934, %v8186, 0
    %v8230 = vsel %vm934, %v8187, 0
    %v8233 = vsel %vm934, %v8188, 0
    %v8236 = vsel %vm934, %v8189, 0
    %8238 = vmatprep.subr.mxu0 0.0
    %8239 = vmatpush1.msra.mxu0 %v8191
    %8240 = vmatprep.subr.mxu0 0.0
    %8241 = vmatpush1.msra.mxu0 %v8193
    %8242 = vmatprep.subr.mxu0 0.0
    %8243 = vmatpush1.msra.mxu0 %v8195
    %8244 = vmatprep.subr.mxu0 0.0
    %8245 = vmatpush1.msra.mxu0 %v8197
    %8246 = vmatprep.subr.mxu0 0.0
    %8247 = vmatpush1.msra.mxu0 %v8199
    %8248 = vmatprep.subr.mxu0 0.0
    %8249 = vmatpush1.msra.mxu0 %v8201
    %8250 = vmatprep.subr.mxu0 0.0
    %8251 = vmatpush1.msra.mxu0 %v8203
    %8252 = vmatprep.subr.mxu0 0.0
    %8253 = vmatpush1.msra.mxu0 %v8205
    %8254 = vmatprep.subr.mxu0 0.0
    %8255 = vmatpush1.msra.mxu0 0.0
    %8256 = vmatprep.subr.mxu0 0.0
    %8257 = vmatpush1.msra.mxu0 0.0
    %8258 = vmatprep.subr.mxu0 0.0
    %8259 = vmatpush1.msra.mxu0 0.0
    %8260 = vmatprep.subr.mxu0 0.0
    %8261 = vmatpush1.msra.mxu0 0.0
    %8262 = vmatprep.subr.mxu0 0.0
    %8263 = vmatpush1.msra.mxu0 0.0
    %8264 = vmatprep.subr.mxu0 0.0
    %8265 = vmatpush1.msra.mxu0 0.0
    %8266 = vmatprep.subr.mxu0 0.0
    %8267 = vmatpush1.msra.mxu0 0.0
    %8268 = vmatprep.subr.mxu0 0.0
    %8269 = vmatpush1.msra.mxu0 0.0
    %8270 = vmatprep.subr.mxu0 0.0
    %8271 = vmatpush1.msra.mxu0 0.0
    %8272 = vmatprep.subr.mxu0 0.0
    %8273 = vmatpush1.msra.mxu0 0.0
    %8274 = vmatprep.subr.mxu0 0.0
    %8275 = vmatpush1.msra.mxu0 0.0
    %8276 = vmatprep.subr.mxu0 0.0
    %8277 = vmatpush1.msra.mxu0 0.0
    %8278 = vmatprep.subr.mxu0 0.0
    %8279 = vmatpush1.msra.mxu0 0.0
    %8280 = vmatprep.subr.mxu0 0.0
    %8281 = vmatpush1.msra.mxu0 0.0
    %8282 = vmatprep.subr.mxu0 0.0
    %8283 = vmatpush1.msra.mxu0 0.0
    %8284 = vmatprep.subr.mxu0 0.0
    %8285 = vmatpush1.msra.mxu0 0.0
    %8286 = vmatprep.subr.mxu0 0.0
    %8287 = vmatpush1.msra.mxu0 0.0
    %8288 = vmatprep.subr.mxu0 0.0
    %8289 = vmatpush1.msra.mxu0 0.0
    %8290 = vmatprep.subr.mxu0 0.0
    %8291 = vmatpush1.msra.mxu0 0.0
    %8292 = vmatprep.subr.mxu0 0.0
    %8293 = vmatpush1.msra.mxu0 0.0
    %8294 = vmatprep.subr.mxu0 0.0
    %8295 = vmatpush1.msra.mxu0 0.0
    %8296 = vmatprep.subr.mxu0 0.0
    %8297 = vmatpush1.msra.mxu0 0.0
    %8298 = vmatprep.subr.mxu0 0.0
    %8299 = vmatpush1.msra.mxu0 0.0
    %8300 = vmatprep.subr.mxu0 0.0
    %8301 = vmatpush1.msra.mxu0 0.0
    %8302 = vmatprep.mubr.f32.mxu0 0.0
    %8303 = vmatmul.mubr.f32.gmra.mrb[0].mxu0 %v8215
    %v8304 = vpop.f32.mrb[0].mxu0
    %v8305 = vadd.f32 0.0, %v8304
    %v8306 = vpop.f32.mrb[0].mxu0
    %8307 = vmatprep.mubr.f32.mxu0 0.0
    %8308 = vmatmul.mubr.f32.gmra.mrb[0].mxu0 %v8218
    %v8309 = vpop.f32.mrb[0].mxu0
    %v8310 = vadd.f32 0.0, %v8309
    %v8311 = vpop.f32.mrb[0].mxu0
    %8312 = vmatprep.mubr.f32.mxu0 0.0
    %8313 = vmatmul.mubr.f32.gmra.mrb[0].mxu0 %v8221
    %v8314 = vpop.f32.mrb[0].mxu0
    %v8315 = vadd.f32 0.0, %v8314
    %v8316 = vpop.f32.mrb[0].mxu0
    %8317 = vmatprep.mubr.f32.mxu0 0.0
    %8318 = vmatmul.mubr.f32.gmra.mrb[0].mxu0 %v8224
    %v8319 = vpop.f32.mrb[0].mxu0
    %v8320 = vadd.f32 0.0, %v8319
    %v8321 = vpop.f32.mrb[0].mxu0
    %8322 = vmatprep.mubr.f32.mxu0 0.0
    %8323 = vmatmul.mubr.f32.gmra.mrb[0].mxu0 %v8227
    %v8324 = vpop.f32.mrb[0].mxu0
    %v8325 = vadd.f32 0.0, %v8324
    %v8326 = vpop.f32.mrb[0].mxu0
    %8327 = vmatprep.mubr.f32.mxu0 0.0
    %8328 = vmatmul.mubr.f32.gmra.mrb[0].mxu0 %v8230
    %v8329 = vpop.f32.mrb[0].mxu0
    %v8330 = vadd.f32 0.0, %v8329
    %v8331 = vpop.f32.mrb[0].mxu0
    %8332 = vmatprep.mubr.f32.mxu0 0.0
    %8333 = vmatmul.mubr.f32.gmra.mrb[0].mxu0 %v8233
    %v8334 = vpop.f32.mrb[0].mxu0
    %v8335 = vadd.f32 0.0, %v8334
    %v8336 = vpop.f32.mrb[0].mxu0
    %8337 = vmatprep.mubr.f32.mxu0 0.0
    %8338 = vmatmul.mubr.f32.gmra.mrb[0].mxu0 %v8236
    %v8339 = vpop.f32.mrb[0].mxu0
    %v8340 = vadd.f32 0.0, %v8339
    %v8341 = vpop.f32.mrb[0].mxu0
    %8342 = vdwg.mxu0
    %8343 = vrot.lane.b32.xlu0 %v5755, 112
    %v8344 = vpop.permute.xlu0 %8343
    %8345 = vrot.lane.b32.xlu0 %v5756, 112
    %v8346 = vpop.permute.xlu0 %8345
    %8347 = vrot.lane.b32.xlu0 %v5757, 112
    %v8348 = vpop.permute.xlu0 %8347
    %8349 = vrot.lane.b32.xlu0 %v5758, 112
    %v8350 = vpop.permute.xlu0 %8349
    %8351 = vrot.lane.b32.xlu0 %v5759, 112
    %v8352 = vpop.permute.xlu0 %8351
    %8353 = vrot.lane.b32.xlu0 %v5760, 112
    %v8354 = vpop.permute.xlu0 %8353
    %8355 = vrot.lane.b32.xlu0 %v5761, 112
    %v8356 = vpop.permute.xlu0 %8355
    %8357 = vrot.lane.b32.xlu0 %v5762, 112
    %v8358 = vpop.permute.xlu0 %8357
    %8359 = vrot.lane.b32.xlu0 %v5709, 80
    %v8360 = vpop.permute.xlu0 %8359
    %8361 = vrot.lane.b32.xlu0 %v5714, 80
    %v8362 = vpop.permute.xlu0 %8361
    %8363 = vrot.lane.b32.xlu0 %v5719, 80
    %v8364 = vpop.permute.xlu0 %8363
    %8365 = vrot.lane.b32.xlu0 %v5724, 80
    %v8366 = vpop.permute.xlu0 %8365
    %8367 = vrot.lane.b32.xlu0 %v5729, 80
    %v8368 = vpop.permute.xlu0 %8367
    %8369 = vrot.lane.b32.xlu0 %v5734, 80
    %v8370 = vpop.permute.xlu0 %8369
    %8371 = vrot.lane.b32.xlu0 %v5739, 80
    %v8372 = vpop.permute.xlu0 %8371
    %8373 = vrot.lane.b32.xlu0 %v5744, 80
    %v8374 = vpop.permute.xlu0 %8373
    %v8375 = vsel %vm51, %v8344, 0
    %v8377 = vsel %vm51, %v8346, 0
    %v8379 = vsel %vm51, %v8348, 0
    %v8381 = vsel %vm51, %v8350, 0
    %v8383 = vsel %vm51, %v8352, 0
    %v8385 = vsel %vm51, %v8354, 0
    %v8387 = vsel %vm51, %v8356, 0
    %v8389 = vsel %vm51, %v8358, 0
    %v8391 = vsel %vm51, %v8360, 0
    %v8393 = vsel %vm51, %v8362, 0
    %v8395 = vsel %vm51, %v8364, 0
    %v8397 = vsel %vm51, %v8366, 0
    %v8399 = vsel %vm51, %v8368, 0
    %v8401 = vsel %vm51, %v8370, 0
    %v8403 = vsel %vm51, %v8372, 0
    %v8405 = vsel %vm51, %v8374, 0
    %8407 = vmatprep.subr.mxu0 0.0
    %8408 = vmatpush1.xpose.msra.mxu0 %v8391
    %8409 = vmatprep.subr.mxu0 0.0
    %8410 = vmatpush1.xpose.msra.mxu0 %v8393
    %8411 = vmatprep.subr.mxu0 0.0
    %8412 = vmatpush1.xpose.msra.mxu0 %v8395
    %8413 = vmatprep.subr.mxu0 0.0
    %8414 = vmatpush1.xpose.msra.mxu0 %v8397
    %8415 = vmatprep.subr.mxu0 0.0
    %8416 = vmatpush1.xpose.msra.mxu0 %v8399
    %8417 = vmatprep.subr.mxu0 0.0
    %8418 = vmatpush1.xpose.msra.mxu0 %v8401
    %8419 = vmatprep.subr.mxu0 0.0
    %8420 = vmatpush1.xpose.msra.mxu0 %v8403
    %8421 = vmatprep.subr.mxu0 0.0
    %8422 = vmatpush1.xpose.msra.mxu0 %v8405
    %8423 = vmatprep.subr.mxu0 0.0
    %8424 = vmatpush1.xpose.msra.mxu0 0.0
    %8425 = vmatprep.subr.mxu0 0.0
    %8426 = vmatpush1.xpose.msra.mxu0 0.0
    %8427 = vmatprep.subr.mxu0 0.0
    %8428 = vmatpush1.xpose.msra.mxu0 0.0
    %8429 = vmatprep.subr.mxu0 0.0
    %8430 = vmatpush1.xpose.msra.mxu0 0.0
    %8431 = vmatprep.subr.mxu0 0.0
    %8432 = vmatpush1.xpose.msra.mxu0 0.0
    %8433 = vmatprep.subr.mxu0 0.0
    %8434 = vmatpush1.xpose.msra.mxu0 0.0
    %8435 = vmatprep.subr.mxu0 0.0
    %8436 = vmatpush1.xpose.msra.mxu0 0.0
    %8437 = vmatprep.subr.mxu0 0.0
    %8438 = vmatpush1.xpose.msra.mxu0 0.0
    %8439 = vmatprep.subr.mxu0 0.0
    %8440 = vmatpush1.xpose.msra.mxu0 0.0
    %8441 = vmatprep.subr.mxu0 0.0
    %8442 = vmatpush1.xpose.msra.mxu0 0.0
    %8443 = vmatprep.subr.mxu0 0.0
    %8444 = vmatpush1.xpose.msra.mxu0 0.0
    %8445 = vmatprep.subr.mxu0 0.0
    %8446 = vmatpush1.xpose.msra.mxu0 0.0
    %8447 = vmatprep.subr.mxu0 0.0
    %8448 = vmatpush1.xpose.msra.mxu0 0.0
    %8449 = vmatprep.subr.mxu0 0.0
    %8450 = vmatpush1.xpose.msra.mxu0 0.0
    %8451 = vmatprep.subr.mxu0 0.0
    %8452 = vmatpush1.xpose.msra.mxu0 0.0
    %8453 = vmatprep.subr.mxu0 0.0
    %8454 = vmatpush1.xpose.msra.mxu0 0.0
    %8455 = vmatprep.subr.mxu0 0.0
    %8456 = vmatpush1.xpose.msra.mxu0 0.0
    %8457 = vmatprep.subr.mxu0 0.0
    %8458 = vmatpush1.xpose.msra.mxu0 0.0
    %8459 = vmatprep.subr.mxu0 0.0
    %8460 = vmatpush1.xpose.msra.mxu0 0.0
    %8461 = vmatprep.subr.mxu0 0.0
    %8462 = vmatpush1.xpose.msra.mxu0 0.0
    %8463 = vmatprep.subr.mxu0 0.0
    %8464 = vmatpush1.xpose.msra.mxu0 0.0
    %8465 = vmatprep.subr.mxu0 0.0
    %8466 = vmatpush1.xpose.msra.mxu0 0.0
    %8467 = vmatprep.subr.mxu0 0.0
    %8468 = vmatpush1.xpose.msra.mxu0 0.0
    %8469 = vmatprep.subr.mxu0 0.0
    %8470 = vmatpush1.xpose.msra.mxu0 0.0
    %8471 = vmatprep.mubr.f32.mxu0 0.0
    %8472 = vmatmul.mubr.f32.gmra.mrb[0].mxu0 %v8375
    %v8473 = vpop.f32.mrb[0].mxu0
    %v8474 = vadd.f32 0.0, %v8473
    %v8475 = vpop.f32.mrb[0].mxu0
    %8476 = vmatprep.mubr.f32.mxu0 0.0
    %8477 = vmatmul.mubr.f32.gmra.mrb[0].mxu0 %v8377
    %v8478 = vpop.f32.mrb[0].mxu0
    %v8479 = vadd.f32 0.0, %v8478
    %v8480 = vpop.f32.mrb[0].mxu0
    %8481 = vmatprep.mubr.f32.mxu0 0.0
    %8482 = vmatmul.mubr.f32.gmra.mrb[0].mxu0 %v8379
    %v8483 = vpop.f32.mrb[0].mxu0
    %v8484 = vadd.f32 0.0, %v8483
    %v8485 = vpop.f32.mrb[0].mxu0
    %8486 = vmatprep.mubr.f32.mxu0 0.0
    %8487 = vmatmul.mubr.f32.gmra.mrb[0].mxu0 %v8381
    %v8488 = vpop.f32.mrb[0].mxu0
    %v8489 = vadd.f32 0.0, %v8488
    %v8490 = vpop.f32.mrb[0].mxu0
    %8491 = vmatprep.mubr.f32.mxu0 0.0
    %8492 = vmatmul.mubr.f32.gmra.mrb[0].mxu0 %v8383
    %v8493 = vpop.f32.mrb[0].mxu0
    %v8494 = vadd.f32 0.0, %v8493
    %v8495 = vpop.f32.mrb[0].mxu0
    %8496 = vmatprep.mubr.f32.mxu0 0.0
    %8497 = vmatmul.mubr.f32.gmra.mrb[0].mxu0 %v8385
    %v8498 = vpop.f32.mrb[0].mxu0
    %v8499 = vadd.f32 0.0, %v8498
    %v8500 = vpop.f32.mrb[0].mxu0
    %8501 = vmatprep.mubr.f32.mxu0 0.0
    %8502 = vmatmul.mubr.f32.gmra.mrb[0].mxu0 %v8387
    %v8503 = vpop.f32.mrb[0].mxu0
    %v8504 = vadd.f32 0.0, %v8503
    %v8505 = vpop.f32.mrb[0].mxu0
    %8506 = vmatprep.mubr.f32.mxu0 0.0
    %8507 = vmatmul.mubr.f32.gmra.mrb[0].mxu0 %v8389
    %v8508 = vpop.f32.mrb[0].mxu0
    %v8509 = vadd.f32 0.0, %v8508
    %v8510 = vpop.f32.mrb[0].mxu0
    %8511 = vdwg.mxu0
    %v8512 = vsel %vm934, %v8474, -inf
    %8513 = vmax.xlane.f32.xlu0 %v8512
    %v8514 = vpop.xlane.xlu0 %8513
    %v8515 = vsel %vm934, %v8479, -inf
    %8516 = vmax.xlane.f32.xlu0 %v8515
    %v8517 = vpop.xlane.xlu0 %8516
    %v8518 = vsel %vm934, %v8484, -inf
    %8519 = vmax.xlane.f32.xlu0 %v8518
    %v8520 = vpop.xlane.xlu0 %8519
    %v8521 = vsel %vm934, %v8489, -inf
    %8522 = vmax.xlane.f32.xlu0 %v8521
    %v8523 = vpop.xlane.xlu0 %8522
    %v8524 = vsel %vm934, %v8494, -inf
    %8525 = vmax.xlane.f32.xlu0 %v8524
    %v8526 = vpop.xlane.xlu0 %8525
    %v8527 = vsel %vm934, %v8499, -inf
    %8528 = vmax.xlane.f32.xlu0 %v8527
    %v8529 = vpop.xlane.xlu0 %8528
    %v8530 = vsel %vm934, %v8504, -inf
    %8531 = vmax.xlane.f32.xlu0 %v8530
    %v8532 = vpop.xlane.xlu0 %8531
    %v8533 = vsel %vm934, %v8509, -inf
    %8534 = vmax.xlane.f32.xlu0 %v8533
    %v8535 = vpop.xlane.xlu0 %8534
    %v8536 = vsub.f32 %v8474, %v8514
    %v8537 = vsub.f32 %v8479, %v8517
    %v8538 = vsub.f32 %v8484, %v8520
    %v8539 = vsub.f32 %v8489, %v8523
    %v8540 = vsub.f32 %v8494, %v8526
    %v8541 = vsub.f32 %v8499, %v8529
    %v8542 = vsub.f32 %v8504, %v8532
    %v8543 = vsub.f32 %v8509, %v8535
    %v8544 = vmul.f32 %v8536, 1.442695
    %v8545 = vpow.pop %v8544
    %v8546 = vmul.f32 %v8537, 1.442695
    %v8547 = vpow.pop %v8546
    %v8548 = vmul.f32 %v8538, 1.442695
    %v8549 = vpow.pop %v8548
    %v8550 = vmul.f32 %v8539, 1.442695
    %v8551 = vpow.pop %v8550
    %v8552 = vmul.f32 %v8540, 1.442695
    %v8553 = vpow.pop %v8552
    %v8554 = vmul.f32 %v8541, 1.442695
    %v8555 = vpow.pop %v8554
    %v8556 = vmul.f32 %v8542, 1.442695
    %v8557 = vpow.pop %v8556
    %v8558 = vmul.f32 %v8543, 1.442695
    %v8559 = vpow.pop %v8558
    %v8560 = vsel %vm934, %v8545, 0.0
    %8561 = vadd.xlane.f32.xlu0 %v8560
    %v8562 = vpop.xlane.xlu0 %8561
    %v8563 = vsel %vm934, %v8547, 0.0
    %8564 = vadd.xlane.f32.xlu0 %v8563
    %v8565 = vpop.xlane.xlu0 %8564
    %v8566 = vsel %vm934, %v8549, 0.0
    %8567 = vadd.xlane.f32.xlu0 %v8566
    %v8568 = vpop.xlane.xlu0 %8567
    %v8569 = vsel %vm934, %v8551, 0.0
    %8570 = vadd.xlane.f32.xlu0 %v8569
    %v8571 = vpop.xlane.xlu0 %8570
    %v8572 = vsel %vm934, %v8553, 0.0
    %8573 = vadd.xlane.f32.xlu0 %v8572
    %v8574 = vpop.xlane.xlu0 %8573
    %v8575 = vsel %vm934, %v8555, 0.0
    %8576 = vadd.xlane.f32.xlu0 %v8575
    %v8577 = vpop.xlane.xlu0 %8576
    %v8578 = vsel %vm934, %v8557, 0.0
    %8579 = vadd.xlane.f32.xlu0 %v8578
    %v8580 = vpop.xlane.xlu0 %8579
    %v8581 = vsel %vm934, %v8559, 0.0
    %8582 = vadd.xlane.f32.xlu0 %v8581
    %v8583 = vpop.xlane.xlu0 %8582
    %v8584 = vrcp.pop %v8562
    %v8585 = vrcp.pop %v8565
    %v8586 = vrcp.pop %v8568
    %v8587 = vrcp.pop %v8571
    %v8588 = vrcp.pop %v8574
    %v8589 = vrcp.pop %v8577
    %v8590 = vrcp.pop %v8580
    %v8591 = vrcp.pop %v8583
    %v8592 = vmul.f32 %v8545, %v8584
    %v8593 = vmul.f32 %v8547, %v8585
    %v8594 = vmul.f32 %v8549, %v8586
    %v8595 = vmul.f32 %v8551, %v8587
    %v8596 = vmul.f32 %v8553, %v8588
    %v8597 = vmul.f32 %v8555, %v8589
    %v8598 = vmul.f32 %v8557, %v8590
    %v8599 = vmul.f32 %v8559, %v8591
    %8600 = vrot.lane.b32.xlu0 %v5709, 48
    %v8601 = vpop.permute.xlu0 %8600
    %8602 = vrot.lane.b32.xlu0 %v5714, 48
    %v8603 = vpop.permute.xlu0 %8602
    %8604 = vrot.lane.b32.xlu0 %v5719, 48
    %v8605 = vpop.permute.xlu0 %8604
    %8606 = vrot.lane.b32.xlu0 %v5724, 48
    %v8607 = vpop.permute.xlu0 %8606
    %8608 = vrot.lane.b32.xlu0 %v5729, 48
    %v8609 = vpop.permute.xlu0 %8608
    %8610 = vrot.lane.b32.xlu0 %v5734, 48
    %v8611 = vpop.permute.xlu0 %8610
    %8612 = vrot.lane.b32.xlu0 %v5739, 48
    %v8613 = vpop.permute.xlu0 %8612
    %8614 = vrot.lane.b32.xlu0 %v5744, 48
    %v8615 = vpop.permute.xlu0 %8614
    %v8625 = vsel %vm934, %v8592, 0
    %v8628 = vsel %vm934, %v8593, 0
    %v8631 = vsel %vm934, %v8594, 0
    %v8634 = vsel %vm934, %v8595, 0
    %v8637 = vsel %vm934, %v8596, 0
    %v8640 = vsel %vm934, %v8597, 0
    %v8643 = vsel %vm934, %v8598, 0
    %v8646 = vsel %vm934, %v8599, 0
    %8648 = vmatprep.subr.mxu0 0.0
    %8649 = vmatpush1.msra.mxu0 %v8601
    %8650 = vmatprep.subr.mxu0 0.0
    %8651 = vmatpush1.msra.mxu0 %v8603
    %8652 = vmatprep.subr.mxu0 0.0
    %8653 = vmatpush1.msra.mxu0 %v8605
    %8654 = vmatprep.subr.mxu0 0.0
    %8655 = vmatpush1.msra.mxu0 %v8607
    %8656 = vmatprep.subr.mxu0 0.0
    %8657 = vmatpush1.msra.mxu0 %v8609
    %8658 = vmatprep.subr.mxu0 0.0
    %8659 = vmatpush1.msra.mxu0 %v8611
    %8660 = vmatprep.subr.mxu0 0.0
    %8661 = vmatpush1.msra.mxu0 %v8613
    %8662 = vmatprep.subr.mxu0 0.0
    %8663 = vmatpush1.msra.mxu0 %v8615
    %8664 = vmatprep.subr.mxu0 0.0
    %8665 = vmatpush1.msra.mxu0 0.0
    %8666 = vmatprep.subr.mxu0 0.0
    %8667 = vmatpush1.msra.mxu0 0.0
    %8668 = vmatprep.subr.mxu0 0.0
    %8669 = vmatpush1.msra.mxu0 0.0
    %8670 = vmatprep.subr.mxu0 0.0
    %8671 = vmatpush1.msra.mxu0 0.0
    %8672 = vmatprep.subr.mxu0 0.0
    %8673 = vmatpush1.msra.mxu0 0.0
    %8674 = vmatprep.subr.mxu0 0.0
    %8675 = vmatpush1.msra.mxu0 0.0
    %8676 = vmatprep.subr.mxu0 0.0
    %8677 = vmatpush1.msra.mxu0 0.0
    %8678 = vmatprep.subr.mxu0 0.0
    %8679 = vmatpush1.msra.mxu0 0.0
    %8680 = vmatprep.subr.mxu0 0.0
    %8681 = vmatpush1.msra.mxu0 0.0
    %8682 = vmatprep.subr.mxu0 0.0
    %8683 = vmatpush1.msra.mxu0 0.0
    %8684 = vmatprep.subr.mxu0 0.0
    %8685 = vmatpush1.msra.mxu0 0.0
    %8686 = vmatprep.subr.mxu0 0.0
    %8687 = vmatpush1.msra.mxu0 0.0
    %8688 = vmatprep.subr.mxu0 0.0
    %8689 = vmatpush1.msra.mxu0 0.0
    %8690 = vmatprep.subr.mxu0 0.0
    %8691 = vmatpush1.msra.mxu0 0.0
    %8692 = vmatprep.subr.mxu0 0.0
    %8693 = vmatpush1.msra.mxu0 0.0
    %8694 = vmatprep.subr.mxu0 0.0
    %8695 = vmatpush1.msra.mxu0 0.0
    %8696 = vmatprep.subr.mxu0 0.0
    %8697 = vmatpush1.msra.mxu0 0.0
    %8698 = vmatprep.subr.mxu0 0.0
    %8699 = vmatpush1.msra.mxu0 0.0
    %8700 = vmatprep.subr.mxu0 0.0
    %8701 = vmatpush1.msra.mxu0 0.0
    %8702 = vmatprep.subr.mxu0 0.0
    %8703 = vmatpush1.msra.mxu0 0.0
    %8704 = vmatprep.subr.mxu0 0.0
    %8705 = vmatpush1.msra.mxu0 0.0
    %8706 = vmatprep.subr.mxu0 0.0
    %8707 = vmatpush1.msra.mxu0 0.0
    %8708 = vmatprep.subr.mxu0 0.0
    %8709 = vmatpush1.msra.mxu0 0.0
    %8710 = vmatprep.subr.mxu0 0.0
    %8711 = vmatpush1.msra.mxu0 0.0
    %8712 = vmatprep.mubr.f32.mxu0 0.0
    %8713 = vmatmul.mubr.f32.gmra.mrb[0].mxu0 %v8625
    %v8714 = vpop.f32.mrb[0].mxu0
    %v8715 = vadd.f32 0.0, %v8714
    %v8716 = vpop.f32.mrb[0].mxu0
    %8717 = vmatprep.mubr.f32.mxu0 0.0
    %8718 = vmatmul.mubr.f32.gmra.mrb[0].mxu0 %v8628
    %v8719 = vpop.f32.mrb[0].mxu0
    %v8720 = vadd.f32 0.0, %v8719
    %v8721 = vpop.f32.mrb[0].mxu0
    %8722 = vmatprep.mubr.f32.mxu0 0.0
    %8723 = vmatmul.mubr.f32.gmra.mrb[0].mxu0 %v8631
    %v8724 = vpop.f32.mrb[0].mxu0
    %v8725 = vadd.f32 0.0, %v8724
    %v8726 = vpop.f32.mrb[0].mxu0
    %8727 = vmatprep.mubr.f32.mxu0 0.0
    %8728 = vmatmul.mubr.f32.gmra.mrb[0].mxu0 %v8634
    %v8729 = vpop.f32.mrb[0].mxu0
    %v8730 = vadd.f32 0.0, %v8729
    %v8731 = vpop.f32.mrb[0].mxu0
    %8732 = vmatprep.mubr.f32.mxu0 0.0
    %8733 = vmatmul.mubr.f32.gmra.mrb[0].mxu0 %v8637
    %v8734 = vpop.f32.mrb[0].mxu0
    %v8735 = vadd.f32 0.0, %v8734
    %v8736 = vpop.f32.mrb[0].mxu0
    %8737 = vmatprep.mubr.f32.mxu0 0.0
    %8738 = vmatmul.mubr.f32.gmra.mrb[0].mxu0 %v8640
    %v8739 = vpop.f32.mrb[0].mxu0
    %v8740 = vadd.f32 0.0, %v8739
    %v8741 = vpop.f32.mrb[0].mxu0
    %8742 = vmatprep.mubr.f32.mxu0 0.0
    %8743 = vmatmul.mubr.f32.gmra.mrb[0].mxu0 %v8643
    %v8744 = vpop.f32.mrb[0].mxu0
    %v8745 = vadd.f32 0.0, %v8744
    %v8746 = vpop.f32.mrb[0].mxu0
    %8747 = vmatprep.mubr.f32.mxu0 0.0
    %8748 = vmatmul.mubr.f32.gmra.mrb[0].mxu0 %v8646
    %v8749 = vpop.f32.mrb[0].mxu0
    %v8750 = vadd.f32 0.0, %v8749
    %v8751 = vpop.f32.mrb[0].mxu0
    %8752 = vdwg.mxu0
    %8753 = vrot.lane.b32.xlu0 %v5755, 104
    %v8754 = vpop.permute.xlu0 %8753
    %8755 = vrot.lane.b32.xlu0 %v5756, 104
    %v8756 = vpop.permute.xlu0 %8755
    %8757 = vrot.lane.b32.xlu0 %v5757, 104
    %v8758 = vpop.permute.xlu0 %8757
    %8759 = vrot.lane.b32.xlu0 %v5758, 104
    %v8760 = vpop.permute.xlu0 %8759
    %8761 = vrot.lane.b32.xlu0 %v5759, 104
    %v8762 = vpop.permute.xlu0 %8761
    %8763 = vrot.lane.b32.xlu0 %v5760, 104
    %v8764 = vpop.permute.xlu0 %8763
    %8765 = vrot.lane.b32.xlu0 %v5761, 104
    %v8766 = vpop.permute.xlu0 %8765
    %8767 = vrot.lane.b32.xlu0 %v5762, 104
    %v8768 = vpop.permute.xlu0 %8767
    %8769 = vrot.lane.b32.xlu0 %v5709, 72
    %v8770 = vpop.permute.xlu0 %8769
    %8771 = vrot.lane.b32.xlu0 %v5714, 72
    %v8772 = vpop.permute.xlu0 %8771
    %8773 = vrot.lane.b32.xlu0 %v5719, 72
    %v8774 = vpop.permute.xlu0 %8773
    %8775 = vrot.lane.b32.xlu0 %v5724, 72
    %v8776 = vpop.permute.xlu0 %8775
    %8777 = vrot.lane.b32.xlu0 %v5729, 72
    %v8778 = vpop.permute.xlu0 %8777
    %8779 = vrot.lane.b32.xlu0 %v5734, 72
    %v8780 = vpop.permute.xlu0 %8779
    %8781 = vrot.lane.b32.xlu0 %v5739, 72
    %v8782 = vpop.permute.xlu0 %8781
    %8783 = vrot.lane.b32.xlu0 %v5744, 72
    %v8784 = vpop.permute.xlu0 %8783
    %v8785 = vsel %vm51, %v8754, 0
    %v8787 = vsel %vm51, %v8756, 0
    %v8789 = vsel %vm51, %v8758, 0
    %v8791 = vsel %vm51, %v8760, 0
    %v8793 = vsel %vm51, %v8762, 0
    %v8795 = vsel %vm51, %v8764, 0
    %v8797 = vsel %vm51, %v8766, 0
    %v8799 = vsel %vm51, %v8768, 0
    %v8801 = vsel %vm51, %v8770, 0
    %v8803 = vsel %vm51, %v8772, 0
    %v8805 = vsel %vm51, %v8774, 0
    %v8807 = vsel %vm51, %v8776, 0
    %v8809 = vsel %vm51, %v8778, 0
    %v8811 = vsel %vm51, %v8780, 0
    %v8813 = vsel %vm51, %v8782, 0
    %v8815 = vsel %vm51, %v8784, 0
    %8817 = vmatprep.subr.mxu0 0.0
    %8818 = vmatpush1.xpose.msra.mxu0 %v8801
    %8819 = vmatprep.subr.mxu0 0.0
    %8820 = vmatpush1.xpose.msra.mxu0 %v8803
    %8821 = vmatprep.subr.mxu0 0.0
    %8822 = vmatpush1.xpose.msra.mxu0 %v8805
    %8823 = vmatprep.subr.mxu0 0.0
    %8824 = vmatpush1.xpose.msra.mxu0 %v8807
    %8825 = vmatprep.subr.mxu0 0.0
    %8826 = vmatpush1.xpose.msra.mxu0 %v8809
    %8827 = vmatprep.subr.mxu0 0.0
    %8828 = vmatpush1.xpose.msra.mxu0 %v8811
    %8829 = vmatprep.subr.mxu0 0.0
    %8830 = vmatpush1.xpose.msra.mxu0 %v8813
    %8831 = vmatprep.subr.mxu0 0.0
    %8832 = vmatpush1.xpose.msra.mxu0 %v8815
    %8833 = vmatprep.subr.mxu0 0.0
    %8834 = vmatpush1.xpose.msra.mxu0 0.0
    %8835 = vmatprep.subr.mxu0 0.0
    %8836 = vmatpush1.xpose.msra.mxu0 0.0
    %8837 = vmatprep.subr.mxu0 0.0
    %8838 = vmatpush1.xpose.msra.mxu0 0.0
    %8839 = vmatprep.subr.mxu0 0.0
    %8840 = vmatpush1.xpose.msra.mxu0 0.0
    %8841 = vmatprep.subr.mxu0 0.0
    %8842 = vmatpush1.xpose.msra.mxu0 0.0
    %8843 = vmatprep.subr.mxu0 0.0
    %8844 = vmatpush1.xpose.msra.mxu0 0.0
    %8845 = vmatprep.subr.mxu0 0.0
    %8846 = vmatpush1.xpose.msra.mxu0 0.0
    %8847 = vmatprep.subr.mxu0 0.0
    %8848 = vmatpush1.xpose.msra.mxu0 0.0
    %8849 = vmatprep.subr.mxu0 0.0
    %8850 = vmatpush1.xpose.msra.mxu0 0.0
    %8851 = vmatprep.subr.mxu0 0.0
    %8852 = vmatpush1.xpose.msra.mxu0 0.0
    %8853 = vmatprep.subr.mxu0 0.0
    %8854 = vmatpush1.xpose.msra.mxu0 0.0
    %8855 = vmatprep.subr.mxu0 0.0
    %8856 = vmatpush1.xpose.msra.mxu0 0.0
    %8857 = vmatprep.subr.mxu0 0.0
    %8858 = vmatpush1.xpose.msra.mxu0 0.0
    %8859 = vmatprep.subr.mxu0 0.0
    %8860 = vmatpush1.xpose.msra.mxu0 0.0
    %8861 = vmatprep.subr.mxu0 0.0
    %8862 = vmatpush1.xpose.msra.mxu0 0.0
    %8863 = vmatprep.subr.mxu0 0.0
    %8864 = vmatpush1.xpose.msra.mxu0 0.0
    %8865 = vmatprep.subr.mxu0 0.0
    %8866 = vmatpush1.xpose.msra.mxu0 0.0
    %8867 = vmatprep.subr.mxu0 0.0
    %8868 = vmatpush1.xpose.msra.mxu0 0.0
    %8869 = vmatprep.subr.mxu0 0.0
    %8870 = vmatpush1.xpose.msra.mxu0 0.0
    %8871 = vmatprep.subr.mxu0 0.0
    %8872 = vmatpush1.xpose.msra.mxu0 0.0
    %8873 = vmatprep.subr.mxu0 0.0
    %8874 = vmatpush1.xpose.msra.mxu0 0.0
    %8875 = vmatprep.subr.mxu0 0.0
    %8876 = vmatpush1.xpose.msra.mxu0 0.0
    %8877 = vmatprep.subr.mxu0 0.0
    %8878 = vmatpush1.xpose.msra.mxu0 0.0
    %8879 = vmatprep.subr.mxu0 0.0
    %8880 = vmatpush1.xpose.msra.mxu0 0.0
    %8881 = vmatprep.mubr.f32.mxu0 0.0
    %8882 = vmatmul.mubr.f32.gmra.mrb[0].mxu0 %v8785
    %v8883 = vpop.f32.mrb[0].mxu0
    %v8884 = vadd.f32 0.0, %v8883
    %v8885 = vpop.f32.mrb[0].mxu0
    %8886 = vmatprep.mubr.f32.mxu0 0.0
    %8887 = vmatmul.mubr.f32.gmra.mrb[0].mxu0 %v8787
    %v8888 = vpop.f32.mrb[0].mxu0
    %v8889 = vadd.f32 0.0, %v8888
    %v8890 = vpop.f32.mrb[0].mxu0
    %8891 = vmatprep.mubr.f32.mxu0 0.0
    %8892 = vmatmul.mubr.f32.gmra.mrb[0].mxu0 %v8789
    %v8893 = vpop.f32.mrb[0].mxu0
    %v8894 = vadd.f32 0.0, %v8893
    %v8895 = vpop.f32.mrb[0].mxu0
    %8896 = vmatprep.mubr.f32.mxu0 0.0
    %8897 = vmatmul.mubr.f32.gmra.mrb[0].mxu0 %v8791
    %v8898 = vpop.f32.mrb[0].mxu0
    %v8899 = vadd.f32 0.0, %v8898
    %v8900 = vpop.f32.mrb[0].mxu0
    %8901 = vmatprep.mubr.f32.mxu0 0.0
    %8902 = vmatmul.mubr.f32.gmra.mrb[0].mxu0 %v8793
    %v8903 = vpop.f32.mrb[0].mxu0
    %v8904 = vadd.f32 0.0, %v8903
    %v8905 = vpop.f32.mrb[0].mxu0
    %8906 = vmatprep.mubr.f32.mxu0 0.0
    %8907 = vmatmul.mubr.f32.gmra.mrb[0].mxu0 %v8795
    %v8908 = vpop.f32.mrb[0].mxu0
    %v8909 = vadd.f32 0.0, %v8908
    %v8910 = vpop.f32.mrb[0].mxu0
    %8911 = vmatprep.mubr.f32.mxu0 0.0
    %8912 = vmatmul.mubr.f32.gmra.mrb[0].mxu0 %v8797
    %v8913 = vpop.f32.mrb[0].mxu0
    %v8914 = vadd.f32 0.0, %v8913
    %v8915 = vpop.f32.mrb[0].mxu0
    %8916 = vmatprep.mubr.f32.mxu0 0.0
    %8917 = vmatmul.mubr.f32.gmra.mrb[0].mxu0 %v8799
    %v8918 = vpop.f32.mrb[0].mxu0
    %v8919 = vadd.f32 0.0, %v8918
    %v8920 = vpop.f32.mrb[0].mxu0
    %8921 = vdwg.mxu0
    %v8922 = vsel %vm934, %v8884, -inf
    %8923 = vmax.xlane.f32.xlu0 %v8922
    %v8924 = vpop.xlane.xlu0 %8923
    %v8925 = vsel %vm934, %v8889, -inf
    %8926 = vmax.xlane.f32.xlu0 %v8925
    %v8927 = vpop.xlane.xlu0 %8926
    %v8928 = vsel %vm934, %v8894, -inf
    %8929 = vmax.xlane.f32.xlu0 %v8928
    %v8930 = vpop.xlane.xlu0 %8929
    %v8931 = vsel %vm934, %v8899, -inf
    %8932 = vmax.xlane.f32.xlu0 %v8931
    %v8933 = vpop.xlane.xlu0 %8932
    %v8934 = vsel %vm934, %v8904, -inf
    %8935 = vmax.xlane.f32.xlu0 %v8934
    %v8936 = vpop.xlane.xlu0 %8935
    %v8937 = vsel %vm934, %v8909, -inf
    %8938 = vmax.xlane.f32.xlu0 %v8937
    %v8939 = vpop.xlane.xlu0 %8938
    %v8940 = vsel %vm934, %v8914, -inf
    %8941 = vmax.xlane.f32.xlu0 %v8940
    %v8942 = vpop.xlane.xlu0 %8941
    %v8943 = vsel %vm934, %v8919, -inf
    %8944 = vmax.xlane.f32.xlu0 %v8943
    %v8945 = vpop.xlane.xlu0 %8944
    %v8946 = vsub.f32 %v8884, %v8924
    %v8947 = vsub.f32 %v8889, %v8927
    %v8948 = vsub.f32 %v8894, %v8930
    %v8949 = vsub.f32 %v8899, %v8933
    %v8950 = vsub.f32 %v8904, %v8936
    %v8951 = vsub.f32 %v8909, %v8939
    %v8952 = vsub.f32 %v8914, %v8942
    %v8953 = vsub.f32 %v8919, %v8945
    %v8954 = vmul.f32 %v8946, 1.442695
    %v8955 = vpow.pop %v8954
    %v8956 = vmul.f32 %v8947, 1.442695
    %v8957 = vpow.pop %v8956
    %v8958 = vmul.f32 %v8948, 1.442695
    %v8959 = vpow.pop %v8958
    %v8960 = vmul.f32 %v8949, 1.442695
    %v8961 = vpow.pop %v8960
    %v8962 = vmul.f32 %v8950, 1.442695
    %v8963 = vpow.pop %v8962
    %v8964 = vmul.f32 %v8951, 1.442695
    %v8965 = vpow.pop %v8964
    %v8966 = vmul.f32 %v8952, 1.442695
    %v8967 = vpow.pop %v8966
    %v8968 = vmul.f32 %v8953, 1.442695
    %v8969 = vpow.pop %v8968
    %v8970 = vsel %vm934, %v8955, 0.0
    %8971 = vadd.xlane.f32.xlu0 %v8970
    %v8972 = vpop.xlane.xlu0 %8971
    %v8973 = vsel %vm934, %v8957, 0.0
    %8974 = vadd.xlane.f32.xlu0 %v8973
    %v8975 = vpop.xlane.xlu0 %8974
    %v8976 = vsel %vm934, %v8959, 0.0
    %8977 = vadd.xlane.f32.xlu0 %v8976
    %v8978 = vpop.xlane.xlu0 %8977
    %v8979 = vsel %vm934, %v8961, 0.0
    %8980 = vadd.xlane.f32.xlu0 %v8979
    %v8981 = vpop.xlane.xlu0 %8980
    %v8982 = vsel %vm934, %v8963, 0.0
    %8983 = vadd.xlane.f32.xlu0 %v8982
    %v8984 = vpop.xlane.xlu0 %8983
    %v8985 = vsel %vm934, %v8965, 0.0
    %8986 = vadd.xlane.f32.xlu0 %v8985
    %v8987 = vpop.xlane.xlu0 %8986
    %v8988 = vsel %vm934, %v8967, 0.0
    %8989 = vadd.xlane.f32.xlu0 %v8988
    %v8990 = vpop.xlane.xlu0 %8989
    %v8991 = vsel %vm934, %v8969, 0.0
    %8992 = vadd.xlane.f32.xlu0 %v8991
    %v8993 = vpop.xlane.xlu0 %8992
    %v8994 = vrcp.pop %v8972
    %v8995 = vrcp.pop %v8975
    %v8996 = vrcp.pop %v8978
    %v8997 = vrcp.pop %v8981
    %v8998 = vrcp.pop %v8984
    %v8999 = vrcp.pop %v8987
    %v9000 = vrcp.pop %v8990
    %v9001 = vrcp.pop %v8993
    %v9002 = vmul.f32 %v8955, %v8994
    %v9003 = vmul.f32 %v8957, %v8995
    %v9004 = vmul.f32 %v8959, %v8996
    %v9005 = vmul.f32 %v8961, %v8997
    %v9006 = vmul.f32 %v8963, %v8998
    %v9007 = vmul.f32 %v8965, %v8999
    %v9008 = vmul.f32 %v8967, %v9000
    %v9009 = vmul.f32 %v8969, %v9001
    %9010 = vrot.lane.b32.xlu0 %v5709, 40
    %v9011 = vpop.permute.xlu0 %9010
    %9012 = vrot.lane.b32.xlu0 %v5714, 40
    %v9013 = vpop.permute.xlu0 %9012
    %9014 = vrot.lane.b32.xlu0 %v5719, 40
    %v9015 = vpop.permute.xlu0 %9014
    %9016 = vrot.lane.b32.xlu0 %v5724, 40
    %v9017 = vpop.permute.xlu0 %9016
    %9018 = vrot.lane.b32.xlu0 %v5729, 40
    %v9019 = vpop.permute.xlu0 %9018
    %9020 = vrot.lane.b32.xlu0 %v5734, 40
    %v9021 = vpop.permute.xlu0 %9020
    %9022 = vrot.lane.b32.xlu0 %v5739, 40
    %v9023 = vpop.permute.xlu0 %9022
    %9024 = vrot.lane.b32.xlu0 %v5744, 40
    %v9025 = vpop.permute.xlu0 %9024
    %v9035 = vsel %vm934, %v9002, 0
    %v9038 = vsel %vm934, %v9003, 0
    %v9041 = vsel %vm934, %v9004, 0
    %v9044 = vsel %vm934, %v9005, 0
    %v9047 = vsel %vm934, %v9006, 0
    %v9050 = vsel %vm934, %v9007, 0
    %v9053 = vsel %vm934, %v9008, 0
    %v9056 = vsel %vm934, %v9009, 0
    %9058 = vmatprep.subr.mxu0 0.0
    %9059 = vmatpush1.msra.mxu0 %v9011
    %9060 = vmatprep.subr.mxu0 0.0
    %9061 = vmatpush1.msra.mxu0 %v9013
    %9062 = vmatprep.subr.mxu0 0.0
    %9063 = vmatpush1.msra.mxu0 %v9015
    %9064 = vmatprep.subr.mxu0 0.0
    %9065 = vmatpush1.msra.mxu0 %v9017
    %9066 = vmatprep.subr.mxu0 0.0
    %9067 = vmatpush1.msra.mxu0 %v9019
    %9068 = vmatprep.subr.mxu0 0.0
    %9069 = vmatpush1.msra.mxu0 %v9021
    %9070 = vmatprep.subr.mxu0 0.0
    %9071 = vmatpush1.msra.mxu0 %v9023
    %9072 = vmatprep.subr.mxu0 0.0
    %9073 = vmatpush1.msra.mxu0 %v9025
    %9074 = vmatprep.subr.mxu0 0.0
    %9075 = vmatpush1.msra.mxu0 0.0
    %9076 = vmatprep.subr.mxu0 0.0
    %9077 = vmatpush1.msra.mxu0 0.0
    %9078 = vmatprep.subr.mxu0 0.0
    %9079 = vmatpush1.msra.mxu0 0.0
    %9080 = vmatprep.subr.mxu0 0.0
    %9081 = vmatpush1.msra.mxu0 0.0
    %9082 = vmatprep.subr.mxu0 0.0
    %9083 = vmatpush1.msra.mxu0 0.0
    %9084 = vmatprep.subr.mxu0 0.0
    %9085 = vmatpush1.msra.mxu0 0.0
    %9086 = vmatprep.subr.mxu0 0.0
    %9087 = vmatpush1.msra.mxu0 0.0
    %9088 = vmatprep.subr.mxu0 0.0
    %9089 = vmatpush1.msra.mxu0 0.0
    %9090 = vmatprep.subr.mxu0 0.0
    %9091 = vmatpush1.msra.mxu0 0.0
    %9092 = vmatprep.subr.mxu0 0.0
    %9093 = vmatpush1.msra.mxu0 0.0
    %9094 = vmatprep.subr.mxu0 0.0
    %9095 = vmatpush1.msra.mxu0 0.0
    %9096 = vmatprep.subr.mxu0 0.0
    %9097 = vmatpush1.msra.mxu0 0.0
    %9098 = vmatprep.subr.mxu0 0.0
    %9099 = vmatpush1.msra.mxu0 0.0
    %9100 = vmatprep.subr.mxu0 0.0
    %9101 = vmatpush1.msra.mxu0 0.0
    %9102 = vmatprep.subr.mxu0 0.0
    %9103 = vmatpush1.msra.mxu0 0.0
    %9104 = vmatprep.subr.mxu0 0.0
    %9105 = vmatpush1.msra.mxu0 0.0
    %9106 = vmatprep.subr.mxu0 0.0
    %9107 = vmatpush1.msra.mxu0 0.0
    %9108 = vmatprep.subr.mxu0 0.0
    %9109 = vmatpush1.msra.mxu0 0.0
    %9110 = vmatprep.subr.mxu0 0.0
    %9111 = vmatpush1.msra.mxu0 0.0
    %9112 = vmatprep.subr.mxu0 0.0
    %9113 = vmatpush1.msra.mxu0 0.0
    %9114 = vmatprep.subr.mxu0 0.0
    %9115 = vmatpush1.msra.mxu0 0.0
    %9116 = vmatprep.subr.mxu0 0.0
    %9117 = vmatpush1.msra.mxu0 0.0
    %9118 = vmatprep.subr.mxu0 0.0
    %9119 = vmatpush1.msra.mxu0 0.0
    %9120 = vmatprep.subr.mxu0 0.0
    %9121 = vmatpush1.msra.mxu0 0.0
    %9122 = vmatprep.mubr.f32.mxu0 0.0
    %9123 = vmatmul.mubr.f32.gmra.mrb[0].mxu0 %v9035
    %v9124 = vpop.f32.mrb[0].mxu0
    %v9125 = vadd.f32 0.0, %v9124
    %v9126 = vpop.f32.mrb[0].mxu0
    %9127 = vmatprep.mubr.f32.mxu0 0.0
    %9128 = vmatmul.mubr.f32.gmra.mrb[0].mxu0 %v9038
    %v9129 = vpop.f32.mrb[0].mxu0
    %v9130 = vadd.f32 0.0, %v9129
    %v9131 = vpop.f32.mrb[0].mxu0
    %9132 = vmatprep.mubr.f32.mxu0 0.0
    %9133 = vmatmul.mubr.f32.gmra.mrb[0].mxu0 %v9041
    %v9134 = vpop.f32.mrb[0].mxu0
    %v9135 = vadd.f32 0.0, %v9134
    %v9136 = vpop.f32.mrb[0].mxu0
    %9137 = vmatprep.mubr.f32.mxu0 0.0
    %9138 = vmatmul.mubr.f32.gmra.mrb[0].mxu0 %v9044
    %v9139 = vpop.f32.mrb[0].mxu0
    %v9140 = vadd.f32 0.0, %v9139
    %v9141 = vpop.f32.mrb[0].mxu0
    %9142 = vmatprep.mubr.f32.mxu0 0.0
    %9143 = vmatmul.mubr.f32.gmra.mrb[0].mxu0 %v9047
    %v9144 = vpop.f32.mrb[0].mxu0
    %v9145 = vadd.f32 0.0, %v9144
    %v9146 = vpop.f32.mrb[0].mxu0
    %9147 = vmatprep.mubr.f32.mxu0 0.0
    %9148 = vmatmul.mubr.f32.gmra.mrb[0].mxu0 %v9050
    %v9149 = vpop.f32.mrb[0].mxu0
    %v9150 = vadd.f32 0.0, %v9149
    %v9151 = vpop.f32.mrb[0].mxu0
    %9152 = vmatprep.mubr.f32.mxu0 0.0
    %9153 = vmatmul.mubr.f32.gmra.mrb[0].mxu0 %v9053
    %v9154 = vpop.f32.mrb[0].mxu0
    %v9155 = vadd.f32 0.0, %v9154
    %v9156 = vpop.f32.mrb[0].mxu0
    %9157 = vmatprep.mubr.f32.mxu0 0.0
    %9158 = vmatmul.mubr.f32.gmra.mrb[0].mxu0 %v9056
    %v9159 = vpop.f32.mrb[0].mxu0
    %v9160 = vadd.f32 0.0, %v9159
    %v9161 = vpop.f32.mrb[0].mxu0
    %9162 = vdwg.mxu0
    %9171 = vrot.lane.b32.xlu0 %v8305, 8
    %v9172 = vpop.permute.xlu0 %9171
    %9173 = vrot.lane.b32.xlu0 %v8310, 8
    %v9174 = vpop.permute.xlu0 %9173
    %9175 = vrot.lane.b32.xlu0 %v8315, 8
    %v9176 = vpop.permute.xlu0 %9175
    %9177 = vrot.lane.b32.xlu0 %v8320, 8
    %v9178 = vpop.permute.xlu0 %9177
    %9179 = vrot.lane.b32.xlu0 %v8325, 8
    %v9180 = vpop.permute.xlu0 %9179
    %9181 = vrot.lane.b32.xlu0 %v8330, 8
    %v9182 = vpop.permute.xlu0 %9181
    %9183 = vrot.lane.b32.xlu0 %v8335, 8
    %v9184 = vpop.permute.xlu0 %9183
    %9185 = vrot.lane.b32.xlu0 %v8340, 8
    %v9186 = vpop.permute.xlu0 %9185
    %9203 = vrot.lane.b32.xlu0 %v8715, 16
    %v9204 = vpop.permute.xlu0 %9203
    %9205 = vrot.lane.b32.xlu0 %v8720, 16
    %v9206 = vpop.permute.xlu0 %9205
    %9207 = vrot.lane.b32.xlu0 %v8725, 16
    %v9208 = vpop.permute.xlu0 %9207
    %9209 = vrot.lane.b32.xlu0 %v8730, 16
    %v9210 = vpop.permute.xlu0 %9209
    %9211 = vrot.lane.b32.xlu0 %v8735, 16
    %v9212 = vpop.permute.xlu0 %9211
    %9213 = vrot.lane.b32.xlu0 %v8740, 16
    %v9214 = vpop.permute.xlu0 %9213
    %9215 = vrot.lane.b32.xlu0 %v8745, 16
    %v9216 = vpop.permute.xlu0 %9215
    %9217 = vrot.lane.b32.xlu0 %v8750, 16
    %v9218 = vpop.permute.xlu0 %9217
    %9235 = vrot.lane.b32.xlu0 %v9125, 24
    %v9236 = vpop.permute.xlu0 %9235
    %9237 = vrot.lane.b32.xlu0 %v9130, 24
    %v9238 = vpop.permute.xlu0 %9237
    %9239 = vrot.lane.b32.xlu0 %v9135, 24
    %v9240 = vpop.permute.xlu0 %9239
    %9241 = vrot.lane.b32.xlu0 %v9140, 24
    %v9242 = vpop.permute.xlu0 %9241
    %9243 = vrot.lane.b32.xlu0 %v9145, 24
    %v9244 = vpop.permute.xlu0 %9243
    %9245 = vrot.lane.b32.xlu0 %v9150, 24
    %v9246 = vpop.permute.xlu0 %9245
    %9247 = vrot.lane.b32.xlu0 %v9155, 24
    %v9248 = vpop.permute.xlu0 %9247
    %9249 = vrot.lane.b32.xlu0 %v9160, 24
    %v9250 = vpop.permute.xlu0 %9249
    %v9259 = vsel %vm51, %v7895, %v9172
    %v9260 = vsel %vm51, %v7900, %v9174
    %v9261 = vsel %vm51, %v7905, %v9176
    %v9262 = vsel %vm51, %v7910, %v9178
    %v9263 = vsel %vm51, %v7915, %v9180
    %v9264 = vsel %vm51, %v7920, %v9182
    %v9265 = vsel %vm51, %v7925, %v9184
    %v9266 = vsel %vm51, %v7930, %v9186
    %v9267 = vsel %vm2510, %v9259, %v9204
    %v9268 = vsel %vm2510, %v9260, %v9206
    %v9269 = vsel %vm2510, %v9261, %v9208
    %v9270 = vsel %vm2510, %v9262, %v9210
    %v9271 = vsel %vm2510, %v9263, %v9212
    %v9272 = vsel %vm2510, %v9264, %v9214
    %v9273 = vsel %vm2510, %v9265, %v9216
    %v9274 = vsel %vm2510, %v9266, %v9218
    %v9275 = vsel %vm2519, %v9267, %v9236
    %v9276 = vsel %vm2519, %v9268, %v9238
    %v9277 = vsel %vm2519, %v9269, %v9240
    %v9278 = vsel %vm2519, %v9270, %v9242
    %v9279 = vsel %vm2519, %v9271, %v9244
    %v9280 = vsel %vm2519, %v9272, %v9246
    %v9281 = vsel %vm2519, %v9273, %v9248
    %v9282 = vsel %vm2519, %v9274, %v9250
    %9287 = vrot.lane.b32.xlu0 %v5519, 32
    %v9288 = vpop.permute.xlu0 %9287
    %9289 = vrot.lane.b32.xlu0 %v5520, 32
    %v9290 = vpop.permute.xlu0 %9289
    %9291 = vrot.lane.b32.xlu0 %v5521, 32
    %v9292 = vpop.permute.xlu0 %9291
    %9293 = vrot.lane.b32.xlu0 %v5522, 32
    %v9294 = vpop.permute.xlu0 %9293
    %9300 = vrot.lane.b32.xlu0 %v5553, 32
    %v9301 = vpop.permute.xlu0 %9300
    %v9304 = vsel %vm271, %v7515, 0
    %v9307 = vsel %vm271, %v7516, 0
    %v9310 = vsel %vm271, %v7517, 0
    %v9313 = vsel %vm271, %v7518, 0
    %v9316 = vsel %vm271, %v7519, 0
    %v9319 = vsel %vm271, %v7520, 0
    %v9322 = vsel %vm271, %v7521, 0
    %v9325 = vsel %vm271, %v7522, 0
    %v9328 = vsel %vm271, %v9275, 0
    %v9331 = vsel %vm271, %v9276, 0
    %v9334 = vsel %vm271, %v9277, 0
    %v9337 = vsel %vm271, %v9278, 0
    %v9340 = vsel %vm271, %v9279, 0
    %v9343 = vsel %vm271, %v9280, 0
    %v9346 = vsel %vm271, %v9281, 0
    %v9349 = vsel %vm271, %v9282, 0
    %9351 = vmatprep.subr.mxu0 0.0
    %9352 = vmatpush1.msra.mxu0 %v9288
    %9353 = vmatprep.subr.mxu0 0.0
    %9354 = vmatpush1.msra.mxu0 %v9290
    %9355 = vmatprep.subr.mxu0 0.0
    %9356 = vmatpush1.msra.mxu0 %v9292
    %9357 = vmatprep.subr.mxu0 0.0
    %9358 = vmatpush1.msra.mxu0 %v9294
    %9359 = vmatprep.subr.mxu0 0.0
    %9360 = vmatpush1.msra.mxu0 0.0
    %9361 = vmatprep.subr.mxu0 0.0
    %9362 = vmatpush1.msra.mxu0 0.0
    %9363 = vmatprep.subr.mxu0 0.0
    %9364 = vmatpush1.msra.mxu0 0.0
    %9365 = vmatprep.subr.mxu0 0.0
    %9366 = vmatpush1.msra.mxu0 0.0
    %9367 = vmatprep.subr.mxu0 0.0
    %9368 = vmatpush1.msra.mxu0 0.0
    %9369 = vmatprep.subr.mxu0 0.0
    %9370 = vmatpush1.msra.mxu0 0.0
    %9371 = vmatprep.subr.mxu0 0.0
    %9372 = vmatpush1.msra.mxu0 0.0
    %9373 = vmatprep.subr.mxu0 0.0
    %9374 = vmatpush1.msra.mxu0 0.0
    %9375 = vmatprep.subr.mxu0 0.0
    %9376 = vmatpush1.msra.mxu0 0.0
    %9377 = vmatprep.subr.mxu0 0.0
    %9378 = vmatpush1.msra.mxu0 0.0
    %9379 = vmatprep.subr.mxu0 0.0
    %9380 = vmatpush1.msra.mxu0 0.0
    %9381 = vmatprep.subr.mxu0 0.0
    %9382 = vmatpush1.msra.mxu0 0.0
    %9383 = vmatprep.subr.mxu0 0.0
    %9384 = vmatpush1.msra.mxu0 0.0
    %9385 = vmatprep.subr.mxu0 0.0
    %9386 = vmatpush1.msra.mxu0 0.0
    %9387 = vmatprep.subr.mxu0 0.0
    %9388 = vmatpush1.msra.mxu0 0.0
    %9389 = vmatprep.subr.mxu0 0.0
    %9390 = vmatpush1.msra.mxu0 0.0
    %9391 = vmatprep.subr.mxu0 0.0
    %9392 = vmatpush1.msra.mxu0 0.0
    %9393 = vmatprep.subr.mxu0 0.0
    %9394 = vmatpush1.msra.mxu0 0.0
    %9395 = vmatprep.subr.mxu0 0.0
    %9396 = vmatpush1.msra.mxu0 0.0
    %9397 = vmatprep.subr.mxu0 0.0
    %9398 = vmatpush1.msra.mxu0 0.0
    %9399 = vmatprep.subr.mxu0 0.0
    %9400 = vmatpush1.msra.mxu0 0.0
    %9401 = vmatprep.subr.mxu0 0.0
    %9402 = vmatpush1.msra.mxu0 0.0
    %9403 = vmatprep.subr.mxu0 0.0
    %9404 = vmatpush1.msra.mxu0 0.0
    %9405 = vmatprep.subr.mxu0 0.0
    %9406 = vmatpush1.msra.mxu0 0.0
    %9407 = vmatprep.subr.mxu0 0.0
    %9408 = vmatpush1.msra.mxu0 0.0
    %9409 = vmatprep.subr.mxu0 0.0
    %9410 = vmatpush1.msra.mxu0 0.0
    %9411 = vmatprep.subr.mxu0 0.0
    %9412 = vmatpush1.msra.mxu0 0.0
    %9413 = vmatprep.subr.mxu0 0.0
    %9414 = vmatpush1.msra.mxu0 0.0
    %9415 = vmatprep.mubr.f32.mxu0 0.0
    %9416 = vmatmul.mubr.f32.gmra.mrb[0].mxu0 %v9304
    %v9417 = vpop.f32.mrb[0].mxu0
    %v9418 = vadd.f32 %v9301, %v9417
    %v9419 = vpop.f32.mrb[0].mxu0
    %9420 = vmatprep.mubr.f32.mxu0 0.0
    %9421 = vmatmul.mubr.f32.gmra.mrb[0].mxu0 %v9307
    %v9422 = vpop.f32.mrb[0].mxu0
    %v9423 = vadd.f32 %v9301, %v9422
    %v9424 = vpop.f32.mrb[0].mxu0
    %9425 = vmatprep.mubr.f32.mxu0 0.0
    %9426 = vmatmul.mubr.f32.gmra.mrb[0].mxu0 %v9310
    %v9427 = vpop.f32.mrb[0].mxu0
    %v9428 = vadd.f32 %v9301, %v9427
    %v9429 = vpop.f32.mrb[0].mxu0
    %9430 = vmatprep.mubr.f32.mxu0 0.0
    %9431 = vmatmul.mubr.f32.gmra.mrb[0].mxu0 %v9313
    %v9432 = vpop.f32.mrb[0].mxu0
    %v9433 = vadd.f32 %v9301, %v9432
    %v9434 = vpop.f32.mrb[0].mxu0
    %9435 = vmatprep.mubr.f32.mxu0 0.0
    %9436 = vmatmul.mubr.f32.gmra.mrb[0].mxu0 %v9316
    %v9437 = vpop.f32.mrb[0].mxu0
    %v9438 = vadd.f32 %v9301, %v9437
    %v9439 = vpop.f32.mrb[0].mxu0
    %9440 = vmatprep.mubr.f32.mxu0 0.0
    %9441 = vmatmul.mubr.f32.gmra.mrb[0].mxu0 %v9319
    %v9442 = vpop.f32.mrb[0].mxu0
    %v9443 = vadd.f32 %v9301, %v9442
    %v9444 = vpop.f32.mrb[0].mxu0
    %9445 = vmatprep.mubr.f32.mxu0 0.0
    %9446 = vmatmul.mubr.f32.gmra.mrb[0].mxu0 %v9322
    %v9447 = vpop.f32.mrb[0].mxu0
    %v9448 = vadd.f32 %v9301, %v9447
    %v9449 = vpop.f32.mrb[0].mxu0
    %9450 = vmatprep.mubr.f32.mxu0 0.0
    %9451 = vmatmul.mubr.f32.gmra.mrb[0].mxu0 %v9325
    %v9452 = vpop.f32.mrb[0].mxu0
    %v9453 = vadd.f32 %v9301, %v9452
    %v9454 = vpop.f32.mrb[0].mxu0
    %9455 = vmatprep.mubr.f32.mxu0 0.0
    %9456 = vmatmul.mubr.f32.gmra.mrb[0].mxu0 %v9328
    %v9457 = vpop.f32.mrb[0].mxu0
    %v9458 = vadd.f32 %v9301, %v9457
    %v9459 = vpop.f32.mrb[0].mxu0
    %9460 = vmatprep.mubr.f32.mxu0 0.0
    %9461 = vmatmul.mubr.f32.gmra.mrb[0].mxu0 %v9331
    %v9462 = vpop.f32.mrb[0].mxu0
    %v9463 = vadd.f32 %v9301, %v9462
    %v9464 = vpop.f32.mrb[0].mxu0
    %9465 = vmatprep.mubr.f32.mxu0 0.0
    %9466 = vmatmul.mubr.f32.gmra.mrb[0].mxu0 %v9334
    %v9467 = vpop.f32.mrb[0].mxu0
    %v9468 = vadd.f32 %v9301, %v9467
    %v9469 = vpop.f32.mrb[0].mxu0
    %9470 = vmatprep.mubr.f32.mxu0 0.0
    %9471 = vmatmul.mubr.f32.gmra.mrb[0].mxu0 %v9337
    %v9472 = vpop.f32.mrb[0].mxu0
    %v9473 = vadd.f32 %v9301, %v9472
    %v9474 = vpop.f32.mrb[0].mxu0
    %9475 = vmatprep.mubr.f32.mxu0 0.0
    %9476 = vmatmul.mubr.f32.gmra.mrb[0].mxu0 %v9340
    %v9477 = vpop.f32.mrb[0].mxu0
    %v9478 = vadd.f32 %v9301, %v9477
    %v9479 = vpop.f32.mrb[0].mxu0
    %9480 = vmatprep.mubr.f32.mxu0 0.0
    %9481 = vmatmul.mubr.f32.gmra.mrb[0].mxu0 %v9343
    %v9482 = vpop.f32.mrb[0].mxu0
    %v9483 = vadd.f32 %v9301, %v9482
    %v9484 = vpop.f32.mrb[0].mxu0
    %9485 = vmatprep.mubr.f32.mxu0 0.0
    %9486 = vmatmul.mubr.f32.gmra.mrb[0].mxu0 %v9346
    %v9487 = vpop.f32.mrb[0].mxu0
    %v9488 = vadd.f32 %v9301, %v9487
    %v9489 = vpop.f32.mrb[0].mxu0
    %9490 = vmatprep.mubr.f32.mxu0 0.0
    %9491 = vmatmul.mubr.f32.gmra.mrb[0].mxu0 %v9349
    %v9492 = vpop.f32.mrb[0].mxu0
    %v9493 = vadd.f32 %v9301, %v9492
    %v9494 = vpop.f32.mrb[0].mxu0
    %9495 = vdwg.mxu0
    %v9496 = vadd.f32 %v5503, %v9418
    %v9497 = vadd.f32 %v5504, %v9423
    %v9498 = vadd.f32 %v5505, %v9428
    %v9499 = vadd.f32 %v5506, %v9433
    %v9500 = vadd.f32 %v5507, %v9438
    %v9501 = vadd.f32 %v5508, %v9443
    %v9502 = vadd.f32 %v5509, %v9448
    %v9503 = vadd.f32 %v5510, %v9453
    %v9504 = vadd.f32 %v5511, %v9458
    %v9505 = vadd.f32 %v5512, %v9463
    %v9506 = vadd.f32 %v5513, %v9468
    %v9507 = vadd.f32 %v5514, %v9473
    %v9508 = vadd.f32 %v5515, %v9478
    %v9509 = vadd.f32 %v5516, %v9483
    %v9510 = vadd.f32 %v5517, %v9488
    %v9511 = vadd.f32 %v5518, %v9493
    %v9512 = vsel %vm271, %v9496, 0.0
    %9513 = vadd.xlane.f32.xlu0 %v9512
    %v9514 = vpop.xlane.xlu0 %9513
    %v9515 = vsel %vm271, %v9497, 0.0
    %9516 = vadd.xlane.f32.xlu0 %v9515
    %v9517 = vpop.xlane.xlu0 %9516
    %v9518 = vsel %vm271, %v9498, 0.0
    %9519 = vadd.xlane.f32.xlu0 %v9518
    %v9520 = vpop.xlane.xlu0 %9519
    %v9521 = vsel %vm271, %v9499, 0.0
    %9522 = vadd.xlane.f32.xlu0 %v9521
    %v9523 = vpop.xlane.xlu0 %9522
    %v9524 = vsel %vm271, %v9500, 0.0
    %9525 = vadd.xlane.f32.xlu0 %v9524
    %v9526 = vpop.xlane.xlu0 %9525
    %v9527 = vsel %vm271, %v9501, 0.0
    %9528 = vadd.xlane.f32.xlu0 %v9527
    %v9529 = vpop.xlane.xlu0 %9528
    %v9530 = vsel %vm271, %v9502, 0.0
    %9531 = vadd.xlane.f32.xlu0 %v9530
    %v9532 = vpop.xlane.xlu0 %9531
    %v9533 = vsel %vm271, %v9503, 0.0
    %9534 = vadd.xlane.f32.xlu0 %v9533
    %v9535 = vpop.xlane.xlu0 %9534
    %v9536 = vsel %vm271, %v9504, 0.0
    %9537 = vadd.xlane.f32.xlu0 %v9536
    %v9538 = vpop.xlane.xlu0 %9537
    %v9539 = vsel %vm271, %v9505, 0.0
    %9540 = vadd.xlane.f32.xlu0 %v9539
    %v9541 = vpop.xlane.xlu0 %9540
    %v9542 = vsel %vm271, %v9506, 0.0
    %9543 = vadd.xlane.f32.xlu0 %v9542
    %v9544 = vpop.xlane.xlu0 %9543
    %v9545 = vsel %vm271, %v9507, 0.0
    %9546 = vadd.xlane.f32.xlu0 %v9545
    %v9547 = vpop.xlane.xlu0 %9546
    %v9548 = vsel %vm271, %v9508, 0.0
    %9549 = vadd.xlane.f32.xlu0 %v9548
    %v9550 = vpop.xlane.xlu0 %9549
    %v9551 = vsel %vm271, %v9509, 0.0
    %9552 = vadd.xlane.f32.xlu0 %v9551
    %v9553 = vpop.xlane.xlu0 %9552
    %v9554 = vsel %vm271, %v9510, 0.0
    %9555 = vadd.xlane.f32.xlu0 %v9554
    %v9556 = vpop.xlane.xlu0 %9555
    %v9557 = vsel %vm271, %v9511, 0.0
    %9558 = vadd.xlane.f32.xlu0 %v9557
    %v9559 = vpop.xlane.xlu0 %9558
    %v9560 = vmul.f32 %v9514, %v320
    %v9561 = vmul.f32 %v9517, %v320
    %v9562 = vmul.f32 %v9520, %v320
    %v9563 = vmul.f32 %v9523, %v320
    %v9564 = vmul.f32 %v9526, %v320
    %v9565 = vmul.f32 %v9529, %v320
    %v9566 = vmul.f32 %v9532, %v320
    %v9567 = vmul.f32 %v9535, %v320
    %v9568 = vmul.f32 %v9538, %v320
    %v9569 = vmul.f32 %v9541, %v320
    %v9570 = vmul.f32 %v9544, %v320
    %v9571 = vmul.f32 %v9547, %v320
    %v9572 = vmul.f32 %v9550, %v320
    %v9573 = vmul.f32 %v9553, %v320
    %v9574 = vmul.f32 %v9556, %v320
    %v9575 = vmul.f32 %v9559, %v320
    %v9576 = vsub.f32 %v9496, %v9560
    %v9577 = vsub.f32 %v9497, %v9561
    %v9578 = vsub.f32 %v9498, %v9562
    %v9579 = vsub.f32 %v9499, %v9563
    %v9580 = vsub.f32 %v9500, %v9564
    %v9581 = vsub.f32 %v9501, %v9565
    %v9582 = vsub.f32 %v9502, %v9566
    %v9583 = vsub.f32 %v9503, %v9567
    %v9584 = vsub.f32 %v9504, %v9568
    %v9585 = vsub.f32 %v9505, %v9569
    %v9586 = vsub.f32 %v9506, %v9570
    %v9587 = vsub.f32 %v9507, %v9571
    %v9588 = vsub.f32 %v9508, %v9572
    %v9589 = vsub.f32 %v9509, %v9573
    %v9590 = vsub.f32 %v9510, %v9574
    %v9591 = vsub.f32 %v9511, %v9575
    %v9592 = vmul.f32 %v9576, %v9576
    %v9593 = vmul.f32 %v9577, %v9577
    %v9594 = vmul.f32 %v9578, %v9578
    %v9595 = vmul.f32 %v9579, %v9579
    %v9596 = vmul.f32 %v9580, %v9580
    %v9597 = vmul.f32 %v9581, %v9581
    %v9598 = vmul.f32 %v9582, %v9582
    %v9599 = vmul.f32 %v9583, %v9583
    %v9600 = vmul.f32 %v9584, %v9584
    %v9601 = vmul.f32 %v9585, %v9585
    %v9602 = vmul.f32 %v9586, %v9586
    %v9603 = vmul.f32 %v9587, %v9587
    %v9604 = vmul.f32 %v9588, %v9588
    %v9605 = vmul.f32 %v9589, %v9589
    %v9606 = vmul.f32 %v9590, %v9590
    %v9607 = vmul.f32 %v9591, %v9591
    %v9608 = vsel %vm271, %v9592, 0.0
    %9609 = vadd.xlane.f32.xlu0 %v9608
    %v9610 = vpop.xlane.xlu0 %9609
    %v9611 = vsel %vm271, %v9593, 0.0
    %9612 = vadd.xlane.f32.xlu0 %v9611
    %v9613 = vpop.xlane.xlu0 %9612
    %v9614 = vsel %vm271, %v9594, 0.0
    %9615 = vadd.xlane.f32.xlu0 %v9614
    %v9616 = vpop.xlane.xlu0 %9615
    %v9617 = vsel %vm271, %v9595, 0.0
    %9618 = vadd.xlane.f32.xlu0 %v9617
    %v9619 = vpop.xlane.xlu0 %9618
    %v9620 = vsel %vm271, %v9596, 0.0
    %9621 = vadd.xlane.f32.xlu0 %v9620
    %v9622 = vpop.xlane.xlu0 %9621
    %v9623 = vsel %vm271, %v9597, 0.0
    %9624 = vadd.xlane.f32.xlu0 %v9623
    %v9625 = vpop.xlane.xlu0 %9624
    %v9626 = vsel %vm271, %v9598, 0.0
    %9627 = vadd.xlane.f32.xlu0 %v9626
    %v9628 = vpop.xlane.xlu0 %9627
    %v9629 = vsel %vm271, %v9599, 0.0
    %9630 = vadd.xlane.f32.xlu0 %v9629
    %v9631 = vpop.xlane.xlu0 %9630
    %v9632 = vsel %vm271, %v9600, 0.0
    %9633 = vadd.xlane.f32.xlu0 %v9632
    %v9634 = vpop.xlane.xlu0 %9633
    %v9635 = vsel %vm271, %v9601, 0.0
    %9636 = vadd.xlane.f32.xlu0 %v9635
    %v9637 = vpop.xlane.xlu0 %9636
    %v9638 = vsel %vm271, %v9602, 0.0
    %9639 = vadd.xlane.f32.xlu0 %v9638
    %v9640 = vpop.xlane.xlu0 %9639
    %v9641 = vsel %vm271, %v9603, 0.0
    %9642 = vadd.xlane.f32.xlu0 %v9641
    %v9643 = vpop.xlane.xlu0 %9642
    %v9644 = vsel %vm271, %v9604, 0.0
    %9645 = vadd.xlane.f32.xlu0 %v9644
    %v9646 = vpop.xlane.xlu0 %9645
    %v9647 = vsel %vm271, %v9605, 0.0
    %9648 = vadd.xlane.f32.xlu0 %v9647
    %v9649 = vpop.xlane.xlu0 %9648
    %v9650 = vsel %vm271, %v9606, 0.0
    %9651 = vadd.xlane.f32.xlu0 %v9650
    %v9652 = vpop.xlane.xlu0 %9651
    %v9653 = vsel %vm271, %v9607, 0.0
    %9654 = vadd.xlane.f32.xlu0 %v9653
    %v9655 = vpop.xlane.xlu0 %9654
    %v9656 = vmul.f32 %v9610, %v320
    %v9657 = vmul.f32 %v9613, %v320
    %v9658 = vmul.f32 %v9616, %v320
    %v9659 = vmul.f32 %v9619, %v320
    %v9660 = vmul.f32 %v9622, %v320
    %v9661 = vmul.f32 %v9625, %v320
    %v9662 = vmul.f32 %v9628, %v320
    %v9663 = vmul.f32 %v9631, %v320
    %v9664 = vmul.f32 %v9634, %v320
    %v9665 = vmul.f32 %v9637, %v320
    %v9666 = vmul.f32 %v9640, %v320
    %v9667 = vmul.f32 %v9643, %v320
    %v9668 = vmul.f32 %v9646, %v320
    %v9669 = vmul.f32 %v9649, %v320
    %v9670 = vmul.f32 %v9652, %v320
    %v9671 = vmul.f32 %v9655, %v320
    %v9672 = vadd.f32 %v9656, 1e-12
    %v9673 = vadd.f32 %v9657, 1e-12
    %v9674 = vadd.f32 %v9658, 1e-12
    %v9675 = vadd.f32 %v9659, 1e-12
    %v9676 = vadd.f32 %v9660, 1e-12
    %v9677 = vadd.f32 %v9661, 1e-12
    %v9678 = vadd.f32 %v9662, 1e-12
    %v9679 = vadd.f32 %v9663, 1e-12
    %v9680 = vadd.f32 %v9664, 1e-12
    %v9681 = vadd.f32 %v9665, 1e-12
    %v9682 = vadd.f32 %v9666, 1e-12
    %v9683 = vadd.f32 %v9667, 1e-12
    %v9684 = vadd.f32 %v9668, 1e-12
    %v9685 = vadd.f32 %v9669, 1e-12
    %v9686 = vadd.f32 %v9670, 1e-12
    %v9687 = vadd.f32 %v9671, 1e-12
    %v9688 = vrsqrt.pop %v9672
    %v9689 = vrsqrt.pop %v9673
    %v9690 = vrsqrt.pop %v9674
    %v9691 = vrsqrt.pop %v9675
    %v9692 = vrsqrt.pop %v9676
    %v9693 = vrsqrt.pop %v9677
    %v9694 = vrsqrt.pop %v9678
    %v9695 = vrsqrt.pop %v9679
    %v9696 = vrsqrt.pop %v9680
    %v9697 = vrsqrt.pop %v9681
    %v9698 = vrsqrt.pop %v9682
    %v9699 = vrsqrt.pop %v9683
    %v9700 = vrsqrt.pop %v9684
    %v9701 = vrsqrt.pop %v9685
    %v9702 = vrsqrt.pop %v9686
    %v9703 = vrsqrt.pop %v9687
    %v9704 = vmul.f32 %v9576, %v9688
    %v9705 = vmul.f32 %v9577, %v9689
    %v9706 = vmul.f32 %v9578, %v9690
    %v9707 = vmul.f32 %v9579, %v9691
    %v9708 = vmul.f32 %v9580, %v9692
    %v9709 = vmul.f32 %v9581, %v9693
    %v9710 = vmul.f32 %v9582, %v9694
    %v9711 = vmul.f32 %v9583, %v9695
    %v9712 = vmul.f32 %v9584, %v9696
    %v9713 = vmul.f32 %v9585, %v9697
    %v9714 = vmul.f32 %v9586, %v9698
    %v9715 = vmul.f32 %v9587, %v9699
    %v9716 = vmul.f32 %v9588, %v9700
    %v9717 = vmul.f32 %v9589, %v9701
    %v9718 = vmul.f32 %v9590, %v9702
    %v9719 = vmul.f32 %v9591, %v9703
    %v9720 = vlaneseq
    %v9721 = vshrl.u32 %v9720, 7
    %v9722 = vsub.s32 0, %v9721
    %v9723 = vrot.slane %v5544, %v9722
    %v9724 = vmul.f32 %v9704, %v9723
    %v9725 = vmul.f32 %v9705, %v9723
    %v9726 = vmul.f32 %v9706, %v9723
    %v9727 = vmul.f32 %v9707, %v9723
    %v9728 = vmul.f32 %v9708, %v9723
    %v9729 = vmul.f32 %v9709, %v9723
    %v9730 = vmul.f32 %v9710, %v9723
    %v9731 = vmul.f32 %v9711, %v9723
    %v9732 = vmul.f32 %v9712, %v9723
    %v9733 = vmul.f32 %v9713, %v9723
    %v9734 = vmul.f32 %v9714, %v9723
    %v9735 = vmul.f32 %v9715, %v9723
    %v9736 = vmul.f32 %v9716, %v9723
    %v9737 = vmul.f32 %v9717, %v9723
    %v9738 = vmul.f32 %v9718, %v9723
    %v9739 = vmul.f32 %v9719, %v9723
    %v9740 = vlaneseq
    %v9741 = vshrl.u32 %v9740, 7
    %v9742 = vsub.s32 0, %v9741
    %v9743 = vrot.slane %v5545, %v9742
    %v9744 = vadd.f32 %v9724, %v9743
    %v9745 = vadd.f32 %v9725, %v9743
    %v9746 = vadd.f32 %v9726, %v9743
    %v9747 = vadd.f32 %v9727, %v9743
    %v9748 = vadd.f32 %v9728, %v9743
    %v9749 = vadd.f32 %v9729, %v9743
    %v9750 = vadd.f32 %v9730, %v9743
    %v9751 = vadd.f32 %v9731, %v9743
    %v9752 = vadd.f32 %v9732, %v9743
    %v9753 = vadd.f32 %v9733, %v9743
    %v9754 = vadd.f32 %v9734, %v9743
    %v9755 = vadd.f32 %v9735, %v9743
    %v9756 = vadd.f32 %v9736, %v9743
    %v9757 = vadd.f32 %v9737, %v9743
    %v9758 = vadd.f32 %v9738, %v9743
    %v9759 = vadd.f32 %v9739, %v9743
    %v9760 = vlaneseq
    %v9761 = vshrl.u32 %v9760, 7
    %v9762 = vsub.s32 0, %v9761
    %v9763 = vrot.slane %v5546, %v9762
    %v9765 = vsel %vm271, %v9744, 0
    %v9768 = vsel %vm271, %v9745, 0
    %v9771 = vsel %vm271, %v9746, 0
    %v9774 = vsel %vm271, %v9747, 0
    %v9777 = vsel %vm271, %v9748, 0
    %v9780 = vsel %vm271, %v9749, 0
    %v9783 = vsel %vm271, %v9750, 0
    %v9786 = vsel %vm271, %v9751, 0
    %v9789 = vsel %vm271, %v9752, 0
    %v9792 = vsel %vm271, %v9753, 0
    %v9795 = vsel %vm271, %v9754, 0
    %v9798 = vsel %vm271, %v9755, 0
    %v9801 = vsel %vm271, %v9756, 0
    %v9804 = vsel %vm271, %v9757, 0
    %v9807 = vsel %vm271, %v9758, 0
    %v9810 = vsel %vm271, %v9759, 0
    %9812 = vmatprep.subr.mxu0 0.0
    %9813 = vmatpush1.msra.mxu0 %v5523
    %9814 = vmatprep.subr.mxu0 0.0
    %9815 = vmatpush1.msra.mxu0 %v5524
    %9816 = vmatprep.subr.mxu0 0.0
    %9817 = vmatpush1.msra.mxu0 %v5525
    %9818 = vmatprep.subr.mxu0 0.0
    %9819 = vmatpush1.msra.mxu0 %v5526
    %9820 = vmatprep.subr.mxu0 0.0
    %9821 = vmatpush1.msra.mxu0 0.0
    %9822 = vmatprep.subr.mxu0 0.0
    %9823 = vmatpush1.msra.mxu0 0.0
    %9824 = vmatprep.subr.mxu0 0.0
    %9825 = vmatpush1.msra.mxu0 0.0
    %9826 = vmatprep.subr.mxu0 0.0
    %9827 = vmatpush1.msra.mxu0 0.0
    %9828 = vmatprep.subr.mxu0 0.0
    %9829 = vmatpush1.msra.mxu0 0.0
    %9830 = vmatprep.subr.mxu0 0.0
    %9831 = vmatpush1.msra.mxu0 0.0
    %9832 = vmatprep.subr.mxu0 0.0
    %9833 = vmatpush1.msra.mxu0 0.0
    %9834 = vmatprep.subr.mxu0 0.0
    %9835 = vmatpush1.msra.mxu0 0.0
    %9836 = vmatprep.subr.mxu0 0.0
    %9837 = vmatpush1.msra.mxu0 0.0
    %9838 = vmatprep.subr.mxu0 0.0
    %9839 = vmatpush1.msra.mxu0 0.0
    %9840 = vmatprep.subr.mxu0 0.0
    %9841 = vmatpush1.msra.mxu0 0.0
    %9842 = vmatprep.subr.mxu0 0.0
    %9843 = vmatpush1.msra.mxu0 0.0
    %9844 = vmatprep.subr.mxu0 0.0
    %9845 = vmatpush1.msra.mxu0 0.0
    %9846 = vmatprep.subr.mxu0 0.0
    %9847 = vmatpush1.msra.mxu0 0.0
    %9848 = vmatprep.subr.mxu0 0.0
    %9849 = vmatpush1.msra.mxu0 0.0
    %9850 = vmatprep.subr.mxu0 0.0
    %9851 = vmatpush1.msra.mxu0 0.0
    %9852 = vmatprep.subr.mxu0 0.0
    %9853 = vmatpush1.msra.mxu0 0.0
    %9854 = vmatprep.subr.mxu0 0.0
    %9855 = vmatpush1.msra.mxu0 0.0
    %9856 = vmatprep.subr.mxu0 0.0
    %9857 = vmatpush1.msra.mxu0 0.0
    %9858 = vmatprep.subr.mxu0 0.0
    %9859 = vmatpush1.msra.mxu0 0.0
    %9860 = vmatprep.subr.mxu0 0.0
    %9861 = vmatpush1.msra.mxu0 0.0
    %9862 = vmatprep.subr.mxu0 0.0
    %9863 = vmatpush1.msra.mxu0 0.0
    %9864 = vmatprep.subr.mxu0 0.0
    %9865 = vmatpush1.msra.mxu0 0.0
    %9866 = vmatprep.subr.mxu0 0.0
    %9867 = vmatpush1.msra.mxu0 0.0
    %9868 = vmatprep.subr.mxu0 0.0
    %9869 = vmatpush1.msra.mxu0 0.0
    %9870 = vmatprep.subr.mxu0 0.0
    %9871 = vmatpush1.msra.mxu0 0.0
    %9872 = vmatprep.subr.mxu0 0.0
    %9873 = vmatpush1.msra.mxu0 0.0
    %9874 = vmatprep.subr.mxu0 0.0
    %9875 = vmatpush1.msra.mxu0 0.0
    %9876 = vmatprep.mubr.f32.mxu0 0.0
    %9877 = vmatmul.mubr.f32.gmra.mrb[0].mxu0 %v9765
    %v9878 = vpop.f32.mrb[0].mxu0
    %v9879 = vadd.f32 %v9763, %v9878
    %v9880 = vpop.f32.mrb[0].mxu0
    %9881 = vmatprep.mubr.f32.mxu0 0.0
    %9882 = vmatmul.mubr.f32.gmra.mrb[0].mxu0 %v9768
    %v9883 = vpop.f32.mrb[0].mxu0
    %v9884 = vadd.f32 %v9763, %v9883
    %v9885 = vpop.f32.mrb[0].mxu0
    %9886 = vmatprep.mubr.f32.mxu0 0.0
    %9887 = vmatmul.mubr.f32.gmra.mrb[0].mxu0 %v9771
    %v9888 = vpop.f32.mrb[0].mxu0
    %v9889 = vadd.f32 %v9763, %v9888
    %v9890 = vpop.f32.mrb[0].mxu0
    %9891 = vmatprep.mubr.f32.mxu0 0.0
    %9892 = vmatmul.mubr.f32.gmra.mrb[0].mxu0 %v9774
    %v9893 = vpop.f32.mrb[0].mxu0
    %v9894 = vadd.f32 %v9763, %v9893
    %v9895 = vpop.f32.mrb[0].mxu0
    %9896 = vmatprep.mubr.f32.mxu0 0.0
    %9897 = vmatmul.mubr.f32.gmra.mrb[0].mxu0 %v9777
    %v9898 = vpop.f32.mrb[0].mxu0
    %v9899 = vadd.f32 %v9763, %v9898
    %v9900 = vpop.f32.mrb[0].mxu0
    %9901 = vmatprep.mubr.f32.mxu0 0.0
    %9902 = vmatmul.mubr.f32.gmra.mrb[0].mxu0 %v9780
    %v9903 = vpop.f32.mrb[0].mxu0
    %v9904 = vadd.f32 %v9763, %v9903
    %v9905 = vpop.f32.mrb[0].mxu0
    %9906 = vmatprep.mubr.f32.mxu0 0.0
    %9907 = vmatmul.mubr.f32.gmra.mrb[0].mxu0 %v9783
    %v9908 = vpop.f32.mrb[0].mxu0
    %v9909 = vadd.f32 %v9763, %v9908
    %v9910 = vpop.f32.mrb[0].mxu0
    %9911 = vmatprep.mubr.f32.mxu0 0.0
    %9912 = vmatmul.mubr.f32.gmra.mrb[0].mxu0 %v9786
    %v9913 = vpop.f32.mrb[0].mxu0
    %v9914 = vadd.f32 %v9763, %v9913
    %v9915 = vpop.f32.mrb[0].mxu0
    %9916 = vmatprep.mubr.f32.mxu0 0.0
    %9917 = vmatmul.mubr.f32.gmra.mrb[0].mxu0 %v9789
    %v9918 = vpop.f32.mrb[0].mxu0
    %v9919 = vadd.f32 %v9763, %v9918
    %v9920 = vpop.f32.mrb[0].mxu0
    %9921 = vmatprep.mubr.f32.mxu0 0.0
    %9922 = vmatmul.mubr.f32.gmra.mrb[0].mxu0 %v9792
    %v9923 = vpop.f32.mrb[0].mxu0
    %v9924 = vadd.f32 %v9763, %v9923
    %v9925 = vpop.f32.mrb[0].mxu0
    %9926 = vmatprep.mubr.f32.mxu0 0.0
    %9927 = vmatmul.mubr.f32.gmra.mrb[0].mxu0 %v9795
    %v9928 = vpop.f32.mrb[0].mxu0
    %v9929 = vadd.f32 %v9763, %v9928
    %v9930 = vpop.f32.mrb[0].mxu0
    %9931 = vmatprep.mubr.f32.mxu0 0.0
    %9932 = vmatmul.mubr.f32.gmra.mrb[0].mxu0 %v9798
    %v9933 = vpop.f32.mrb[0].mxu0
    %v9934 = vadd.f32 %v9763, %v9933
    %v9935 = vpop.f32.mrb[0].mxu0
    %9936 = vmatprep.mubr.f32.mxu0 0.0
    %9937 = vmatmul.mubr.f32.gmra.mrb[0].mxu0 %v9801
    %v9938 = vpop.f32.mrb[0].mxu0
    %v9939 = vadd.f32 %v9763, %v9938
    %v9940 = vpop.f32.mrb[0].mxu0
    %9941 = vmatprep.mubr.f32.mxu0 0.0
    %9942 = vmatmul.mubr.f32.gmra.mrb[0].mxu0 %v9804
    %v9943 = vpop.f32.mrb[0].mxu0
    %v9944 = vadd.f32 %v9763, %v9943
    %v9945 = vpop.f32.mrb[0].mxu0
    %9946 = vmatprep.mubr.f32.mxu0 0.0
    %9947 = vmatmul.mubr.f32.gmra.mrb[0].mxu0 %v9807
    %v9948 = vpop.f32.mrb[0].mxu0
    %v9949 = vadd.f32 %v9763, %v9948
    %v9950 = vpop.f32.mrb[0].mxu0
    %9951 = vmatprep.mubr.f32.mxu0 0.0
    %9952 = vmatmul.mubr.f32.gmra.mrb[0].mxu0 %v9810
    %v9953 = vpop.f32.mrb[0].mxu0
    %v9954 = vadd.f32 %v9763, %v9953
    %v9955 = vpop.f32.mrb[0].mxu0
    %9956 = vdwg.mxu0
    %v9957 = vmul.f32 %v9879, %v9879
    %v9958 = vmul.f32 %v9884, %v9884
    %v9959 = vmul.f32 %v9889, %v9889
    %v9960 = vmul.f32 %v9894, %v9894
    %v9961 = vmul.f32 %v9899, %v9899
    %v9962 = vmul.f32 %v9904, %v9904
    %v9963 = vmul.f32 %v9909, %v9909
    %v9964 = vmul.f32 %v9914, %v9914
    %v9965 = vmul.f32 %v9919, %v9919
    %v9966 = vmul.f32 %v9924, %v9924
    %v9967 = vmul.f32 %v9929, %v9929
    %v9968 = vmul.f32 %v9934, %v9934
    %v9969 = vmul.f32 %v9939, %v9939
    %v9970 = vmul.f32 %v9944, %v9944
    %v9971 = vmul.f32 %v9949, %v9949
    %v9972 = vmul.f32 %v9954, %v9954
    %v9973 = vmul.f32 %v9879, %v9957
    %v9974 = vmul.f32 %v9884, %v9958
    %v9975 = vmul.f32 %v9889, %v9959
    %v9976 = vmul.f32 %v9894, %v9960
    %v9977 = vmul.f32 %v9899, %v9961
    %v9978 = vmul.f32 %v9904, %v9962
    %v9979 = vmul.f32 %v9909, %v9963
    %v9980 = vmul.f32 %v9914, %v9964
    %v9981 = vmul.f32 %v9919, %v9965
    %v9982 = vmul.f32 %v9924, %v9966
    %v9983 = vmul.f32 %v9929, %v9967
    %v9984 = vmul.f32 %v9934, %v9968
    %v9985 = vmul.f32 %v9939, %v9969
    %v9986 = vmul.f32 %v9944, %v9970
    %v9987 = vmul.f32 %v9949, %v9971
    %v9988 = vmul.f32 %v9954, %v9972
    %v9989 = vmul.f32 %v9973, 0.044715
    %v9990 = vmul.f32 %v9974, 0.044715
    %v9991 = vmul.f32 %v9975, 0.044715
    %v9992 = vmul.f32 %v9976, 0.044715
    %v9993 = vmul.f32 %v9977, 0.044715
    %v9994 = vmul.f32 %v9978, 0.044715
    %v9995 = vmul.f32 %v9979, 0.044715
    %v9996 = vmul.f32 %v9980, 0.044715
    %v9997 = vmul.f32 %v9981, 0.044715
    %v9998 = vmul.f32 %v9982, 0.044715
    %v9999 = vmul.f32 %v9983, 0.044715
    %v10000 = vmul.f32 %v9984, 0.044715
    %v10001 = vmul.f32 %v9985, 0.044715
    %v10002 = vmul.f32 %v9986, 0.044715
    %v10003 = vmul.f32 %v9987, 0.044715
    %v10004 = vmul.f32 %v9988, 0.044715
    %v10005 = vadd.f32 %v9879, %v9989
    %v10006 = vadd.f32 %v9884, %v9990
    %v10007 = vadd.f32 %v9889, %v9991
    %v10008 = vadd.f32 %v9894, %v9992
    %v10009 = vadd.f32 %v9899, %v9993
    %v10010 = vadd.f32 %v9904, %v9994
    %v10011 = vadd.f32 %v9909, %v9995
    %v10012 = vadd.f32 %v9914, %v9996
    %v10013 = vadd.f32 %v9919, %v9997
    %v10014 = vadd.f32 %v9924, %v9998
    %v10015 = vadd.f32 %v9929, %v9999
    %v10016 = vadd.f32 %v9934, %v10000
    %v10017 = vadd.f32 %v9939, %v10001
    %v10018 = vadd.f32 %v9944, %v10002
    %v10019 = vadd.f32 %v9949, %v10003
    %v10020 = vadd.f32 %v9954, %v10004
    %v10021 = vmul.f32 %v10005, 0.7978846
    %v10022 = vmul.f32 %v10006, 0.7978846
    %v10023 = vmul.f32 %v10007, 0.7978846
    %v10024 = vmul.f32 %v10008, 0.7978846
    %v10025 = vmul.f32 %v10009, 0.7978846
    %v10026 = vmul.f32 %v10010, 0.7978846
    %v10027 = vmul.f32 %v10011, 0.7978846
    %v10028 = vmul.f32 %v10012, 0.7978846
    %v10029 = vmul.f32 %v10013, 0.7978846
    %v10030 = vmul.f32 %v10014, 0.7978846
    %v10031 = vmul.f32 %v10015, 0.7978846
    %v10032 = vmul.f32 %v10016, 0.7978846
    %v10033 = vmul.f32 %v10017, 0.7978846
    %v10034 = vmul.f32 %v10018, 0.7978846
    %v10035 = vmul.f32 %v10019, 0.7978846
    %v10036 = vmul.f32 %v10020, 0.7978846
    %v10037 = vtanh.pop %v10021
    %v10038 = vtanh.pop %v10022
    %v10039 = vtanh.pop %v10023
    %v10040 = vtanh.pop %v10024
    %v10041 = vtanh.pop %v10025
    %v10042 = vtanh.pop %v10026
    %v10043 = vtanh.pop %v10027
    %v10044 = vtanh.pop %v10028
    %v10045 = vtanh.pop %v10029
    %v10046 = vtanh.pop %v10030
    %v10047 = vtanh.pop %v10031
    %v10048 = vtanh.pop %v10032
    %v10049 = vtanh.pop %v10033
    %v10050 = vtanh.pop %v10034
    %v10051 = vtanh.pop %v10035
    %v10052 = vtanh.pop %v10036
    %v10053 = vadd.f32 %v10037, 1.0
    %v10054 = vadd.f32 %v10038, 1.0
    %v10055 = vadd.f32 %v10039, 1.0
    %v10056 = vadd.f32 %v10040, 1.0
    %v10057 = vadd.f32 %v10041, 1.0
    %v10058 = vadd.f32 %v10042, 1.0
    %v10059 = vadd.f32 %v10043, 1.0
    %v10060 = vadd.f32 %v10044, 1.0
    %v10061 = vadd.f32 %v10045, 1.0
    %v10062 = vadd.f32 %v10046, 1.0
    %v10063 = vadd.f32 %v10047, 1.0
    %v10064 = vadd.f32 %v10048, 1.0
    %v10065 = vadd.f32 %v10049, 1.0
    %v10066 = vadd.f32 %v10050, 1.0
    %v10067 = vadd.f32 %v10051, 1.0
    %v10068 = vadd.f32 %v10052, 1.0
    %v10069 = vmul.f32 %v10053, 0.5
    %v10070 = vmul.f32 %v10054, 0.5
    %v10071 = vmul.f32 %v10055, 0.5
    %v10072 = vmul.f32 %v10056, 0.5
    %v10073 = vmul.f32 %v10057, 0.5
    %v10074 = vmul.f32 %v10058, 0.5
    %v10075 = vmul.f32 %v10059, 0.5
    %v10076 = vmul.f32 %v10060, 0.5
    %v10077 = vmul.f32 %v10061, 0.5
    %v10078 = vmul.f32 %v10062, 0.5
    %v10079 = vmul.f32 %v10063, 0.5
    %v10080 = vmul.f32 %v10064, 0.5
    %v10081 = vmul.f32 %v10065, 0.5
    %v10082 = vmul.f32 %v10066, 0.5
    %v10083 = vmul.f32 %v10067, 0.5
    %v10084 = vmul.f32 %v10068, 0.5
    %v10085 = vmul.f32 %v9879, %v10069
    %v10086 = vmul.f32 %v9884, %v10070
    %v10087 = vmul.f32 %v9889, %v10071
    %v10088 = vmul.f32 %v9894, %v10072
    %v10089 = vmul.f32 %v9899, %v10073
    %v10090 = vmul.f32 %v9904, %v10074
    %v10091 = vmul.f32 %v9909, %v10075
    %v10092 = vmul.f32 %v9914, %v10076
    %v10093 = vmul.f32 %v9919, %v10077
    %v10094 = vmul.f32 %v9924, %v10078
    %v10095 = vmul.f32 %v9929, %v10079
    %v10096 = vmul.f32 %v9934, %v10080
    %v10097 = vmul.f32 %v9939, %v10081
    %v10098 = vmul.f32 %v9944, %v10082
    %v10099 = vmul.f32 %v9949, %v10083
    %v10100 = vmul.f32 %v9954, %v10084
    %v10101 = vlaneseq
    %v10102 = vshrl.u32 %v10101, 7
    %v10103 = vsub.s32 0, %v10102
    %v10104 = vrot.slane %v5547, %v10103
    %10105 = vmatprep.subr.mxu0 0.0
    %10106 = vmatpush1.msra.mxu0 %v5527
    %10107 = vmatprep.subr.mxu0 0.0
    %10108 = vmatpush1.msra.mxu0 %v5528
    %10109 = vmatprep.subr.mxu0 0.0
    %10110 = vmatpush1.msra.mxu0 %v5529
    %10111 = vmatprep.subr.mxu0 0.0
    %10112 = vmatpush1.msra.mxu0 %v5530
    %10113 = vmatprep.subr.mxu0 0.0
    %10114 = vmatpush1.msra.mxu0 %v5531
    %10115 = vmatprep.subr.mxu0 0.0
    %10116 = vmatpush1.msra.mxu0 %v5532
    %10117 = vmatprep.subr.mxu0 0.0
    %10118 = vmatpush1.msra.mxu0 %v5533
    %10119 = vmatprep.subr.mxu0 0.0
    %10120 = vmatpush1.msra.mxu0 %v5534
    %10121 = vmatprep.subr.mxu0 0.0
    %10122 = vmatpush1.msra.mxu0 %v5535
    %10123 = vmatprep.subr.mxu0 0.0
    %10124 = vmatpush1.msra.mxu0 %v5536
    %10125 = vmatprep.subr.mxu0 0.0
    %10126 = vmatpush1.msra.mxu0 %v5537
    %10127 = vmatprep.subr.mxu0 0.0
    %10128 = vmatpush1.msra.mxu0 %v5538
    %10129 = vmatprep.subr.mxu0 0.0
    %10130 = vmatpush1.msra.mxu0 %v5539
    %10131 = vmatprep.subr.mxu0 0.0
    %10132 = vmatpush1.msra.mxu0 %v5540
    %10133 = vmatprep.subr.mxu0 0.0
    %10134 = vmatpush1.msra.mxu0 %v5541
    %10135 = vmatprep.subr.mxu0 0.0
    %10136 = vmatpush1.msra.mxu0 %v5542
    %10137 = vmatprep.subr.mxu0 0.0
    %10138 = vmatpush1.msra.mxu0 0.0
    %10139 = vmatprep.subr.mxu0 0.0
    %10140 = vmatpush1.msra.mxu0 0.0
    %10141 = vmatprep.subr.mxu0 0.0
    %10142 = vmatpush1.msra.mxu0 0.0
    %10143 = vmatprep.subr.mxu0 0.0
    %10144 = vmatpush1.msra.mxu0 0.0
    %10145 = vmatprep.subr.mxu0 0.0
    %10146 = vmatpush1.msra.mxu0 0.0
    %10147 = vmatprep.subr.mxu0 0.0
    %10148 = vmatpush1.msra.mxu0 0.0
    %10149 = vmatprep.subr.mxu0 0.0
    %10150 = vmatpush1.msra.mxu0 0.0
    %10151 = vmatprep.subr.mxu0 0.0
    %10152 = vmatpush1.msra.mxu0 0.0
    %10153 = vmatprep.subr.mxu0 0.0
    %10154 = vmatpush1.msra.mxu0 0.0
    %10155 = vmatprep.subr.mxu0 0.0
    %10156 = vmatpush1.msra.mxu0 0.0
    %10157 = vmatprep.subr.mxu0 0.0
    %10158 = vmatpush1.msra.mxu0 0.0
    %10159 = vmatprep.subr.mxu0 0.0
    %10160 = vmatpush1.msra.mxu0 0.0
    %10161 = vmatprep.subr.mxu0 0.0
    %10162 = vmatpush1.msra.mxu0 0.0
    %10163 = vmatprep.subr.mxu0 0.0
    %10164 = vmatpush1.msra.mxu0 0.0
    %10165 = vmatprep.subr.mxu0 0.0
    %10166 = vmatpush1.msra.mxu0 0.0
    %10167 = vmatprep.subr.mxu0 0.0
    %10168 = vmatpush1.msra.mxu0 0.0
    %10169 = vmatprep.mubr.f32.mxu0 0.0
    %10170 = vmatmul.mubr.f32.gmra.mrb[0].mxu0 %v10085
    %v10171 = vpop.f32.mrb[0].mxu0
    %v10172 = vadd.f32 %v10104, %v10171
    %v10173 = vpop.f32.mrb[0].mxu0
    %10174 = vmatprep.mubr.f32.mxu0 0.0
    %10175 = vmatmul.mubr.f32.gmra.mrb[0].mxu0 %v10086
    %v10176 = vpop.f32.mrb[0].mxu0
    %v10177 = vadd.f32 %v10104, %v10176
    %v10178 = vpop.f32.mrb[0].mxu0
    %10179 = vmatprep.mubr.f32.mxu0 0.0
    %10180 = vmatmul.mubr.f32.gmra.mrb[0].mxu0 %v10087
    %v10181 = vpop.f32.mrb[0].mxu0
    %v10182 = vadd.f32 %v10104, %v10181
    %v10183 = vpop.f32.mrb[0].mxu0
    %10184 = vmatprep.mubr.f32.mxu0 0.0
    %10185 = vmatmul.mubr.f32.gmra.mrb[0].mxu0 %v10088
    %v10186 = vpop.f32.mrb[0].mxu0
    %v10187 = vadd.f32 %v10104, %v10186
    %v10188 = vpop.f32.mrb[0].mxu0
    %10189 = vmatprep.mubr.f32.mxu0 0.0
    %10190 = vmatmul.mubr.f32.gmra.mrb[0].mxu0 %v10089
    %v10191 = vpop.f32.mrb[0].mxu0
    %v10192 = vadd.f32 %v10104, %v10191
    %v10193 = vpop.f32.mrb[0].mxu0
    %10194 = vmatprep.mubr.f32.mxu0 0.0
    %10195 = vmatmul.mubr.f32.gmra.mrb[0].mxu0 %v10090
    %v10196 = vpop.f32.mrb[0].mxu0
    %v10197 = vadd.f32 %v10104, %v10196
    %v10198 = vpop.f32.mrb[0].mxu0
    %10199 = vmatprep.mubr.f32.mxu0 0.0
    %10200 = vmatmul.mubr.f32.gmra.mrb[0].mxu0 %v10091
    %v10201 = vpop.f32.mrb[0].mxu0
    %v10202 = vadd.f32 %v10104, %v10201
    %v10203 = vpop.f32.mrb[0].mxu0
    %10204 = vmatprep.mubr.f32.mxu0 0.0
    %10205 = vmatmul.mubr.f32.gmra.mrb[0].mxu0 %v10092
    %v10206 = vpop.f32.mrb[0].mxu0
    %v10207 = vadd.f32 %v10104, %v10206
    %v10208 = vpop.f32.mrb[0].mxu0
    %10209 = vmatprep.mubr.f32.mxu0 0.0
    %10210 = vmatmul.mubr.f32.gmra.mrb[0].mxu0 %v10093
    %v10211 = vpop.f32.mrb[0].mxu0
    %v10212 = vadd.f32 %v10104, %v10211
    %v10213 = vpop.f32.mrb[0].mxu0
    %10214 = vmatprep.mubr.f32.mxu0 0.0
    %10215 = vmatmul.mubr.f32.gmra.mrb[0].mxu0 %v10094
    %v10216 = vpop.f32.mrb[0].mxu0
    %v10217 = vadd.f32 %v10104, %v10216
    %v10218 = vpop.f32.mrb[0].mxu0
    %10219 = vmatprep.mubr.f32.mxu0 0.0
    %10220 = vmatmul.mubr.f32.gmra.mrb[0].mxu0 %v10095
    %v10221 = vpop.f32.mrb[0].mxu0
    %v10222 = vadd.f32 %v10104, %v10221
    %v10223 = vpop.f32.mrb[0].mxu0
    %10224 = vmatprep.mubr.f32.mxu0 0.0
    %10225 = vmatmul.mubr.f32.gmra.mrb[0].mxu0 %v10096
    %v10226 = vpop.f32.mrb[0].mxu0
    %v10227 = vadd.f32 %v10104, %v10226
    %v10228 = vpop.f32.mrb[0].mxu0
    %10229 = vmatprep.mubr.f32.mxu0 0.0
    %10230 = vmatmul.mubr.f32.gmra.mrb[0].mxu0 %v10097
    %v10231 = vpop.f32.mrb[0].mxu0
    %v10232 = vadd.f32 %v10104, %v10231
    %v10233 = vpop.f32.mrb[0].mxu0
    %10234 = vmatprep.mubr.f32.mxu0 0.0
    %10235 = vmatmul.mubr.f32.gmra.mrb[0].mxu0 %v10098
    %v10236 = vpop.f32.mrb[0].mxu0
    %v10237 = vadd.f32 %v10104, %v10236
    %v10238 = vpop.f32.mrb[0].mxu0
    %10239 = vmatprep.mubr.f32.mxu0 0.0
    %10240 = vmatmul.mubr.f32.gmra.mrb[0].mxu0 %v10099
    %v10241 = vpop.f32.mrb[0].mxu0
    %v10242 = vadd.f32 %v10104, %v10241
    %v10243 = vpop.f32.mrb[0].mxu0
    %10244 = vmatprep.mubr.f32.mxu0 0.0
    %10245 = vmatmul.mubr.f32.gmra.mrb[0].mxu0 %v10100
    %v10246 = vpop.f32.mrb[0].mxu0
    %v10247 = vadd.f32 %v10104, %v10246
    %v10248 = vpop.f32.mrb[0].mxu0
    %10249 = vdwg.mxu0
    %v10250 = vadd.f32 %v9744, %v10172
    %v10251 = vadd.f32 %v9745, %v10177
    %v10252 = vadd.f32 %v9746, %v10182
    %v10253 = vadd.f32 %v9747, %v10187
    %v10254 = vadd.f32 %v9748, %v10192
    %v10255 = vadd.f32 %v9749, %v10197
    %v10256 = vadd.f32 %v9750, %v10202
    %v10257 = vadd.f32 %v9751, %v10207
    %v10258 = vadd.f32 %v9752, %v10212
    %v10259 = vadd.f32 %v9753, %v10217
    %v10260 = vadd.f32 %v9754, %v10222
    %v10261 = vadd.f32 %v9755, %v10227
    %v10262 = vadd.f32 %v9756, %v10232
    %v10263 = vadd.f32 %v9757, %v10237
    %v10264 = vadd.f32 %v9758, %v10242
    %v10265 = vadd.f32 %v9759, %v10247
    %v10266 = vsel %vm271, %v10250, 0.0
    %10267 = vadd.xlane.f32.xlu0 %v10266
    %v10268 = vpop.xlane.xlu0 %10267
    %v10269 = vsel %vm271, %v10251, 0.0
    %10270 = vadd.xlane.f32.xlu0 %v10269
    %v10271 = vpop.xlane.xlu0 %10270
    %v10272 = vsel %vm271, %v10252, 0.0
    %10273 = vadd.xlane.f32.xlu0 %v10272
    %v10274 = vpop.xlane.xlu0 %10273
    %v10275 = vsel %vm271, %v10253, 0.0
    %10276 = vadd.xlane.f32.xlu0 %v10275
    %v10277 = vpop.xlane.xlu0 %10276
    %v10278 = vsel %vm271, %v10254, 0.0
    %10279 = vadd.xlane.f32.xlu0 %v10278
    %v10280 = vpop.xlane.xlu0 %10279
    %v10281 = vsel %vm271, %v10255, 0.0
    %10282 = vadd.xlane.f32.xlu0 %v10281
    %v10283 = vpop.xlane.xlu0 %10282
    %v10284 = vsel %vm271, %v10256, 0.0
    %10285 = vadd.xlane.f32.xlu0 %v10284
    %v10286 = vpop.xlane.xlu0 %10285
    %v10287 = vsel %vm271, %v10257, 0.0
    %10288 = vadd.xlane.f32.xlu0 %v10287
    %v10289 = vpop.xlane.xlu0 %10288
    %v10290 = vsel %vm271, %v10258, 0.0
    %10291 = vadd.xlane.f32.xlu0 %v10290
    %v10292 = vpop.xlane.xlu0 %10291
    %v10293 = vsel %vm271, %v10259, 0.0
    %10294 = vadd.xlane.f32.xlu0 %v10293
    %v10295 = vpop.xlane.xlu0 %10294
    %v10296 = vsel %vm271, %v10260, 0.0
    %10297 = vadd.xlane.f32.xlu0 %v10296
    %v10298 = vpop.xlane.xlu0 %10297
    %v10299 = vsel %vm271, %v10261, 0.0
    %10300 = vadd.xlane.f32.xlu0 %v10299
    %v10301 = vpop.xlane.xlu0 %10300
    %v10302 = vsel %vm271, %v10262, 0.0
    %10303 = vadd.xlane.f32.xlu0 %v10302
    %v10304 = vpop.xlane.xlu0 %10303
    %v10305 = vsel %vm271, %v10263, 0.0
    %10306 = vadd.xlane.f32.xlu0 %v10305
    %v10307 = vpop.xlane.xlu0 %10306
    %v10308 = vsel %vm271, %v10264, 0.0
    %10309 = vadd.xlane.f32.xlu0 %v10308
    %v10310 = vpop.xlane.xlu0 %10309
    %v10311 = vsel %vm271, %v10265, 0.0
    %10312 = vadd.xlane.f32.xlu0 %v10311
    %v10313 = vpop.xlane.xlu0 %10312
    %v10314 = vmul.f32 %v10268, %v320
    %v10315 = vmul.f32 %v10271, %v320
    %v10316 = vmul.f32 %v10274, %v320
    %v10317 = vmul.f32 %v10277, %v320
    %v10318 = vmul.f32 %v10280, %v320
    %v10319 = vmul.f32 %v10283, %v320
    %v10320 = vmul.f32 %v10286, %v320
    %v10321 = vmul.f32 %v10289, %v320
    %v10322 = vmul.f32 %v10292, %v320
    %v10323 = vmul.f32 %v10295, %v320
    %v10324 = vmul.f32 %v10298, %v320
    %v10325 = vmul.f32 %v10301, %v320
    %v10326 = vmul.f32 %v10304, %v320
    %v10327 = vmul.f32 %v10307, %v320
    %v10328 = vmul.f32 %v10310, %v320
    %v10329 = vmul.f32 %v10313, %v320
    %v10330 = vsub.f32 %v10250, %v10314
    %v10331 = vsub.f32 %v10251, %v10315
    %v10332 = vsub.f32 %v10252, %v10316
    %v10333 = vsub.f32 %v10253, %v10317
    %v10334 = vsub.f32 %v10254, %v10318
    %v10335 = vsub.f32 %v10255, %v10319
    %v10336 = vsub.f32 %v10256, %v10320
    %v10337 = vsub.f32 %v10257, %v10321
    %v10338 = vsub.f32 %v10258, %v10322
    %v10339 = vsub.f32 %v10259, %v10323
    %v10340 = vsub.f32 %v10260, %v10324
    %v10341 = vsub.f32 %v10261, %v10325
    %v10342 = vsub.f32 %v10262, %v10326
    %v10343 = vsub.f32 %v10263, %v10327
    %v10344 = vsub.f32 %v10264, %v10328
    %v10345 = vsub.f32 %v10265, %v10329
    %v10346 = vmul.f32 %v10330, %v10330
    %v10347 = vmul.f32 %v10331, %v10331
    %v10348 = vmul.f32 %v10332, %v10332
    %v10349 = vmul.f32 %v10333, %v10333
    %v10350 = vmul.f32 %v10334, %v10334
    %v10351 = vmul.f32 %v10335, %v10335
    %v10352 = vmul.f32 %v10336, %v10336
    %v10353 = vmul.f32 %v10337, %v10337
    %v10354 = vmul.f32 %v10338, %v10338
    %v10355 = vmul.f32 %v10339, %v10339
    %v10356 = vmul.f32 %v10340, %v10340
    %v10357 = vmul.f32 %v10341, %v10341
    %v10358 = vmul.f32 %v10342, %v10342
    %v10359 = vmul.f32 %v10343, %v10343
    %v10360 = vmul.f32 %v10344, %v10344
    %v10361 = vmul.f32 %v10345, %v10345
    %v10362 = vsel %vm271, %v10346, 0.0
    %10363 = vadd.xlane.f32.xlu0 %v10362
    %v10364 = vpop.xlane.xlu0 %10363
    %v10365 = vsel %vm271, %v10347, 0.0
    %10366 = vadd.xlane.f32.xlu0 %v10365
    %v10367 = vpop.xlane.xlu0 %10366
    %v10368 = vsel %vm271, %v10348, 0.0
    %10369 = vadd.xlane.f32.xlu0 %v10368
    %v10370 = vpop.xlane.xlu0 %10369
    %v10371 = vsel %vm271, %v10349, 0.0
    %10372 = vadd.xlane.f32.xlu0 %v10371
    %v10373 = vpop.xlane.xlu0 %10372
    %v10374 = vsel %vm271, %v10350, 0.0
    %10375 = vadd.xlane.f32.xlu0 %v10374
    %v10376 = vpop.xlane.xlu0 %10375
    %v10377 = vsel %vm271, %v10351, 0.0
    %10378 = vadd.xlane.f32.xlu0 %v10377
    %v10379 = vpop.xlane.xlu0 %10378
    %v10380 = vsel %vm271, %v10352, 0.0
    %10381 = vadd.xlane.f32.xlu0 %v10380
    %v10382 = vpop.xlane.xlu0 %10381
    %v10383 = vsel %vm271, %v10353, 0.0
    %10384 = vadd.xlane.f32.xlu0 %v10383
    %v10385 = vpop.xlane.xlu0 %10384
    %v10386 = vsel %vm271, %v10354, 0.0
    %10387 = vadd.xlane.f32.xlu0 %v10386
    %v10388 = vpop.xlane.xlu0 %10387
    %v10389 = vsel %vm271, %v10355, 0.0
    %10390 = vadd.xlane.f32.xlu0 %v10389
    %v10391 = vpop.xlane.xlu0 %10390
    %v10392 = vsel %vm271, %v10356, 0.0
    %10393 = vadd.xlane.f32.xlu0 %v10392
    %v10394 = vpop.xlane.xlu0 %10393
    %v10395 = vsel %vm271, %v10357, 0.0
    %10396 = vadd.xlane.f32.xlu0 %v10395
    %v10397 = vpop.xlane.xlu0 %10396
    %v10398 = vsel %vm271, %v10358, 0.0
    %10399 = vadd.xlane.f32.xlu0 %v10398
    %v10400 = vpop.xlane.xlu0 %10399
    %v10401 = vsel %vm271, %v10359, 0.0
    %10402 = vadd.xlane.f32.xlu0 %v10401
    %v10403 = vpop.xlane.xlu0 %10402
    %v10404 = vsel %vm271, %v10360, 0.0
    %10405 = vadd.xlane.f32.xlu0 %v10404
    %v10406 = vpop.xlane.xlu0 %10405
    %v10407 = vsel %vm271, %v10361, 0.0
    %10408 = vadd.xlane.f32.xlu0 %v10407
    %v10409 = vpop.xlane.xlu0 %10408
    %v10410 = vmul.f32 %v10364, %v320
    %v10411 = vmul.f32 %v10367, %v320
    %v10412 = vmul.f32 %v10370, %v320
    %v10413 = vmul.f32 %v10373, %v320
    %v10414 = vmul.f32 %v10376, %v320
    %v10415 = vmul.f32 %v10379, %v320
    %v10416 = vmul.f32 %v10382, %v320
    %v10417 = vmul.f32 %v10385, %v320
    %v10418 = vmul.f32 %v10388, %v320
    %v10419 = vmul.f32 %v10391, %v320
    %v10420 = vmul.f32 %v10394, %v320
    %v10421 = vmul.f32 %v10397, %v320
    %v10422 = vmul.f32 %v10400, %v320
    %v10423 = vmul.f32 %v10403, %v320
    %v10424 = vmul.f32 %v10406, %v320
    %v10425 = vmul.f32 %v10409, %v320
    %v10426 = vadd.f32 %v10410, 1e-12
    %v10427 = vadd.f32 %v10411, 1e-12
    %v10428 = vadd.f32 %v10412, 1e-12
    %v10429 = vadd.f32 %v10413, 1e-12
    %v10430 = vadd.f32 %v10414, 1e-12
    %v10431 = vadd.f32 %v10415, 1e-12
    %v10432 = vadd.f32 %v10416, 1e-12
    %v10433 = vadd.f32 %v10417, 1e-12
    %v10434 = vadd.f32 %v10418, 1e-12
    %v10435 = vadd.f32 %v10419, 1e-12
    %v10436 = vadd.f32 %v10420, 1e-12
    %v10437 = vadd.f32 %v10421, 1e-12
    %v10438 = vadd.f32 %v10422, 1e-12
    %v10439 = vadd.f32 %v10423, 1e-12
    %v10440 = vadd.f32 %v10424, 1e-12
    %v10441 = vadd.f32 %v10425, 1e-12
    %v10442 = vrsqrt.pop %v10426
    %v10443 = vrsqrt.pop %v10427
    %v10444 = vrsqrt.pop %v10428
    %v10445 = vrsqrt.pop %v10429
    %v10446 = vrsqrt.pop %v10430
    %v10447 = vrsqrt.pop %v10431
    %v10448 = vrsqrt.pop %v10432
    %v10449 = vrsqrt.pop %v10433
    %v10450 = vrsqrt.pop %v10434
    %v10451 = vrsqrt.pop %v10435
    %v10452 = vrsqrt.pop %v10436
    %v10453 = vrsqrt.pop %v10437
    %v10454 = vrsqrt.pop %v10438
    %v10455 = vrsqrt.pop %v10439
    %v10456 = vrsqrt.pop %v10440
    %v10457 = vrsqrt.pop %v10441
    %v10458 = vmul.f32 %v10330, %v10442
    %v10459 = vmul.f32 %v10331, %v10443
    %v10460 = vmul.f32 %v10332, %v10444
    %v10461 = vmul.f32 %v10333, %v10445
    %v10462 = vmul.f32 %v10334, %v10446
    %v10463 = vmul.f32 %v10335, %v10447
    %v10464 = vmul.f32 %v10336, %v10448
    %v10465 = vmul.f32 %v10337, %v10449
    %v10466 = vmul.f32 %v10338, %v10450
    %v10467 = vmul.f32 %v10339, %v10451
    %v10468 = vmul.f32 %v10340, %v10452
    %v10469 = vmul.f32 %v10341, %v10453
    %v10470 = vmul.f32 %v10342, %v10454
    %v10471 = vmul.f32 %v10343, %v10455
    %v10472 = vmul.f32 %v10344, %v10456
    %v10473 = vmul.f32 %v10345, %v10457
    %v10474 = vlaneseq
    %v10475 = vshrl.u32 %v10474, 7
    %v10476 = vsub.s32 0, %v10475
    %v10477 = vrot.slane %v5548, %v10476
    %v10478 = vmul.f32 %v10458, %v10477
    %v10479 = vmul.f32 %v10459, %v10477
    %v10480 = vmul.f32 %v10460, %v10477
    %v10481 = vmul.f32 %v10461, %v10477
    %v10482 = vmul.f32 %v10462, %v10477
    %v10483 = vmul.f32 %v10463, %v10477
    %v10484 = vmul.f32 %v10464, %v10477
    %v10485 = vmul.f32 %v10465, %v10477
    %v10486 = vmul.f32 %v10466, %v10477
    %v10487 = vmul.f32 %v10467, %v10477
    %v10488 = vmul.f32 %v10468, %v10477
    %v10489 = vmul.f32 %v10469, %v10477
    %v10490 = vmul.f32 %v10470, %v10477
    %v10491 = vmul.f32 %v10471, %v10477
    %v10492 = vmul.f32 %v10472, %v10477
    %v10493 = vmul.f32 %v10473, %v10477
    %v10494 = vlaneseq
    %v10495 = vshrl.u32 %v10494, 7
    %v10496 = vsub.s32 0, %v10495
    %v10497 = vrot.slane %v5549, %v10496
    %v10498 = vadd.f32 %v10478, %v10497
    %v10499 = vadd.f32 %v10479, %v10497
    %v10500 = vadd.f32 %v10480, %v10497
    %v10501 = vadd.f32 %v10481, %v10497
    %v10502 = vadd.f32 %v10482, %v10497
    %v10503 = vadd.f32 %v10483, %v10497
    %v10504 = vadd.f32 %v10484, %v10497
    %v10505 = vadd.f32 %v10485, %v10497
    %v10506 = vadd.f32 %v10486, %v10497
    %v10507 = vadd.f32 %v10487, %v10497
    %v10508 = vadd.f32 %v10488, %v10497
    %v10509 = vadd.f32 %v10489, %v10497
    %v10510 = vadd.f32 %v10490, %v10497
    %v10511 = vadd.f32 %v10491, %v10497
    %v10512 = vadd.f32 %v10492, %v10497
    %v10513 = vadd.f32 %v10493, %v10497
    %v10514 = vld [vmem:[#allocation2 + $0x8] sm:$0xff]
    %v10515 = vld [vmem:[#allocation2 + $0x10] sm:$0xff]
    %v10516 = vld [vmem:[#allocation2 + $0x18] sm:$0xff]
    %v10517 = vld [vmem:[#allocation2 + $0x20] sm:$0xff]
    %v10518 = vld [vmem:[%s2 + $0x43] sm:$0x1]
    %v10519 = vlaneseq
    %v10520 = vshrl.u32 %v10519, 7
    %v10521 = vsub.s32 0, %v10520
    %v10522 = vrot.slane %v10518, %v10521
    %v10524 = vsel %vm271, %v10498, 0
    %v10527 = vsel %vm271, %v10499, 0
    %v10530 = vsel %vm271, %v10500, 0
    %v10533 = vsel %vm271, %v10501, 0
    %v10536 = vsel %vm271, %v10502, 0
    %v10539 = vsel %vm271, %v10503, 0
    %v10542 = vsel %vm271, %v10504, 0
    %v10545 = vsel %vm271, %v10505, 0
    %v10548 = vsel %vm271, %v10506, 0
    %v10551 = vsel %vm271, %v10507, 0
    %v10554 = vsel %vm271, %v10508, 0
    %v10557 = vsel %vm271, %v10509, 0
    %v10560 = vsel %vm271, %v10510, 0
    %v10563 = vsel %vm271, %v10511, 0
    %v10566 = vsel %vm271, %v10512, 0
    %v10569 = vsel %vm271, %v10513, 0
    %10571 = vmatprep.subr.mxu0 0.0
    %10572 = vmatpush1.msra.mxu0 %v10514
    %10573 = vmatprep.subr.mxu0 0.0
    %10574 = vmatpush1.msra.mxu0 %v10515
    %10575 = vmatprep.subr.mxu0 0.0
    %10576 = vmatpush1.msra.mxu0 %v10516
    %10577 = vmatprep.subr.mxu0 0.0
    %10578 = vmatpush1.msra.mxu0 %v10517
    %10579 = vmatprep.subr.mxu0 0.0
    %10580 = vmatpush1.msra.mxu0 0.0
    %10581 = vmatprep.subr.mxu0 0.0
    %10582 = vmatpush1.msra.mxu0 0.0
    %10583 = vmatprep.subr.mxu0 0.0
    %10584 = vmatpush1.msra.mxu0 0.0
    %10585 = vmatprep.subr.mxu0 0.0
    %10586 = vmatpush1.msra.mxu0 0.0
    %10587 = vmatprep.subr.mxu0 0.0
    %10588 = vmatpush1.msra.mxu0 0.0
    %10589 = vmatprep.subr.mxu0 0.0
    %10590 = vmatpush1.msra.mxu0 0.0
    %10591 = vmatprep.subr.mxu0 0.0
    %10592 = vmatpush1.msra.mxu0 0.0
    %10593 = vmatprep.subr.mxu0 0.0
    %10594 = vmatpush1.msra.mxu0 0.0
    %10595 = vmatprep.subr.mxu0 0.0
    %10596 = vmatpush1.msra.mxu0 0.0
    %10597 = vmatprep.subr.mxu0 0.0
    %10598 = vmatpush1.msra.mxu0 0.0
    %10599 = vmatprep.subr.mxu0 0.0
    %10600 = vmatpush1.msra.mxu0 0.0
    %10601 = vmatprep.subr.mxu0 0.0
    %10602 = vmatpush1.msra.mxu0 0.0
    %10603 = vmatprep.subr.mxu0 0.0
    %10604 = vmatpush1.msra.mxu0 0.0
    %10605 = vmatprep.subr.mxu0 0.0
    %10606 = vmatpush1.msra.mxu0 0.0
    %10607 = vmatprep.subr.mxu0 0.0
    %10608 = vmatpush1.msra.mxu0 0.0
    %10609 = vmatprep.subr.mxu0 0.0
    %10610 = vmatpush1.msra.mxu0 0.0
    %10611 = vmatprep.subr.mxu0 0.0
    %10612 = vmatpush1.msra.mxu0 0.0
    %10613 = vmatprep.subr.mxu0 0.0
    %10614 = vmatpush1.msra.mxu0 0.0
    %10615 = vmatprep.subr.mxu0 0.0
    %10616 = vmatpush1.msra.mxu0 0.0
    %10617 = vmatprep.subr.mxu0 0.0
    %10618 = vmatpush1.msra.mxu0 0.0
    %10619 = vmatprep.subr.mxu0 0.0
    %10620 = vmatpush1.msra.mxu0 0.0
    %10621 = vmatprep.subr.mxu0 0.0
    %10622 = vmatpush1.msra.mxu0 0.0
    %10623 = vmatprep.subr.mxu0 0.0
    %10624 = vmatpush1.msra.mxu0 0.0
    %10625 = vmatprep.subr.mxu0 0.0
    %10626 = vmatpush1.msra.mxu0 0.0
    %10627 = vmatprep.subr.mxu0 0.0
    %10628 = vmatpush1.msra.mxu0 0.0
    %10629 = vmatprep.subr.mxu0 0.0
    %10630 = vmatpush1.msra.mxu0 0.0
    %10631 = vmatprep.subr.mxu0 0.0
    %10632 = vmatpush1.msra.mxu0 0.0
    %10633 = vmatprep.subr.mxu0 0.0
    %10634 = vmatpush1.msra.mxu0 0.0
    %10635 = vmatprep.mubr.f32.mxu0 0.0
    %10636 = vmatmul.mubr.f32.gmra.mrb[0].mxu0 %v10524
    %v10637 = vpop.f32.mrb[0].mxu0
    %v10638 = vadd.f32 %v10522, %v10637
    %v10639 = vpop.f32.mrb[0].mxu0
    %10640 = vmatprep.mubr.f32.mxu0 0.0
    %10641 = vmatmul.mubr.f32.gmra.mrb[0].mxu0 %v10527
    %v10642 = vpop.f32.mrb[0].mxu0
    %v10643 = vadd.f32 %v10522, %v10642
    %v10644 = vpop.f32.mrb[0].mxu0
    %10645 = vmatprep.mubr.f32.mxu0 0.0
    %10646 = vmatmul.mubr.f32.gmra.mrb[0].mxu0 %v10530
    %v10647 = vpop.f32.mrb[0].mxu0
    %v10648 = vadd.f32 %v10522, %v10647
    %v10649 = vpop.f32.mrb[0].mxu0
    %10650 = vmatprep.mubr.f32.mxu0 0.0
    %10651 = vmatmul.mubr.f32.gmra.mrb[0].mxu0 %v10533
    %v10652 = vpop.f32.mrb[0].mxu0
    %v10653 = vadd.f32 %v10522, %v10652
    %v10654 = vpop.f32.mrb[0].mxu0
    %10655 = vmatprep.mubr.f32.mxu0 0.0
    %10656 = vmatmul.mubr.f32.gmra.mrb[0].mxu0 %v10536
    %v10657 = vpop.f32.mrb[0].mxu0
    %v10658 = vadd.f32 %v10522, %v10657
    %v10659 = vpop.f32.mrb[0].mxu0
    %10660 = vmatprep.mubr.f32.mxu0 0.0
    %10661 = vmatmul.mubr.f32.gmra.mrb[0].mxu0 %v10539
    %v10662 = vpop.f32.mrb[0].mxu0
    %v10663 = vadd.f32 %v10522, %v10662
    %v10664 = vpop.f32.mrb[0].mxu0
    %10665 = vmatprep.mubr.f32.mxu0 0.0
    %10666 = vmatmul.mubr.f32.gmra.mrb[0].mxu0 %v10542
    %v10667 = vpop.f32.mrb[0].mxu0
    %v10668 = vadd.f32 %v10522, %v10667
    %v10669 = vpop.f32.mrb[0].mxu0
    %10670 = vmatprep.mubr.f32.mxu0 0.0
    %10671 = vmatmul.mubr.f32.gmra.mrb[0].mxu0 %v10545
    %v10672 = vpop.f32.mrb[0].mxu0
    %v10673 = vadd.f32 %v10522, %v10672
    %v10674 = vpop.f32.mrb[0].mxu0
    %10675 = vmatprep.mubr.f32.mxu0 0.0
    %10676 = vmatmul.mubr.f32.gmra.mrb[0].mxu0 %v10548
    %v10677 = vpop.f32.mrb[0].mxu0
    %v10678 = vadd.f32 %v10522, %v10677
    %v10679 = vpop.f32.mrb[0].mxu0
    %10680 = vmatprep.mubr.f32.mxu0 0.0
    %10681 = vmatmul.mubr.f32.gmra.mrb[0].mxu0 %v10551
    %v10682 = vpop.f32.mrb[0].mxu0
    %v10683 = vadd.f32 %v10522, %v10682
    %v10684 = vpop.f32.mrb[0].mxu0
    %10685 = vmatprep.mubr.f32.mxu0 0.0
    %10686 = vmatmul.mubr.f32.gmra.mrb[0].mxu0 %v10554
    %v10687 = vpop.f32.mrb[0].mxu0
    %v10688 = vadd.f32 %v10522, %v10687
    %v10689 = vpop.f32.mrb[0].mxu0
    %10690 = vmatprep.mubr.f32.mxu0 0.0
    %10691 = vmatmul.mubr.f32.gmra.mrb[0].mxu0 %v10557
    %v10692 = vpop.f32.mrb[0].mxu0
    %v10693 = vadd.f32 %v10522, %v10692
    %v10694 = vpop.f32.mrb[0].mxu0
    %10695 = vmatprep.mubr.f32.mxu0 0.0
    %10696 = vmatmul.mubr.f32.gmra.mrb[0].mxu0 %v10560
    %v10697 = vpop.f32.mrb[0].mxu0
    %v10698 = vadd.f32 %v10522, %v10697
    %v10699 = vpop.f32.mrb[0].mxu0
    %10700 = vmatprep.mubr.f32.mxu0 0.0
    %10701 = vmatmul.mubr.f32.gmra.mrb[0].mxu0 %v10563
    %v10702 = vpop.f32.mrb[0].mxu0
    %v10703 = vadd.f32 %v10522, %v10702
    %v10704 = vpop.f32.mrb[0].mxu0
    %10705 = vmatprep.mubr.f32.mxu0 0.0
    %10706 = vmatmul.mubr.f32.gmra.mrb[0].mxu0 %v10566
    %v10707 = vpop.f32.mrb[0].mxu0
    %v10708 = vadd.f32 %v10522, %v10707
    %v10709 = vpop.f32.mrb[0].mxu0
    %10710 = vmatprep.mubr.f32.mxu0 0.0
    %10711 = vmatmul.mubr.f32.gmra.mrb[0].mxu0 %v10569
    %v10712 = vpop.f32.mrb[0].mxu0
    %v10713 = vadd.f32 %v10522, %v10712
    %v10714 = vpop.f32.mrb[0].mxu0
    %10715 = vdwg.mxu0
    %10716 = vst [vmem:[#allocation5] sm:$0xff] %v10638
    %10717 = vst [vmem:[#allocation5 + $0x8] sm:$0xff] %v10643
    %10718 = vst [vmem:[#allocation5 + $0x10] sm:$0xff] %v10648
    %10719 = vst [vmem:[#allocation5 + $0x18] sm:$0xff] %v10653
    %10720 = vst [vmem:[#allocation5 + $0x20] sm:$0xff] %v10658
    %10721 = vst [vmem:[#allocation5 + $0x28] sm:$0xff] %v10663
    %10722 = vst [vmem:[#allocation5 + $0x30] sm:$0xff] %v10668
    %10723 = vst [vmem:[#allocation5 + $0x38] sm:$0xff] %v10673
    %10724 = vst [vmem:[#allocation5 + $0x40] sm:$0xff] %v10678
    %10725 = vst [vmem:[#allocation5 + $0x48] sm:$0xff] %v10683
    %10726 = vst [vmem:[#allocation5 + $0x50] sm:$0xff] %v10688
    %10727 = vst [vmem:[#allocation5 + $0x58] sm:$0xff] %v10693
    %10728 = vst [vmem:[#allocation5 + $0x60] sm:$0xff] %v10698
    %10729 = vst [vmem:[#allocation5 + $0x68] sm:$0xff] %v10703
    %10730 = vst [vmem:[#allocation5 + $0x70] sm:$0xff] %v10708
    %10731 = vst [vmem:[#allocation5 + $0x78] sm:$0xff] %v10713
    // Predicated region
    $region18: #{tpu_custom_call.1} parent=1 // pred_check
      _
    $region19: #{tpu_custom_call.1} parent=1 // pred_check_branch
      %10733 = sbr.rel (0) target = $region21
    $region20: #{tpu_custom_call.1} parent=1 // pred_region
      %s10735 = ssub.s32 2048, 2048
      %10736 = vsyncadd [#allocation4], %s10735
      %s10737 = sshll.u32 [#allocation5], 4
      %s10738 = int_to_ptr.vmem [resolvable:$true] %s10737
      %10743 = dma.vmem_to_hbm [thread:$0]  %s10738, 2048, %s3, [#allocation4], 128, 128, 8
    $region21: #{tpu_custom_call.1} parent=1 // pred_fallthru
      _
    // Predicated region
    $region22: #{tpu_custom_call.1} parent=1 // pred_check
      _
    $region23: #{tpu_custom_call.1} parent=1 // pred_check_branch
      %10745 = sbr.rel (0) target = $region25
    $region24: #{tpu_custom_call.1} parent=1 // pred_region
      %10746 = dma.done [#allocation4], 2048
    $region25: #{tpu_custom_call.1} parent=1 // pred_fallthru
      _
    %10747 = vsyncpa [#allocation3], 1
    %10748 = vsyncpa [#allocation4], 1

</llo_original>
